<compile_context>
chip_gen: v5e
topology: v5e:2x2
jax: 0.10.0
libtpu: 0.0.40
codegen_flags: <defaults>
</compile_context>

<pallas_src>
import numpy as np
import jax
import jax.numpy as jnp
from jax.experimental import pallas as pl
from jax.experimental.pallas import tpu as pltpu

_P1 = 0.2
_P2 = 0.4
# keep element iff (uniform uint32 hash) >= THR  ->  keep probability = 1 - p
_THR1_32 = int(round(_P1 * (1 << 32)))
_THR2_32 = int(round(_P2 * (1 << 32)))
_LANE = 128
_SALT1 = 0x1D872B41
_SALT2 = 0x5BD1E995


def _round_up(n, m):
    return (n + m - 1) // m * m


def _keep_mask(seed_u32, salt, row0_u32, shape, thr32):
    """Separable counter-hash PRNG -> boolean keep-mask.

    Row term (tile_b,1) and col term (1,N) are rank-1 and broadcast-added, so the
    only full-size VALU work is: 1 add + 1 xor-shift-mul round + 1 xor-shift + 1
    unsigned compare (~7 ops/vreg). Deterministic in (seed, layer salt, global row,
    col), so masks do not depend on the batch tile size and match the JAX reference.
    Mixing quality is adequate for dropout (don't reuse where statistics matter).
    """
    rows = (jax.lax.broadcasted_iota(jnp.int32, (shape[0], 1), 0).astype(jnp.uint32)
            + row0_u32)
    cols = jax.lax.broadcasted_iota(jnp.int32, (1, shape[1]), 1).astype(jnp.uint32)
    row_t = (seed_u32 ^ jnp.uint32(salt)) + rows * jnp.uint32(0x9E3779B1)
    col_t = cols * jnp.uint32(0x85EBCA77)
    x = row_t + col_t                                  # only full-size pre-mix op
    x = (x ^ (x >> 16)) * jnp.uint32(0x7FEB352D)       # single finalizer round
    x = x ^ (x >> 15)
    return x >= jnp.uint32(thr32)                      # raw 32-bit compare, no cast


def dnn_kernel(seed_ref, x_ref, w1_ref, b1_ref, w2_ref, b2_ref, w3_ref, b3_ref, o_ref):
    seed = seed_ref[0].astype(jnp.uint32)
    tile_b = x_ref.shape[0]
    row0 = (pl.program_id(0) * tile_b).astype(jnp.uint32)

    # fc1: (TILE_B, F) @ (F, 512) + (1, 512)   -- bf16 MXU operands, f32 accumulation
    h1 = jnp.dot(x_ref[...].astype(jnp.bfloat16), w1_ref[...],
                 preferred_element_type=jnp.float32) + b1_ref[...]
    # Dropout(0.2): bf16 select (mask only; 1/(1-p) folded into w2), feeds next dot
    h1 = jnp.where(_keep_mask(seed, _SALT1, row0, h1.shape, _THR1_32),
                   h1.astype(jnp.bfloat16), jnp.bfloat16(0.0))

    # fc2: (TILE_B, 512) @ (512, 1024) + (1, 1024)
    h2 = jnp.dot(h1, w2_ref[...], preferred_element_type=jnp.float32) + b2_ref[...]
    # Dropout(0.4): bf16 select; 1/(1-p) folded into w3
    h2 = jnp.where(_keep_mask(seed, _SALT2, row0, h2.shape, _THR2_32),
                   h2.astype(jnp.bfloat16), jnp.bfloat16(0.0))

    # fc3: (TILE_B, 1024) @ (1024, C_pad) + (1, C_pad)   -- lane-dense padded output
    out = jnp.dot(h2, w3_ref[...], preferred_element_type=jnp.float32) + b3_ref[...]
    o_ref[...] = out.astype(o_ref.dtype)


def _prepare_weights(params, c_pad):
    """Fold inverted-dropout scales into downstream weights, cast matmul operands to bf16,
    and zero-pad fc3 to a lane-dense (multiple-of-128) output width."""
    w1 = params["w1"].astype(jnp.bfloat16)
    b1 = params["b1"].astype(jnp.float32)
    w2 = (params["w2"] * (1.0 / (1.0 - _P1))).astype(jnp.bfloat16)
    b2 = params["b2"].astype(jnp.float32)
    w3 = (params["w3"] * (1.0 / (1.0 - _P2))).astype(jnp.bfloat16)
    b3 = params["b3"].astype(jnp.float32)
    c = w3.shape[1]
    if c_pad != c:
        w3 = jnp.pad(w3, ((0, 0), (0, c_pad - c)))
        b3 = jnp.pad(b3, ((0, 0), (0, c_pad - c)))
    return w1, b1, w2, b2, w3, b3


def _pick_tile_b(B, tile_b):
    """Prefer large tiles (amortize ~0.35us/step grid overhead) but keep >=4 tiles
    (2 per v7x TensorCore) for big batches so x/out DMAs overlap compute; never
    shrink below 256 rows and always keep tile_b a multiple of 8."""
    tile_b = min(tile_b, _round_up(B, 8))
    if B >= 4 * 256:
        tile_b = min(tile_b, max(256, _round_up(pl.cdiv(B, 4), 8)))
    elif B >= 2 * 256:
        tile_b = min(tile_b, max(256, _round_up(pl.cdiv(B, 2), 8)))
    return tile_b


def dnn_forward(x, params, seed, *, tile_b=1024):
    """x: (B, in_features) f32. params: dict of w1,b1,w2,b2,w3,b3 (f32, (in,out) layout).
    Returns (B, classes_num) f32."""
    B, F = x.shape
    C = params["w3"].shape[1]
    C_pad = _round_up(max(C, _LANE), _LANE)

    tile_b = _pick_tile_b(B, tile_b)
    B_pad = _round_up(B, tile_b)
    if B_pad != B:
        x = jnp.pad(x, ((0, B_pad - B), (0, 0)))

    w1, b1, w2, b2, w3, b3 = _prepare_weights(params, C_pad)
    seed_arr = jnp.asarray([seed], dtype=jnp.int32)
    n_tiles = B_pad // tile_b

    grid_spec = pltpu.PrefetchScalarGridSpec(
        num_scalar_prefetch=1,            # seed -> SMEM
        grid=(n_tiles,),
        in_specs=[
            pl.BlockSpec((tile_b, F), lambda i, s: (i, 0)),      # x: streamed per tile
            pl.BlockSpec((F, 512), lambda i, s: (0, 0)),         # weights/biases: resident
            pl.BlockSpec((1, 512), lambda i, s: (0, 0)),
            pl.BlockSpec((512, 1024), lambda i, s: (0, 0)),
            pl.BlockSpec((1, 1024), lambda i, s: (0, 0)),
            pl.BlockSpec((1024, C_pad), lambda i, s: (0, 0)),
            pl.BlockSpec((1, C_pad), lambda i, s: (0, 0)),
        ],
        out_specs=pl.BlockSpec((tile_b, C_pad), lambda i, s: (i, 0)),
    )

    flops = 2 * B_pad * (F * 512 + 512 * 1024 + 1024 * C_pad)
    bytes_accessed = (x.size * 4 + (w1.size + w2.size + w3.size) * 2
                      + (b1.size + b2.size + b3.size) * 4 + B_pad * C_pad * 4)

    out = pl.pallas_call(
        dnn_kernel,
        out_shape=jax.ShapeDtypeStruct((B_pad, C_pad), jnp.float32),
        grid_spec=grid_spec,
        compiler_params=pltpu.CompilerParams(
            dimension_semantics=("parallel",),      # shards batch tiles across v7x's 2 TCs
            vmem_limit_bytes=32 * 1024 * 1024),     # large tiles also fit v5e's scope
        cost_estimate=pl.CostEstimate(
            flops=flops, transcendentals=0, bytes_accessed=bytes_accessed),
    )(seed_arr, x, w1, b1, w2, b2, w3, b3)

    return out[:B, :C]


def dnn_reference(x, params, seed):
    """Pure-JAX reference with identical dropout masks (same hash, same folded weights)."""
    B = x.shape[0]
    C = params["w3"].shape[1]
    C_pad = _round_up(max(C, _LANE), _LANE)
    w1, b1, w2, b2, w3, b3 = _prepare_weights(params, C_pad)
    s = jnp.uint32(seed)
    zero = jnp.uint32(0)

    h1 = jnp.dot(x.astype(jnp.bfloat16), w1, preferred_element_type=jnp.float32) + b1
    h1 = jnp.where(_keep_mask(s, _SALT1, zero, (B, 512), _THR1_32),
                   h1.astype(jnp.bfloat16), jnp.bfloat16(0.0))
    h2 = jnp.dot(h1, w2, preferred_element_type=jnp.float32) + b2
    h2 = jnp.where(_keep_mask(s, _SALT2, zero, (B, 1024), _THR2_32),
                   h2.astype(jnp.bfloat16), jnp.bfloat16(0.0))
    out = jnp.dot(h2, w3, preferred_element_type=jnp.float32) + b3
    return out[:, :C]


def init_params(key, in_features, classes_num):
    """Mimics nn.Linear's uniform(-1/sqrt(fan_in), 1/sqrt(fan_in)) init; (in, out) layout."""
    ks = jax.random.split(key, 6)

    def linear(kw, kb, fan_in, fan_out):
        bound = 1.0 / float(np.sqrt(fan_in))
        w = jax.random.uniform(kw, (fan_in, fan_out), jnp.float32, -bound, bound)
        b = jax.random.uniform(kb, (1, fan_out), jnp.float32, -bound, bound)
        return w, b

    w1, b1 = linear(ks[0], ks[1], in_features, 512)
    w2, b2 = linear(ks[2], ks[3], 512, 1024)
    w3, b3 = linear(ks[4], ks[5], 1024, classes_num)
    return {"w1": w1, "b1": b1, "w2": w2, "b2": b2, "w3": w3, "b3": b3}


if __name__ == "__main__":
    key = jax.random.PRNGKey(0)
    k_x, k_p = jax.random.split(key)

    batch = 1024         # 4 batch tiles of 256 -> exercises the grid + parallel sharding
    in_features = 128
    classes_num = 10

    x = jax.random.normal(k_x, (batch, in_features), dtype=jnp.float32)
    params = init_params(k_p, in_features, classes_num)

    out = dnn_forward(x, params, seed=1234)
    out = jax.block_until_ready(out)

    assert out.shape == (batch, classes_num)
    assert out.dtype == jnp.float32
    assert bool(jnp.all(jnp.isfinite(out)))

    ref = dnn_reference(x, params, seed=1234)
    np.testing.assert_allclose(np.asarray(out), np.asarray(ref), rtol=5e-2, atol=5e-2)

    print("KERNEL_OK")
</pallas_src>

<mosaic_0001>
module attributes {stable_mosaic.version = 11 : i64} {
  func.func @dnn_kernel(%arg0: i32, %arg1: memref<1xi32, #tpu.memory_space<smem>>, %arg2: memref<256x128xf32, #tpu.memory_space<vmem>>, %arg3: memref<128x512xbf16, #tpu.memory_space<vmem>>, %arg4: memref<1x512xf32, #tpu.memory_space<vmem>>, %arg5: memref<512x1024xbf16, #tpu.memory_space<vmem>>, %arg6: memref<1x1024xf32, #tpu.memory_space<vmem>>, %arg7: memref<1024x128xbf16, #tpu.memory_space<vmem>>, %arg8: memref<1x128xf32, #tpu.memory_space<vmem>>, %arg9: memref<256x128xf32, #tpu.memory_space<vmem>>) attributes {dimension_semantics = [#tpu.dimension_semantics<parallel>], iteration_bounds = array<i64: 4>, scalar_prefetch = 1 : i64, scratch_operands = 0 : i64, tpu.core_type = #tpu.core_type<tc>, window_params = [{transform_indices = @transform_0, window_bounds = array<i64: 256, 128>}, {pipeline_mode = #tpu.pipeline_mode<synchronous>, transform_indices = @transform_1, window_bounds = array<i64: 128, 512>}, {pipeline_mode = #tpu.pipeline_mode<synchronous>, transform_indices = @transform_2, window_bounds = array<i64: 1, 512>}, {pipeline_mode = #tpu.pipeline_mode<synchronous>, transform_indices = @transform_3, window_bounds = array<i64: 512, 1024>}, {pipeline_mode = #tpu.pipeline_mode<synchronous>, transform_indices = @transform_4, window_bounds = array<i64: 1, 1024>}, {pipeline_mode = #tpu.pipeline_mode<synchronous>, transform_indices = @transform_5, window_bounds = array<i64: 1024, 128>}, {pipeline_mode = #tpu.pipeline_mode<synchronous>, transform_indices = @transform_6, window_bounds = array<i64: 1, 128>}, {transform_indices = @transform_7, window_bounds = array<i64: 256, 128>}]} {
    %c0 = arith.constant 0 : index
    %0 = memref.load %arg1[%c0] : memref<1xi32, #tpu.memory_space<smem>>
    %c256_i32 = arith.constant 256 : i32
    %1 = arith.muli %arg0, %c256_i32 : i32
    %c0_0 = arith.constant 0 : index
    %c0_1 = arith.constant 0 : index
    %2 = vector.load %arg2[%c0_0, %c0_1] : memref<256x128xf32, #tpu.memory_space<vmem>>, vector<256x128xf32>
    %3 = arith.truncf %2 : vector<256x128xf32> to vector<256x128xbf16>
    %c0_2 = arith.constant 0 : index
    %c0_3 = arith.constant 0 : index
    %4 = vector.load %arg3[%c0_2, %c0_3] : memref<128x512xbf16, #tpu.memory_space<vmem>>, vector<128x512xbf16>
    %cst = arith.constant dense<0.000000e+00> : vector<256x512xf32>
    %5 = tpu.matmul %3, %4, %cst {dimension_numbers = #tpu.dot_dimension_numbers<[1], [0], [0], [1], [0, 0, 1, 1], [], []>} : vector<256x128xbf16>, vector<128x512xbf16>, vector<256x512xf32> -> vector<256x512xf32>
    %c0_4 = arith.constant 0 : index
    %c0_5 = arith.constant 0 : index
    %6 = vector.load %arg4[%c0_4, %c0_5] : memref<1x512xf32, #tpu.memory_space<vmem>>, vector<1x512xf32>
    %7 = vector.broadcast %6 : vector<1x512xf32> to vector<256x512xf32>
    %8 = arith.addf %5, %7 : vector<256x512xf32>
    %9 = tpu.iota {dimensions = array<i32: 0>} : vector<256x1xi32>
    %10 = vector.broadcast %1 : i32 to vector<256x1xi32>
    %11 = arith.addi %9, %10 : vector<256x1xi32>
    %12 = tpu.iota {dimensions = array<i32: 1>} : vector<1x512xi32>
    %c495397697_i32 = arith.constant 495397697 : i32
    %13 = arith.xori %0, %c495397697_i32 : i32
    %c-1640531535_i32 = arith.constant -1640531535 : i32
    %14 = vector.broadcast %c-1640531535_i32 : i32 to vector<256x1xi32>
    %15 = arith.muli %11, %14 : vector<256x1xi32>
    %16 = vector.broadcast %13 : i32 to vector<256x1xi32>
    %17 = arith.addi %16, %15 : vector<256x1xi32>
    %c-2048144777_i32 = arith.constant -2048144777 : i32
    %18 = vector.broadcast %c-2048144777_i32 : i32 to vector<1x512xi32>
    %19 = arith.muli %12, %18 : vector<1x512xi32>
    %20 = vector.broadcast %17 : vector<256x1xi32> to vector<256x512xi32>
    %21 = vector.broadcast %19 : vector<1x512xi32> to vector<256x512xi32>
    %22 = arith.addi %20, %21 : vector<256x512xi32>
    %c16_i32 = arith.constant 16 : i32
    %23 = vector.broadcast %c16_i32 : i32 to vector<256x512xi32>
    %24 = arith.shrui %22, %23 : vector<256x512xi32>
    %25 = arith.xori %22, %24 : vector<256x512xi32>
    %c2146121005_i32 = arith.constant 2146121005 : i32
    %26 = vector.broadcast %c2146121005_i32 : i32 to vector<256x512xi32>
    %27 = arith.muli %25, %26 : vector<256x512xi32>
    %c15_i32 = arith.constant 15 : i32
    %28 = vector.broadcast %c15_i32 : i32 to vector<256x512xi32>
    %29 = arith.shrui %27, %28 : vector<256x512xi32>
    %30 = arith.xori %27, %29 : vector<256x512xi32>
    %c858993459_i32 = arith.constant 858993459 : i32
    %31 = vector.broadcast %c858993459_i32 : i32 to vector<256x512xi32>
    %32 = arith.cmpi uge, %30, %31 : vector<256x512xi32>
    %33 = arith.truncf %8 : vector<256x512xf32> to vector<256x512xbf16>
    %cst_6 = arith.constant 0.000000e+00 : bf16
    %34 = vector.broadcast %cst_6 : bf16 to vector<256x512xbf16>
    %35 = arith.select %32, %33, %34 : vector<256x512xi1>, vector<256x512xbf16>
    %c0_7 = arith.constant 0 : index
    %c0_8 = arith.constant 0 : index
    %36 = vector.load %arg5[%c0_7, %c0_8] : memref<512x1024xbf16, #tpu.memory_space<vmem>>, vector<512x1024xbf16>
    %cst_9 = arith.constant dense<0.000000e+00> : vector<256x1024xf32>
    %37 = tpu.matmul %35, %36, %cst_9 {dimension_numbers = #tpu.dot_dimension_numbers<[1], [0], [0], [1], [0, 0, 1, 1], [], []>} : vector<256x512xbf16>, vector<512x1024xbf16>, vector<256x1024xf32> -> vector<256x1024xf32>
    %c0_10 = arith.constant 0 : index
    %c0_11 = arith.constant 0 : index
    %38 = vector.load %arg6[%c0_10, %c0_11] : memref<1x1024xf32, #tpu.memory_space<vmem>>, vector<1x1024xf32>
    %39 = vector.broadcast %38 : vector<1x1024xf32> to vector<256x1024xf32>
    %40 = arith.addf %37, %39 : vector<256x1024xf32>
    %41 = tpu.iota {dimensions = array<i32: 0>} : vector<256x1xi32>
    %42 = vector.broadcast %1 : i32 to vector<256x1xi32>
    %43 = arith.addi %41, %42 : vector<256x1xi32>
    %44 = tpu.iota {dimensions = array<i32: 1>} : vector<1x1024xi32>
    %c1540483477_i32 = arith.constant 1540483477 : i32
    %45 = arith.xori %0, %c1540483477_i32 : i32
    %c-1640531535_i32_12 = arith.constant -1640531535 : i32
    %46 = vector.broadcast %c-1640531535_i32_12 : i32 to vector<256x1xi32>
    %47 = arith.muli %43, %46 : vector<256x1xi32>
    %48 = vector.broadcast %45 : i32 to vector<256x1xi32>
    %49 = arith.addi %48, %47 : vector<256x1xi32>
    %c-2048144777_i32_13 = arith.constant -2048144777 : i32
    %50 = vector.broadcast %c-2048144777_i32_13 : i32 to vector<1x1024xi32>
    %51 = arith.muli %44, %50 : vector<1x1024xi32>
    %52 = vector.broadcast %49 : vector<256x1xi32> to vector<256x1024xi32>
    %53 = vector.broadcast %51 : vector<1x1024xi32> to vector<256x1024xi32>
    %54 = arith.addi %52, %53 : vector<256x1024xi32>
    %c16_i32_14 = arith.constant 16 : i32
    %55 = vector.broadcast %c16_i32_14 : i32 to vector<256x1024xi32>
    %56 = arith.shrui %54, %55 : vector<256x1024xi32>
    %57 = arith.xori %54, %56 : vector<256x1024xi32>
    %c2146121005_i32_15 = arith.constant 2146121005 : i32
    %58 = vector.broadcast %c2146121005_i32_15 : i32 to vector<256x1024xi32>
    %59 = arith.muli %57, %58 : vector<256x1024xi32>
    %c15_i32_16 = arith.constant 15 : i32
    %60 = vector.broadcast %c15_i32_16 : i32 to vector<256x1024xi32>
    %61 = arith.shrui %59, %60 : vector<256x1024xi32>
    %62 = arith.xori %59, %61 : vector<256x1024xi32>
    %c1717986918_i32 = arith.constant 1717986918 : i32
    %63 = vector.broadcast %c1717986918_i32 : i32 to vector<256x1024xi32>
    %64 = arith.cmpi uge, %62, %63 : vector<256x1024xi32>
    %65 = arith.truncf %40 : vector<256x1024xf32> to vector<256x1024xbf16>
    %cst_17 = arith.constant 0.000000e+00 : bf16
    %66 = vector.broadcast %cst_17 : bf16 to vector<256x1024xbf16>
    %67 = arith.select %64, %65, %66 : vector<256x1024xi1>, vector<256x1024xbf16>
    %c0_18 = arith.constant 0 : index
    %c0_19 = arith.constant 0 : index
    %68 = vector.load %arg7[%c0_18, %c0_19] : memref<1024x128xbf16, #tpu.memory_space<vmem>>, vector<1024x128xbf16>
    %cst_20 = arith.constant dense<0.000000e+00> : vector<256x128xf32>
    %69 = tpu.matmul %67, %68, %cst_20 {dimension_numbers = #tpu.dot_dimension_numbers<[1], [0], [0], [1], [0, 0, 1, 1], [], []>} : vector<256x1024xbf16>, vector<1024x128xbf16>, vector<256x128xf32> -> vector<256x128xf32>
    %c0_21 = arith.constant 0 : index
    %c0_22 = arith.constant 0 : index
    %70 = vector.load %arg8[%c0_21, %c0_22] : memref<1x128xf32, #tpu.memory_space<vmem>>, vector<1x128xf32>
    %71 = vector.broadcast %70 : vector<1x128xf32> to vector<256x128xf32>
    %72 = arith.addf %69, %71 : vector<256x128xf32>
    %c0_23 = arith.constant 0 : index
    %c0_24 = arith.constant 0 : index
    %73 = vector.load %arg9[%c0_23, %c0_24] : memref<256x128xf32, #tpu.memory_space<vmem>>, vector<256x128xf32>
    tpu.vector_store %arg9[%c0_23, %c0_24], %72 {strides = array<i32>} : memref<256x128xf32, #tpu.memory_space<vmem>>, vector<256x128xf32>,
    return
  }
  func.func @transform_0(%arg0: i32, %arg1: memref<1xi32, #tpu.memory_space<smem>>) -> (i32, i32) {
    %c0_i32 = arith.constant 0 : i32
    %c0_i32_0 = arith.constant 0 : i32
    return %arg0, %c0_i32 : i32, i32
  }
  func.func @transform_1(%arg0: i32, %arg1: memref<1xi32, #tpu.memory_space<smem>>) -> (i32, i32) {
    %c0_i32 = arith.constant 0 : i32
    %c0_i32_0 = arith.constant 0 : i32
    %c0_i32_1 = arith.constant 0 : i32
    return %c0_i32, %c0_i32_0 : i32, i32
  }
  func.func @transform_2(%arg0: i32, %arg1: memref<1xi32, #tpu.memory_space<smem>>) -> (i32, i32) {
    %c0_i32 = arith.constant 0 : i32
    %c0_i32_0 = arith.constant 0 : i32
    %c0_i32_1 = arith.constant 0 : i32
    return %c0_i32, %c0_i32_0 : i32, i32
  }
  func.func @transform_3(%arg0: i32, %arg1: memref<1xi32, #tpu.memory_space<smem>>) -> (i32, i32) {
    %c0_i32 = arith.constant 0 : i32
    %c0_i32_0 = arith.constant 0 : i32
    %c0_i32_1 = arith.constant 0 : i32
    return %c0_i32, %c0_i32_0 : i32, i32
  }
  func.func @transform_4(%arg0: i32, %arg1: memref<1xi32, #tpu.memory_space<smem>>) -> (i32, i32) {
    %c0_i32 = arith.constant 0 : i32
    %c0_i32_0 = arith.constant 0 : i32
    %c0_i32_1 = arith.constant 0 : i32
    return %c0_i32, %c0_i32_0 : i32, i32
  }
  func.func @transform_5(%arg0: i32, %arg1: memref<1xi32, #tpu.memory_space<smem>>) -> (i32, i32) {
    %c0_i32 = arith.constant 0 : i32
    %c0_i32_0 = arith.constant 0 : i32
    %c0_i32_1 = arith.constant 0 : i32
    return %c0_i32, %c0_i32_0 : i32, i32
  }
  func.func @transform_6(%arg0: i32, %arg1: memref<1xi32, #tpu.memory_space<smem>>) -> (i32, i32) {
    %c0_i32 = arith.constant 0 : i32
    %c0_i32_0 = arith.constant 0 : i32
    %c0_i32_1 = arith.constant 0 : i32
    return %c0_i32, %c0_i32_0 : i32, i32
  }
  func.func @transform_7(%arg0: i32, %arg1: memref<1xi32, #tpu.memory_space<smem>>) -> (i32, i32) {
    %c0_i32 = arith.constant 0 : i32
    %c0_i32_0 = arith.constant 0 : i32
    return %arg0, %c0_i32 : i32, i32
  }
}

</mosaic_0001>

<llo_original>
// kernel: tpu_custom_call.1
$region0: #{tpu_custom_call.1}
  #allocation0 [shape = 'u32[]', space=smem, size = 0x4, offset = 0x4, fixed_abs, tag = 'smem constant byte address 0x4 - core index']
  #allocation1 [shape = 'u32[72,128]{1,0:T(1,128)}', space=vmem, size = 0x9000, scoped, tag = 'internal scratch']
  #allocation2 [shape = 's32[1]{0}', space=sflag, size = 0x4, scoped, tag = 'scoped memory for tpu_custom_call.1']
  #allocation3 [shape = 's32[1]{0:T(128)S(6)}', space=smem, size = 0x200, scoped, tag = 'prefetched SMEM operand 0']
  %s0 = inlined_call_operand.<no memory space> [shape: s32[1], index: 0, kind: input, shape index: {}]
  %s1 = inlined_call_operand.hbm [shape: f32[1024,128], index: 1, kind: input, shape index: {}]
  %s2 = inlined_call_operand.hbm [shape: bf16[128,512], index: 2, kind: input, shape index: {}]
  %s3 = inlined_call_operand.hbm [shape: f32[1,512], index: 3, kind: input, shape index: {}]
  %s4 = inlined_call_operand.hbm [shape: bf16[512,1024], index: 4, kind: input, shape index: {}]
  %s5 = inlined_call_operand.hbm [shape: f32[1,1024], index: 5, kind: input, shape index: {}]
  %s6 = inlined_call_operand.hbm [shape: bf16[1024,128], index: 6, kind: input, shape index: {}]
  %s7 = inlined_call_operand.vmem [shape: f32[1,128], index: 7, kind: input, shape index: {}]
  %s8 = inlined_call_operand.hbm [shape: f32[1024,128], index: 8, kind: output, shape index: {}]
  %s9 = sld [smem:[#allocation0]]
  $region85: #{tpu_custom_call.1} parent=0
    _
  %s11 = ssub.s32 1, %s9
  %s12 = scalar_select 0, %s11, %s9
  %13 = sst [smem:[#allocation3]] %s0
  $region1: #{tpu_custom_call.1} parent=0
    #allocation4 [shape = 'u8[262144]{0}', space=vmem, size = 0x40000, scoped, tag = 'input window, operand 1']
    #allocation5 [shape = 's32[2]{0}', space=sflag, size = 0x8, scoped, tag = 'scoped memory for tpu_custom_call.1']
    #allocation6 [shape = 's32[2]{0}', space=sflag, size = 0x8, scoped, tag = 'scoped memory for tpu_custom_call.1']
    #allocation7 [shape = 'u8[131072]{0}', space=vmem, size = 0x20000, scoped, tag = 'input window, operand 2, single buffered']
    #allocation8 [shape = 's32[1]{0}', space=sflag, size = 0x4, scoped, tag = 'scoped memory for tpu_custom_call.1']
    #allocation9 [shape = 'u8[2048]{0}', space=vmem, size = 0x800, scoped, tag = 'input window, operand 3, single buffered']
    #allocation10 [shape = 'u8[1048576]{0}', space=vmem, size = 0x100000, scoped, tag = 'input window, operand 4, single buffered']
    #allocation11 [shape = 's32[1]{0}', space=sflag, size = 0x4, scoped, tag = 'scoped memory for tpu_custom_call.1']
    #allocation12 [shape = 'u8[4096]{0}', space=vmem, size = 0x1000, scoped, tag = 'input window, operand 5, single buffered']
    #allocation13 [shape = 'u8[262144]{0}', space=vmem, size = 0x40000, scoped, tag = 'input window, operand 6, single buffered']
    #allocation14 [shape = 's32[1]{0}', space=sflag, size = 0x4, scoped, tag = 'scoped memory for tpu_custom_call.1']
    #allocation15 [shape = 'u8[262144]{0}', space=vmem, size = 0x40000, scoped, tag = 'output window, operand 0']
    %14 = vsyncpa [#allocation5], 0
    %s15 = scalar_lea.sflag [#allocation5], 1
    %16 = vsyncpa %s15, 0
    %17 = vsyncpa [#allocation8], 0
    %18 = vsyncpa [#allocation11], 0
    %19 = vsyncpa [#allocation14], 0
    %20 = vsyncpa [#allocation6], 0
    %s21 = scalar_lea.sflag [#allocation6], 1
    %22 = vsyncpa %s21, 0
    loop: start=0, step=1, limit=6
    $region2: #{tpu_custom_call.1} parent=1 // loop_pre_header
      _
    $region3: #{tpu_custom_call.1} parent=1 // loop_header
      %s24 = sphi 0, %s28
      %p25 = scmp.ge.s32.totalorder %s24, 6
      %s34 = sphi 0, %s36
      %s37 = sphi 0, %s34
      %s38 = sphi 0, %s37
      %s54 = sphi 0, %s38
      %s58 = sphi 0, %s58
      %s60 = sphi 0, %s58
      %s61 = sphi 0, %s60
      %s75 = sphi 0, %s61
      %s79 = sphi 0, %s79
      %s81 = sphi 0, %s79
      %s82 = sphi 0, %s81
      %s96 = sphi 0, %s82
      %s100 = sphi 0, %s100
      %s102 = sphi 0, %s100
      %s103 = sphi 0, %s102
      %s117 = sphi 0, %s103
      %s121 = sphi 0, %s121
      %s123 = sphi 0, %s121
      %s124 = sphi 0, %s123
      %s138 = sphi 0, %s124
      %s142 = sphi 0, %s142
      %s144 = sphi 0, %s142
      %s145 = sphi 0, %s144
      %s159 = sphi 0, %s145
      %s163 = sphi 0, %s163
      %s165 = sphi 0, %s163
      %s166 = sphi 0, %s165
      %s180 = sphi 0, %s166
      %s186 = sphi 0, %s188
      %s189 = sphi 0, %s186
      %s190 = sphi 0, %s189
      %s206 = sphi 0, %s190
    $region4: #{tpu_custom_call.1} parent=1 // loop_header_branch
      %27 = sbr.rel (%p25) target = $region8
    $region5: #{tpu_custom_call.1} parent=1 // loop_body
      %s29 = ssub.s32 %s24, 1
      %s30 = ssub.s32 %s24, 2
      %s31 = sadd.s32 %s24, 1
      %s32 = ssub.s32 %s24, %s31
      %p33 = scmp.eq.s32.totalorder %s32, 0
      %s35 = sadd.s32 %s34, 1
      %s36 = scalar_select %p33, %s34, %s35
      %p39 = pneg %p33
      %p40 = scmp.eq.s32.totalorder %s24, 3
      %p41 = por %p39, %p40
      %p42 = scmp.ne.s32.totalorder %s34, %s37
      %p43 = scmp.eq.s32.totalorder %s24, 0
      %p44 = por %p42, %p43
      %p45 = scmp.ne.s32.totalorder %s34, %s37
      %p46 = scmp.eq.s32.totalorder %s29, 3
      %p47 = por %p45, %p46
      %p48 = scmp.ne.s32.totalorder %s37, %s38
      %p49 = scmp.eq.s32.totalorder %s29, 0
      %p50 = por %p48, %p49
      %p51 = scmp.ne.s32.totalorder %s37, %s38
      %p52 = scmp.eq.s32.totalorder %s30, 3
      %p53 = por %p51, %p52
      %p55 = scmp.ne.s32.totalorder %s38, %s54
      %p56 = scmp.eq.s32.totalorder %s30, 0
      %p57 = por %p55, %p56
      %s59 = sadd.s32 %s58, 1
      %p62 = scmp.eq.s32.totalorder %s24, 3
      %p63 = scmp.ne.s32.totalorder %s58, %s60
      %p64 = scmp.eq.s32.totalorder %s24, 0
      %p65 = por %p63, %p64
      %p66 = scmp.ne.s32.totalorder %s58, %s60
      %p67 = scmp.eq.s32.totalorder %s29, 3
      %p68 = por %p66, %p67
      %p69 = scmp.ne.s32.totalorder %s60, %s61
      %p70 = scmp.eq.s32.totalorder %s29, 0
      %p71 = por %p69, %p70
      %p72 = scmp.ne.s32.totalorder %s60, %s61
      %p73 = scmp.eq.s32.totalorder %s30, 3
      %p74 = por %p72, %p73
      %p76 = scmp.ne.s32.totalorder %s61, %s75
      %p77 = scmp.eq.s32.totalorder %s30, 0
      %p78 = por %p76, %p77
      %s80 = sadd.s32 %s79, 1
      %p83 = scmp.eq.s32.totalorder %s24, 3
      %p84 = scmp.ne.s32.totalorder %s79, %s81
      %p85 = scmp.eq.s32.totalorder %s24, 0
      %p86 = por %p84, %p85
      %p87 = scmp.ne.s32.totalorder %s79, %s81
      %p88 = scmp.eq.s32.totalorder %s29, 3
      %p89 = por %p87, %p88
      %p90 = scmp.ne.s32.totalorder %s81, %s82
      %p91 = scmp.eq.s32.totalorder %s29, 0
      %p92 = por %p90, %p91
      %p93 = scmp.ne.s32.totalorder %s81, %s82
      %p94 = scmp.eq.s32.totalorder %s30, 3
      %p95 = por %p93, %p94
      %p97 = scmp.ne.s32.totalorder %s82, %s96
      %p98 = scmp.eq.s32.totalorder %s30, 0
      %p99 = por %p97, %p98
      %s101 = sadd.s32 %s100, 1
      %p104 = scmp.eq.s32.totalorder %s24, 3
      %p105 = scmp.ne.s32.totalorder %s100, %s102
      %p106 = scmp.eq.s32.totalorder %s24, 0
      %p107 = por %p105, %p106
      %p108 = scmp.ne.s32.totalorder %s100, %s102
      %p109 = scmp.eq.s32.totalorder %s29, 3
      %p110 = por %p108, %p109
      %p111 = scmp.ne.s32.totalorder %s102, %s103
      %p112 = scmp.eq.s32.totalorder %s29, 0
      %p113 = por %p111, %p112
      %p114 = scmp.ne.s32.totalorder %s102, %s103
      %p115 = scmp.eq.s32.totalorder %s30, 3
      %p116 = por %p114, %p115
      %p118 = scmp.ne.s32.totalorder %s103, %s117
      %p119 = scmp.eq.s32.totalorder %s30, 0
      %p120 = por %p118, %p119
      %s122 = sadd.s32 %s121, 1
      %p125 = scmp.eq.s32.totalorder %s24, 3
      %p126 = scmp.ne.s32.totalorder %s121, %s123
      %p127 = scmp.eq.s32.totalorder %s24, 0
      %p128 = por %p126, %p127
      %p129 = scmp.ne.s32.totalorder %s121, %s123
      %p130 = scmp.eq.s32.totalorder %s29, 3
      %p131 = por %p129, %p130
      %p132 = scmp.ne.s32.totalorder %s123, %s124
      %p133 = scmp.eq.s32.totalorder %s29, 0
      %p134 = por %p132, %p133
      %p135 = scmp.ne.s32.totalorder %s123, %s124
      %p136 = scmp.eq.s32.totalorder %s30, 3
      %p137 = por %p135, %p136
      %p139 = scmp.ne.s32.totalorder %s124, %s138
      %p140 = scmp.eq.s32.totalorder %s30, 0
      %p141 = por %p139, %p140
      %s143 = sadd.s32 %s142, 1
      %p146 = scmp.eq.s32.totalorder %s24, 3
      %p147 = scmp.ne.s32.totalorder %s142, %s144
      %p148 = scmp.eq.s32.totalorder %s24, 0
      %p149 = por %p147, %p148
      %p150 = scmp.ne.s32.totalorder %s142, %s144
      %p151 = scmp.eq.s32.totalorder %s29, 3
      %p152 = por %p150, %p151
      %p153 = scmp.ne.s32.totalorder %s144, %s145
      %p154 = scmp.eq.s32.totalorder %s29, 0
      %p155 = por %p153, %p154
      %p156 = scmp.ne.s32.totalorder %s144, %s145
      %p157 = scmp.eq.s32.totalorder %s30, 3
      %p158 = por %p156, %p157
      %p160 = scmp.ne.s32.totalorder %s145, %s159
      %p161 = scmp.eq.s32.totalorder %s30, 0
      %p162 = por %p160, %p161
      %s164 = sadd.s32 %s163, 1
      %p167 = scmp.eq.s32.totalorder %s24, 3
      %p168 = scmp.ne.s32.totalorder %s163, %s165
      %p169 = scmp.eq.s32.totalorder %s24, 0
      %p170 = por %p168, %p169
      %p171 = scmp.ne.s32.totalorder %s163, %s165
      %p172 = scmp.eq.s32.totalorder %s29, 3
      %p173 = por %p171, %p172
      %p174 = scmp.ne.s32.totalorder %s165, %s166
      %p175 = scmp.eq.s32.totalorder %s29, 0
      %p176 = por %p174, %p175
      %p177 = scmp.ne.s32.totalorder %s165, %s166
      %p178 = scmp.eq.s32.totalorder %s30, 3
      %p179 = por %p177, %p178
      %p181 = scmp.ne.s32.totalorder %s166, %s180
      %p182 = scmp.eq.s32.totalorder %s30, 0
      %p183 = por %p181, %p182
      %s184 = ssub.s32 %s24, %s31
      %p185 = scmp.eq.s32.totalorder %s184, 0
      %s187 = sadd.s32 %s186, 1
      %s188 = scalar_select %p185, %s186, %s187
      %p191 = pneg %p185
      %p192 = scmp.eq.s32.totalorder %s24, 3
      %p193 = por %p191, %p192
      %p194 = scmp.ne.s32.totalorder %s186, %s189
      %p195 = scmp.eq.s32.totalorder %s24, 0
      %p196 = por %p194, %p195
      %p197 = scmp.ne.s32.totalorder %s186, %s189
      %p198 = scmp.eq.s32.totalorder %s29, 3
      %p199 = por %p197, %p198
      %p200 = scmp.ne.s32.totalorder %s189, %s190
      %p201 = scmp.eq.s32.totalorder %s29, 0
      %p202 = por %p200, %p201
      %p203 = scmp.ne.s32.totalorder %s189, %s190
      %p204 = scmp.eq.s32.totalorder %s30, 3
      %p205 = por %p203, %p204
      %p207 = scmp.ne.s32.totalorder %s190, %s206
      %p208 = scmp.eq.s32.totalorder %s30, 0
      %p209 = por %p207, %p208
      %p210 = scmp.le.s32.totalorder 1, %s24
      %p211 = scmp.lt.s32.totalorder %s24, 5
      %p212 = pnand %p210, %p211
      %p213 = pneg %p212
      // Predicated region
      $region9: #{tpu_custom_call.1} parent=5 // pred_check
        _
      $region10: #{tpu_custom_call.1} parent=5 // pred_check_branch
        %215 = sbr.rel (%p212) target = $region12
      $region11: #{tpu_custom_call.1} parent=5 // pred_region
        %s216 = ssub.s32 %s24, 1
        // Predicated region
        $region13: #{tpu_custom_call.1} parent=11 // pred_check
          %p217 = pneg %p71
        $region14: #{tpu_custom_call.1} parent=11 // pred_check_branch
          %219 = sbr.rel (%p217) target = $region16
        $region15: #{tpu_custom_call.1} parent=11 // pred_region
          %221 = vsyncadd [#allocation8], 0
          %s222 = sshll.u32 %s2, 4
          %s223 = int_to_ptr.hbm [resolvable:$true] %s222
          %s224 = sshll.u32 [#allocation7], 4
          %s225 = int_to_ptr.vmem [resolvable:$true] %s224
          %230 = dma.hbm_to_vmem [thread:$0]  %s223, 4096, %s225, [#allocation8], 256, 256, 16
        $region16: #{tpu_custom_call.1} parent=11 // pred_fallthru
          _
        // Predicated region
        $region17: #{tpu_custom_call.1} parent=11 // pred_check
          %p231 = pneg %p92
        $region18: #{tpu_custom_call.1} parent=11 // pred_check_branch
          %233 = sbr.rel (%p231) target = $region20
        $region19: #{tpu_custom_call.1} parent=11 // pred_region
          %235 = vsyncadd [#allocation8], 0
          %s237 = sshll.u32 %s3, 4
          %s238 = int_to_ptr.hbm [resolvable:$true] %s237
          %s239 = sshll.u32 [#allocation9], 4
          %s240 = int_to_ptr.vmem [resolvable:$true] %s239
          %242 = dma.hbm_to_vmem [thread:$0]  %s238, 64, %s240, [#allocation8]
        $region20: #{tpu_custom_call.1} parent=11 // pred_fallthru
          _
        // Predicated region
        $region21: #{tpu_custom_call.1} parent=11 // pred_check
          %p243 = pneg %p113
        $region22: #{tpu_custom_call.1} parent=11 // pred_check_branch
          %245 = sbr.rel (%p243) target = $region24
        $region23: #{tpu_custom_call.1} parent=11 // pred_region
          %247 = vsyncadd [#allocation11], 0
          %s248 = sshll.u32 %s4, 4
          %s249 = int_to_ptr.hbm [resolvable:$true] %s248
          %s250 = sshll.u32 [#allocation10], 4
          %s251 = int_to_ptr.vmem [resolvable:$true] %s250
          %256 = dma.hbm_to_vmem [thread:$0]  %s249, 32768, %s251, [#allocation11], 512, 512, 32
        $region24: #{tpu_custom_call.1} parent=11 // pred_fallthru
          _
        // Predicated region
        $region25: #{tpu_custom_call.1} parent=11 // pred_check
          %p257 = pneg %p134
        $region26: #{tpu_custom_call.1} parent=11 // pred_check_branch
          %259 = sbr.rel (%p257) target = $region28
        $region27: #{tpu_custom_call.1} parent=11 // pred_region
          %261 = vsyncadd [#allocation11], 0
          %s263 = sshll.u32 %s5, 4
          %s264 = int_to_ptr.hbm [resolvable:$true] %s263
          %s265 = sshll.u32 [#allocation12], 4
          %s266 = int_to_ptr.vmem [resolvable:$true] %s265
          %268 = dma.hbm_to_vmem [thread:$0]  %s264, 128, %s266, [#allocation11]
        $region28: #{tpu_custom_call.1} parent=11 // pred_fallthru
          _
        // Predicated region
        $region29: #{tpu_custom_call.1} parent=11 // pred_check
          %p269 = pneg %p155
        $region30: #{tpu_custom_call.1} parent=11 // pred_check_branch
          %271 = sbr.rel (%p269) target = $region32
        $region31: #{tpu_custom_call.1} parent=11 // pred_region
          %273 = vsyncadd [#allocation14], 0
          %s274 = sshll.u32 %s6, 4
          %s275 = int_to_ptr.hbm [resolvable:$true] %s274
          %s276 = sshll.u32 [#allocation13], 4
          %s277 = int_to_ptr.vmem [resolvable:$true] %s276
          %282 = dma.hbm_to_vmem [thread:$0]  %s275, 8192, %s277, [#allocation14], 64, 64, 4
        $region32: #{tpu_custom_call.1} parent=11 // pred_fallthru
          _
        // Predicated region
        $region33: #{tpu_custom_call.1} parent=11 // pred_check
          %p283 = pneg %p176
        $region34: #{tpu_custom_call.1} parent=11 // pred_check_branch
          %285 = sbr.rel (%p283) target = $region36
        $region35: #{tpu_custom_call.1} parent=11 // pred_region
          _
        $region36: #{tpu_custom_call.1} parent=11 // pred_fallthru
          _
      $region12: #{tpu_custom_call.1} parent=5 // pred_fallthru
        _
      %p286 = scmp.lt.s32.totalorder %s24, 4
      // Predicated region
      $region37: #{tpu_custom_call.1} parent=5 // pred_check
        %p287 = pneg %p286
      $region38: #{tpu_custom_call.1} parent=5 // pred_check_branch
        %289 = sbr.rel (%p287) target = $region40
      $region39: #{tpu_custom_call.1} parent=5 // pred_region
        // Predicated region
        $region41: #{tpu_custom_call.1} parent=39 // pred_check
          %p290 = pneg %p44
        $region42: #{tpu_custom_call.1} parent=39 // pred_check_branch
          %292 = sbr.rel (%p290) target = $region44
        $region43: #{tpu_custom_call.1} parent=39 // pred_region
          %s293 = sand.u32 %s34, 1
          %s294 = scalar_lea.sflag [#allocation5], %s293
          %s295 = sand.u32 %s34, 1
          %s296 = smul.addr %s295, 256
          %s297 = scalar_lea.vmem [#allocation4], %s296
          %s298 = smul.u32 32, %s24
          %300 = vsyncadd %s294, 0
          %s301 = smul.addr %s298, 8
          %s302 = scalar_lea.hbm %s1, %s301
          %s303 = sshll.u32 %s302, 4
          %s304 = int_to_ptr.hbm [resolvable:$true] %s303
          %s305 = sshll.u32 %s297, 4
          %s306 = int_to_ptr.vmem [resolvable:$true] %s305
          %311 = dma.hbm_to_vmem [thread:$0]  %s304, 4096, %s306, %s294, 128, 128, 8
        $region44: #{tpu_custom_call.1} parent=39 // pred_fallthru
          _
      $region40: #{tpu_custom_call.1} parent=5 // pred_fallthru
        _
      %p312 = scmp.le.s32.totalorder 1, %s24
      %p313 = scmp.lt.s32.totalorder %s24, 5
      %p314 = pnand %p312, %p313
      %p315 = pneg %p314
      // Predicated region
      $region45: #{tpu_custom_call.1} parent=5 // pred_check
        _
      $region46: #{tpu_custom_call.1} parent=5 // pred_check_branch
        %317 = sbr.rel (%p314) target = $region48
      $region47: #{tpu_custom_call.1} parent=5 // pred_region
        %s318 = ssub.s32 %s24, 1
        %s319 = sand.u32 %s37, 1
        %s320 = scalar_lea.sflag [#allocation5], %s319
        %s321 = sand.u32 %s37, 1
        %s322 = smul.addr %s321, 256
        %s323 = scalar_lea.vmem [#allocation4], %s322
        // Predicated region
        $region49: #{tpu_custom_call.1} parent=47 // pred_check
          %p324 = pneg %p50
        $region50: #{tpu_custom_call.1} parent=47 // pred_check_branch
          %326 = sbr.rel (%p324) target = $region52
        $region51: #{tpu_custom_call.1} parent=47 // pred_region
          %328 = dma.done %s320, 4096
        $region52: #{tpu_custom_call.1} parent=47 // pred_fallthru
          _
        // Predicated region
        $region53: #{tpu_custom_call.1} parent=47 // pred_check
          %p329 = pneg %p71
        $region54: #{tpu_custom_call.1} parent=47 // pred_check_branch
          %331 = sbr.rel (%p329) target = $region56
        $region55: #{tpu_custom_call.1} parent=47 // pred_region
          %333 = dma.done [#allocation8], 4096
        $region56: #{tpu_custom_call.1} parent=47 // pred_fallthru
          _
        // Predicated region
        $region57: #{tpu_custom_call.1} parent=47 // pred_check
          %p334 = pneg %p92
        $region58: #{tpu_custom_call.1} parent=47 // pred_check_branch
          %336 = sbr.rel (%p334) target = $region60
        $region59: #{tpu_custom_call.1} parent=47 // pred_region
          %338 = dma.done [#allocation8], 64
        $region60: #{tpu_custom_call.1} parent=47 // pred_fallthru
          _
        // Predicated region
        $region61: #{tpu_custom_call.1} parent=47 // pred_check
          %p339 = pneg %p113
        $region62: #{tpu_custom_call.1} parent=47 // pred_check_branch
          %341 = sbr.rel (%p339) target = $region64
        $region63: #{tpu_custom_call.1} parent=47 // pred_region
          %343 = dma.done [#allocation11], 32768
        $region64: #{tpu_custom_call.1} parent=47 // pred_fallthru
          _
        // Predicated region
        $region65: #{tpu_custom_call.1} parent=47 // pred_check
          %p344 = pneg %p134
        $region66: #{tpu_custom_call.1} parent=47 // pred_check_branch
          %346 = sbr.rel (%p344) target = $region68
        $region67: #{tpu_custom_call.1} parent=47 // pred_region
          %348 = dma.done [#allocation11], 128
        $region68: #{tpu_custom_call.1} parent=47 // pred_fallthru
          _
        // Predicated region
        $region69: #{tpu_custom_call.1} parent=47 // pred_check
          %p349 = pneg %p155
        $region70: #{tpu_custom_call.1} parent=47 // pred_check_branch
          %351 = sbr.rel (%p349) target = $region72
        $region71: #{tpu_custom_call.1} parent=47 // pred_region
          %353 = dma.done [#allocation14], 8192
        $region72: #{tpu_custom_call.1} parent=47 // pred_fallthru
          _
        %s354 = sand.u32 %s37, 1
        %s355 = scalar_lea.sflag [#allocation5], %s354
        %s356 = sand.u32 %s37, 1
        %s357 = smul.addr %s356, 256
        %s358 = scalar_lea.vmem [#allocation4], %s357
        %p359 = pneg %p50
        %p360 = pneg %p47
        %p361 = pneg %p71
        %p362 = pneg %p68
        %p363 = pneg %p92
        %p364 = pneg %p89
        %p365 = pneg %p113
        %p366 = pneg %p110
        %p367 = pneg %p134
        %p368 = pneg %p131
        %p369 = pneg %p155
        %p370 = pneg %p152
        %p371 = pneg %p176
        %p372 = pneg %p173
        %p373 = pneg %p202
        %p374 = pneg %p199
        %s375 = sand.u32 %s189, 1
        %s376 = scalar_lea.sflag [#allocation6], %s375
        %s377 = sand.u32 %s189, 1
        %s378 = smul.addr %s377, 256
        %s379 = scalar_lea.vmem [#allocation15], %s378
        %s380 = smul.u32 32, %s29
        %s381 = smul.u32 32, %s29
        %s383 = sld [smem:[#allocation3]]
        %s384 = smul.u32 %s29, 256
        %v385 = vld [vmem:[%s323] sm:$0xff]
        %v386 = vld [vmem:[%s323 + $0x8] sm:$0xff]
        %v387 = vld [vmem:[%s323 + $0x10] sm:$0xff]
        %v388 = vld [vmem:[%s323 + $0x18] sm:$0xff]
        %v389 = vld [vmem:[%s323 + $0x20] sm:$0xff]
        %v390 = vld [vmem:[%s323 + $0x28] sm:$0xff]
        %v391 = vld [vmem:[%s323 + $0x30] sm:$0xff]
        %v392 = vld [vmem:[%s323 + $0x38] sm:$0xff]
        %v393 = vld [vmem:[%s323 + $0x40] sm:$0xff]
        %v394 = vld [vmem:[%s323 + $0x48] sm:$0xff]
        %v395 = vld [vmem:[%s323 + $0x50] sm:$0xff]
        %v396 = vld [vmem:[%s323 + $0x58] sm:$0xff]
        %v397 = vld [vmem:[%s323 + $0x60] sm:$0xff]
        %v398 = vld [vmem:[%s323 + $0x68] sm:$0xff]
        %v399 = vld [vmem:[%s323 + $0x70] sm:$0xff]
        %v400 = vld [vmem:[%s323 + $0x78] sm:$0xff]
        %v401 = vld [vmem:[%s323 + $0x80] sm:$0xff]
        %v402 = vld [vmem:[%s323 + $0x88] sm:$0xff]
        %v403 = vld [vmem:[%s323 + $0x90] sm:$0xff]
        %v404 = vld [vmem:[%s323 + $0x98] sm:$0xff]
        %v405 = vld [vmem:[%s323 + $0xa0] sm:$0xff]
        %v406 = vld [vmem:[%s323 + $0xa8] sm:$0xff]
        %v407 = vld [vmem:[%s323 + $0xb0] sm:$0xff]
        %v408 = vld [vmem:[%s323 + $0xb8] sm:$0xff]
        %v409 = vld [vmem:[%s323 + $0xc0] sm:$0xff]
        %v410 = vld [vmem:[%s323 + $0xc8] sm:$0xff]
        %v411 = vld [vmem:[%s323 + $0xd0] sm:$0xff]
        %v412 = vld [vmem:[%s323 + $0xd8] sm:$0xff]
        %v413 = vld [vmem:[%s323 + $0xe0] sm:$0xff]
        %v414 = vld [vmem:[%s323 + $0xe8] sm:$0xff]
        %v415 = vld [vmem:[%s323 + $0xf0] sm:$0xff]
        %v416 = vld [vmem:[%s323 + $0xf8] sm:$0xff]
        %v417 = vpack.c.bf16 %v386, %v385
        %v418 = vpack.c.bf16 %v388, %v387
        %v419 = vpack.c.bf16 %v390, %v389
        %v420 = vpack.c.bf16 %v392, %v391
        %v421 = vpack.c.bf16 %v394, %v393
        %v422 = vpack.c.bf16 %v396, %v395
        %v423 = vpack.c.bf16 %v398, %v397
        %v424 = vpack.c.bf16 %v400, %v399
        %v425 = vpack.c.bf16 %v402, %v401
        %v426 = vpack.c.bf16 %v404, %v403
        %v427 = vpack.c.bf16 %v406, %v405
        %v428 = vpack.c.bf16 %v408, %v407
        %v429 = vpack.c.bf16 %v410, %v409
        %v430 = vpack.c.bf16 %v412, %v411
        %v431 = vpack.c.bf16 %v414, %v413
        %v432 = vpack.c.bf16 %v416, %v415
        %v433 = vld [vmem:[#allocation7] sm:$0xff]
        %v434 = vld [vmem:[#allocation7 + $0x8] sm:$0xff]
        %v435 = vld [vmem:[#allocation7 + $0x10] sm:$0xff]
        %v436 = vld [vmem:[#allocation7 + $0x18] sm:$0xff]
        %v437 = vld [vmem:[#allocation7 + $0x20] sm:$0xff]
        %v438 = vld [vmem:[#allocation7 + $0x28] sm:$0xff]
        %v439 = vld [vmem:[#allocation7 + $0x30] sm:$0xff]
        %v440 = vld [vmem:[#allocation7 + $0x38] sm:$0xff]
        %v441 = vld [vmem:[#allocation7 + $0x40] sm:$0xff]
        %v442 = vld [vmem:[#allocation7 + $0x48] sm:$0xff]
        %v443 = vld [vmem:[#allocation7 + $0x50] sm:$0xff]
        %v444 = vld [vmem:[#allocation7 + $0x58] sm:$0xff]
        %v445 = vld [vmem:[#allocation7 + $0x60] sm:$0xff]
        %v446 = vld [vmem:[#allocation7 + $0x68] sm:$0xff]
        %v447 = vld [vmem:[#allocation7 + $0x70] sm:$0xff]
        %v448 = vld [vmem:[#allocation7 + $0x78] sm:$0xff]
        %v449 = vld [vmem:[#allocation7 + $0x80] sm:$0xff]
        %v450 = vld [vmem:[#allocation7 + $0x88] sm:$0xff]
        %v451 = vld [vmem:[#allocation7 + $0x90] sm:$0xff]
        %v452 = vld [vmem:[#allocation7 + $0x98] sm:$0xff]
        %v453 = vld [vmem:[#allocation7 + $0xa0] sm:$0xff]
        %v454 = vld [vmem:[#allocation7 + $0xa8] sm:$0xff]
        %v455 = vld [vmem:[#allocation7 + $0xb0] sm:$0xff]
        %v456 = vld [vmem:[#allocation7 + $0xb8] sm:$0xff]
        %v457 = vld [vmem:[#allocation7 + $0xc0] sm:$0xff]
        %v458 = vld [vmem:[#allocation7 + $0xc8] sm:$0xff]
        %v459 = vld [vmem:[#allocation7 + $0xd0] sm:$0xff]
        %v460 = vld [vmem:[#allocation7 + $0xd8] sm:$0xff]
        %v461 = vld [vmem:[#allocation7 + $0xe0] sm:$0xff]
        %v462 = vld [vmem:[#allocation7 + $0xe8] sm:$0xff]
        %v463 = vld [vmem:[#allocation7 + $0xf0] sm:$0xff]
        %v464 = vld [vmem:[#allocation7 + $0xf8] sm:$0xff]
        %v465 = vld [vmem:[#allocation9] sm:$0xf]
        %v467 = vperm.slane %v465, 0
        %v468 = vperm.slane %v465, 1
        %v469 = vperm.slane %v465, 2
        %v470 = vperm.slane %v465, 3
        %v507 = vunpack.c.l.b16 %v433
        %v508 = vunpack.c.h.b16 %v433
        %v509 = vunpack.c.l.b16 %v434
        %v510 = vunpack.c.h.b16 %v434
        %v511 = vunpack.c.l.b16 %v435
        %v512 = vunpack.c.h.b16 %v435
        %v513 = vunpack.c.l.b16 %v436
        %v514 = vunpack.c.h.b16 %v436
        %v515 = vunpack.c.l.b16 %v437
        %v516 = vunpack.c.h.b16 %v437
        %v517 = vunpack.c.l.b16 %v438
        %v518 = vunpack.c.h.b16 %v438
        %v519 = vunpack.c.l.b16 %v439
        %v520 = vunpack.c.h.b16 %v439
        %v521 = vunpack.c.l.b16 %v440
        %v522 = vunpack.c.h.b16 %v440
        %v523 = vunpack.c.l.b16 %v441
        %v524 = vunpack.c.h.b16 %v441
        %v525 = vunpack.c.l.b16 %v442
        %v526 = vunpack.c.h.b16 %v442
        %v527 = vunpack.c.l.b16 %v443
        %v528 = vunpack.c.h.b16 %v443
        %v529 = vunpack.c.l.b16 %v444
        %v530 = vunpack.c.h.b16 %v444
        %v531 = vunpack.c.l.b16 %v445
        %v532 = vunpack.c.h.b16 %v445
        %v533 = vunpack.c.l.b16 %v446
        %v534 = vunpack.c.h.b16 %v446
        %v535 = vunpack.c.l.b16 %v447
        %v536 = vunpack.c.h.b16 %v447
        %v537 = vunpack.c.l.b16 %v448
        %v538 = vunpack.c.h.b16 %v448
        %v539 = vunpack.c.l.b16 %v449
        %v540 = vunpack.c.h.b16 %v449
        %v541 = vunpack.c.l.b16 %v450
        %v542 = vunpack.c.h.b16 %v450
        %v543 = vunpack.c.l.b16 %v451
        %v544 = vunpack.c.h.b16 %v451
        %v545 = vunpack.c.l.b16 %v452
        %v546 = vunpack.c.h.b16 %v452
        %v547 = vunpack.c.l.b16 %v453
        %v548 = vunpack.c.h.b16 %v453
        %v549 = vunpack.c.l.b16 %v454
        %v550 = vunpack.c.h.b16 %v454
        %v551 = vunpack.c.l.b16 %v455
        %v552 = vunpack.c.h.b16 %v455
        %v553 = vunpack.c.l.b16 %v456
        %v554 = vunpack.c.h.b16 %v456
        %v555 = vunpack.c.l.b16 %v457
        %v556 = vunpack.c.h.b16 %v457
        %v557 = vunpack.c.l.b16 %v458
        %v558 = vunpack.c.h.b16 %v458
        %v559 = vunpack.c.l.b16 %v459
        %v560 = vunpack.c.h.b16 %v459
        %v561 = vunpack.c.l.b16 %v460
        %v562 = vunpack.c.h.b16 %v460
        %v563 = vunpack.c.l.b16 %v461
        %v564 = vunpack.c.h.b16 %v461
        %v565 = vunpack.c.l.b16 %v462
        %v566 = vunpack.c.h.b16 %v462
        %v567 = vunpack.c.l.b16 %v463
        %v568 = vunpack.c.h.b16 %v463
        %v569 = vunpack.c.l.b16 %v464
        %v570 = vunpack.c.h.b16 %v464
        %v571 = vpack.c.b16 %v511, %v507
        %v572 = vpack.c.b16 %v512, %v508
        %v573 = vpack.c.b16 %v513, %v509
        %v574 = vpack.c.b16 %v514, %v510
        %v575 = vpack.c.b16 %v519, %v515
        %v576 = vpack.c.b16 %v520, %v516
        %v577 = vpack.c.b16 %v521, %v517
        %v578 = vpack.c.b16 %v522, %v518
        %v579 = vpack.c.b16 %v527, %v523
        %v580 = vpack.c.b16 %v528, %v524
        %v581 = vpack.c.b16 %v529, %v525
        %v582 = vpack.c.b16 %v530, %v526
        %v583 = vpack.c.b16 %v535, %v531
        %v584 = vpack.c.b16 %v536, %v532
        %v585 = vpack.c.b16 %v537, %v533
        %v586 = vpack.c.b16 %v538, %v534
        %v587 = vpack.c.b16 %v543, %v539
        %v588 = vpack.c.b16 %v544, %v540
        %v589 = vpack.c.b16 %v545, %v541
        %v590 = vpack.c.b16 %v546, %v542
        %v591 = vpack.c.b16 %v551, %v547
        %v592 = vpack.c.b16 %v552, %v548
        %v593 = vpack.c.b16 %v553, %v549
        %v594 = vpack.c.b16 %v554, %v550
        %v595 = vpack.c.b16 %v559, %v555
        %v596 = vpack.c.b16 %v560, %v556
        %v597 = vpack.c.b16 %v561, %v557
        %v598 = vpack.c.b16 %v562, %v558
        %v599 = vpack.c.b16 %v567, %v563
        %v600 = vpack.c.b16 %v568, %v564
        %v601 = vpack.c.b16 %v569, %v565
        %v602 = vpack.c.b16 %v570, %v566
        %635 = vmatpush.bf16.msra.mxu0 %v599
        %636 = vmatpush.bf16.msra.mxu0 %v595
        %637 = vmatpush.bf16.msra.mxu0 %v591
        %638 = vmatpush.bf16.msra.mxu0 %v587
        %639 = vmatpush.bf16.msra.mxu0 %v583
        %640 = vmatpush.bf16.msra.mxu0 %v579
        %641 = vmatpush.bf16.msra.mxu0 %v575
        %642 = vmatpush.bf16.msra.mxu0 %v571
        %643 = vmatmul.bf16.gmra.mxu0 %v417
        %v644 = vpop.f32.mrf.mxu0
        %v645 = vadd.f32 %v467, %v644
        %v646 = vpop.f32.mrf.mxu0
        %v647 = vadd.f32 %v467, %v646
        %648 = vmatmul.bf16.gmra.mxu0 %v418
        %v649 = vpop.f32.mrf.mxu0
        %v650 = vadd.f32 %v467, %v649
        %v651 = vpop.f32.mrf.mxu0
        %v652 = vadd.f32 %v467, %v651
        %653 = vmatmul.bf16.gmra.mxu0 %v419
        %v654 = vpop.f32.mrf.mxu0
        %v655 = vadd.f32 %v467, %v654
        %v656 = vpop.f32.mrf.mxu0
        %v657 = vadd.f32 %v467, %v656
        %658 = vmatmul.bf16.gmra.mxu0 %v420
        %v659 = vpop.f32.mrf.mxu0
        %v660 = vadd.f32 %v467, %v659
        %v661 = vpop.f32.mrf.mxu0
        %v662 = vadd.f32 %v467, %v661
        %663 = vmatmul.bf16.gmra.mxu0 %v421
        %v664 = vpop.f32.mrf.mxu0
        %v665 = vadd.f32 %v467, %v664
        %v666 = vpop.f32.mrf.mxu0
        %v667 = vadd.f32 %v467, %v666
        %668 = vmatmul.bf16.gmra.mxu0 %v422
        %v669 = vpop.f32.mrf.mxu0
        %v670 = vadd.f32 %v467, %v669
        %v671 = vpop.f32.mrf.mxu0
        %v672 = vadd.f32 %v467, %v671
        %673 = vmatmul.bf16.gmra.mxu0 %v423
        %v674 = vpop.f32.mrf.mxu0
        %v675 = vadd.f32 %v467, %v674
        %v676 = vpop.f32.mrf.mxu0
        %v677 = vadd.f32 %v467, %v676
        %678 = vmatmul.bf16.gmra.mxu0 %v424
        %v679 = vpop.f32.mrf.mxu0
        %v680 = vadd.f32 %v467, %v679
        %v681 = vpop.f32.mrf.mxu0
        %v682 = vadd.f32 %v467, %v681
        %683 = vmatmul.bf16.gmra.mxu0 %v425
        %v684 = vpop.f32.mrf.mxu0
        %v685 = vadd.f32 %v467, %v684
        %v686 = vpop.f32.mrf.mxu0
        %v687 = vadd.f32 %v467, %v686
        %688 = vmatmul.bf16.gmra.mxu0 %v426
        %v689 = vpop.f32.mrf.mxu0
        %v690 = vadd.f32 %v467, %v689
        %v691 = vpop.f32.mrf.mxu0
        %v692 = vadd.f32 %v467, %v691
        %693 = vmatmul.bf16.gmra.mxu0 %v427
        %v694 = vpop.f32.mrf.mxu0
        %v695 = vadd.f32 %v467, %v694
        %v696 = vpop.f32.mrf.mxu0
        %v697 = vadd.f32 %v467, %v696
        %698 = vmatmul.bf16.gmra.mxu0 %v428
        %v699 = vpop.f32.mrf.mxu0
        %v700 = vadd.f32 %v467, %v699
        %v701 = vpop.f32.mrf.mxu0
        %v702 = vadd.f32 %v467, %v701
        %703 = vmatmul.bf16.gmra.mxu0 %v429
        %v704 = vpop.f32.mrf.mxu0
        %v705 = vadd.f32 %v467, %v704
        %v706 = vpop.f32.mrf.mxu0
        %v707 = vadd.f32 %v467, %v706
        %708 = vmatmul.bf16.gmra.mxu0 %v430
        %v709 = vpop.f32.mrf.mxu0
        %v710 = vadd.f32 %v467, %v709
        %v711 = vpop.f32.mrf.mxu0
        %v712 = vadd.f32 %v467, %v711
        %713 = vmatmul.bf16.gmra.mxu0 %v431
        %v714 = vpop.f32.mrf.mxu0
        %v715 = vadd.f32 %v467, %v714
        %v716 = vpop.f32.mrf.mxu0
        %v717 = vadd.f32 %v467, %v716
        %718 = vmatmul.bf16.gmra.mxu0 %v432
        %v719 = vpop.f32.mrf.mxu0
        %v720 = vadd.f32 %v467, %v719
        %v721 = vpop.f32.mrf.mxu0
        %v722 = vadd.f32 %v467, %v721
        %723 = vdwg.mxu0
        %724 = vmatpush.bf16.msra.mxu0 %v600
        %725 = vmatpush.bf16.msra.mxu0 %v596
        %726 = vmatpush.bf16.msra.mxu0 %v592
        %727 = vmatpush.bf16.msra.mxu0 %v588
        %728 = vmatpush.bf16.msra.mxu0 %v584
        %729 = vmatpush.bf16.msra.mxu0 %v580
        %730 = vmatpush.bf16.msra.mxu0 %v576
        %731 = vmatpush.bf16.msra.mxu0 %v572
        %732 = vmatmul.bf16.gmra.mxu0 %v417
        %v733 = vpop.f32.mrf.mxu0
        %v734 = vadd.f32 %v468, %v733
        %v735 = vpop.f32.mrf.mxu0
        %v736 = vadd.f32 %v468, %v735
        %737 = vmatmul.bf16.gmra.mxu0 %v418
        %v738 = vpop.f32.mrf.mxu0
        %v739 = vadd.f32 %v468, %v738
        %v740 = vpop.f32.mrf.mxu0
        %v741 = vadd.f32 %v468, %v740
        %742 = vmatmul.bf16.gmra.mxu0 %v419
        %v743 = vpop.f32.mrf.mxu0
        %v744 = vadd.f32 %v468, %v743
        %v745 = vpop.f32.mrf.mxu0
        %v746 = vadd.f32 %v468, %v745
        %747 = vmatmul.bf16.gmra.mxu0 %v420
        %v748 = vpop.f32.mrf.mxu0
        %v749 = vadd.f32 %v468, %v748
        %v750 = vpop.f32.mrf.mxu0
        %v751 = vadd.f32 %v468, %v750
        %752 = vmatmul.bf16.gmra.mxu0 %v421
        %v753 = vpop.f32.mrf.mxu0
        %v754 = vadd.f32 %v468, %v753
        %v755 = vpop.f32.mrf.mxu0
        %v756 = vadd.f32 %v468, %v755
        %757 = vmatmul.bf16.gmra.mxu0 %v422
        %v758 = vpop.f32.mrf.mxu0
        %v759 = vadd.f32 %v468, %v758
        %v760 = vpop.f32.mrf.mxu0
        %v761 = vadd.f32 %v468, %v760
        %762 = vmatmul.bf16.gmra.mxu0 %v423
        %v763 = vpop.f32.mrf.mxu0
        %v764 = vadd.f32 %v468, %v763
        %v765 = vpop.f32.mrf.mxu0
        %v766 = vadd.f32 %v468, %v765
        %767 = vmatmul.bf16.gmra.mxu0 %v424
        %v768 = vpop.f32.mrf.mxu0
        %v769 = vadd.f32 %v468, %v768
        %v770 = vpop.f32.mrf.mxu0
        %v771 = vadd.f32 %v468, %v770
        %772 = vmatmul.bf16.gmra.mxu0 %v425
        %v773 = vpop.f32.mrf.mxu0
        %v774 = vadd.f32 %v468, %v773
        %v775 = vpop.f32.mrf.mxu0
        %v776 = vadd.f32 %v468, %v775
        %777 = vmatmul.bf16.gmra.mxu0 %v426
        %v778 = vpop.f32.mrf.mxu0
        %v779 = vadd.f32 %v468, %v778
        %v780 = vpop.f32.mrf.mxu0
        %v781 = vadd.f32 %v468, %v780
        %782 = vmatmul.bf16.gmra.mxu0 %v427
        %v783 = vpop.f32.mrf.mxu0
        %v784 = vadd.f32 %v468, %v783
        %v785 = vpop.f32.mrf.mxu0
        %v786 = vadd.f32 %v468, %v785
        %787 = vmatmul.bf16.gmra.mxu0 %v428
        %v788 = vpop.f32.mrf.mxu0
        %v789 = vadd.f32 %v468, %v788
        %v790 = vpop.f32.mrf.mxu0
        %v791 = vadd.f32 %v468, %v790
        %792 = vmatmul.bf16.gmra.mxu0 %v429
        %v793 = vpop.f32.mrf.mxu0
        %v794 = vadd.f32 %v468, %v793
        %v795 = vpop.f32.mrf.mxu0
        %v796 = vadd.f32 %v468, %v795
        %797 = vmatmul.bf16.gmra.mxu0 %v430
        %v798 = vpop.f32.mrf.mxu0
        %v799 = vadd.f32 %v468, %v798
        %v800 = vpop.f32.mrf.mxu0
        %v801 = vadd.f32 %v468, %v800
        %802 = vmatmul.bf16.gmra.mxu0 %v431
        %v803 = vpop.f32.mrf.mxu0
        %v804 = vadd.f32 %v468, %v803
        %v805 = vpop.f32.mrf.mxu0
        %v806 = vadd.f32 %v468, %v805
        %807 = vmatmul.bf16.gmra.mxu0 %v432
        %v808 = vpop.f32.mrf.mxu0
        %v809 = vadd.f32 %v468, %v808
        %v810 = vpop.f32.mrf.mxu0
        %v811 = vadd.f32 %v468, %v810
        %812 = vdwg.mxu0
        %813 = vmatpush.bf16.msra.mxu0 %v601
        %814 = vmatpush.bf16.msra.mxu0 %v597
        %815 = vmatpush.bf16.msra.mxu0 %v593
        %816 = vmatpush.bf16.msra.mxu0 %v589
        %817 = vmatpush.bf16.msra.mxu0 %v585
        %818 = vmatpush.bf16.msra.mxu0 %v581
        %819 = vmatpush.bf16.msra.mxu0 %v577
        %820 = vmatpush.bf16.msra.mxu0 %v573
        %821 = vmatmul.bf16.gmra.mxu0 %v417
        %v822 = vpop.f32.mrf.mxu0
        %v823 = vadd.f32 %v469, %v822
        %v824 = vpop.f32.mrf.mxu0
        %v825 = vadd.f32 %v469, %v824
        %826 = vmatmul.bf16.gmra.mxu0 %v418
        %v827 = vpop.f32.mrf.mxu0
        %v828 = vadd.f32 %v469, %v827
        %v829 = vpop.f32.mrf.mxu0
        %v830 = vadd.f32 %v469, %v829
        %831 = vmatmul.bf16.gmra.mxu0 %v419
        %v832 = vpop.f32.mrf.mxu0
        %v833 = vadd.f32 %v469, %v832
        %v834 = vpop.f32.mrf.mxu0
        %v835 = vadd.f32 %v469, %v834
        %836 = vmatmul.bf16.gmra.mxu0 %v420
        %v837 = vpop.f32.mrf.mxu0
        %v838 = vadd.f32 %v469, %v837
        %v839 = vpop.f32.mrf.mxu0
        %v840 = vadd.f32 %v469, %v839
        %841 = vmatmul.bf16.gmra.mxu0 %v421
        %v842 = vpop.f32.mrf.mxu0
        %v843 = vadd.f32 %v469, %v842
        %v844 = vpop.f32.mrf.mxu0
        %v845 = vadd.f32 %v469, %v844
        %846 = vmatmul.bf16.gmra.mxu0 %v422
        %v847 = vpop.f32.mrf.mxu0
        %v848 = vadd.f32 %v469, %v847
        %v849 = vpop.f32.mrf.mxu0
        %v850 = vadd.f32 %v469, %v849
        %851 = vmatmul.bf16.gmra.mxu0 %v423
        %v852 = vpop.f32.mrf.mxu0
        %v853 = vadd.f32 %v469, %v852
        %v854 = vpop.f32.mrf.mxu0
        %v855 = vadd.f32 %v469, %v854
        %856 = vmatmul.bf16.gmra.mxu0 %v424
        %v857 = vpop.f32.mrf.mxu0
        %v858 = vadd.f32 %v469, %v857
        %v859 = vpop.f32.mrf.mxu0
        %v860 = vadd.f32 %v469, %v859
        %861 = vmatmul.bf16.gmra.mxu0 %v425
        %v862 = vpop.f32.mrf.mxu0
        %v863 = vadd.f32 %v469, %v862
        %v864 = vpop.f32.mrf.mxu0
        %v865 = vadd.f32 %v469, %v864
        %866 = vmatmul.bf16.gmra.mxu0 %v426
        %v867 = vpop.f32.mrf.mxu0
        %v868 = vadd.f32 %v469, %v867
        %v869 = vpop.f32.mrf.mxu0
        %v870 = vadd.f32 %v469, %v869
        %871 = vmatmul.bf16.gmra.mxu0 %v427
        %v872 = vpop.f32.mrf.mxu0
        %v873 = vadd.f32 %v469, %v872
        %v874 = vpop.f32.mrf.mxu0
        %v875 = vadd.f32 %v469, %v874
        %876 = vmatmul.bf16.gmra.mxu0 %v428
        %v877 = vpop.f32.mrf.mxu0
        %v878 = vadd.f32 %v469, %v877
        %v879 = vpop.f32.mrf.mxu0
        %v880 = vadd.f32 %v469, %v879
        %881 = vmatmul.bf16.gmra.mxu0 %v429
        %v882 = vpop.f32.mrf.mxu0
        %v883 = vadd.f32 %v469, %v882
        %v884 = vpop.f32.mrf.mxu0
        %v885 = vadd.f32 %v469, %v884
        %886 = vmatmul.bf16.gmra.mxu0 %v430
        %v887 = vpop.f32.mrf.mxu0
        %v888 = vadd.f32 %v469, %v887
        %v889 = vpop.f32.mrf.mxu0
        %v890 = vadd.f32 %v469, %v889
        %891 = vmatmul.bf16.gmra.mxu0 %v431
        %v892 = vpop.f32.mrf.mxu0
        %v893 = vadd.f32 %v469, %v892
        %v894 = vpop.f32.mrf.mxu0
        %v895 = vadd.f32 %v469, %v894
        %896 = vmatmul.bf16.gmra.mxu0 %v432
        %v897 = vpop.f32.mrf.mxu0
        %v898 = vadd.f32 %v469, %v897
        %v899 = vpop.f32.mrf.mxu0
        %v900 = vadd.f32 %v469, %v899
        %901 = vdwg.mxu0
        %902 = vmatpush.bf16.msra.mxu0 %v602
        %903 = vmatpush.bf16.msra.mxu0 %v598
        %904 = vmatpush.bf16.msra.mxu0 %v594
        %905 = vmatpush.bf16.msra.mxu0 %v590
        %906 = vmatpush.bf16.msra.mxu0 %v586
        %907 = vmatpush.bf16.msra.mxu0 %v582
        %908 = vmatpush.bf16.msra.mxu0 %v578
        %909 = vmatpush.bf16.msra.mxu0 %v574
        %910 = vmatmul.bf16.gmra.mxu0 %v417
        %v911 = vpop.f32.mrf.mxu0
        %v912 = vadd.f32 %v470, %v911
        %v913 = vpop.f32.mrf.mxu0
        %v914 = vadd.f32 %v470, %v913
        %915 = vmatmul.bf16.gmra.mxu0 %v418
        %v916 = vpop.f32.mrf.mxu0
        %v917 = vadd.f32 %v470, %v916
        %v918 = vpop.f32.mrf.mxu0
        %v919 = vadd.f32 %v470, %v918
        %920 = vmatmul.bf16.gmra.mxu0 %v419
        %v921 = vpop.f32.mrf.mxu0
        %v922 = vadd.f32 %v470, %v921
        %v923 = vpop.f32.mrf.mxu0
        %v924 = vadd.f32 %v470, %v923
        %925 = vmatmul.bf16.gmra.mxu0 %v420
        %v926 = vpop.f32.mrf.mxu0
        %v927 = vadd.f32 %v470, %v926
        %v928 = vpop.f32.mrf.mxu0
        %v929 = vadd.f32 %v470, %v928
        %930 = vmatmul.bf16.gmra.mxu0 %v421
        %v931 = vpop.f32.mrf.mxu0
        %v932 = vadd.f32 %v470, %v931
        %v933 = vpop.f32.mrf.mxu0
        %v934 = vadd.f32 %v470, %v933
        %935 = vmatmul.bf16.gmra.mxu0 %v422
        %v936 = vpop.f32.mrf.mxu0
        %v937 = vadd.f32 %v470, %v936
        %v938 = vpop.f32.mrf.mxu0
        %v939 = vadd.f32 %v470, %v938
        %940 = vmatmul.bf16.gmra.mxu0 %v423
        %v941 = vpop.f32.mrf.mxu0
        %v942 = vadd.f32 %v470, %v941
        %v943 = vpop.f32.mrf.mxu0
        %v944 = vadd.f32 %v470, %v943
        %945 = vmatmul.bf16.gmra.mxu0 %v424
        %v946 = vpop.f32.mrf.mxu0
        %v947 = vadd.f32 %v470, %v946
        %v948 = vpop.f32.mrf.mxu0
        %v949 = vadd.f32 %v470, %v948
        %950 = vmatmul.bf16.gmra.mxu0 %v425
        %v951 = vpop.f32.mrf.mxu0
        %v952 = vadd.f32 %v470, %v951
        %v953 = vpop.f32.mrf.mxu0
        %v954 = vadd.f32 %v470, %v953
        %955 = vmatmul.bf16.gmra.mxu0 %v426
        %v956 = vpop.f32.mrf.mxu0
        %v957 = vadd.f32 %v470, %v956
        %v958 = vpop.f32.mrf.mxu0
        %v959 = vadd.f32 %v470, %v958
        %960 = vmatmul.bf16.gmra.mxu0 %v427
        %v961 = vpop.f32.mrf.mxu0
        %v962 = vadd.f32 %v470, %v961
        %v963 = vpop.f32.mrf.mxu0
        %v964 = vadd.f32 %v470, %v963
        %965 = vmatmul.bf16.gmra.mxu0 %v428
        %v966 = vpop.f32.mrf.mxu0
        %v967 = vadd.f32 %v470, %v966
        %v968 = vpop.f32.mrf.mxu0
        %v969 = vadd.f32 %v470, %v968
        %970 = vmatmul.bf16.gmra.mxu0 %v429
        %v971 = vpop.f32.mrf.mxu0
        %v972 = vadd.f32 %v470, %v971
        %v973 = vpop.f32.mrf.mxu0
        %v974 = vadd.f32 %v470, %v973
        %975 = vmatmul.bf16.gmra.mxu0 %v430
        %v976 = vpop.f32.mrf.mxu0
        %v977 = vadd.f32 %v470, %v976
        %v978 = vpop.f32.mrf.mxu0
        %v979 = vadd.f32 %v470, %v978
        %980 = vmatmul.bf16.gmra.mxu0 %v431
        %v981 = vpop.f32.mrf.mxu0
        %v982 = vadd.f32 %v470, %v981
        %v983 = vpop.f32.mrf.mxu0
        %v984 = vadd.f32 %v470, %v983
        %985 = vmatmul.bf16.gmra.mxu0 %v432
        %v986 = vpop.f32.mrf.mxu0
        %v987 = vadd.f32 %v470, %v986
        %v988 = vpop.f32.mrf.mxu0
        %v989 = vadd.f32 %v470, %v988
        %990 = vdwg.mxu0
        %v991 = vlaneseq
        %v992 = vshrl.u32 %v991, 7
        %v993 = vadd.s32 %v992, 8
        %v994 = vadd.s32 %v992, 16
        %v995 = vadd.s32 %v992, 24
        %v996 = vadd.s32 %v992, 32
        %v997 = vadd.s32 %v992, 40
        %v998 = vadd.s32 %v992, 48
        %v999 = vadd.s32 %v992, 56
        %v1000 = vadd.s32 %v992, 64
        %v1001 = vadd.s32 %v992, 72
        %v1002 = vadd.s32 %v992, 80
        %v1003 = vadd.s32 %v992, 88
        %v1004 = vadd.s32 %v992, 96
        %v1005 = vadd.s32 %v992, 104
        %v1006 = vadd.s32 %v992, 112
        %v1007 = vadd.s32 %v992, 120
        %v1008 = vadd.s32 %v992, 128
        %v1009 = vadd.s32 %v992, 136
        %v1010 = vadd.s32 %v992, 144
        %v1011 = vadd.s32 %v992, 152
        %v1012 = vadd.s32 %v992, 160
        %v1013 = vadd.s32 %v992, 168
        %v1014 = vadd.s32 %v992, 176
        %v1015 = vadd.s32 %v992, 184
        %v1016 = vadd.s32 %v992, 192
        %v1017 = vadd.s32 %v992, 200
        %v1018 = vadd.s32 %v992, 208
        %v1019 = vadd.s32 %v992, 216
        %v1020 = vadd.s32 %v992, 224
        %v1021 = vadd.s32 %v992, 232
        %v1022 = vadd.s32 %v992, 240
        %v1023 = vadd.s32 %v992, 248
        %v1024 = vstv %s384
        %v1025 = vadd.s32 %v992, %v1024
        %v1026 = vadd.s32 %v993, %v1024
        %v1027 = vadd.s32 %v994, %v1024
        %v1028 = vadd.s32 %v995, %v1024
        %v1029 = vadd.s32 %v996, %v1024
        %v1030 = vadd.s32 %v997, %v1024
        %v1031 = vadd.s32 %v998, %v1024
        %v1032 = vadd.s32 %v999, %v1024
        %v1033 = vadd.s32 %v1000, %v1024
        %v1034 = vadd.s32 %v1001, %v1024
        %v1035 = vadd.s32 %v1002, %v1024
        %v1036 = vadd.s32 %v1003, %v1024
        %v1037 = vadd.s32 %v1004, %v1024
        %v1038 = vadd.s32 %v1005, %v1024
        %v1039 = vadd.s32 %v1006, %v1024
        %v1040 = vadd.s32 %v1007, %v1024
        %v1041 = vadd.s32 %v1008, %v1024
        %v1042 = vadd.s32 %v1009, %v1024
        %v1043 = vadd.s32 %v1010, %v1024
        %v1044 = vadd.s32 %v1011, %v1024
        %v1045 = vadd.s32 %v1012, %v1024
        %v1046 = vadd.s32 %v1013, %v1024
        %v1047 = vadd.s32 %v1014, %v1024
        %v1048 = vadd.s32 %v1015, %v1024
        %v1049 = vadd.s32 %v1016, %v1024
        %v1050 = vadd.s32 %v1017, %v1024
        %v1051 = vadd.s32 %v1018, %v1024
        %v1052 = vadd.s32 %v1019, %v1024
        %v1053 = vadd.s32 %v1020, %v1024
        %v1054 = vadd.s32 %v1021, %v1024
        %v1055 = vadd.s32 %v1022, %v1024
        %v1056 = vadd.s32 %v1023, %v1024
        %v1057 = vlaneseq
        %v1058 = vand.u32 %v1057, 127
        %v1059 = vadd.s32 %v1058, 128
        %v1060 = vadd.s32 %v1058, 256
        %v1061 = vadd.s32 %v1058, 384
        %s1062 = sxor.u32 %s383, 495397697
        %v1063 = vmul.u32 %v1025, 2654435761
        %v1064 = vmul.u32 %v1026, 2654435761
        %v1065 = vmul.u32 %v1027, 2654435761
        %v1066 = vmul.u32 %v1028, 2654435761
        %v1067 = vmul.u32 %v1029, 2654435761
        %v1068 = vmul.u32 %v1030, 2654435761
        %v1069 = vmul.u32 %v1031, 2654435761
        %v1070 = vmul.u32 %v1032, 2654435761
        %v1071 = vmul.u32 %v1033, 2654435761
        %v1072 = vmul.u32 %v1034, 2654435761
        %v1073 = vmul.u32 %v1035, 2654435761
        %v1074 = vmul.u32 %v1036, 2654435761
        %v1075 = vmul.u32 %v1037, 2654435761
        %v1076 = vmul.u32 %v1038, 2654435761
        %v1077 = vmul.u32 %v1039, 2654435761
        %v1078 = vmul.u32 %v1040, 2654435761
        %v1079 = vmul.u32 %v1041, 2654435761
        %v1080 = vmul.u32 %v1042, 2654435761
        %v1081 = vmul.u32 %v1043, 2654435761
        %v1082 = vmul.u32 %v1044, 2654435761
        %v1083 = vmul.u32 %v1045, 2654435761
        %v1084 = vmul.u32 %v1046, 2654435761
        %v1085 = vmul.u32 %v1047, 2654435761
        %v1086 = vmul.u32 %v1048, 2654435761
        %v1087 = vmul.u32 %v1049, 2654435761
        %v1088 = vmul.u32 %v1050, 2654435761
        %v1089 = vmul.u32 %v1051, 2654435761
        %v1090 = vmul.u32 %v1052, 2654435761
        %v1091 = vmul.u32 %v1053, 2654435761
        %v1092 = vmul.u32 %v1054, 2654435761
        %v1093 = vmul.u32 %v1055, 2654435761
        %v1094 = vmul.u32 %v1056, 2654435761
        %v1095 = vstv %s1062
        %v1096 = vadd.s32 %v1095, %v1063
        %v1097 = vadd.s32 %v1095, %v1064
        %v1098 = vadd.s32 %v1095, %v1065
        %v1099 = vadd.s32 %v1095, %v1066
        %v1100 = vadd.s32 %v1095, %v1067
        %v1101 = vadd.s32 %v1095, %v1068
        %v1102 = vadd.s32 %v1095, %v1069
        %v1103 = vadd.s32 %v1095, %v1070
        %v1104 = vadd.s32 %v1095, %v1071
        %v1105 = vadd.s32 %v1095, %v1072
        %v1106 = vadd.s32 %v1095, %v1073
        %v1107 = vadd.s32 %v1095, %v1074
        %v1108 = vadd.s32 %v1095, %v1075
        %v1109 = vadd.s32 %v1095, %v1076
        %v1110 = vadd.s32 %v1095, %v1077
        %v1111 = vadd.s32 %v1095, %v1078
        %v1112 = vadd.s32 %v1095, %v1079
        %v1113 = vadd.s32 %v1095, %v1080
        %v1114 = vadd.s32 %v1095, %v1081
        %v1115 = vadd.s32 %v1095, %v1082
        %v1116 = vadd.s32 %v1095, %v1083
        %v1117 = vadd.s32 %v1095, %v1084
        %v1118 = vadd.s32 %v1095, %v1085
        %v1119 = vadd.s32 %v1095, %v1086
        %v1120 = vadd.s32 %v1095, %v1087
        %v1121 = vadd.s32 %v1095, %v1088
        %v1122 = vadd.s32 %v1095, %v1089
        %v1123 = vadd.s32 %v1095, %v1090
        %v1124 = vadd.s32 %v1095, %v1091
        %v1125 = vadd.s32 %v1095, %v1092
        %v1126 = vadd.s32 %v1095, %v1093
        %v1127 = vadd.s32 %v1095, %v1094
        %v1128 = vmul.u32 %v1058, 2246822519
        %v1129 = vmul.u32 %v1059, 2246822519
        %v1130 = vmul.u32 %v1060, 2246822519
        %v1131 = vmul.u32 %v1061, 2246822519
        %v1132 = vadd.s32 %v1096, %v1128
        %v1133 = vadd.s32 %v1096, %v1129
        %v1134 = vadd.s32 %v1096, %v1130
        %v1135 = vadd.s32 %v1096, %v1131
        %v1136 = vadd.s32 %v1097, %v1128
        %v1137 = vadd.s32 %v1097, %v1129
        %v1138 = vadd.s32 %v1097, %v1130
        %v1139 = vadd.s32 %v1097, %v1131
        %v1140 = vadd.s32 %v1098, %v1128
        %v1141 = vadd.s32 %v1098, %v1129
        %v1142 = vadd.s32 %v1098, %v1130
        %v1143 = vadd.s32 %v1098, %v1131
        %v1144 = vadd.s32 %v1099, %v1128
        %v1145 = vadd.s32 %v1099, %v1129
        %v1146 = vadd.s32 %v1099, %v1130
        %v1147 = vadd.s32 %v1099, %v1131
        %v1148 = vadd.s32 %v1100, %v1128
        %v1149 = vadd.s32 %v1100, %v1129
        %v1150 = vadd.s32 %v1100, %v1130
        %v1151 = vadd.s32 %v1100, %v1131
        %v1152 = vadd.s32 %v1101, %v1128
        %v1153 = vadd.s32 %v1101, %v1129
        %v1154 = vadd.s32 %v1101, %v1130
        %v1155 = vadd.s32 %v1101, %v1131
        %v1156 = vadd.s32 %v1102, %v1128
        %v1157 = vadd.s32 %v1102, %v1129
        %v1158 = vadd.s32 %v1102, %v1130
        %v1159 = vadd.s32 %v1102, %v1131
        %v1160 = vadd.s32 %v1103, %v1128
        %v1161 = vadd.s32 %v1103, %v1129
        %v1162 = vadd.s32 %v1103, %v1130
        %v1163 = vadd.s32 %v1103, %v1131
        %v1164 = vadd.s32 %v1104, %v1128
        %v1165 = vadd.s32 %v1104, %v1129
        %v1166 = vadd.s32 %v1104, %v1130
        %v1167 = vadd.s32 %v1104, %v1131
        %v1168 = vadd.s32 %v1105, %v1128
        %v1169 = vadd.s32 %v1105, %v1129
        %v1170 = vadd.s32 %v1105, %v1130
        %v1171 = vadd.s32 %v1105, %v1131
        %v1172 = vadd.s32 %v1106, %v1128
        %v1173 = vadd.s32 %v1106, %v1129
        %v1174 = vadd.s32 %v1106, %v1130
        %v1175 = vadd.s32 %v1106, %v1131
        %v1176 = vadd.s32 %v1107, %v1128
        %v1177 = vadd.s32 %v1107, %v1129
        %v1178 = vadd.s32 %v1107, %v1130
        %v1179 = vadd.s32 %v1107, %v1131
        %v1180 = vadd.s32 %v1108, %v1128
        %v1181 = vadd.s32 %v1108, %v1129
        %v1182 = vadd.s32 %v1108, %v1130
        %v1183 = vadd.s32 %v1108, %v1131
        %v1184 = vadd.s32 %v1109, %v1128
        %v1185 = vadd.s32 %v1109, %v1129
        %v1186 = vadd.s32 %v1109, %v1130
        %v1187 = vadd.s32 %v1109, %v1131
        %v1188 = vadd.s32 %v1110, %v1128
        %v1189 = vadd.s32 %v1110, %v1129
        %v1190 = vadd.s32 %v1110, %v1130
        %v1191 = vadd.s32 %v1110, %v1131
        %v1192 = vadd.s32 %v1111, %v1128
        %v1193 = vadd.s32 %v1111, %v1129
        %v1194 = vadd.s32 %v1111, %v1130
        %v1195 = vadd.s32 %v1111, %v1131
        %v1196 = vadd.s32 %v1112, %v1128
        %v1197 = vadd.s32 %v1112, %v1129
        %v1198 = vadd.s32 %v1112, %v1130
        %v1199 = vadd.s32 %v1112, %v1131
        %v1200 = vadd.s32 %v1113, %v1128
        %v1201 = vadd.s32 %v1113, %v1129
        %v1202 = vadd.s32 %v1113, %v1130
        %v1203 = vadd.s32 %v1113, %v1131
        %v1204 = vadd.s32 %v1114, %v1128
        %v1205 = vadd.s32 %v1114, %v1129
        %v1206 = vadd.s32 %v1114, %v1130
        %v1207 = vadd.s32 %v1114, %v1131
        %v1208 = vadd.s32 %v1115, %v1128
        %v1209 = vadd.s32 %v1115, %v1129
        %v1210 = vadd.s32 %v1115, %v1130
        %v1211 = vadd.s32 %v1115, %v1131
        %v1212 = vadd.s32 %v1116, %v1128
        %v1213 = vadd.s32 %v1116, %v1129
        %v1214 = vadd.s32 %v1116, %v1130
        %v1215 = vadd.s32 %v1116, %v1131
        %v1216 = vadd.s32 %v1117, %v1128
        %v1217 = vadd.s32 %v1117, %v1129
        %v1218 = vadd.s32 %v1117, %v1130
        %v1219 = vadd.s32 %v1117, %v1131
        %v1220 = vadd.s32 %v1118, %v1128
        %v1221 = vadd.s32 %v1118, %v1129
        %v1222 = vadd.s32 %v1118, %v1130
        %v1223 = vadd.s32 %v1118, %v1131
        %v1224 = vadd.s32 %v1119, %v1128
        %v1225 = vadd.s32 %v1119, %v1129
        %v1226 = vadd.s32 %v1119, %v1130
        %v1227 = vadd.s32 %v1119, %v1131
        %v1228 = vadd.s32 %v1120, %v1128
        %v1229 = vadd.s32 %v1120, %v1129
        %v1230 = vadd.s32 %v1120, %v1130
        %v1231 = vadd.s32 %v1120, %v1131
        %v1232 = vadd.s32 %v1121, %v1128
        %v1233 = vadd.s32 %v1121, %v1129
        %v1234 = vadd.s32 %v1121, %v1130
        %v1235 = vadd.s32 %v1121, %v1131
        %v1236 = vadd.s32 %v1122, %v1128
        %v1237 = vadd.s32 %v1122, %v1129
        %v1238 = vadd.s32 %v1122, %v1130
        %v1239 = vadd.s32 %v1122, %v1131
        %v1240 = vadd.s32 %v1123, %v1128
        %v1241 = vadd.s32 %v1123, %v1129
        %v1242 = vadd.s32 %v1123, %v1130
        %v1243 = vadd.s32 %v1123, %v1131
        %v1244 = vadd.s32 %v1124, %v1128
        %v1245 = vadd.s32 %v1124, %v1129
        %v1246 = vadd.s32 %v1124, %v1130
        %v1247 = vadd.s32 %v1124, %v1131
        %v1248 = vadd.s32 %v1125, %v1128
        %v1249 = vadd.s32 %v1125, %v1129
        %v1250 = vadd.s32 %v1125, %v1130
        %v1251 = vadd.s32 %v1125, %v1131
        %v1252 = vadd.s32 %v1126, %v1128
        %v1253 = vadd.s32 %v1126, %v1129
        %v1254 = vadd.s32 %v1126, %v1130
        %v1255 = vadd.s32 %v1126, %v1131
        %v1256 = vadd.s32 %v1127, %v1128
        %v1257 = vadd.s32 %v1127, %v1129
        %v1258 = vadd.s32 %v1127, %v1130
        %v1259 = vadd.s32 %v1127, %v1131
        %v1260 = vshrl.u32 %v1132, 16
        %v1261 = vshrl.u32 %v1133, 16
        %v1262 = vshrl.u32 %v1134, 16
        %v1263 = vshrl.u32 %v1135, 16
        %v1264 = vshrl.u32 %v1136, 16
        %v1265 = vshrl.u32 %v1137, 16
        %v1266 = vshrl.u32 %v1138, 16
        %v1267 = vshrl.u32 %v1139, 16
        %v1268 = vshrl.u32 %v1140, 16
        %v1269 = vshrl.u32 %v1141, 16
        %v1270 = vshrl.u32 %v1142, 16
        %v1271 = vshrl.u32 %v1143, 16
        %v1272 = vshrl.u32 %v1144, 16
        %v1273 = vshrl.u32 %v1145, 16
        %v1274 = vshrl.u32 %v1146, 16
        %v1275 = vshrl.u32 %v1147, 16
        %v1276 = vshrl.u32 %v1148, 16
        %v1277 = vshrl.u32 %v1149, 16
        %v1278 = vshrl.u32 %v1150, 16
        %v1279 = vshrl.u32 %v1151, 16
        %v1280 = vshrl.u32 %v1152, 16
        %v1281 = vshrl.u32 %v1153, 16
        %v1282 = vshrl.u32 %v1154, 16
        %v1283 = vshrl.u32 %v1155, 16
        %v1284 = vshrl.u32 %v1156, 16
        %v1285 = vshrl.u32 %v1157, 16
        %v1286 = vshrl.u32 %v1158, 16
        %v1287 = vshrl.u32 %v1159, 16
        %v1288 = vshrl.u32 %v1160, 16
        %v1289 = vshrl.u32 %v1161, 16
        %v1290 = vshrl.u32 %v1162, 16
        %v1291 = vshrl.u32 %v1163, 16
        %v1292 = vshrl.u32 %v1164, 16
        %v1293 = vshrl.u32 %v1165, 16
        %v1294 = vshrl.u32 %v1166, 16
        %v1295 = vshrl.u32 %v1167, 16
        %v1296 = vshrl.u32 %v1168, 16
        %v1297 = vshrl.u32 %v1169, 16
        %v1298 = vshrl.u32 %v1170, 16
        %v1299 = vshrl.u32 %v1171, 16
        %v1300 = vshrl.u32 %v1172, 16
        %v1301 = vshrl.u32 %v1173, 16
        %v1302 = vshrl.u32 %v1174, 16
        %v1303 = vshrl.u32 %v1175, 16
        %v1304 = vshrl.u32 %v1176, 16
        %v1305 = vshrl.u32 %v1177, 16
        %v1306 = vshrl.u32 %v1178, 16
        %v1307 = vshrl.u32 %v1179, 16
        %v1308 = vshrl.u32 %v1180, 16
        %v1309 = vshrl.u32 %v1181, 16
        %v1310 = vshrl.u32 %v1182, 16
        %v1311 = vshrl.u32 %v1183, 16
        %v1312 = vshrl.u32 %v1184, 16
        %v1313 = vshrl.u32 %v1185, 16
        %v1314 = vshrl.u32 %v1186, 16
        %v1315 = vshrl.u32 %v1187, 16
        %v1316 = vshrl.u32 %v1188, 16
        %v1317 = vshrl.u32 %v1189, 16
        %v1318 = vshrl.u32 %v1190, 16
        %v1319 = vshrl.u32 %v1191, 16
        %v1320 = vshrl.u32 %v1192, 16
        %v1321 = vshrl.u32 %v1193, 16
        %v1322 = vshrl.u32 %v1194, 16
        %v1323 = vshrl.u32 %v1195, 16
        %v1324 = vshrl.u32 %v1196, 16
        %v1325 = vshrl.u32 %v1197, 16
        %v1326 = vshrl.u32 %v1198, 16
        %v1327 = vshrl.u32 %v1199, 16
        %v1328 = vshrl.u32 %v1200, 16
        %v1329 = vshrl.u32 %v1201, 16
        %v1330 = vshrl.u32 %v1202, 16
        %v1331 = vshrl.u32 %v1203, 16
        %v1332 = vshrl.u32 %v1204, 16
        %v1333 = vshrl.u32 %v1205, 16
        %v1334 = vshrl.u32 %v1206, 16
        %v1335 = vshrl.u32 %v1207, 16
        %v1336 = vshrl.u32 %v1208, 16
        %v1337 = vshrl.u32 %v1209, 16
        %v1338 = vshrl.u32 %v1210, 16
        %v1339 = vshrl.u32 %v1211, 16
        %v1340 = vshrl.u32 %v1212, 16
        %v1341 = vshrl.u32 %v1213, 16
        %v1342 = vshrl.u32 %v1214, 16
        %v1343 = vshrl.u32 %v1215, 16
        %v1344 = vshrl.u32 %v1216, 16
        %v1345 = vshrl.u32 %v1217, 16
        %v1346 = vshrl.u32 %v1218, 16
        %v1347 = vshrl.u32 %v1219, 16
        %v1348 = vshrl.u32 %v1220, 16
        %v1349 = vshrl.u32 %v1221, 16
        %v1350 = vshrl.u32 %v1222, 16
        %v1351 = vshrl.u32 %v1223, 16
        %v1352 = vshrl.u32 %v1224, 16
        %v1353 = vshrl.u32 %v1225, 16
        %v1354 = vshrl.u32 %v1226, 16
        %v1355 = vshrl.u32 %v1227, 16
        %v1356 = vshrl.u32 %v1228, 16
        %v1357 = vshrl.u32 %v1229, 16
        %v1358 = vshrl.u32 %v1230, 16
        %v1359 = vshrl.u32 %v1231, 16
        %v1360 = vshrl.u32 %v1232, 16
        %v1361 = vshrl.u32 %v1233, 16
        %v1362 = vshrl.u32 %v1234, 16
        %v1363 = vshrl.u32 %v1235, 16
        %v1364 = vshrl.u32 %v1236, 16
        %v1365 = vshrl.u32 %v1237, 16
        %v1366 = vshrl.u32 %v1238, 16
        %v1367 = vshrl.u32 %v1239, 16
        %v1368 = vshrl.u32 %v1240, 16
        %v1369 = vshrl.u32 %v1241, 16
        %v1370 = vshrl.u32 %v1242, 16
        %v1371 = vshrl.u32 %v1243, 16
        %v1372 = vshrl.u32 %v1244, 16
        %v1373 = vshrl.u32 %v1245, 16
        %v1374 = vshrl.u32 %v1246, 16
        %v1375 = vshrl.u32 %v1247, 16
        %v1376 = vshrl.u32 %v1248, 16
        %v1377 = vshrl.u32 %v1249, 16
        %v1378 = vshrl.u32 %v1250, 16
        %v1379 = vshrl.u32 %v1251, 16
        %v1380 = vshrl.u32 %v1252, 16
        %v1381 = vshrl.u32 %v1253, 16
        %v1382 = vshrl.u32 %v1254, 16
        %v1383 = vshrl.u32 %v1255, 16
        %v1384 = vshrl.u32 %v1256, 16
        %v1385 = vshrl.u32 %v1257, 16
        %v1386 = vshrl.u32 %v1258, 16
        %v1387 = vshrl.u32 %v1259, 16
        %v1388 = vxor.u32 %v1132, %v1260
        %v1389 = vxor.u32 %v1133, %v1261
        %v1390 = vxor.u32 %v1134, %v1262
        %v1391 = vxor.u32 %v1135, %v1263
        %v1392 = vxor.u32 %v1136, %v1264
        %v1393 = vxor.u32 %v1137, %v1265
        %v1394 = vxor.u32 %v1138, %v1266
        %v1395 = vxor.u32 %v1139, %v1267
        %v1396 = vxor.u32 %v1140, %v1268
        %v1397 = vxor.u32 %v1141, %v1269
        %v1398 = vxor.u32 %v1142, %v1270
        %v1399 = vxor.u32 %v1143, %v1271
        %v1400 = vxor.u32 %v1144, %v1272
        %v1401 = vxor.u32 %v1145, %v1273
        %v1402 = vxor.u32 %v1146, %v1274
        %v1403 = vxor.u32 %v1147, %v1275
        %v1404 = vxor.u32 %v1148, %v1276
        %v1405 = vxor.u32 %v1149, %v1277
        %v1406 = vxor.u32 %v1150, %v1278
        %v1407 = vxor.u32 %v1151, %v1279
        %v1408 = vxor.u32 %v1152, %v1280
        %v1409 = vxor.u32 %v1153, %v1281
        %v1410 = vxor.u32 %v1154, %v1282
        %v1411 = vxor.u32 %v1155, %v1283
        %v1412 = vxor.u32 %v1156, %v1284
        %v1413 = vxor.u32 %v1157, %v1285
        %v1414 = vxor.u32 %v1158, %v1286
        %v1415 = vxor.u32 %v1159, %v1287
        %v1416 = vxor.u32 %v1160, %v1288
        %v1417 = vxor.u32 %v1161, %v1289
        %v1418 = vxor.u32 %v1162, %v1290
        %v1419 = vxor.u32 %v1163, %v1291
        %v1420 = vxor.u32 %v1164, %v1292
        %v1421 = vxor.u32 %v1165, %v1293
        %v1422 = vxor.u32 %v1166, %v1294
        %v1423 = vxor.u32 %v1167, %v1295
        %v1424 = vxor.u32 %v1168, %v1296
        %v1425 = vxor.u32 %v1169, %v1297
        %v1426 = vxor.u32 %v1170, %v1298
        %v1427 = vxor.u32 %v1171, %v1299
        %v1428 = vxor.u32 %v1172, %v1300
        %v1429 = vxor.u32 %v1173, %v1301
        %v1430 = vxor.u32 %v1174, %v1302
        %v1431 = vxor.u32 %v1175, %v1303
        %v1432 = vxor.u32 %v1176, %v1304
        %v1433 = vxor.u32 %v1177, %v1305
        %v1434 = vxor.u32 %v1178, %v1306
        %v1435 = vxor.u32 %v1179, %v1307
        %v1436 = vxor.u32 %v1180, %v1308
        %v1437 = vxor.u32 %v1181, %v1309
        %v1438 = vxor.u32 %v1182, %v1310
        %v1439 = vxor.u32 %v1183, %v1311
        %v1440 = vxor.u32 %v1184, %v1312
        %v1441 = vxor.u32 %v1185, %v1313
        %v1442 = vxor.u32 %v1186, %v1314
        %v1443 = vxor.u32 %v1187, %v1315
        %v1444 = vxor.u32 %v1188, %v1316
        %v1445 = vxor.u32 %v1189, %v1317
        %v1446 = vxor.u32 %v1190, %v1318
        %v1447 = vxor.u32 %v1191, %v1319
        %v1448 = vxor.u32 %v1192, %v1320
        %v1449 = vxor.u32 %v1193, %v1321
        %v1450 = vxor.u32 %v1194, %v1322
        %v1451 = vxor.u32 %v1195, %v1323
        %v1452 = vxor.u32 %v1196, %v1324
        %v1453 = vxor.u32 %v1197, %v1325
        %v1454 = vxor.u32 %v1198, %v1326
        %v1455 = vxor.u32 %v1199, %v1327
        %v1456 = vxor.u32 %v1200, %v1328
        %v1457 = vxor.u32 %v1201, %v1329
        %v1458 = vxor.u32 %v1202, %v1330
        %v1459 = vxor.u32 %v1203, %v1331
        %v1460 = vxor.u32 %v1204, %v1332
        %v1461 = vxor.u32 %v1205, %v1333
        %v1462 = vxor.u32 %v1206, %v1334
        %v1463 = vxor.u32 %v1207, %v1335
        %v1464 = vxor.u32 %v1208, %v1336
        %v1465 = vxor.u32 %v1209, %v1337
        %v1466 = vxor.u32 %v1210, %v1338
        %v1467 = vxor.u32 %v1211, %v1339
        %v1468 = vxor.u32 %v1212, %v1340
        %v1469 = vxor.u32 %v1213, %v1341
        %v1470 = vxor.u32 %v1214, %v1342
        %v1471 = vxor.u32 %v1215, %v1343
        %v1472 = vxor.u32 %v1216, %v1344
        %v1473 = vxor.u32 %v1217, %v1345
        %v1474 = vxor.u32 %v1218, %v1346
        %v1475 = vxor.u32 %v1219, %v1347
        %v1476 = vxor.u32 %v1220, %v1348
        %v1477 = vxor.u32 %v1221, %v1349
        %v1478 = vxor.u32 %v1222, %v1350
        %v1479 = vxor.u32 %v1223, %v1351
        %v1480 = vxor.u32 %v1224, %v1352
        %v1481 = vxor.u32 %v1225, %v1353
        %v1482 = vxor.u32 %v1226, %v1354
        %v1483 = vxor.u32 %v1227, %v1355
        %v1484 = vxor.u32 %v1228, %v1356
        %v1485 = vxor.u32 %v1229, %v1357
        %v1486 = vxor.u32 %v1230, %v1358
        %v1487 = vxor.u32 %v1231, %v1359
        %v1488 = vxor.u32 %v1232, %v1360
        %v1489 = vxor.u32 %v1233, %v1361
        %v1490 = vxor.u32 %v1234, %v1362
        %v1491 = vxor.u32 %v1235, %v1363
        %v1492 = vxor.u32 %v1236, %v1364
        %v1493 = vxor.u32 %v1237, %v1365
        %v1494 = vxor.u32 %v1238, %v1366
        %v1495 = vxor.u32 %v1239, %v1367
        %v1496 = vxor.u32 %v1240, %v1368
        %v1497 = vxor.u32 %v1241, %v1369
        %v1498 = vxor.u32 %v1242, %v1370
        %v1499 = vxor.u32 %v1243, %v1371
        %v1500 = vxor.u32 %v1244, %v1372
        %v1501 = vxor.u32 %v1245, %v1373
        %v1502 = vxor.u32 %v1246, %v1374
        %v1503 = vxor.u32 %v1247, %v1375
        %v1504 = vxor.u32 %v1248, %v1376
        %v1505 = vxor.u32 %v1249, %v1377
        %v1506 = vxor.u32 %v1250, %v1378
        %v1507 = vxor.u32 %v1251, %v1379
        %v1508 = vxor.u32 %v1252, %v1380
        %v1509 = vxor.u32 %v1253, %v1381
        %v1510 = vxor.u32 %v1254, %v1382
        %v1511 = vxor.u32 %v1255, %v1383
        %v1512 = vxor.u32 %v1256, %v1384
        %v1513 = vxor.u32 %v1257, %v1385
        %v1514 = vxor.u32 %v1258, %v1386
        %v1515 = vxor.u32 %v1259, %v1387
        %v1516 = vmul.u32 %v1388, 2146121005
        %v1517 = vmul.u32 %v1389, 2146121005
        %v1518 = vmul.u32 %v1390, 2146121005
        %v1519 = vmul.u32 %v1391, 2146121005
        %v1520 = vmul.u32 %v1392, 2146121005
        %v1521 = vmul.u32 %v1393, 2146121005
        %v1522 = vmul.u32 %v1394, 2146121005
        %v1523 = vmul.u32 %v1395, 2146121005
        %v1524 = vmul.u32 %v1396, 2146121005
        %v1525 = vmul.u32 %v1397, 2146121005
        %v1526 = vmul.u32 %v1398, 2146121005
        %v1527 = vmul.u32 %v1399, 2146121005
        %v1528 = vmul.u32 %v1400, 2146121005
        %v1529 = vmul.u32 %v1401, 2146121005
        %v1530 = vmul.u32 %v1402, 2146121005
        %v1531 = vmul.u32 %v1403, 2146121005
        %v1532 = vmul.u32 %v1404, 2146121005
        %v1533 = vmul.u32 %v1405, 2146121005
        %v1534 = vmul.u32 %v1406, 2146121005
        %v1535 = vmul.u32 %v1407, 2146121005
        %v1536 = vmul.u32 %v1408, 2146121005
        %v1537 = vmul.u32 %v1409, 2146121005
        %v1538 = vmul.u32 %v1410, 2146121005
        %v1539 = vmul.u32 %v1411, 2146121005
        %v1540 = vmul.u32 %v1412, 2146121005
        %v1541 = vmul.u32 %v1413, 2146121005
        %v1542 = vmul.u32 %v1414, 2146121005
        %v1543 = vmul.u32 %v1415, 2146121005
        %v1544 = vmul.u32 %v1416, 2146121005
        %v1545 = vmul.u32 %v1417, 2146121005
        %v1546 = vmul.u32 %v1418, 2146121005
        %v1547 = vmul.u32 %v1419, 2146121005
        %v1548 = vmul.u32 %v1420, 2146121005
        %v1549 = vmul.u32 %v1421, 2146121005
        %v1550 = vmul.u32 %v1422, 2146121005
        %v1551 = vmul.u32 %v1423, 2146121005
        %v1552 = vmul.u32 %v1424, 2146121005
        %v1553 = vmul.u32 %v1425, 2146121005
        %v1554 = vmul.u32 %v1426, 2146121005
        %v1555 = vmul.u32 %v1427, 2146121005
        %v1556 = vmul.u32 %v1428, 2146121005
        %v1557 = vmul.u32 %v1429, 2146121005
        %v1558 = vmul.u32 %v1430, 2146121005
        %v1559 = vmul.u32 %v1431, 2146121005
        %v1560 = vmul.u32 %v1432, 2146121005
        %v1561 = vmul.u32 %v1433, 2146121005
        %v1562 = vmul.u32 %v1434, 2146121005
        %v1563 = vmul.u32 %v1435, 2146121005
        %v1564 = vmul.u32 %v1436, 2146121005
        %v1565 = vmul.u32 %v1437, 2146121005
        %v1566 = vmul.u32 %v1438, 2146121005
        %v1567 = vmul.u32 %v1439, 2146121005
        %v1568 = vmul.u32 %v1440, 2146121005
        %v1569 = vmul.u32 %v1441, 2146121005
        %v1570 = vmul.u32 %v1442, 2146121005
        %v1571 = vmul.u32 %v1443, 2146121005
        %v1572 = vmul.u32 %v1444, 2146121005
        %v1573 = vmul.u32 %v1445, 2146121005
        %v1574 = vmul.u32 %v1446, 2146121005
        %v1575 = vmul.u32 %v1447, 2146121005
        %v1576 = vmul.u32 %v1448, 2146121005
        %v1577 = vmul.u32 %v1449, 2146121005
        %v1578 = vmul.u32 %v1450, 2146121005
        %v1579 = vmul.u32 %v1451, 2146121005
        %v1580 = vmul.u32 %v1452, 2146121005
        %v1581 = vmul.u32 %v1453, 2146121005
        %v1582 = vmul.u32 %v1454, 2146121005
        %v1583 = vmul.u32 %v1455, 2146121005
        %v1584 = vmul.u32 %v1456, 2146121005
        %v1585 = vmul.u32 %v1457, 2146121005
        %v1586 = vmul.u32 %v1458, 2146121005
        %v1587 = vmul.u32 %v1459, 2146121005
        %v1588 = vmul.u32 %v1460, 2146121005
        %v1589 = vmul.u32 %v1461, 2146121005
        %v1590 = vmul.u32 %v1462, 2146121005
        %v1591 = vmul.u32 %v1463, 2146121005
        %v1592 = vmul.u32 %v1464, 2146121005
        %v1593 = vmul.u32 %v1465, 2146121005
        %v1594 = vmul.u32 %v1466, 2146121005
        %v1595 = vmul.u32 %v1467, 2146121005
        %v1596 = vmul.u32 %v1468, 2146121005
        %v1597 = vmul.u32 %v1469, 2146121005
        %v1598 = vmul.u32 %v1470, 2146121005
        %v1599 = vmul.u32 %v1471, 2146121005
        %v1600 = vmul.u32 %v1472, 2146121005
        %v1601 = vmul.u32 %v1473, 2146121005
        %v1602 = vmul.u32 %v1474, 2146121005
        %v1603 = vmul.u32 %v1475, 2146121005
        %v1604 = vmul.u32 %v1476, 2146121005
        %v1605 = vmul.u32 %v1477, 2146121005
        %v1606 = vmul.u32 %v1478, 2146121005
        %v1607 = vmul.u32 %v1479, 2146121005
        %v1608 = vmul.u32 %v1480, 2146121005
        %v1609 = vmul.u32 %v1481, 2146121005
        %v1610 = vmul.u32 %v1482, 2146121005
        %v1611 = vmul.u32 %v1483, 2146121005
        %v1612 = vmul.u32 %v1484, 2146121005
        %v1613 = vmul.u32 %v1485, 2146121005
        %v1614 = vmul.u32 %v1486, 2146121005
        %v1615 = vmul.u32 %v1487, 2146121005
        %v1616 = vmul.u32 %v1488, 2146121005
        %v1617 = vmul.u32 %v1489, 2146121005
        %v1618 = vmul.u32 %v1490, 2146121005
        %v1619 = vmul.u32 %v1491, 2146121005
        %v1620 = vmul.u32 %v1492, 2146121005
        %v1621 = vmul.u32 %v1493, 2146121005
        %v1622 = vmul.u32 %v1494, 2146121005
        %v1623 = vmul.u32 %v1495, 2146121005
        %v1624 = vmul.u32 %v1496, 2146121005
        %v1625 = vmul.u32 %v1497, 2146121005
        %v1626 = vmul.u32 %v1498, 2146121005
        %v1627 = vmul.u32 %v1499, 2146121005
        %v1628 = vmul.u32 %v1500, 2146121005
        %v1629 = vmul.u32 %v1501, 2146121005
        %v1630 = vmul.u32 %v1502, 2146121005
        %v1631 = vmul.u32 %v1503, 2146121005
        %v1632 = vmul.u32 %v1504, 2146121005
        %v1633 = vmul.u32 %v1505, 2146121005
        %v1634 = vmul.u32 %v1506, 2146121005
        %v1635 = vmul.u32 %v1507, 2146121005
        %v1636 = vmul.u32 %v1508, 2146121005
        %v1637 = vmul.u32 %v1509, 2146121005
        %v1638 = vmul.u32 %v1510, 2146121005
        %v1639 = vmul.u32 %v1511, 2146121005
        %v1640 = vmul.u32 %v1512, 2146121005
        %v1641 = vmul.u32 %v1513, 2146121005
        %v1642 = vmul.u32 %v1514, 2146121005
        %v1643 = vmul.u32 %v1515, 2146121005
        %v1644 = vshrl.u32 %v1516, 15
        %v1645 = vshrl.u32 %v1517, 15
        %v1646 = vshrl.u32 %v1518, 15
        %v1647 = vshrl.u32 %v1519, 15
        %v1648 = vshrl.u32 %v1520, 15
        %v1649 = vshrl.u32 %v1521, 15
        %v1650 = vshrl.u32 %v1522, 15
        %v1651 = vshrl.u32 %v1523, 15
        %v1652 = vshrl.u32 %v1524, 15
        %v1653 = vshrl.u32 %v1525, 15
        %v1654 = vshrl.u32 %v1526, 15
        %v1655 = vshrl.u32 %v1527, 15
        %v1656 = vshrl.u32 %v1528, 15
        %v1657 = vshrl.u32 %v1529, 15
        %v1658 = vshrl.u32 %v1530, 15
        %v1659 = vshrl.u32 %v1531, 15
        %v1660 = vshrl.u32 %v1532, 15
        %v1661 = vshrl.u32 %v1533, 15
        %v1662 = vshrl.u32 %v1534, 15
        %v1663 = vshrl.u32 %v1535, 15
        %v1664 = vshrl.u32 %v1536, 15
        %v1665 = vshrl.u32 %v1537, 15
        %v1666 = vshrl.u32 %v1538, 15
        %v1667 = vshrl.u32 %v1539, 15
        %v1668 = vshrl.u32 %v1540, 15
        %v1669 = vshrl.u32 %v1541, 15
        %v1670 = vshrl.u32 %v1542, 15
        %v1671 = vshrl.u32 %v1543, 15
        %v1672 = vshrl.u32 %v1544, 15
        %v1673 = vshrl.u32 %v1545, 15
        %v1674 = vshrl.u32 %v1546, 15
        %v1675 = vshrl.u32 %v1547, 15
        %v1676 = vshrl.u32 %v1548, 15
        %v1677 = vshrl.u32 %v1549, 15
        %v1678 = vshrl.u32 %v1550, 15
        %v1679 = vshrl.u32 %v1551, 15
        %v1680 = vshrl.u32 %v1552, 15
        %v1681 = vshrl.u32 %v1553, 15
        %v1682 = vshrl.u32 %v1554, 15
        %v1683 = vshrl.u32 %v1555, 15
        %v1684 = vshrl.u32 %v1556, 15
        %v1685 = vshrl.u32 %v1557, 15
        %v1686 = vshrl.u32 %v1558, 15
        %v1687 = vshrl.u32 %v1559, 15
        %v1688 = vshrl.u32 %v1560, 15
        %v1689 = vshrl.u32 %v1561, 15
        %v1690 = vshrl.u32 %v1562, 15
        %v1691 = vshrl.u32 %v1563, 15
        %v1692 = vshrl.u32 %v1564, 15
        %v1693 = vshrl.u32 %v1565, 15
        %v1694 = vshrl.u32 %v1566, 15
        %v1695 = vshrl.u32 %v1567, 15
        %v1696 = vshrl.u32 %v1568, 15
        %v1697 = vshrl.u32 %v1569, 15
        %v1698 = vshrl.u32 %v1570, 15
        %v1699 = vshrl.u32 %v1571, 15
        %v1700 = vshrl.u32 %v1572, 15
        %v1701 = vshrl.u32 %v1573, 15
        %v1702 = vshrl.u32 %v1574, 15
        %v1703 = vshrl.u32 %v1575, 15
        %v1704 = vshrl.u32 %v1576, 15
        %v1705 = vshrl.u32 %v1577, 15
        %v1706 = vshrl.u32 %v1578, 15
        %v1707 = vshrl.u32 %v1579, 15
        %v1708 = vshrl.u32 %v1580, 15
        %v1709 = vshrl.u32 %v1581, 15
        %v1710 = vshrl.u32 %v1582, 15
        %v1711 = vshrl.u32 %v1583, 15
        %v1712 = vshrl.u32 %v1584, 15
        %v1713 = vshrl.u32 %v1585, 15
        %v1714 = vshrl.u32 %v1586, 15
        %v1715 = vshrl.u32 %v1587, 15
        %v1716 = vshrl.u32 %v1588, 15
        %v1717 = vshrl.u32 %v1589, 15
        %v1718 = vshrl.u32 %v1590, 15
        %v1719 = vshrl.u32 %v1591, 15
        %v1720 = vshrl.u32 %v1592, 15
        %v1721 = vshrl.u32 %v1593, 15
        %v1722 = vshrl.u32 %v1594, 15
        %v1723 = vshrl.u32 %v1595, 15
        %v1724 = vshrl.u32 %v1596, 15
        %v1725 = vshrl.u32 %v1597, 15
        %v1726 = vshrl.u32 %v1598, 15
        %v1727 = vshrl.u32 %v1599, 15
        %v1728 = vshrl.u32 %v1600, 15
        %v1729 = vshrl.u32 %v1601, 15
        %v1730 = vshrl.u32 %v1602, 15
        %v1731 = vshrl.u32 %v1603, 15
        %v1732 = vshrl.u32 %v1604, 15
        %v1733 = vshrl.u32 %v1605, 15
        %v1734 = vshrl.u32 %v1606, 15
        %v1735 = vshrl.u32 %v1607, 15
        %v1736 = vshrl.u32 %v1608, 15
        %v1737 = vshrl.u32 %v1609, 15
        %v1738 = vshrl.u32 %v1610, 15
        %v1739 = vshrl.u32 %v1611, 15
        %v1740 = vshrl.u32 %v1612, 15
        %v1741 = vshrl.u32 %v1613, 15
        %v1742 = vshrl.u32 %v1614, 15
        %v1743 = vshrl.u32 %v1615, 15
        %v1744 = vshrl.u32 %v1616, 15
        %v1745 = vshrl.u32 %v1617, 15
        %v1746 = vshrl.u32 %v1618, 15
        %v1747 = vshrl.u32 %v1619, 15
        %v1748 = vshrl.u32 %v1620, 15
        %v1749 = vshrl.u32 %v1621, 15
        %v1750 = vshrl.u32 %v1622, 15
        %v1751 = vshrl.u32 %v1623, 15
        %v1752 = vshrl.u32 %v1624, 15
        %v1753 = vshrl.u32 %v1625, 15
        %v1754 = vshrl.u32 %v1626, 15
        %v1755 = vshrl.u32 %v1627, 15
        %v1756 = vshrl.u32 %v1628, 15
        %v1757 = vshrl.u32 %v1629, 15
        %v1758 = vshrl.u32 %v1630, 15
        %v1759 = vshrl.u32 %v1631, 15
        %v1760 = vshrl.u32 %v1632, 15
        %v1761 = vshrl.u32 %v1633, 15
        %v1762 = vshrl.u32 %v1634, 15
        %v1763 = vshrl.u32 %v1635, 15
        %v1764 = vshrl.u32 %v1636, 15
        %v1765 = vshrl.u32 %v1637, 15
        %v1766 = vshrl.u32 %v1638, 15
        %v1767 = vshrl.u32 %v1639, 15
        %v1768 = vshrl.u32 %v1640, 15
        %v1769 = vshrl.u32 %v1641, 15
        %v1770 = vshrl.u32 %v1642, 15
        %v1771 = vshrl.u32 %v1643, 15
        %v1772 = vxor.u32 %v1516, %v1644
        %v1773 = vxor.u32 %v1517, %v1645
        %v1774 = vxor.u32 %v1518, %v1646
        %v1775 = vxor.u32 %v1519, %v1647
        %v1776 = vxor.u32 %v1520, %v1648
        %v1777 = vxor.u32 %v1521, %v1649
        %v1778 = vxor.u32 %v1522, %v1650
        %v1779 = vxor.u32 %v1523, %v1651
        %v1780 = vxor.u32 %v1524, %v1652
        %v1781 = vxor.u32 %v1525, %v1653
        %v1782 = vxor.u32 %v1526, %v1654
        %v1783 = vxor.u32 %v1527, %v1655
        %v1784 = vxor.u32 %v1528, %v1656
        %v1785 = vxor.u32 %v1529, %v1657
        %v1786 = vxor.u32 %v1530, %v1658
        %v1787 = vxor.u32 %v1531, %v1659
        %v1788 = vxor.u32 %v1532, %v1660
        %v1789 = vxor.u32 %v1533, %v1661
        %v1790 = vxor.u32 %v1534, %v1662
        %v1791 = vxor.u32 %v1535, %v1663
        %v1792 = vxor.u32 %v1536, %v1664
        %v1793 = vxor.u32 %v1537, %v1665
        %v1794 = vxor.u32 %v1538, %v1666
        %v1795 = vxor.u32 %v1539, %v1667
        %v1796 = vxor.u32 %v1540, %v1668
        %v1797 = vxor.u32 %v1541, %v1669
        %v1798 = vxor.u32 %v1542, %v1670
        %v1799 = vxor.u32 %v1543, %v1671
        %v1800 = vxor.u32 %v1544, %v1672
        %v1801 = vxor.u32 %v1545, %v1673
        %v1802 = vxor.u32 %v1546, %v1674
        %v1803 = vxor.u32 %v1547, %v1675
        %v1804 = vxor.u32 %v1548, %v1676
        %v1805 = vxor.u32 %v1549, %v1677
        %v1806 = vxor.u32 %v1550, %v1678
        %v1807 = vxor.u32 %v1551, %v1679
        %v1808 = vxor.u32 %v1552, %v1680
        %v1809 = vxor.u32 %v1553, %v1681
        %v1810 = vxor.u32 %v1554, %v1682
        %v1811 = vxor.u32 %v1555, %v1683
        %v1812 = vxor.u32 %v1556, %v1684
        %v1813 = vxor.u32 %v1557, %v1685
        %v1814 = vxor.u32 %v1558, %v1686
        %v1815 = vxor.u32 %v1559, %v1687
        %v1816 = vxor.u32 %v1560, %v1688
        %v1817 = vxor.u32 %v1561, %v1689
        %v1818 = vxor.u32 %v1562, %v1690
        %v1819 = vxor.u32 %v1563, %v1691
        %v1820 = vxor.u32 %v1564, %v1692
        %v1821 = vxor.u32 %v1565, %v1693
        %v1822 = vxor.u32 %v1566, %v1694
        %v1823 = vxor.u32 %v1567, %v1695
        %v1824 = vxor.u32 %v1568, %v1696
        %v1825 = vxor.u32 %v1569, %v1697
        %v1826 = vxor.u32 %v1570, %v1698
        %v1827 = vxor.u32 %v1571, %v1699
        %v1828 = vxor.u32 %v1572, %v1700
        %v1829 = vxor.u32 %v1573, %v1701
        %v1830 = vxor.u32 %v1574, %v1702
        %v1831 = vxor.u32 %v1575, %v1703
        %v1832 = vxor.u32 %v1576, %v1704
        %v1833 = vxor.u32 %v1577, %v1705
        %v1834 = vxor.u32 %v1578, %v1706
        %v1835 = vxor.u32 %v1579, %v1707
        %v1836 = vxor.u32 %v1580, %v1708
        %v1837 = vxor.u32 %v1581, %v1709
        %v1838 = vxor.u32 %v1582, %v1710
        %v1839 = vxor.u32 %v1583, %v1711
        %v1840 = vxor.u32 %v1584, %v1712
        %v1841 = vxor.u32 %v1585, %v1713
        %v1842 = vxor.u32 %v1586, %v1714
        %v1843 = vxor.u32 %v1587, %v1715
        %v1844 = vxor.u32 %v1588, %v1716
        %v1845 = vxor.u32 %v1589, %v1717
        %v1846 = vxor.u32 %v1590, %v1718
        %v1847 = vxor.u32 %v1591, %v1719
        %v1848 = vxor.u32 %v1592, %v1720
        %v1849 = vxor.u32 %v1593, %v1721
        %v1850 = vxor.u32 %v1594, %v1722
        %v1851 = vxor.u32 %v1595, %v1723
        %v1852 = vxor.u32 %v1596, %v1724
        %v1853 = vxor.u32 %v1597, %v1725
        %v1854 = vxor.u32 %v1598, %v1726
        %v1855 = vxor.u32 %v1599, %v1727
        %v1856 = vxor.u32 %v1600, %v1728
        %v1857 = vxor.u32 %v1601, %v1729
        %v1858 = vxor.u32 %v1602, %v1730
        %v1859 = vxor.u32 %v1603, %v1731
        %v1860 = vxor.u32 %v1604, %v1732
        %v1861 = vxor.u32 %v1605, %v1733
        %v1862 = vxor.u32 %v1606, %v1734
        %v1863 = vxor.u32 %v1607, %v1735
        %v1864 = vxor.u32 %v1608, %v1736
        %v1865 = vxor.u32 %v1609, %v1737
        %v1866 = vxor.u32 %v1610, %v1738
        %v1867 = vxor.u32 %v1611, %v1739
        %v1868 = vxor.u32 %v1612, %v1740
        %v1869 = vxor.u32 %v1613, %v1741
        %v1870 = vxor.u32 %v1614, %v1742
        %v1871 = vxor.u32 %v1615, %v1743
        %v1872 = vxor.u32 %v1616, %v1744
        %v1873 = vxor.u32 %v1617, %v1745
        %v1874 = vxor.u32 %v1618, %v1746
        %v1875 = vxor.u32 %v1619, %v1747
        %v1876 = vxor.u32 %v1620, %v1748
        %v1877 = vxor.u32 %v1621, %v1749
        %v1878 = vxor.u32 %v1622, %v1750
        %v1879 = vxor.u32 %v1623, %v1751
        %v1880 = vxor.u32 %v1624, %v1752
        %v1881 = vxor.u32 %v1625, %v1753
        %v1882 = vxor.u32 %v1626, %v1754
        %v1883 = vxor.u32 %v1627, %v1755
        %v1884 = vxor.u32 %v1628, %v1756
        %v1885 = vxor.u32 %v1629, %v1757
        %v1886 = vxor.u32 %v1630, %v1758
        %v1887 = vxor.u32 %v1631, %v1759
        %v1888 = vxor.u32 %v1632, %v1760
        %v1889 = vxor.u32 %v1633, %v1761
        %v1890 = vxor.u32 %v1634, %v1762
        %v1891 = vxor.u32 %v1635, %v1763
        %v1892 = vxor.u32 %v1636, %v1764
        %v1893 = vxor.u32 %v1637, %v1765
        %v1894 = vxor.u32 %v1638, %v1766
        %v1895 = vxor.u32 %v1639, %v1767
        %v1896 = vxor.u32 %v1640, %v1768
        %v1897 = vxor.u32 %v1641, %v1769
        %v1898 = vxor.u32 %v1642, %v1770
        %v1899 = vxor.u32 %v1643, %v1771
        %v1900 = vadd.s32 %v1772, 2147483648
        %vm1902 = vcmp.ge.s32.totalorder %v1900, 3006477107
        %v1903 = vadd.s32 %v1773, 2147483648
        %vm1905 = vcmp.ge.s32.totalorder %v1903, 3006477107
        %v1906 = vadd.s32 %v1774, 2147483648
        %vm1908 = vcmp.ge.s32.totalorder %v1906, 3006477107
        %v1909 = vadd.s32 %v1775, 2147483648
        %vm1911 = vcmp.ge.s32.totalorder %v1909, 3006477107
        %v1912 = vadd.s32 %v1776, 2147483648
        %vm1914 = vcmp.ge.s32.totalorder %v1912, 3006477107
        %v1915 = vadd.s32 %v1777, 2147483648
        %vm1917 = vcmp.ge.s32.totalorder %v1915, 3006477107
        %v1918 = vadd.s32 %v1778, 2147483648
        %vm1920 = vcmp.ge.s32.totalorder %v1918, 3006477107
        %v1921 = vadd.s32 %v1779, 2147483648
        %vm1923 = vcmp.ge.s32.totalorder %v1921, 3006477107
        %v1924 = vadd.s32 %v1780, 2147483648
        %vm1926 = vcmp.ge.s32.totalorder %v1924, 3006477107
        %v1927 = vadd.s32 %v1781, 2147483648
        %vm1929 = vcmp.ge.s32.totalorder %v1927, 3006477107
        %v1930 = vadd.s32 %v1782, 2147483648
        %vm1932 = vcmp.ge.s32.totalorder %v1930, 3006477107
        %v1933 = vadd.s32 %v1783, 2147483648
        %vm1935 = vcmp.ge.s32.totalorder %v1933, 3006477107
        %v1936 = vadd.s32 %v1784, 2147483648
        %vm1938 = vcmp.ge.s32.totalorder %v1936, 3006477107
        %v1939 = vadd.s32 %v1785, 2147483648
        %vm1941 = vcmp.ge.s32.totalorder %v1939, 3006477107
        %v1942 = vadd.s32 %v1786, 2147483648
        %vm1944 = vcmp.ge.s32.totalorder %v1942, 3006477107
        %v1945 = vadd.s32 %v1787, 2147483648
        %vm1947 = vcmp.ge.s32.totalorder %v1945, 3006477107
        %v1948 = vadd.s32 %v1788, 2147483648
        %vm1950 = vcmp.ge.s32.totalorder %v1948, 3006477107
        %v1951 = vadd.s32 %v1789, 2147483648
        %vm1953 = vcmp.ge.s32.totalorder %v1951, 3006477107
        %v1954 = vadd.s32 %v1790, 2147483648
        %vm1956 = vcmp.ge.s32.totalorder %v1954, 3006477107
        %v1957 = vadd.s32 %v1791, 2147483648
        %vm1959 = vcmp.ge.s32.totalorder %v1957, 3006477107
        %v1960 = vadd.s32 %v1792, 2147483648
        %vm1962 = vcmp.ge.s32.totalorder %v1960, 3006477107
        %v1963 = vadd.s32 %v1793, 2147483648
        %vm1965 = vcmp.ge.s32.totalorder %v1963, 3006477107
        %v1966 = vadd.s32 %v1794, 2147483648
        %vm1968 = vcmp.ge.s32.totalorder %v1966, 3006477107
        %v1969 = vadd.s32 %v1795, 2147483648
        %vm1971 = vcmp.ge.s32.totalorder %v1969, 3006477107
        %v1972 = vadd.s32 %v1796, 2147483648
        %vm1974 = vcmp.ge.s32.totalorder %v1972, 3006477107
        %v1975 = vadd.s32 %v1797, 2147483648
        %vm1977 = vcmp.ge.s32.totalorder %v1975, 3006477107
        %v1978 = vadd.s32 %v1798, 2147483648
        %vm1980 = vcmp.ge.s32.totalorder %v1978, 3006477107
        %v1981 = vadd.s32 %v1799, 2147483648
        %vm1983 = vcmp.ge.s32.totalorder %v1981, 3006477107
        %v1984 = vadd.s32 %v1800, 2147483648
        %vm1986 = vcmp.ge.s32.totalorder %v1984, 3006477107
        %v1987 = vadd.s32 %v1801, 2147483648
        %vm1989 = vcmp.ge.s32.totalorder %v1987, 3006477107
        %v1990 = vadd.s32 %v1802, 2147483648
        %vm1992 = vcmp.ge.s32.totalorder %v1990, 3006477107
        %v1993 = vadd.s32 %v1803, 2147483648
        %vm1995 = vcmp.ge.s32.totalorder %v1993, 3006477107
        %v1996 = vadd.s32 %v1804, 2147483648
        %vm1998 = vcmp.ge.s32.totalorder %v1996, 3006477107
        %v1999 = vadd.s32 %v1805, 2147483648
        %vm2001 = vcmp.ge.s32.totalorder %v1999, 3006477107
        %v2002 = vadd.s32 %v1806, 2147483648
        %vm2004 = vcmp.ge.s32.totalorder %v2002, 3006477107
        %v2005 = vadd.s32 %v1807, 2147483648
        %vm2007 = vcmp.ge.s32.totalorder %v2005, 3006477107
        %v2008 = vadd.s32 %v1808, 2147483648
        %vm2010 = vcmp.ge.s32.totalorder %v2008, 3006477107
        %v2011 = vadd.s32 %v1809, 2147483648
        %vm2013 = vcmp.ge.s32.totalorder %v2011, 3006477107
        %v2014 = vadd.s32 %v1810, 2147483648
        %vm2016 = vcmp.ge.s32.totalorder %v2014, 3006477107
        %v2017 = vadd.s32 %v1811, 2147483648
        %vm2019 = vcmp.ge.s32.totalorder %v2017, 3006477107
        %v2020 = vadd.s32 %v1812, 2147483648
        %vm2022 = vcmp.ge.s32.totalorder %v2020, 3006477107
        %v2023 = vadd.s32 %v1813, 2147483648
        %vm2025 = vcmp.ge.s32.totalorder %v2023, 3006477107
        %v2026 = vadd.s32 %v1814, 2147483648
        %vm2028 = vcmp.ge.s32.totalorder %v2026, 3006477107
        %v2029 = vadd.s32 %v1815, 2147483648
        %vm2031 = vcmp.ge.s32.totalorder %v2029, 3006477107
        %v2032 = vadd.s32 %v1816, 2147483648
        %vm2034 = vcmp.ge.s32.totalorder %v2032, 3006477107
        %v2035 = vadd.s32 %v1817, 2147483648
        %vm2037 = vcmp.ge.s32.totalorder %v2035, 3006477107
        %v2038 = vadd.s32 %v1818, 2147483648
        %vm2040 = vcmp.ge.s32.totalorder %v2038, 3006477107
        %v2041 = vadd.s32 %v1819, 2147483648
        %vm2043 = vcmp.ge.s32.totalorder %v2041, 3006477107
        %v2044 = vadd.s32 %v1820, 2147483648
        %vm2046 = vcmp.ge.s32.totalorder %v2044, 3006477107
        %v2047 = vadd.s32 %v1821, 2147483648
        %vm2049 = vcmp.ge.s32.totalorder %v2047, 3006477107
        %v2050 = vadd.s32 %v1822, 2147483648
        %vm2052 = vcmp.ge.s32.totalorder %v2050, 3006477107
        %v2053 = vadd.s32 %v1823, 2147483648
        %vm2055 = vcmp.ge.s32.totalorder %v2053, 3006477107
        %v2056 = vadd.s32 %v1824, 2147483648
        %vm2058 = vcmp.ge.s32.totalorder %v2056, 3006477107
        %v2059 = vadd.s32 %v1825, 2147483648
        %vm2061 = vcmp.ge.s32.totalorder %v2059, 3006477107
        %v2062 = vadd.s32 %v1826, 2147483648
        %vm2064 = vcmp.ge.s32.totalorder %v2062, 3006477107
        %v2065 = vadd.s32 %v1827, 2147483648
        %vm2067 = vcmp.ge.s32.totalorder %v2065, 3006477107
        %v2068 = vadd.s32 %v1828, 2147483648
        %vm2070 = vcmp.ge.s32.totalorder %v2068, 3006477107
        %v2071 = vadd.s32 %v1829, 2147483648
        %vm2073 = vcmp.ge.s32.totalorder %v2071, 3006477107
        %v2074 = vadd.s32 %v1830, 2147483648
        %vm2076 = vcmp.ge.s32.totalorder %v2074, 3006477107
        %v2077 = vadd.s32 %v1831, 2147483648
        %vm2079 = vcmp.ge.s32.totalorder %v2077, 3006477107
        %v2080 = vadd.s32 %v1832, 2147483648
        %vm2082 = vcmp.ge.s32.totalorder %v2080, 3006477107
        %v2083 = vadd.s32 %v1833, 2147483648
        %vm2085 = vcmp.ge.s32.totalorder %v2083, 3006477107
        %v2086 = vadd.s32 %v1834, 2147483648
        %vm2088 = vcmp.ge.s32.totalorder %v2086, 3006477107
        %v2089 = vadd.s32 %v1835, 2147483648
        %vm2091 = vcmp.ge.s32.totalorder %v2089, 3006477107
        %v2092 = vadd.s32 %v1836, 2147483648
        %vm2094 = vcmp.ge.s32.totalorder %v2092, 3006477107
        %v2095 = vadd.s32 %v1837, 2147483648
        %vm2097 = vcmp.ge.s32.totalorder %v2095, 3006477107
        %v2098 = vadd.s32 %v1838, 2147483648
        %vm2100 = vcmp.ge.s32.totalorder %v2098, 3006477107
        %v2101 = vadd.s32 %v1839, 2147483648
        %vm2103 = vcmp.ge.s32.totalorder %v2101, 3006477107
        %v2104 = vadd.s32 %v1840, 2147483648
        %vm2106 = vcmp.ge.s32.totalorder %v2104, 3006477107
        %v2107 = vadd.s32 %v1841, 2147483648
        %vm2109 = vcmp.ge.s32.totalorder %v2107, 3006477107
        %v2110 = vadd.s32 %v1842, 2147483648
        %vm2112 = vcmp.ge.s32.totalorder %v2110, 3006477107
        %v2113 = vadd.s32 %v1843, 2147483648
        %vm2115 = vcmp.ge.s32.totalorder %v2113, 3006477107
        %v2116 = vadd.s32 %v1844, 2147483648
        %vm2118 = vcmp.ge.s32.totalorder %v2116, 3006477107
        %v2119 = vadd.s32 %v1845, 2147483648
        %vm2121 = vcmp.ge.s32.totalorder %v2119, 3006477107
        %v2122 = vadd.s32 %v1846, 2147483648
        %vm2124 = vcmp.ge.s32.totalorder %v2122, 3006477107
        %v2125 = vadd.s32 %v1847, 2147483648
        %vm2127 = vcmp.ge.s32.totalorder %v2125, 3006477107
        %v2128 = vadd.s32 %v1848, 2147483648
        %vm2130 = vcmp.ge.s32.totalorder %v2128, 3006477107
        %v2131 = vadd.s32 %v1849, 2147483648
        %vm2133 = vcmp.ge.s32.totalorder %v2131, 3006477107
        %v2134 = vadd.s32 %v1850, 2147483648
        %vm2136 = vcmp.ge.s32.totalorder %v2134, 3006477107
        %v2137 = vadd.s32 %v1851, 2147483648
        %vm2139 = vcmp.ge.s32.totalorder %v2137, 3006477107
        %v2140 = vadd.s32 %v1852, 2147483648
        %vm2142 = vcmp.ge.s32.totalorder %v2140, 3006477107
        %v2143 = vadd.s32 %v1853, 2147483648
        %vm2145 = vcmp.ge.s32.totalorder %v2143, 3006477107
        %v2146 = vadd.s32 %v1854, 2147483648
        %vm2148 = vcmp.ge.s32.totalorder %v2146, 3006477107
        %v2149 = vadd.s32 %v1855, 2147483648
        %vm2151 = vcmp.ge.s32.totalorder %v2149, 3006477107
        %v2152 = vadd.s32 %v1856, 2147483648
        %vm2154 = vcmp.ge.s32.totalorder %v2152, 3006477107
        %v2155 = vadd.s32 %v1857, 2147483648
        %vm2157 = vcmp.ge.s32.totalorder %v2155, 3006477107
        %v2158 = vadd.s32 %v1858, 2147483648
        %vm2160 = vcmp.ge.s32.totalorder %v2158, 3006477107
        %v2161 = vadd.s32 %v1859, 2147483648
        %vm2163 = vcmp.ge.s32.totalorder %v2161, 3006477107
        %v2164 = vadd.s32 %v1860, 2147483648
        %vm2166 = vcmp.ge.s32.totalorder %v2164, 3006477107
        %v2167 = vadd.s32 %v1861, 2147483648
        %vm2169 = vcmp.ge.s32.totalorder %v2167, 3006477107
        %v2170 = vadd.s32 %v1862, 2147483648
        %vm2172 = vcmp.ge.s32.totalorder %v2170, 3006477107
        %v2173 = vadd.s32 %v1863, 2147483648
        %vm2175 = vcmp.ge.s32.totalorder %v2173, 3006477107
        %v2176 = vadd.s32 %v1864, 2147483648
        %vm2178 = vcmp.ge.s32.totalorder %v2176, 3006477107
        %v2179 = vadd.s32 %v1865, 2147483648
        %vm2181 = vcmp.ge.s32.totalorder %v2179, 3006477107
        %v2182 = vadd.s32 %v1866, 2147483648
        %vm2184 = vcmp.ge.s32.totalorder %v2182, 3006477107
        %v2185 = vadd.s32 %v1867, 2147483648
        %vm2187 = vcmp.ge.s32.totalorder %v2185, 3006477107
        %v2188 = vadd.s32 %v1868, 2147483648
        %vm2190 = vcmp.ge.s32.totalorder %v2188, 3006477107
        %v2191 = vadd.s32 %v1869, 2147483648
        %vm2193 = vcmp.ge.s32.totalorder %v2191, 3006477107
        %v2194 = vadd.s32 %v1870, 2147483648
        %vm2196 = vcmp.ge.s32.totalorder %v2194, 3006477107
        %v2197 = vadd.s32 %v1871, 2147483648
        %vm2199 = vcmp.ge.s32.totalorder %v2197, 3006477107
        %v2200 = vadd.s32 %v1872, 2147483648
        %vm2202 = vcmp.ge.s32.totalorder %v2200, 3006477107
        %v2203 = vadd.s32 %v1873, 2147483648
        %vm2205 = vcmp.ge.s32.totalorder %v2203, 3006477107
        %v2206 = vadd.s32 %v1874, 2147483648
        %vm2208 = vcmp.ge.s32.totalorder %v2206, 3006477107
        %v2209 = vadd.s32 %v1875, 2147483648
        %vm2211 = vcmp.ge.s32.totalorder %v2209, 3006477107
        %v2212 = vadd.s32 %v1876, 2147483648
        %vm2214 = vcmp.ge.s32.totalorder %v2212, 3006477107
        %v2215 = vadd.s32 %v1877, 2147483648
        %vm2217 = vcmp.ge.s32.totalorder %v2215, 3006477107
        %v2218 = vadd.s32 %v1878, 2147483648
        %vm2220 = vcmp.ge.s32.totalorder %v2218, 3006477107
        %v2221 = vadd.s32 %v1879, 2147483648
        %vm2223 = vcmp.ge.s32.totalorder %v2221, 3006477107
        %v2224 = vadd.s32 %v1880, 2147483648
        %vm2226 = vcmp.ge.s32.totalorder %v2224, 3006477107
        %v2227 = vadd.s32 %v1881, 2147483648
        %vm2229 = vcmp.ge.s32.totalorder %v2227, 3006477107
        %v2230 = vadd.s32 %v1882, 2147483648
        %vm2232 = vcmp.ge.s32.totalorder %v2230, 3006477107
        %v2233 = vadd.s32 %v1883, 2147483648
        %vm2235 = vcmp.ge.s32.totalorder %v2233, 3006477107
        %v2236 = vadd.s32 %v1884, 2147483648
        %vm2238 = vcmp.ge.s32.totalorder %v2236, 3006477107
        %v2239 = vadd.s32 %v1885, 2147483648
        %vm2241 = vcmp.ge.s32.totalorder %v2239, 3006477107
        %v2242 = vadd.s32 %v1886, 2147483648
        %vm2244 = vcmp.ge.s32.totalorder %v2242, 3006477107
        %v2245 = vadd.s32 %v1887, 2147483648
        %vm2247 = vcmp.ge.s32.totalorder %v2245, 3006477107
        %v2248 = vadd.s32 %v1888, 2147483648
        %vm2250 = vcmp.ge.s32.totalorder %v2248, 3006477107
        %v2251 = vadd.s32 %v1889, 2147483648
        %vm2253 = vcmp.ge.s32.totalorder %v2251, 3006477107
        %v2254 = vadd.s32 %v1890, 2147483648
        %vm2256 = vcmp.ge.s32.totalorder %v2254, 3006477107
        %v2257 = vadd.s32 %v1891, 2147483648
        %vm2259 = vcmp.ge.s32.totalorder %v2257, 3006477107
        %v2260 = vadd.s32 %v1892, 2147483648
        %vm2262 = vcmp.ge.s32.totalorder %v2260, 3006477107
        %v2263 = vadd.s32 %v1893, 2147483648
        %vm2265 = vcmp.ge.s32.totalorder %v2263, 3006477107
        %v2266 = vadd.s32 %v1894, 2147483648
        %vm2268 = vcmp.ge.s32.totalorder %v2266, 3006477107
        %v2269 = vadd.s32 %v1895, 2147483648
        %vm2271 = vcmp.ge.s32.totalorder %v2269, 3006477107
        %v2272 = vadd.s32 %v1896, 2147483648
        %vm2274 = vcmp.ge.s32.totalorder %v2272, 3006477107
        %v2275 = vadd.s32 %v1897, 2147483648
        %vm2277 = vcmp.ge.s32.totalorder %v2275, 3006477107
        %v2278 = vadd.s32 %v1898, 2147483648
        %vm2280 = vcmp.ge.s32.totalorder %v2278, 3006477107
        %v2281 = vadd.s32 %v1899, 2147483648
        %vm2283 = vcmp.ge.s32.totalorder %v2281, 3006477107
        %v2284 = vpack.c.bf16 %v734, %v645
        %v2285 = vpack.c.bf16 %v912, %v823
        %v2286 = vpack.c.bf16 %v736, %v647
        %v2287 = vpack.c.bf16 %v914, %v825
        %v2288 = vpack.c.bf16 %v739, %v650
        %v2289 = vpack.c.bf16 %v917, %v828
        %v2290 = vpack.c.bf16 %v741, %v652
        %v2291 = vpack.c.bf16 %v919, %v830
        %v2292 = vpack.c.bf16 %v744, %v655
        %v2293 = vpack.c.bf16 %v922, %v833
        %v2294 = vpack.c.bf16 %v746, %v657
        %v2295 = vpack.c.bf16 %v924, %v835
        %v2296 = vpack.c.bf16 %v749, %v660
        %v2297 = vpack.c.bf16 %v927, %v838
        %v2298 = vpack.c.bf16 %v751, %v662
        %v2299 = vpack.c.bf16 %v929, %v840
        %v2300 = vpack.c.bf16 %v754, %v665
        %v2301 = vpack.c.bf16 %v932, %v843
        %v2302 = vpack.c.bf16 %v756, %v667
        %v2303 = vpack.c.bf16 %v934, %v845
        %v2304 = vpack.c.bf16 %v759, %v670
        %v2305 = vpack.c.bf16 %v937, %v848
        %v2306 = vpack.c.bf16 %v761, %v672
        %v2307 = vpack.c.bf16 %v939, %v850
        %v2308 = vpack.c.bf16 %v764, %v675
        %v2309 = vpack.c.bf16 %v942, %v853
        %v2310 = vpack.c.bf16 %v766, %v677
        %v2311 = vpack.c.bf16 %v944, %v855
        %v2312 = vpack.c.bf16 %v769, %v680
        %v2313 = vpack.c.bf16 %v947, %v858
        %v2314 = vpack.c.bf16 %v771, %v682
        %v2315 = vpack.c.bf16 %v949, %v860
        %v2316 = vpack.c.bf16 %v774, %v685
        %v2317 = vpack.c.bf16 %v952, %v863
        %v2318 = vpack.c.bf16 %v776, %v687
        %v2319 = vpack.c.bf16 %v954, %v865
        %v2320 = vpack.c.bf16 %v779, %v690
        %v2321 = vpack.c.bf16 %v957, %v868
        %v2322 = vpack.c.bf16 %v781, %v692
        %v2323 = vpack.c.bf16 %v959, %v870
        %v2324 = vpack.c.bf16 %v784, %v695
        %v2325 = vpack.c.bf16 %v962, %v873
        %v2326 = vpack.c.bf16 %v786, %v697
        %v2327 = vpack.c.bf16 %v964, %v875
        %v2328 = vpack.c.bf16 %v789, %v700
        %v2329 = vpack.c.bf16 %v967, %v878
        %v2330 = vpack.c.bf16 %v791, %v702
        %v2331 = vpack.c.bf16 %v969, %v880
        %v2332 = vpack.c.bf16 %v794, %v705
        %v2333 = vpack.c.bf16 %v972, %v883
        %v2334 = vpack.c.bf16 %v796, %v707
        %v2335 = vpack.c.bf16 %v974, %v885
        %v2336 = vpack.c.bf16 %v799, %v710
        %v2337 = vpack.c.bf16 %v977, %v888
        %v2338 = vpack.c.bf16 %v801, %v712
        %v2339 = vpack.c.bf16 %v979, %v890
        %v2340 = vpack.c.bf16 %v804, %v715
        %v2341 = vpack.c.bf16 %v982, %v893
        %v2342 = vpack.c.bf16 %v806, %v717
        %v2343 = vpack.c.bf16 %v984, %v895
        %v2344 = vpack.c.bf16 %v809, %v720
        %v2345 = vpack.c.bf16 %v987, %v898
        %v2346 = vpack.c.bf16 %v811, %v722
        %v2347 = vpack.c.bf16 %v989, %v900
        %vm2348 = vmpackc.low %vm1905, %vm1902
        %vm2349 = vmpackc.low %vm1911, %vm1908
        %vm2350 = vmpackc.low %vm1917, %vm1914
        %vm2351 = vmpackc.low %vm1923, %vm1920
        %vm2352 = vmpackc.low %vm1929, %vm1926
        %vm2353 = vmpackc.low %vm1935, %vm1932
        %vm2354 = vmpackc.low %vm1941, %vm1938
        %vm2355 = vmpackc.low %vm1947, %vm1944
        %vm2356 = vmpackc.low %vm1953, %vm1950
        %vm2357 = vmpackc.low %vm1959, %vm1956
        %vm2358 = vmpackc.low %vm1965, %vm1962
        %vm2359 = vmpackc.low %vm1971, %vm1968
        %vm2360 = vmpackc.low %vm1977, %vm1974
        %vm2361 = vmpackc.low %vm1983, %vm1980
        %vm2362 = vmpackc.low %vm1989, %vm1986
        %vm2363 = vmpackc.low %vm1995, %vm1992
        %vm2364 = vmpackc.low %vm2001, %vm1998
        %vm2365 = vmpackc.low %vm2007, %vm2004
        %vm2366 = vmpackc.low %vm2013, %vm2010
        %vm2367 = vmpackc.low %vm2019, %vm2016
        %vm2368 = vmpackc.low %vm2025, %vm2022
        %vm2369 = vmpackc.low %vm2031, %vm2028
        %vm2370 = vmpackc.low %vm2037, %vm2034
        %vm2371 = vmpackc.low %vm2043, %vm2040
        %vm2372 = vmpackc.low %vm2049, %vm2046
        %vm2373 = vmpackc.low %vm2055, %vm2052
        %vm2374 = vmpackc.low %vm2061, %vm2058
        %vm2375 = vmpackc.low %vm2067, %vm2064
        %vm2376 = vmpackc.low %vm2073, %vm2070
        %vm2377 = vmpackc.low %vm2079, %vm2076
        %vm2378 = vmpackc.low %vm2085, %vm2082
        %vm2379 = vmpackc.low %vm2091, %vm2088
        %vm2380 = vmpackc.low %vm2097, %vm2094
        %vm2381 = vmpackc.low %vm2103, %vm2100
        %vm2382 = vmpackc.low %vm2109, %vm2106
        %vm2383 = vmpackc.low %vm2115, %vm2112
        %vm2384 = vmpackc.low %vm2121, %vm2118
        %vm2385 = vmpackc.low %vm2127, %vm2124
        %vm2386 = vmpackc.low %vm2133, %vm2130
        %vm2387 = vmpackc.low %vm2139, %vm2136
        %vm2388 = vmpackc.low %vm2145, %vm2142
        %vm2389 = vmpackc.low %vm2151, %vm2148
        %vm2390 = vmpackc.low %vm2157, %vm2154
        %vm2391 = vmpackc.low %vm2163, %vm2160
        %vm2392 = vmpackc.low %vm2169, %vm2166
        %vm2393 = vmpackc.low %vm2175, %vm2172
        %vm2394 = vmpackc.low %vm2181, %vm2178
        %vm2395 = vmpackc.low %vm2187, %vm2184
        %vm2396 = vmpackc.low %vm2193, %vm2190
        %vm2397 = vmpackc.low %vm2199, %vm2196
        %vm2398 = vmpackc.low %vm2205, %vm2202
        %vm2399 = vmpackc.low %vm2211, %vm2208
        %vm2400 = vmpackc.low %vm2217, %vm2214
        %vm2401 = vmpackc.low %vm2223, %vm2220
        %vm2402 = vmpackc.low %vm2229, %vm2226
        %vm2403 = vmpackc.low %vm2235, %vm2232
        %vm2404 = vmpackc.low %vm2241, %vm2238
        %vm2405 = vmpackc.low %vm2247, %vm2244
        %vm2406 = vmpackc.low %vm2253, %vm2250
        %vm2407 = vmpackc.low %vm2259, %vm2256
        %vm2408 = vmpackc.low %vm2265, %vm2262
        %vm2409 = vmpackc.low %vm2271, %vm2268
        %vm2410 = vmpackc.low %vm2277, %vm2274
        %vm2411 = vmpackc.low %vm2283, %vm2280
        %v2412 = vsel %vm2348, %v2284, 0
        %v2413 = vsel %vm2349, %v2285, 0
        %v2414 = vsel %vm2350, %v2286, 0
        %v2415 = vsel %vm2351, %v2287, 0
        %v2416 = vsel %vm2352, %v2288, 0
        %v2417 = vsel %vm2353, %v2289, 0
        %v2418 = vsel %vm2354, %v2290, 0
        %v2419 = vsel %vm2355, %v2291, 0
        %v2420 = vsel %vm2356, %v2292, 0
        %v2421 = vsel %vm2357, %v2293, 0
        %v2422 = vsel %vm2358, %v2294, 0
        %v2423 = vsel %vm2359, %v2295, 0
        %v2424 = vsel %vm2360, %v2296, 0
        %v2425 = vsel %vm2361, %v2297, 0
        %v2426 = vsel %vm2362, %v2298, 0
        %v2427 = vsel %vm2363, %v2299, 0
        %v2428 = vsel %vm2364, %v2300, 0
        %v2429 = vsel %vm2365, %v2301, 0
        %v2430 = vsel %vm2366, %v2302, 0
        %v2431 = vsel %vm2367, %v2303, 0
        %v2432 = vsel %vm2368, %v2304, 0
        %v2433 = vsel %vm2369, %v2305, 0
        %v2434 = vsel %vm2370, %v2306, 0
        %v2435 = vsel %vm2371, %v2307, 0
        %v2436 = vsel %vm2372, %v2308, 0
        %v2437 = vsel %vm2373, %v2309, 0
        %v2438 = vsel %vm2374, %v2310, 0
        %v2439 = vsel %vm2375, %v2311, 0
        %v2440 = vsel %vm2376, %v2312, 0
        %v2441 = vsel %vm2377, %v2313, 0
        %v2442 = vsel %vm2378, %v2314, 0
        %v2443 = vsel %vm2379, %v2315, 0
        %v2444 = vsel %vm2380, %v2316, 0
        %v2445 = vsel %vm2381, %v2317, 0
        %v2446 = vsel %vm2382, %v2318, 0
        %v2447 = vsel %vm2383, %v2319, 0
        %v2448 = vsel %vm2384, %v2320, 0
        %v2449 = vsel %vm2385, %v2321, 0
        %v2450 = vsel %vm2386, %v2322, 0
        %v2451 = vsel %vm2387, %v2323, 0
        %v2452 = vsel %vm2388, %v2324, 0
        %v2453 = vsel %vm2389, %v2325, 0
        %v2454 = vsel %vm2390, %v2326, 0
        %v2455 = vsel %vm2391, %v2327, 0
        %v2456 = vsel %vm2392, %v2328, 0
        %v2457 = vsel %vm2393, %v2329, 0
        %v2458 = vsel %vm2394, %v2330, 0
        %v2459 = vsel %vm2395, %v2331, 0
        %v2460 = vsel %vm2396, %v2332, 0
        %v2461 = vsel %vm2397, %v2333, 0
        %v2462 = vsel %vm2398, %v2334, 0
        %v2463 = vsel %vm2399, %v2335, 0
        %v2464 = vsel %vm2400, %v2336, 0
        %v2465 = vsel %vm2401, %v2337, 0
        %v2466 = vsel %vm2402, %v2338, 0
        %v2467 = vsel %vm2403, %v2339, 0
        %v2468 = vsel %vm2404, %v2340, 0
        %v2469 = vsel %vm2405, %v2341, 0
        %v2470 = vsel %vm2406, %v2342, 0
        %v2471 = vsel %vm2407, %v2343, 0
        %v2472 = vsel %vm2408, %v2344, 0
        %v2473 = vsel %vm2409, %v2345, 0
        %v2474 = vsel %vm2410, %v2346, 0
        %v2475 = vsel %vm2411, %v2347, 0
        %v2476 = vld [vmem:[#allocation10] sm:$0xff]
        %v2477 = vld [vmem:[#allocation10 + $0x8] sm:$0xff]
        %v2478 = vld [vmem:[#allocation10 + $0x10] sm:$0xff]
        %v2479 = vld [vmem:[#allocation10 + $0x18] sm:$0xff]
        %v2480 = vld [vmem:[#allocation10 + $0x20] sm:$0xff]
        %v2481 = vld [vmem:[#allocation10 + $0x28] sm:$0xff]
        %v2482 = vld [vmem:[#allocation10 + $0x30] sm:$0xff]
        %v2483 = vld [vmem:[#allocation10 + $0x38] sm:$0xff]
        %v2484 = vld [vmem:[#allocation10 + $0x40] sm:$0xff]
        %v2485 = vld [vmem:[#allocation10 + $0x48] sm:$0xff]
        %v2486 = vld [vmem:[#allocation10 + $0x50] sm:$0xff]
        %v2487 = vld [vmem:[#allocation10 + $0x58] sm:$0xff]
        %v2488 = vld [vmem:[#allocation10 + $0x60] sm:$0xff]
        %v2489 = vld [vmem:[#allocation10 + $0x68] sm:$0xff]
        %v2490 = vld [vmem:[#allocation10 + $0x70] sm:$0xff]
        %v2491 = vld [vmem:[#allocation10 + $0x78] sm:$0xff]
        %v2492 = vld [vmem:[#allocation10 + $0x80] sm:$0xff]
        %v2493 = vld [vmem:[#allocation10 + $0x88] sm:$0xff]
        %v2494 = vld [vmem:[#allocation10 + $0x90] sm:$0xff]
        %v2495 = vld [vmem:[#allocation10 + $0x98] sm:$0xff]
        %v2496 = vld [vmem:[#allocation10 + $0xa0] sm:$0xff]
        %v2497 = vld [vmem:[#allocation10 + $0xa8] sm:$0xff]
        %v2498 = vld [vmem:[#allocation10 + $0xb0] sm:$0xff]
        %v2499 = vld [vmem:[#allocation10 + $0xb8] sm:$0xff]
        %v2500 = vld [vmem:[#allocation10 + $0xc0] sm:$0xff]
        %v2501 = vld [vmem:[#allocation10 + $0xc8] sm:$0xff]
        %v2502 = vld [vmem:[#allocation10 + $0xd0] sm:$0xff]
        %v2503 = vld [vmem:[#allocation10 + $0xd8] sm:$0xff]
        %v2504 = vld [vmem:[#allocation10 + $0xe0] sm:$0xff]
        %v2505 = vld [vmem:[#allocation10 + $0xe8] sm:$0xff]
        %v2506 = vld [vmem:[#allocation10 + $0xf0] sm:$0xff]
        %v2507 = vld [vmem:[#allocation10 + $0xf8] sm:$0xff]
        %v2508 = vld [vmem:[#allocation10 + $0x100] sm:$0xff]
        %v2509 = vld [vmem:[#allocation10 + $0x108] sm:$0xff]
        %v2510 = vld [vmem:[#allocation10 + $0x110] sm:$0xff]
        %v2511 = vld [vmem:[#allocation10 + $0x118] sm:$0xff]
        %v2512 = vld [vmem:[#allocation10 + $0x120] sm:$0xff]
        %v2513 = vld [vmem:[#allocation10 + $0x128] sm:$0xff]
        %v2514 = vld [vmem:[#allocation10 + $0x130] sm:$0xff]
        %v2515 = vld [vmem:[#allocation10 + $0x138] sm:$0xff]
        %v2516 = vld [vmem:[#allocation10 + $0x140] sm:$0xff]
        %v2517 = vld [vmem:[#allocation10 + $0x148] sm:$0xff]
        %v2518 = vld [vmem:[#allocation10 + $0x150] sm:$0xff]
        %v2519 = vld [vmem:[#allocation10 + $0x158] sm:$0xff]
        %v2520 = vld [vmem:[#allocation10 + $0x160] sm:$0xff]
        %v2521 = vld [vmem:[#allocation10 + $0x168] sm:$0xff]
        %v2522 = vld [vmem:[#allocation10 + $0x170] sm:$0xff]
        %v2523 = vld [vmem:[#allocation10 + $0x178] sm:$0xff]
        %v2524 = vld [vmem:[#allocation10 + $0x180] sm:$0xff]
        %v2525 = vld [vmem:[#allocation10 + $0x188] sm:$0xff]
        %v2526 = vld [vmem:[#allocation10 + $0x190] sm:$0xff]
        %v2527 = vld [vmem:[#allocation10 + $0x198] sm:$0xff]
        %v2528 = vld [vmem:[#allocation10 + $0x1a0] sm:$0xff]
        %v2529 = vld [vmem:[#allocation10 + $0x1a8] sm:$0xff]
        %v2530 = vld [vmem:[#allocation10 + $0x1b0] sm:$0xff]
        %v2531 = vld [vmem:[#allocation10 + $0x1b8] sm:$0xff]
        %v2532 = vld [vmem:[#allocation10 + $0x1c0] sm:$0xff]
        %v2533 = vld [vmem:[#allocation10 + $0x1c8] sm:$0xff]
        %v2534 = vld [vmem:[#allocation10 + $0x1d0] sm:$0xff]
        %v2535 = vld [vmem:[#allocation10 + $0x1d8] sm:$0xff]
        %v2536 = vld [vmem:[#allocation10 + $0x1e0] sm:$0xff]
        %v2537 = vld [vmem:[#allocation10 + $0x1e8] sm:$0xff]
        %v2538 = vld [vmem:[#allocation10 + $0x1f0] sm:$0xff]
        %v2539 = vld [vmem:[#allocation10 + $0x1f8] sm:$0xff]
        %v2540 = vld [vmem:[#allocation10 + $0x200] sm:$0xff]
        %v2541 = vld [vmem:[#allocation10 + $0x208] sm:$0xff]
        %v2542 = vld [vmem:[#allocation10 + $0x210] sm:$0xff]
        %v2543 = vld [vmem:[#allocation10 + $0x218] sm:$0xff]
        %v2544 = vld [vmem:[#allocation10 + $0x220] sm:$0xff]
        %v2545 = vld [vmem:[#allocation10 + $0x228] sm:$0xff]
        %v2546 = vld [vmem:[#allocation10 + $0x230] sm:$0xff]
        %v2547 = vld [vmem:[#allocation10 + $0x238] sm:$0xff]
        %v2548 = vld [vmem:[#allocation10 + $0x240] sm:$0xff]
        %v2549 = vld [vmem:[#allocation10 + $0x248] sm:$0xff]
        %v2550 = vld [vmem:[#allocation10 + $0x250] sm:$0xff]
        %v2551 = vld [vmem:[#allocation10 + $0x258] sm:$0xff]
        %v2552 = vld [vmem:[#allocation10 + $0x260] sm:$0xff]
        %v2553 = vld [vmem:[#allocation10 + $0x268] sm:$0xff]
        %v2554 = vld [vmem:[#allocation10 + $0x270] sm:$0xff]
        %v2555 = vld [vmem:[#allocation10 + $0x278] sm:$0xff]
        %v2556 = vld [vmem:[#allocation10 + $0x280] sm:$0xff]
        %v2557 = vld [vmem:[#allocation10 + $0x288] sm:$0xff]
        %v2558 = vld [vmem:[#allocation10 + $0x290] sm:$0xff]
        %v2559 = vld [vmem:[#allocation10 + $0x298] sm:$0xff]
        %v2560 = vld [vmem:[#allocation10 + $0x2a0] sm:$0xff]
        %v2561 = vld [vmem:[#allocation10 + $0x2a8] sm:$0xff]
        %v2562 = vld [vmem:[#allocation10 + $0x2b0] sm:$0xff]
        %v2563 = vld [vmem:[#allocation10 + $0x2b8] sm:$0xff]
        %v2564 = vld [vmem:[#allocation10 + $0x2c0] sm:$0xff]
        %v2565 = vld [vmem:[#allocation10 + $0x2c8] sm:$0xff]
        %v2566 = vld [vmem:[#allocation10 + $0x2d0] sm:$0xff]
        %v2567 = vld [vmem:[#allocation10 + $0x2d8] sm:$0xff]
        %v2568 = vld [vmem:[#allocation10 + $0x2e0] sm:$0xff]
        %v2569 = vld [vmem:[#allocation10 + $0x2e8] sm:$0xff]
        %v2570 = vld [vmem:[#allocation10 + $0x2f0] sm:$0xff]
        %v2571 = vld [vmem:[#allocation10 + $0x2f8] sm:$0xff]
        %v2572 = vld [vmem:[#allocation10 + $0x300] sm:$0xff]
        %v2573 = vld [vmem:[#allocation10 + $0x308] sm:$0xff]
        %v2574 = vld [vmem:[#allocation10 + $0x310] sm:$0xff]
        %v2575 = vld [vmem:[#allocation10 + $0x318] sm:$0xff]
        %v2576 = vld [vmem:[#allocation10 + $0x320] sm:$0xff]
        %v2577 = vld [vmem:[#allocation10 + $0x328] sm:$0xff]
        %v2578 = vld [vmem:[#allocation10 + $0x330] sm:$0xff]
        %v2579 = vld [vmem:[#allocation10 + $0x338] sm:$0xff]
        %v2580 = vld [vmem:[#allocation10 + $0x340] sm:$0xff]
        %v2581 = vld [vmem:[#allocation10 + $0x348] sm:$0xff]
        %v2582 = vld [vmem:[#allocation10 + $0x350] sm:$0xff]
        %v2583 = vld [vmem:[#allocation10 + $0x358] sm:$0xff]
        %v2584 = vld [vmem:[#allocation10 + $0x360] sm:$0xff]
        %v2585 = vld [vmem:[#allocation10 + $0x368] sm:$0xff]
        %v2586 = vld [vmem:[#allocation10 + $0x370] sm:$0xff]
        %v2587 = vld [vmem:[#allocation10 + $0x378] sm:$0xff]
        %v2588 = vld [vmem:[#allocation10 + $0x380] sm:$0xff]
        %v2589 = vld [vmem:[#allocation10 + $0x388] sm:$0xff]
        %v2590 = vld [vmem:[#allocation10 + $0x390] sm:$0xff]
        %v2591 = vld [vmem:[#allocation10 + $0x398] sm:$0xff]
        %v2592 = vld [vmem:[#allocation10 + $0x3a0] sm:$0xff]
        %v2593 = vld [vmem:[#allocation10 + $0x3a8] sm:$0xff]
        %v2594 = vld [vmem:[#allocation10 + $0x3b0] sm:$0xff]
        %v2595 = vld [vmem:[#allocation10 + $0x3b8] sm:$0xff]
        %v2596 = vld [vmem:[#allocation10 + $0x3c0] sm:$0xff]
        %v2597 = vld [vmem:[#allocation10 + $0x3c8] sm:$0xff]
        %v2598 = vld [vmem:[#allocation10 + $0x3d0] sm:$0xff]
        %v2599 = vld [vmem:[#allocation10 + $0x3d8] sm:$0xff]
        %v2600 = vld [vmem:[#allocation10 + $0x3e0] sm:$0xff]
        %v2601 = vld [vmem:[#allocation10 + $0x3e8] sm:$0xff]
        %v2602 = vld [vmem:[#allocation10 + $0x3f0] sm:$0xff]
        %v2603 = vld [vmem:[#allocation10 + $0x3f8] sm:$0xff]
        %v2604 = vld [vmem:[#allocation10 + $0x400] sm:$0xff]
        %v2605 = vld [vmem:[#allocation10 + $0x408] sm:$0xff]
        %v2606 = vld [vmem:[#allocation10 + $0x410] sm:$0xff]
        %v2607 = vld [vmem:[#allocation10 + $0x418] sm:$0xff]
        %v2608 = vld [vmem:[#allocation10 + $0x420] sm:$0xff]
        %v2609 = vld [vmem:[#allocation10 + $0x428] sm:$0xff]
        %v2610 = vld [vmem:[#allocation10 + $0x430] sm:$0xff]
        %v2611 = vld [vmem:[#allocation10 + $0x438] sm:$0xff]
        %v2612 = vld [vmem:[#allocation10 + $0x440] sm:$0xff]
        %v2613 = vld [vmem:[#allocation10 + $0x448] sm:$0xff]
        %v2614 = vld [vmem:[#allocation10 + $0x450] sm:$0xff]
        %v2615 = vld [vmem:[#allocation10 + $0x458] sm:$0xff]
        %v2616 = vld [vmem:[#allocation10 + $0x460] sm:$0xff]
        %v2617 = vld [vmem:[#allocation10 + $0x468] sm:$0xff]
        %v2618 = vld [vmem:[#allocation10 + $0x470] sm:$0xff]
        %v2619 = vld [vmem:[#allocation10 + $0x478] sm:$0xff]
        %v2620 = vld [vmem:[#allocation10 + $0x480] sm:$0xff]
        %v2621 = vld [vmem:[#allocation10 + $0x488] sm:$0xff]
        %v2622 = vld [vmem:[#allocation10 + $0x490] sm:$0xff]
        %v2623 = vld [vmem:[#allocation10 + $0x498] sm:$0xff]
        %v2624 = vld [vmem:[#allocation10 + $0x4a0] sm:$0xff]
        %v2625 = vld [vmem:[#allocation10 + $0x4a8] sm:$0xff]
        %v2626 = vld [vmem:[#allocation10 + $0x4b0] sm:$0xff]
        %v2627 = vld [vmem:[#allocation10 + $0x4b8] sm:$0xff]
        %v2628 = vld [vmem:[#allocation10 + $0x4c0] sm:$0xff]
        %v2629 = vld [vmem:[#allocation10 + $0x4c8] sm:$0xff]
        %v2630 = vld [vmem:[#allocation10 + $0x4d0] sm:$0xff]
        %v2631 = vld [vmem:[#allocation10 + $0x4d8] sm:$0xff]
        %v2632 = vld [vmem:[#allocation10 + $0x4e0] sm:$0xff]
        %v2633 = vld [vmem:[#allocation10 + $0x4e8] sm:$0xff]
        %v2634 = vld [vmem:[#allocation10 + $0x4f0] sm:$0xff]
        %v2635 = vld [vmem:[#allocation10 + $0x4f8] sm:$0xff]
        %v2636 = vld [vmem:[#allocation10 + $0x500] sm:$0xff]
        %v2637 = vld [vmem:[#allocation10 + $0x508] sm:$0xff]
        %v2638 = vld [vmem:[#allocation10 + $0x510] sm:$0xff]
        %v2639 = vld [vmem:[#allocation10 + $0x518] sm:$0xff]
        %v2640 = vld [vmem:[#allocation10 + $0x520] sm:$0xff]
        %v2641 = vld [vmem:[#allocation10 + $0x528] sm:$0xff]
        %v2642 = vld [vmem:[#allocation10 + $0x530] sm:$0xff]
        %v2643 = vld [vmem:[#allocation10 + $0x538] sm:$0xff]
        %v2644 = vld [vmem:[#allocation10 + $0x540] sm:$0xff]
        %v2645 = vld [vmem:[#allocation10 + $0x548] sm:$0xff]
        %v2646 = vld [vmem:[#allocation10 + $0x550] sm:$0xff]
        %v2647 = vld [vmem:[#allocation10 + $0x558] sm:$0xff]
        %v2648 = vld [vmem:[#allocation10 + $0x560] sm:$0xff]
        %v2649 = vld [vmem:[#allocation10 + $0x568] sm:$0xff]
        %v2650 = vld [vmem:[#allocation10 + $0x570] sm:$0xff]
        %v2651 = vld [vmem:[#allocation10 + $0x578] sm:$0xff]
        %v2652 = vld [vmem:[#allocation10 + $0x580] sm:$0xff]
        %v2653 = vld [vmem:[#allocation10 + $0x588] sm:$0xff]
        %v2654 = vld [vmem:[#allocation10 + $0x590] sm:$0xff]
        %v2655 = vld [vmem:[#allocation10 + $0x598] sm:$0xff]
        %v2656 = vld [vmem:[#allocation10 + $0x5a0] sm:$0xff]
        %v2657 = vld [vmem:[#allocation10 + $0x5a8] sm:$0xff]
        %v2658 = vld [vmem:[#allocation10 + $0x5b0] sm:$0xff]
        %v2659 = vld [vmem:[#allocation10 + $0x5b8] sm:$0xff]
        %v2660 = vld [vmem:[#allocation10 + $0x5c0] sm:$0xff]
        %v2661 = vld [vmem:[#allocation10 + $0x5c8] sm:$0xff]
        %v2662 = vld [vmem:[#allocation10 + $0x5d0] sm:$0xff]
        %v2663 = vld [vmem:[#allocation10 + $0x5d8] sm:$0xff]
        %v2664 = vld [vmem:[#allocation10 + $0x5e0] sm:$0xff]
        %v2665 = vld [vmem:[#allocation10 + $0x5e8] sm:$0xff]
        %v2666 = vld [vmem:[#allocation10 + $0x5f0] sm:$0xff]
        %v2667 = vld [vmem:[#allocation10 + $0x5f8] sm:$0xff]
        %v2668 = vld [vmem:[#allocation10 + $0x600] sm:$0xff]
        %v2669 = vld [vmem:[#allocation10 + $0x608] sm:$0xff]
        %v2670 = vld [vmem:[#allocation10 + $0x610] sm:$0xff]
        %v2671 = vld [vmem:[#allocation10 + $0x618] sm:$0xff]
        %v2672 = vld [vmem:[#allocation10 + $0x620] sm:$0xff]
        %v2673 = vld [vmem:[#allocation10 + $0x628] sm:$0xff]
        %v2674 = vld [vmem:[#allocation10 + $0x630] sm:$0xff]
        %v2675 = vld [vmem:[#allocation10 + $0x638] sm:$0xff]
        %v2676 = vld [vmem:[#allocation10 + $0x640] sm:$0xff]
        %v2677 = vld [vmem:[#allocation10 + $0x648] sm:$0xff]
        %v2678 = vld [vmem:[#allocation10 + $0x650] sm:$0xff]
        %v2679 = vld [vmem:[#allocation10 + $0x658] sm:$0xff]
        %v2680 = vld [vmem:[#allocation10 + $0x660] sm:$0xff]
        %v2681 = vld [vmem:[#allocation10 + $0x668] sm:$0xff]
        %v2682 = vld [vmem:[#allocation10 + $0x670] sm:$0xff]
        %v2683 = vld [vmem:[#allocation10 + $0x678] sm:$0xff]
        %v2684 = vld [vmem:[#allocation10 + $0x680] sm:$0xff]
        %v2685 = vld [vmem:[#allocation10 + $0x688] sm:$0xff]
        %v2686 = vld [vmem:[#allocation10 + $0x690] sm:$0xff]
        %v2687 = vld [vmem:[#allocation10 + $0x698] sm:$0xff]
        %v2688 = vld [vmem:[#allocation10 + $0x6a0] sm:$0xff]
        %v2689 = vld [vmem:[#allocation10 + $0x6a8] sm:$0xff]
        %v2690 = vld [vmem:[#allocation10 + $0x6b0] sm:$0xff]
        %v2691 = vld [vmem:[#allocation10 + $0x6b8] sm:$0xff]
        %v2692 = vld [vmem:[#allocation10 + $0x6c0] sm:$0xff]
        %v2693 = vld [vmem:[#allocation10 + $0x6c8] sm:$0xff]
        %v2694 = vld [vmem:[#allocation10 + $0x6d0] sm:$0xff]
        %v2695 = vld [vmem:[#allocation10 + $0x6d8] sm:$0xff]
        %v2696 = vld [vmem:[#allocation10 + $0x6e0] sm:$0xff]
        %v2697 = vld [vmem:[#allocation10 + $0x6e8] sm:$0xff]
        %v2698 = vld [vmem:[#allocation10 + $0x6f0] sm:$0xff]
        %v2699 = vld [vmem:[#allocation10 + $0x6f8] sm:$0xff]
        %v2700 = vld [vmem:[#allocation10 + $0x700] sm:$0xff]
        %v2701 = vld [vmem:[#allocation10 + $0x708] sm:$0xff]
        %v2702 = vld [vmem:[#allocation10 + $0x710] sm:$0xff]
        %v2703 = vld [vmem:[#allocation10 + $0x718] sm:$0xff]
        %v2704 = vld [vmem:[#allocation10 + $0x720] sm:$0xff]
        %v2705 = vld [vmem:[#allocation10 + $0x728] sm:$0xff]
        %v2706 = vld [vmem:[#allocation10 + $0x730] sm:$0xff]
        %v2707 = vld [vmem:[#allocation10 + $0x738] sm:$0xff]
        %v2708 = vld [vmem:[#allocation10 + $0x740] sm:$0xff]
        %v2709 = vld [vmem:[#allocation10 + $0x748] sm:$0xff]
        %v2710 = vld [vmem:[#allocation10 + $0x750] sm:$0xff]
        %v2711 = vld [vmem:[#allocation10 + $0x758] sm:$0xff]
        %v2712 = vld [vmem:[#allocation10 + $0x760] sm:$0xff]
        %v2713 = vld [vmem:[#allocation10 + $0x768] sm:$0xff]
        %v2714 = vld [vmem:[#allocation10 + $0x770] sm:$0xff]
        %v2715 = vld [vmem:[#allocation10 + $0x778] sm:$0xff]
        %v2716 = vld [vmem:[#allocation10 + $0x780] sm:$0xff]
        %v2717 = vld [vmem:[#allocation10 + $0x788] sm:$0xff]
        %v2718 = vld [vmem:[#allocation10 + $0x790] sm:$0xff]
        %v2719 = vld [vmem:[#allocation10 + $0x798] sm:$0xff]
        %v2720 = vld [vmem:[#allocation10 + $0x7a0] sm:$0xff]
        %v2721 = vld [vmem:[#allocation10 + $0x7a8] sm:$0xff]
        %v2722 = vld [vmem:[#allocation10 + $0x7b0] sm:$0xff]
        %v2723 = vld [vmem:[#allocation10 + $0x7b8] sm:$0xff]
        %v2724 = vld [vmem:[#allocation10 + $0x7c0] sm:$0xff]
        %v2725 = vld [vmem:[#allocation10 + $0x7c8] sm:$0xff]
        %v2726 = vld [vmem:[#allocation10 + $0x7d0] sm:$0xff]
        %v2727 = vld [vmem:[#allocation10 + $0x7d8] sm:$0xff]
        %v2728 = vld [vmem:[#allocation10 + $0x7e0] sm:$0xff]
        %v2729 = vld [vmem:[#allocation10 + $0x7e8] sm:$0xff]
        %v2730 = vld [vmem:[#allocation10 + $0x7f0] sm:$0xff]
        %v2731 = vld [vmem:[#allocation10 + $0x7f8] sm:$0xff]
        %v2732 = vld [vmem:[#allocation12] sm:$0xff]
        %v2734 = vperm.slane %v2732, 0
        %v2735 = vperm.slane %v2732, 1
        %v2736 = vperm.slane %v2732, 2
        %v2737 = vperm.slane %v2732, 3
        %v2738 = vperm.slane %v2732, 4
        %v2739 = vperm.slane %v2732, 5
        %v2740 = vperm.slane %v2732, 6
        %v2741 = vperm.slane %v2732, 7
        %v2814 = vunpack.c.l.b16 %v2412
        %v2815 = vunpack.c.h.b16 %v2412
        %v2816 = vunpack.c.l.b16 %v2413
        %v2817 = vunpack.c.h.b16 %v2413
        %v2818 = vunpack.c.l.b16 %v2414
        %v2819 = vunpack.c.h.b16 %v2414
        %v2820 = vunpack.c.l.b16 %v2415
        %v2821 = vunpack.c.h.b16 %v2415
        %v2822 = vunpack.c.l.b16 %v2416
        %v2823 = vunpack.c.h.b16 %v2416
        %v2824 = vunpack.c.l.b16 %v2417
        %v2825 = vunpack.c.h.b16 %v2417
        %v2826 = vunpack.c.l.b16 %v2418
        %v2827 = vunpack.c.h.b16 %v2418
        %v2828 = vunpack.c.l.b16 %v2419
        %v2829 = vunpack.c.h.b16 %v2419
        %v2830 = vunpack.c.l.b16 %v2420
        %v2831 = vunpack.c.h.b16 %v2420
        %v2832 = vunpack.c.l.b16 %v2421
        %v2833 = vunpack.c.h.b16 %v2421
        %v2834 = vunpack.c.l.b16 %v2422
        %v2835 = vunpack.c.h.b16 %v2422
        %v2836 = vunpack.c.l.b16 %v2423
        %v2837 = vunpack.c.h.b16 %v2423
        %v2838 = vunpack.c.l.b16 %v2424
        %v2839 = vunpack.c.h.b16 %v2424
        %v2840 = vunpack.c.l.b16 %v2425
        %v2841 = vunpack.c.h.b16 %v2425
        %v2842 = vunpack.c.l.b16 %v2426
        %v2843 = vunpack.c.h.b16 %v2426
        %v2844 = vunpack.c.l.b16 %v2427
        %v2845 = vunpack.c.h.b16 %v2427
        %v2846 = vunpack.c.l.b16 %v2428
        %v2847 = vunpack.c.h.b16 %v2428
        %v2848 = vunpack.c.l.b16 %v2429
        %v2849 = vunpack.c.h.b16 %v2429
        %v2850 = vunpack.c.l.b16 %v2430
        %v2851 = vunpack.c.h.b16 %v2430
        %v2852 = vunpack.c.l.b16 %v2431
        %v2853 = vunpack.c.h.b16 %v2431
        %v2854 = vunpack.c.l.b16 %v2432
        %v2855 = vunpack.c.h.b16 %v2432
        %v2856 = vunpack.c.l.b16 %v2433
        %v2857 = vunpack.c.h.b16 %v2433
        %v2858 = vunpack.c.l.b16 %v2434
        %v2859 = vunpack.c.h.b16 %v2434
        %v2860 = vunpack.c.l.b16 %v2435
        %v2861 = vunpack.c.h.b16 %v2435
        %v2862 = vunpack.c.l.b16 %v2436
        %v2863 = vunpack.c.h.b16 %v2436
        %v2864 = vunpack.c.l.b16 %v2437
        %v2865 = vunpack.c.h.b16 %v2437
        %v2866 = vunpack.c.l.b16 %v2438
        %v2867 = vunpack.c.h.b16 %v2438
        %v2868 = vunpack.c.l.b16 %v2439
        %v2869 = vunpack.c.h.b16 %v2439
        %v2870 = vunpack.c.l.b16 %v2440
        %v2871 = vunpack.c.h.b16 %v2440
        %v2872 = vunpack.c.l.b16 %v2441
        %v2873 = vunpack.c.h.b16 %v2441
        %v2874 = vunpack.c.l.b16 %v2442
        %v2875 = vunpack.c.h.b16 %v2442
        %v2876 = vunpack.c.l.b16 %v2443
        %v2877 = vunpack.c.h.b16 %v2443
        %v2878 = vunpack.c.l.b16 %v2444
        %v2879 = vunpack.c.h.b16 %v2444
        %v2880 = vunpack.c.l.b16 %v2445
        %v2881 = vunpack.c.h.b16 %v2445
        %v2882 = vunpack.c.l.b16 %v2446
        %v2883 = vunpack.c.h.b16 %v2446
        %v2884 = vunpack.c.l.b16 %v2447
        %v2885 = vunpack.c.h.b16 %v2447
        %v2886 = vunpack.c.l.b16 %v2448
        %v2887 = vunpack.c.h.b16 %v2448
        %v2888 = vunpack.c.l.b16 %v2449
        %v2889 = vunpack.c.h.b16 %v2449
        %v2890 = vunpack.c.l.b16 %v2450
        %v2891 = vunpack.c.h.b16 %v2450
        %v2892 = vunpack.c.l.b16 %v2451
        %v2893 = vunpack.c.h.b16 %v2451
        %v2894 = vunpack.c.l.b16 %v2452
        %v2895 = vunpack.c.h.b16 %v2452
        %v2896 = vunpack.c.l.b16 %v2453
        %v2897 = vunpack.c.h.b16 %v2453
        %v2898 = vunpack.c.l.b16 %v2454
        %v2899 = vunpack.c.h.b16 %v2454
        %v2900 = vunpack.c.l.b16 %v2455
        %v2901 = vunpack.c.h.b16 %v2455
        %v2902 = vunpack.c.l.b16 %v2456
        %v2903 = vunpack.c.h.b16 %v2456
        %v2904 = vunpack.c.l.b16 %v2457
        %v2905 = vunpack.c.h.b16 %v2457
        %v2906 = vunpack.c.l.b16 %v2458
        %v2907 = vunpack.c.h.b16 %v2458
        %v2908 = vunpack.c.l.b16 %v2459
        %v2909 = vunpack.c.h.b16 %v2459
        %v2910 = vunpack.c.l.b16 %v2460
        %v2911 = vunpack.c.h.b16 %v2460
        %v2912 = vunpack.c.l.b16 %v2461
        %v2913 = vunpack.c.h.b16 %v2461
        %v2914 = vunpack.c.l.b16 %v2462
        %v2915 = vunpack.c.h.b16 %v2462
        %v2916 = vunpack.c.l.b16 %v2463
        %v2917 = vunpack.c.h.b16 %v2463
        %v2918 = vunpack.c.l.b16 %v2464
        %v2919 = vunpack.c.h.b16 %v2464
        %v2920 = vunpack.c.l.b16 %v2465
        %v2921 = vunpack.c.h.b16 %v2465
        %v2922 = vunpack.c.l.b16 %v2466
        %v2923 = vunpack.c.h.b16 %v2466
        %v2924 = vunpack.c.l.b16 %v2467
        %v2925 = vunpack.c.h.b16 %v2467
        %v2926 = vunpack.c.l.b16 %v2468
        %v2927 = vunpack.c.h.b16 %v2468
        %v2928 = vunpack.c.l.b16 %v2469
        %v2929 = vunpack.c.h.b16 %v2469
        %v2930 = vunpack.c.l.b16 %v2470
        %v2931 = vunpack.c.h.b16 %v2470
        %v2932 = vunpack.c.l.b16 %v2471
        %v2933 = vunpack.c.h.b16 %v2471
        %v2934 = vunpack.c.l.b16 %v2472
        %v2935 = vunpack.c.h.b16 %v2472
        %v2936 = vunpack.c.l.b16 %v2473
        %v2937 = vunpack.c.h.b16 %v2473
        %v2938 = vunpack.c.l.b16 %v2474
        %v2939 = vunpack.c.h.b16 %v2474
        %v2940 = vunpack.c.l.b16 %v2475
        %v2941 = vunpack.c.h.b16 %v2475
        %v2942 = vpack.c.b16 %v2818, %v2814
        %v2943 = vpack.c.b16 %v2819, %v2815
        %v2944 = vpack.c.b16 %v2820, %v2816
        %v2945 = vpack.c.b16 %v2821, %v2817
        %v2946 = vpack.c.b16 %v2826, %v2822
        %v2947 = vpack.c.b16 %v2827, %v2823
        %v2948 = vpack.c.b16 %v2828, %v2824
        %v2949 = vpack.c.b16 %v2829, %v2825
        %v2950 = vpack.c.b16 %v2834, %v2830
        %v2951 = vpack.c.b16 %v2835, %v2831
        %v2952 = vpack.c.b16 %v2836, %v2832
        %v2953 = vpack.c.b16 %v2837, %v2833
        %v2954 = vpack.c.b16 %v2842, %v2838
        %v2955 = vpack.c.b16 %v2843, %v2839
        %v2956 = vpack.c.b16 %v2844, %v2840
        %v2957 = vpack.c.b16 %v2845, %v2841
        %v2958 = vpack.c.b16 %v2850, %v2846
        %v2959 = vpack.c.b16 %v2851, %v2847
        %v2960 = vpack.c.b16 %v2852, %v2848
        %v2961 = vpack.c.b16 %v2853, %v2849
        %v2962 = vpack.c.b16 %v2858, %v2854
        %v2963 = vpack.c.b16 %v2859, %v2855
        %v2964 = vpack.c.b16 %v2860, %v2856
        %v2965 = vpack.c.b16 %v2861, %v2857
        %v2966 = vpack.c.b16 %v2866, %v2862
        %v2967 = vpack.c.b16 %v2867, %v2863
        %v2968 = vpack.c.b16 %v2868, %v2864
        %v2969 = vpack.c.b16 %v2869, %v2865
        %v2970 = vpack.c.b16 %v2874, %v2870
        %v2971 = vpack.c.b16 %v2875, %v2871
        %v2972 = vpack.c.b16 %v2876, %v2872
        %v2973 = vpack.c.b16 %v2877, %v2873
        %v2974 = vpack.c.b16 %v2882, %v2878
        %v2975 = vpack.c.b16 %v2883, %v2879
        %v2976 = vpack.c.b16 %v2884, %v2880
        %v2977 = vpack.c.b16 %v2885, %v2881
        %v2978 = vpack.c.b16 %v2890, %v2886
        %v2979 = vpack.c.b16 %v2891, %v2887
        %v2980 = vpack.c.b16 %v2892, %v2888
        %v2981 = vpack.c.b16 %v2893, %v2889
        %v2982 = vpack.c.b16 %v2898, %v2894
        %v2983 = vpack.c.b16 %v2899, %v2895
        %v2984 = vpack.c.b16 %v2900, %v2896
        %v2985 = vpack.c.b16 %v2901, %v2897
        %v2986 = vpack.c.b16 %v2906, %v2902
        %v2987 = vpack.c.b16 %v2907, %v2903
        %v2988 = vpack.c.b16 %v2908, %v2904
        %v2989 = vpack.c.b16 %v2909, %v2905
        %v2990 = vpack.c.b16 %v2914, %v2910
        %v2991 = vpack.c.b16 %v2915, %v2911
        %v2992 = vpack.c.b16 %v2916, %v2912
        %v2993 = vpack.c.b16 %v2917, %v2913
        %v2994 = vpack.c.b16 %v2922, %v2918
        %v2995 = vpack.c.b16 %v2923, %v2919
        %v2996 = vpack.c.b16 %v2924, %v2920
        %v2997 = vpack.c.b16 %v2925, %v2921
        %v2998 = vpack.c.b16 %v2930, %v2926
        %v2999 = vpack.c.b16 %v2931, %v2927
        %v3000 = vpack.c.b16 %v2932, %v2928
        %v3001 = vpack.c.b16 %v2933, %v2929
        %v3002 = vpack.c.b16 %v2938, %v2934
        %v3003 = vpack.c.b16 %v2939, %v2935
        %v3004 = vpack.c.b16 %v2940, %v2936
        %v3005 = vpack.c.b16 %v2941, %v2937
        %v3326 = vunpack.c.l.b16 %v2476
        %v3327 = vunpack.c.h.b16 %v2476
        %v3328 = vunpack.c.l.b16 %v2477
        %v3329 = vunpack.c.h.b16 %v2477
        %v3330 = vunpack.c.l.b16 %v2478
        %v3331 = vunpack.c.h.b16 %v2478
        %v3332 = vunpack.c.l.b16 %v2479
        %v3333 = vunpack.c.h.b16 %v2479
        %v3334 = vunpack.c.l.b16 %v2480
        %v3335 = vunpack.c.h.b16 %v2480
        %v3336 = vunpack.c.l.b16 %v2481
        %v3337 = vunpack.c.h.b16 %v2481
        %v3338 = vunpack.c.l.b16 %v2482
        %v3339 = vunpack.c.h.b16 %v2482
        %v3340 = vunpack.c.l.b16 %v2483
        %v3341 = vunpack.c.h.b16 %v2483
        %v3342 = vunpack.c.l.b16 %v2484
        %v3343 = vunpack.c.h.b16 %v2484
        %v3344 = vunpack.c.l.b16 %v2485
        %v3345 = vunpack.c.h.b16 %v2485
        %v3346 = vunpack.c.l.b16 %v2486
        %v3347 = vunpack.c.h.b16 %v2486
        %v3348 = vunpack.c.l.b16 %v2487
        %v3349 = vunpack.c.h.b16 %v2487
        %v3350 = vunpack.c.l.b16 %v2488
        %v3351 = vunpack.c.h.b16 %v2488
        %v3352 = vunpack.c.l.b16 %v2489
        %v3353 = vunpack.c.h.b16 %v2489
        %v3354 = vunpack.c.l.b16 %v2490
        %v3355 = vunpack.c.h.b16 %v2490
        %v3356 = vunpack.c.l.b16 %v2491
        %v3357 = vunpack.c.h.b16 %v2491
        %v3358 = vunpack.c.l.b16 %v2492
        %v3359 = vunpack.c.h.b16 %v2492
        %v3360 = vunpack.c.l.b16 %v2493
        %v3361 = vunpack.c.h.b16 %v2493
        %v3362 = vunpack.c.l.b16 %v2494
        %v3363 = vunpack.c.h.b16 %v2494
        %v3364 = vunpack.c.l.b16 %v2495
        %v3365 = vunpack.c.h.b16 %v2495
        %v3366 = vunpack.c.l.b16 %v2496
        %v3367 = vunpack.c.h.b16 %v2496
        %v3368 = vunpack.c.l.b16 %v2497
        %v3369 = vunpack.c.h.b16 %v2497
        %v3370 = vunpack.c.l.b16 %v2498
        %v3371 = vunpack.c.h.b16 %v2498
        %v3372 = vunpack.c.l.b16 %v2499
        %v3373 = vunpack.c.h.b16 %v2499
        %v3374 = vunpack.c.l.b16 %v2500
        %v3375 = vunpack.c.h.b16 %v2500
        %v3376 = vunpack.c.l.b16 %v2501
        %v3377 = vunpack.c.h.b16 %v2501
        %v3378 = vunpack.c.l.b16 %v2502
        %v3379 = vunpack.c.h.b16 %v2502
        %v3380 = vunpack.c.l.b16 %v2503
        %v3381 = vunpack.c.h.b16 %v2503
        %v3382 = vunpack.c.l.b16 %v2504
        %v3383 = vunpack.c.h.b16 %v2504
        %v3384 = vunpack.c.l.b16 %v2505
        %v3385 = vunpack.c.h.b16 %v2505
        %v3386 = vunpack.c.l.b16 %v2506
        %v3387 = vunpack.c.h.b16 %v2506
        %v3388 = vunpack.c.l.b16 %v2507
        %v3389 = vunpack.c.h.b16 %v2507
        %v3390 = vunpack.c.l.b16 %v2508
        %v3391 = vunpack.c.h.b16 %v2508
        %v3392 = vunpack.c.l.b16 %v2509
        %v3393 = vunpack.c.h.b16 %v2509
        %v3394 = vunpack.c.l.b16 %v2510
        %v3395 = vunpack.c.h.b16 %v2510
        %v3396 = vunpack.c.l.b16 %v2511
        %v3397 = vunpack.c.h.b16 %v2511
        %v3398 = vunpack.c.l.b16 %v2512
        %v3399 = vunpack.c.h.b16 %v2512
        %v3400 = vunpack.c.l.b16 %v2513
        %v3401 = vunpack.c.h.b16 %v2513
        %v3402 = vunpack.c.l.b16 %v2514
        %v3403 = vunpack.c.h.b16 %v2514
        %v3404 = vunpack.c.l.b16 %v2515
        %v3405 = vunpack.c.h.b16 %v2515
        %v3406 = vunpack.c.l.b16 %v2516
        %v3407 = vunpack.c.h.b16 %v2516
        %v3408 = vunpack.c.l.b16 %v2517
        %v3409 = vunpack.c.h.b16 %v2517
        %v3410 = vunpack.c.l.b16 %v2518
        %v3411 = vunpack.c.h.b16 %v2518
        %v3412 = vunpack.c.l.b16 %v2519
        %v3413 = vunpack.c.h.b16 %v2519
        %v3414 = vunpack.c.l.b16 %v2520
        %v3415 = vunpack.c.h.b16 %v2520
        %v3416 = vunpack.c.l.b16 %v2521
        %v3417 = vunpack.c.h.b16 %v2521
        %v3418 = vunpack.c.l.b16 %v2522
        %v3419 = vunpack.c.h.b16 %v2522
        %v3420 = vunpack.c.l.b16 %v2523
        %v3421 = vunpack.c.h.b16 %v2523
        %v3422 = vunpack.c.l.b16 %v2524
        %v3423 = vunpack.c.h.b16 %v2524
        %v3424 = vunpack.c.l.b16 %v2525
        %v3425 = vunpack.c.h.b16 %v2525
        %v3426 = vunpack.c.l.b16 %v2526
        %v3427 = vunpack.c.h.b16 %v2526
        %v3428 = vunpack.c.l.b16 %v2527
        %v3429 = vunpack.c.h.b16 %v2527
        %v3430 = vunpack.c.l.b16 %v2528
        %v3431 = vunpack.c.h.b16 %v2528
        %v3432 = vunpack.c.l.b16 %v2529
        %v3433 = vunpack.c.h.b16 %v2529
        %v3434 = vunpack.c.l.b16 %v2530
        %v3435 = vunpack.c.h.b16 %v2530
        %v3436 = vunpack.c.l.b16 %v2531
        %v3437 = vunpack.c.h.b16 %v2531
        %v3438 = vunpack.c.l.b16 %v2532
        %v3439 = vunpack.c.h.b16 %v2532
        %v3440 = vunpack.c.l.b16 %v2533
        %v3441 = vunpack.c.h.b16 %v2533
        %v3442 = vunpack.c.l.b16 %v2534
        %v3443 = vunpack.c.h.b16 %v2534
        %v3444 = vunpack.c.l.b16 %v2535
        %v3445 = vunpack.c.h.b16 %v2535
        %v3446 = vunpack.c.l.b16 %v2536
        %v3447 = vunpack.c.h.b16 %v2536
        %v3448 = vunpack.c.l.b16 %v2537
        %v3449 = vunpack.c.h.b16 %v2537
        %v3450 = vunpack.c.l.b16 %v2538
        %v3451 = vunpack.c.h.b16 %v2538
        %v3452 = vunpack.c.l.b16 %v2539
        %v3453 = vunpack.c.h.b16 %v2539
        %v3454 = vunpack.c.l.b16 %v2540
        %v3455 = vunpack.c.h.b16 %v2540
        %v3456 = vunpack.c.l.b16 %v2541
        %v3457 = vunpack.c.h.b16 %v2541
        %v3458 = vunpack.c.l.b16 %v2542
        %v3459 = vunpack.c.h.b16 %v2542
        %v3460 = vunpack.c.l.b16 %v2543
        %v3461 = vunpack.c.h.b16 %v2543
        %v3462 = vunpack.c.l.b16 %v2544
        %v3463 = vunpack.c.h.b16 %v2544
        %v3464 = vunpack.c.l.b16 %v2545
        %v3465 = vunpack.c.h.b16 %v2545
        %v3466 = vunpack.c.l.b16 %v2546
        %v3467 = vunpack.c.h.b16 %v2546
        %v3468 = vunpack.c.l.b16 %v2547
        %v3469 = vunpack.c.h.b16 %v2547
        %v3470 = vunpack.c.l.b16 %v2548
        %v3471 = vunpack.c.h.b16 %v2548
        %v3472 = vunpack.c.l.b16 %v2549
        %v3473 = vunpack.c.h.b16 %v2549
        %v3474 = vunpack.c.l.b16 %v2550
        %v3475 = vunpack.c.h.b16 %v2550
        %v3476 = vunpack.c.l.b16 %v2551
        %v3477 = vunpack.c.h.b16 %v2551
        %v3478 = vunpack.c.l.b16 %v2552
        %v3479 = vunpack.c.h.b16 %v2552
        %v3480 = vunpack.c.l.b16 %v2553
        %v3481 = vunpack.c.h.b16 %v2553
        %v3482 = vunpack.c.l.b16 %v2554
        %v3483 = vunpack.c.h.b16 %v2554
        %v3484 = vunpack.c.l.b16 %v2555
        %v3485 = vunpack.c.h.b16 %v2555
        %v3486 = vunpack.c.l.b16 %v2556
        %v3487 = vunpack.c.h.b16 %v2556
        %v3488 = vunpack.c.l.b16 %v2557
        %v3489 = vunpack.c.h.b16 %v2557
        %v3490 = vunpack.c.l.b16 %v2558
        %v3491 = vunpack.c.h.b16 %v2558
        %v3492 = vunpack.c.l.b16 %v2559
        %v3493 = vunpack.c.h.b16 %v2559
        %v3494 = vunpack.c.l.b16 %v2560
        %v3495 = vunpack.c.h.b16 %v2560
        %v3496 = vunpack.c.l.b16 %v2561
        %v3497 = vunpack.c.h.b16 %v2561
        %v3498 = vunpack.c.l.b16 %v2562
        %v3499 = vunpack.c.h.b16 %v2562
        %v3500 = vunpack.c.l.b16 %v2563
        %v3501 = vunpack.c.h.b16 %v2563
        %v3502 = vunpack.c.l.b16 %v2564
        %v3503 = vunpack.c.h.b16 %v2564
        %v3504 = vunpack.c.l.b16 %v2565
        %v3505 = vunpack.c.h.b16 %v2565
        %v3506 = vunpack.c.l.b16 %v2566
        %v3507 = vunpack.c.h.b16 %v2566
        %v3508 = vunpack.c.l.b16 %v2567
        %v3509 = vunpack.c.h.b16 %v2567
        %v3510 = vunpack.c.l.b16 %v2568
        %v3511 = vunpack.c.h.b16 %v2568
        %v3512 = vunpack.c.l.b16 %v2569
        %v3513 = vunpack.c.h.b16 %v2569
        %v3514 = vunpack.c.l.b16 %v2570
        %v3515 = vunpack.c.h.b16 %v2570
        %v3516 = vunpack.c.l.b16 %v2571
        %v3517 = vunpack.c.h.b16 %v2571
        %v3518 = vunpack.c.l.b16 %v2572
        %v3519 = vunpack.c.h.b16 %v2572
        %v3520 = vunpack.c.l.b16 %v2573
        %v3521 = vunpack.c.h.b16 %v2573
        %v3522 = vunpack.c.l.b16 %v2574
        %v3523 = vunpack.c.h.b16 %v2574
        %v3524 = vunpack.c.l.b16 %v2575
        %v3525 = vunpack.c.h.b16 %v2575
        %v3526 = vunpack.c.l.b16 %v2576
        %v3527 = vunpack.c.h.b16 %v2576
        %v3528 = vunpack.c.l.b16 %v2577
        %v3529 = vunpack.c.h.b16 %v2577
        %v3530 = vunpack.c.l.b16 %v2578
        %v3531 = vunpack.c.h.b16 %v2578
        %v3532 = vunpack.c.l.b16 %v2579
        %v3533 = vunpack.c.h.b16 %v2579
        %v3534 = vunpack.c.l.b16 %v2580
        %v3535 = vunpack.c.h.b16 %v2580
        %v3536 = vunpack.c.l.b16 %v2581
        %v3537 = vunpack.c.h.b16 %v2581
        %v3538 = vunpack.c.l.b16 %v2582
        %v3539 = vunpack.c.h.b16 %v2582
        %v3540 = vunpack.c.l.b16 %v2583
        %v3541 = vunpack.c.h.b16 %v2583
        %v3542 = vunpack.c.l.b16 %v2584
        %v3543 = vunpack.c.h.b16 %v2584
        %v3544 = vunpack.c.l.b16 %v2585
        %v3545 = vunpack.c.h.b16 %v2585
        %v3546 = vunpack.c.l.b16 %v2586
        %v3547 = vunpack.c.h.b16 %v2586
        %v3548 = vunpack.c.l.b16 %v2587
        %v3549 = vunpack.c.h.b16 %v2587
        %v3550 = vunpack.c.l.b16 %v2588
        %v3551 = vunpack.c.h.b16 %v2588
        %v3552 = vunpack.c.l.b16 %v2589
        %v3553 = vunpack.c.h.b16 %v2589
        %v3554 = vunpack.c.l.b16 %v2590
        %v3555 = vunpack.c.h.b16 %v2590
        %v3556 = vunpack.c.l.b16 %v2591
        %v3557 = vunpack.c.h.b16 %v2591
        %v3558 = vunpack.c.l.b16 %v2592
        %v3559 = vunpack.c.h.b16 %v2592
        %v3560 = vunpack.c.l.b16 %v2593
        %v3561 = vunpack.c.h.b16 %v2593
        %v3562 = vunpack.c.l.b16 %v2594
        %v3563 = vunpack.c.h.b16 %v2594
        %v3564 = vunpack.c.l.b16 %v2595
        %v3565 = vunpack.c.h.b16 %v2595
        %v3566 = vunpack.c.l.b16 %v2596
        %v3567 = vunpack.c.h.b16 %v2596
        %v3568 = vunpack.c.l.b16 %v2597
        %v3569 = vunpack.c.h.b16 %v2597
        %v3570 = vunpack.c.l.b16 %v2598
        %v3571 = vunpack.c.h.b16 %v2598
        %v3572 = vunpack.c.l.b16 %v2599
        %v3573 = vunpack.c.h.b16 %v2599
        %v3574 = vunpack.c.l.b16 %v2600
        %v3575 = vunpack.c.h.b16 %v2600
        %v3576 = vunpack.c.l.b16 %v2601
        %v3577 = vunpack.c.h.b16 %v2601
        %v3578 = vunpack.c.l.b16 %v2602
        %v3579 = vunpack.c.h.b16 %v2602
        %v3580 = vunpack.c.l.b16 %v2603
        %v3581 = vunpack.c.h.b16 %v2603
        %v3582 = vunpack.c.l.b16 %v2604
        %v3583 = vunpack.c.h.b16 %v2604
        %v3584 = vunpack.c.l.b16 %v2605
        %v3585 = vunpack.c.h.b16 %v2605
        %v3586 = vunpack.c.l.b16 %v2606
        %v3587 = vunpack.c.h.b16 %v2606
        %v3588 = vunpack.c.l.b16 %v2607
        %v3589 = vunpack.c.h.b16 %v2607
        %v3590 = vunpack.c.l.b16 %v2608
        %v3591 = vunpack.c.h.b16 %v2608
        %v3592 = vunpack.c.l.b16 %v2609
        %v3593 = vunpack.c.h.b16 %v2609
        %v3594 = vunpack.c.l.b16 %v2610
        %v3595 = vunpack.c.h.b16 %v2610
        %v3596 = vunpack.c.l.b16 %v2611
        %v3597 = vunpack.c.h.b16 %v2611
        %v3598 = vunpack.c.l.b16 %v2612
        %v3599 = vunpack.c.h.b16 %v2612
        %v3600 = vunpack.c.l.b16 %v2613
        %v3601 = vunpack.c.h.b16 %v2613
        %v3602 = vunpack.c.l.b16 %v2614
        %v3603 = vunpack.c.h.b16 %v2614
        %v3604 = vunpack.c.l.b16 %v2615
        %v3605 = vunpack.c.h.b16 %v2615
        %v3606 = vunpack.c.l.b16 %v2616
        %v3607 = vunpack.c.h.b16 %v2616
        %v3608 = vunpack.c.l.b16 %v2617
        %v3609 = vunpack.c.h.b16 %v2617
        %v3610 = vunpack.c.l.b16 %v2618
        %v3611 = vunpack.c.h.b16 %v2618
        %v3612 = vunpack.c.l.b16 %v2619
        %v3613 = vunpack.c.h.b16 %v2619
        %v3614 = vunpack.c.l.b16 %v2620
        %v3615 = vunpack.c.h.b16 %v2620
        %v3616 = vunpack.c.l.b16 %v2621
        %v3617 = vunpack.c.h.b16 %v2621
        %v3618 = vunpack.c.l.b16 %v2622
        %v3619 = vunpack.c.h.b16 %v2622
        %v3620 = vunpack.c.l.b16 %v2623
        %v3621 = vunpack.c.h.b16 %v2623
        %v3622 = vunpack.c.l.b16 %v2624
        %v3623 = vunpack.c.h.b16 %v2624
        %v3624 = vunpack.c.l.b16 %v2625
        %v3625 = vunpack.c.h.b16 %v2625
        %v3626 = vunpack.c.l.b16 %v2626
        %v3627 = vunpack.c.h.b16 %v2626
        %v3628 = vunpack.c.l.b16 %v2627
        %v3629 = vunpack.c.h.b16 %v2627
        %v3630 = vunpack.c.l.b16 %v2628
        %v3631 = vunpack.c.h.b16 %v2628
        %v3632 = vunpack.c.l.b16 %v2629
        %v3633 = vunpack.c.h.b16 %v2629
        %v3634 = vunpack.c.l.b16 %v2630
        %v3635 = vunpack.c.h.b16 %v2630
        %v3636 = vunpack.c.l.b16 %v2631
        %v3637 = vunpack.c.h.b16 %v2631
        %v3638 = vunpack.c.l.b16 %v2632
        %v3639 = vunpack.c.h.b16 %v2632
        %v3640 = vunpack.c.l.b16 %v2633
        %v3641 = vunpack.c.h.b16 %v2633
        %v3642 = vunpack.c.l.b16 %v2634
        %v3643 = vunpack.c.h.b16 %v2634
        %v3644 = vunpack.c.l.b16 %v2635
        %v3645 = vunpack.c.h.b16 %v2635
        %v3646 = vunpack.c.l.b16 %v2636
        %v3647 = vunpack.c.h.b16 %v2636
        %v3648 = vunpack.c.l.b16 %v2637
        %v3649 = vunpack.c.h.b16 %v2637
        %v3650 = vunpack.c.l.b16 %v2638
        %v3651 = vunpack.c.h.b16 %v2638
        %v3652 = vunpack.c.l.b16 %v2639
        %v3653 = vunpack.c.h.b16 %v2639
        %v3654 = vunpack.c.l.b16 %v2640
        %v3655 = vunpack.c.h.b16 %v2640
        %v3656 = vunpack.c.l.b16 %v2641
        %v3657 = vunpack.c.h.b16 %v2641
        %v3658 = vunpack.c.l.b16 %v2642
        %v3659 = vunpack.c.h.b16 %v2642
        %v3660 = vunpack.c.l.b16 %v2643
        %v3661 = vunpack.c.h.b16 %v2643
        %v3662 = vunpack.c.l.b16 %v2644
        %v3663 = vunpack.c.h.b16 %v2644
        %v3664 = vunpack.c.l.b16 %v2645
        %v3665 = vunpack.c.h.b16 %v2645
        %v3666 = vunpack.c.l.b16 %v2646
        %v3667 = vunpack.c.h.b16 %v2646
        %v3668 = vunpack.c.l.b16 %v2647
        %v3669 = vunpack.c.h.b16 %v2647
        %v3670 = vunpack.c.l.b16 %v2648
        %v3671 = vunpack.c.h.b16 %v2648
        %v3672 = vunpack.c.l.b16 %v2649
        %v3673 = vunpack.c.h.b16 %v2649
        %v3674 = vunpack.c.l.b16 %v2650
        %v3675 = vunpack.c.h.b16 %v2650
        %v3676 = vunpack.c.l.b16 %v2651
        %v3677 = vunpack.c.h.b16 %v2651
        %v3678 = vunpack.c.l.b16 %v2652
        %v3679 = vunpack.c.h.b16 %v2652
        %v3680 = vunpack.c.l.b16 %v2653
        %v3681 = vunpack.c.h.b16 %v2653
        %v3682 = vunpack.c.l.b16 %v2654
        %v3683 = vunpack.c.h.b16 %v2654
        %v3684 = vunpack.c.l.b16 %v2655
        %v3685 = vunpack.c.h.b16 %v2655
        %v3686 = vunpack.c.l.b16 %v2656
        %v3687 = vunpack.c.h.b16 %v2656
        %v3688 = vunpack.c.l.b16 %v2657
        %v3689 = vunpack.c.h.b16 %v2657
        %v3690 = vunpack.c.l.b16 %v2658
        %v3691 = vunpack.c.h.b16 %v2658
        %v3692 = vunpack.c.l.b16 %v2659
        %v3693 = vunpack.c.h.b16 %v2659
        %v3694 = vunpack.c.l.b16 %v2660
        %v3695 = vunpack.c.h.b16 %v2660
        %v3696 = vunpack.c.l.b16 %v2661
        %v3697 = vunpack.c.h.b16 %v2661
        %v3698 = vunpack.c.l.b16 %v2662
        %v3699 = vunpack.c.h.b16 %v2662
        %v3700 = vunpack.c.l.b16 %v2663
        %v3701 = vunpack.c.h.b16 %v2663
        %v3702 = vunpack.c.l.b16 %v2664
        %v3703 = vunpack.c.h.b16 %v2664
        %v3704 = vunpack.c.l.b16 %v2665
        %v3705 = vunpack.c.h.b16 %v2665
        %v3706 = vunpack.c.l.b16 %v2666
        %v3707 = vunpack.c.h.b16 %v2666
        %v3708 = vunpack.c.l.b16 %v2667
        %v3709 = vunpack.c.h.b16 %v2667
        %v3710 = vunpack.c.l.b16 %v2668
        %v3711 = vunpack.c.h.b16 %v2668
        %v3712 = vunpack.c.l.b16 %v2669
        %v3713 = vunpack.c.h.b16 %v2669
        %v3714 = vunpack.c.l.b16 %v2670
        %v3715 = vunpack.c.h.b16 %v2670
        %v3716 = vunpack.c.l.b16 %v2671
        %v3717 = vunpack.c.h.b16 %v2671
        %v3718 = vunpack.c.l.b16 %v2672
        %v3719 = vunpack.c.h.b16 %v2672
        %v3720 = vunpack.c.l.b16 %v2673
        %v3721 = vunpack.c.h.b16 %v2673
        %v3722 = vunpack.c.l.b16 %v2674
        %v3723 = vunpack.c.h.b16 %v2674
        %v3724 = vunpack.c.l.b16 %v2675
        %v3725 = vunpack.c.h.b16 %v2675
        %v3726 = vunpack.c.l.b16 %v2676
        %v3727 = vunpack.c.h.b16 %v2676
        %v3728 = vunpack.c.l.b16 %v2677
        %v3729 = vunpack.c.h.b16 %v2677
        %v3730 = vunpack.c.l.b16 %v2678
        %v3731 = vunpack.c.h.b16 %v2678
        %v3732 = vunpack.c.l.b16 %v2679
        %v3733 = vunpack.c.h.b16 %v2679
        %v3734 = vunpack.c.l.b16 %v2680
        %v3735 = vunpack.c.h.b16 %v2680
        %v3736 = vunpack.c.l.b16 %v2681
        %v3737 = vunpack.c.h.b16 %v2681
        %v3738 = vunpack.c.l.b16 %v2682
        %v3739 = vunpack.c.h.b16 %v2682
        %v3740 = vunpack.c.l.b16 %v2683
        %v3741 = vunpack.c.h.b16 %v2683
        %v3742 = vunpack.c.l.b16 %v2684
        %v3743 = vunpack.c.h.b16 %v2684
        %v3744 = vunpack.c.l.b16 %v2685
        %v3745 = vunpack.c.h.b16 %v2685
        %v3746 = vunpack.c.l.b16 %v2686
        %v3747 = vunpack.c.h.b16 %v2686
        %v3748 = vunpack.c.l.b16 %v2687
        %v3749 = vunpack.c.h.b16 %v2687
        %v3750 = vunpack.c.l.b16 %v2688
        %v3751 = vunpack.c.h.b16 %v2688
        %v3752 = vunpack.c.l.b16 %v2689
        %v3753 = vunpack.c.h.b16 %v2689
        %v3754 = vunpack.c.l.b16 %v2690
        %v3755 = vunpack.c.h.b16 %v2690
        %v3756 = vunpack.c.l.b16 %v2691
        %v3757 = vunpack.c.h.b16 %v2691
        %v3758 = vunpack.c.l.b16 %v2692
        %v3759 = vunpack.c.h.b16 %v2692
        %v3760 = vunpack.c.l.b16 %v2693
        %v3761 = vunpack.c.h.b16 %v2693
        %v3762 = vunpack.c.l.b16 %v2694
        %v3763 = vunpack.c.h.b16 %v2694
        %v3764 = vunpack.c.l.b16 %v2695
        %v3765 = vunpack.c.h.b16 %v2695
        %v3766 = vunpack.c.l.b16 %v2696
        %v3767 = vunpack.c.h.b16 %v2696
        %v3768 = vunpack.c.l.b16 %v2697
        %v3769 = vunpack.c.h.b16 %v2697
        %v3770 = vunpack.c.l.b16 %v2698
        %v3771 = vunpack.c.h.b16 %v2698
        %v3772 = vunpack.c.l.b16 %v2699
        %v3773 = vunpack.c.h.b16 %v2699
        %v3774 = vunpack.c.l.b16 %v2700
        %v3775 = vunpack.c.h.b16 %v2700
        %v3776 = vunpack.c.l.b16 %v2701
        %v3777 = vunpack.c.h.b16 %v2701
        %v3778 = vunpack.c.l.b16 %v2702
        %v3779 = vunpack.c.h.b16 %v2702
        %v3780 = vunpack.c.l.b16 %v2703
        %v3781 = vunpack.c.h.b16 %v2703
        %v3782 = vunpack.c.l.b16 %v2704
        %v3783 = vunpack.c.h.b16 %v2704
        %v3784 = vunpack.c.l.b16 %v2705
        %v3785 = vunpack.c.h.b16 %v2705
        %v3786 = vunpack.c.l.b16 %v2706
        %v3787 = vunpack.c.h.b16 %v2706
        %v3788 = vunpack.c.l.b16 %v2707
        %v3789 = vunpack.c.h.b16 %v2707
        %v3790 = vunpack.c.l.b16 %v2708
        %v3791 = vunpack.c.h.b16 %v2708
        %v3792 = vunpack.c.l.b16 %v2709
        %v3793 = vunpack.c.h.b16 %v2709
        %v3794 = vunpack.c.l.b16 %v2710
        %v3795 = vunpack.c.h.b16 %v2710
        %v3796 = vunpack.c.l.b16 %v2711
        %v3797 = vunpack.c.h.b16 %v2711
        %v3798 = vunpack.c.l.b16 %v2712
        %v3799 = vunpack.c.h.b16 %v2712
        %v3800 = vunpack.c.l.b16 %v2713
        %v3801 = vunpack.c.h.b16 %v2713
        %v3802 = vunpack.c.l.b16 %v2714
        %v3803 = vunpack.c.h.b16 %v2714
        %v3804 = vunpack.c.l.b16 %v2715
        %v3805 = vunpack.c.h.b16 %v2715
        %v3806 = vunpack.c.l.b16 %v2716
        %v3807 = vunpack.c.h.b16 %v2716
        %v3808 = vunpack.c.l.b16 %v2717
        %v3809 = vunpack.c.h.b16 %v2717
        %v3810 = vunpack.c.l.b16 %v2718
        %v3811 = vunpack.c.h.b16 %v2718
        %v3812 = vunpack.c.l.b16 %v2719
        %v3813 = vunpack.c.h.b16 %v2719
        %v3814 = vunpack.c.l.b16 %v2720
        %v3815 = vunpack.c.h.b16 %v2720
        %v3816 = vunpack.c.l.b16 %v2721
        %v3817 = vunpack.c.h.b16 %v2721
        %v3818 = vunpack.c.l.b16 %v2722
        %v3819 = vunpack.c.h.b16 %v2722
        %v3820 = vunpack.c.l.b16 %v2723
        %v3821 = vunpack.c.h.b16 %v2723
        %v3822 = vunpack.c.l.b16 %v2724
        %v3823 = vunpack.c.h.b16 %v2724
        %v3824 = vunpack.c.l.b16 %v2725
        %v3825 = vunpack.c.h.b16 %v2725
        %v3826 = vunpack.c.l.b16 %v2726
        %v3827 = vunpack.c.h.b16 %v2726
        %v3828 = vunpack.c.l.b16 %v2727
        %v3829 = vunpack.c.h.b16 %v2727
        %v3830 = vunpack.c.l.b16 %v2728
        %v3831 = vunpack.c.h.b16 %v2728
        %v3832 = vunpack.c.l.b16 %v2729
        %v3833 = vunpack.c.h.b16 %v2729
        %v3834 = vunpack.c.l.b16 %v2730
        %v3835 = vunpack.c.h.b16 %v2730
        %v3836 = vunpack.c.l.b16 %v2731
        %v3837 = vunpack.c.h.b16 %v2731
        %v3838 = vpack.c.b16 %v3334, %v3326
        %v3839 = vpack.c.b16 %v3335, %v3327
        %v3840 = vpack.c.b16 %v3336, %v3328
        %v3841 = vpack.c.b16 %v3337, %v3329
        %v3842 = vpack.c.b16 %v3338, %v3330
        %v3843 = vpack.c.b16 %v3339, %v3331
        %v3844 = vpack.c.b16 %v3340, %v3332
        %v3845 = vpack.c.b16 %v3341, %v3333
        %v3846 = vpack.c.b16 %v3350, %v3342
        %v3847 = vpack.c.b16 %v3351, %v3343
        %v3848 = vpack.c.b16 %v3352, %v3344
        %v3849 = vpack.c.b16 %v3353, %v3345
        %v3850 = vpack.c.b16 %v3354, %v3346
        %v3851 = vpack.c.b16 %v3355, %v3347
        %v3852 = vpack.c.b16 %v3356, %v3348
        %v3853 = vpack.c.b16 %v3357, %v3349
        %v3854 = vpack.c.b16 %v3366, %v3358
        %v3855 = vpack.c.b16 %v3367, %v3359
        %v3856 = vpack.c.b16 %v3368, %v3360
        %v3857 = vpack.c.b16 %v3369, %v3361
        %v3858 = vpack.c.b16 %v3370, %v3362
        %v3859 = vpack.c.b16 %v3371, %v3363
        %v3860 = vpack.c.b16 %v3372, %v3364
        %v3861 = vpack.c.b16 %v3373, %v3365
        %v3862 = vpack.c.b16 %v3382, %v3374
        %v3863 = vpack.c.b16 %v3383, %v3375
        %v3864 = vpack.c.b16 %v3384, %v3376
        %v3865 = vpack.c.b16 %v3385, %v3377
        %v3866 = vpack.c.b16 %v3386, %v3378
        %v3867 = vpack.c.b16 %v3387, %v3379
        %v3868 = vpack.c.b16 %v3388, %v3380
        %v3869 = vpack.c.b16 %v3389, %v3381
        %v3870 = vpack.c.b16 %v3398, %v3390
        %v3871 = vpack.c.b16 %v3399, %v3391
        %v3872 = vpack.c.b16 %v3400, %v3392
        %v3873 = vpack.c.b16 %v3401, %v3393
        %v3874 = vpack.c.b16 %v3402, %v3394
        %v3875 = vpack.c.b16 %v3403, %v3395
        %v3876 = vpack.c.b16 %v3404, %v3396
        %v3877 = vpack.c.b16 %v3405, %v3397
        %v3878 = vpack.c.b16 %v3414, %v3406
        %v3879 = vpack.c.b16 %v3415, %v3407
        %v3880 = vpack.c.b16 %v3416, %v3408
        %v3881 = vpack.c.b16 %v3417, %v3409
        %v3882 = vpack.c.b16 %v3418, %v3410
        %v3883 = vpack.c.b16 %v3419, %v3411
        %v3884 = vpack.c.b16 %v3420, %v3412
        %v3885 = vpack.c.b16 %v3421, %v3413
        %v3886 = vpack.c.b16 %v3430, %v3422
        %v3887 = vpack.c.b16 %v3431, %v3423
        %v3888 = vpack.c.b16 %v3432, %v3424
        %v3889 = vpack.c.b16 %v3433, %v3425
        %v3890 = vpack.c.b16 %v3434, %v3426
        %v3891 = vpack.c.b16 %v3435, %v3427
        %v3892 = vpack.c.b16 %v3436, %v3428
        %v3893 = vpack.c.b16 %v3437, %v3429
        %v3894 = vpack.c.b16 %v3446, %v3438
        %v3895 = vpack.c.b16 %v3447, %v3439
        %v3896 = vpack.c.b16 %v3448, %v3440
        %v3897 = vpack.c.b16 %v3449, %v3441
        %v3898 = vpack.c.b16 %v3450, %v3442
        %v3899 = vpack.c.b16 %v3451, %v3443
        %v3900 = vpack.c.b16 %v3452, %v3444
        %v3901 = vpack.c.b16 %v3453, %v3445
        %v3902 = vpack.c.b16 %v3462, %v3454
        %v3903 = vpack.c.b16 %v3463, %v3455
        %v3904 = vpack.c.b16 %v3464, %v3456
        %v3905 = vpack.c.b16 %v3465, %v3457
        %v3906 = vpack.c.b16 %v3466, %v3458
        %v3907 = vpack.c.b16 %v3467, %v3459
        %v3908 = vpack.c.b16 %v3468, %v3460
        %v3909 = vpack.c.b16 %v3469, %v3461
        %v3910 = vpack.c.b16 %v3478, %v3470
        %v3911 = vpack.c.b16 %v3479, %v3471
        %v3912 = vpack.c.b16 %v3480, %v3472
        %v3913 = vpack.c.b16 %v3481, %v3473
        %v3914 = vpack.c.b16 %v3482, %v3474
        %v3915 = vpack.c.b16 %v3483, %v3475
        %v3916 = vpack.c.b16 %v3484, %v3476
        %v3917 = vpack.c.b16 %v3485, %v3477
        %v3918 = vpack.c.b16 %v3494, %v3486
        %v3919 = vpack.c.b16 %v3495, %v3487
        %v3920 = vpack.c.b16 %v3496, %v3488
        %v3921 = vpack.c.b16 %v3497, %v3489
        %v3922 = vpack.c.b16 %v3498, %v3490
        %v3923 = vpack.c.b16 %v3499, %v3491
        %v3924 = vpack.c.b16 %v3500, %v3492
        %v3925 = vpack.c.b16 %v3501, %v3493
        %v3926 = vpack.c.b16 %v3510, %v3502
        %v3927 = vpack.c.b16 %v3511, %v3503
        %v3928 = vpack.c.b16 %v3512, %v3504
        %v3929 = vpack.c.b16 %v3513, %v3505
        %v3930 = vpack.c.b16 %v3514, %v3506
        %v3931 = vpack.c.b16 %v3515, %v3507
        %v3932 = vpack.c.b16 %v3516, %v3508
        %v3933 = vpack.c.b16 %v3517, %v3509
        %v3934 = vpack.c.b16 %v3526, %v3518
        %v3935 = vpack.c.b16 %v3527, %v3519
        %v3936 = vpack.c.b16 %v3528, %v3520
        %v3937 = vpack.c.b16 %v3529, %v3521
        %v3938 = vpack.c.b16 %v3530, %v3522
        %v3939 = vpack.c.b16 %v3531, %v3523
        %v3940 = vpack.c.b16 %v3532, %v3524
        %v3941 = vpack.c.b16 %v3533, %v3525
        %v3942 = vpack.c.b16 %v3542, %v3534
        %v3943 = vpack.c.b16 %v3543, %v3535
        %v3944 = vpack.c.b16 %v3544, %v3536
        %v3945 = vpack.c.b16 %v3545, %v3537
        %v3946 = vpack.c.b16 %v3546, %v3538
        %v3947 = vpack.c.b16 %v3547, %v3539
        %v3948 = vpack.c.b16 %v3548, %v3540
        %v3949 = vpack.c.b16 %v3549, %v3541
        %v3950 = vpack.c.b16 %v3558, %v3550
        %v3951 = vpack.c.b16 %v3559, %v3551
        %v3952 = vpack.c.b16 %v3560, %v3552
        %v3953 = vpack.c.b16 %v3561, %v3553
        %v3954 = vpack.c.b16 %v3562, %v3554
        %v3955 = vpack.c.b16 %v3563, %v3555
        %v3956 = vpack.c.b16 %v3564, %v3556
        %v3957 = vpack.c.b16 %v3565, %v3557
        %v3958 = vpack.c.b16 %v3574, %v3566
        %v3959 = vpack.c.b16 %v3575, %v3567
        %v3960 = vpack.c.b16 %v3576, %v3568
        %v3961 = vpack.c.b16 %v3577, %v3569
        %v3962 = vpack.c.b16 %v3578, %v3570
        %v3963 = vpack.c.b16 %v3579, %v3571
        %v3964 = vpack.c.b16 %v3580, %v3572
        %v3965 = vpack.c.b16 %v3581, %v3573
        %v3966 = vpack.c.b16 %v3590, %v3582
        %v3967 = vpack.c.b16 %v3591, %v3583
        %v3968 = vpack.c.b16 %v3592, %v3584
        %v3969 = vpack.c.b16 %v3593, %v3585
        %v3970 = vpack.c.b16 %v3594, %v3586
        %v3971 = vpack.c.b16 %v3595, %v3587
        %v3972 = vpack.c.b16 %v3596, %v3588
        %v3973 = vpack.c.b16 %v3597, %v3589
        %v3974 = vpack.c.b16 %v3606, %v3598
        %v3975 = vpack.c.b16 %v3607, %v3599
        %v3976 = vpack.c.b16 %v3608, %v3600
        %v3977 = vpack.c.b16 %v3609, %v3601
        %v3978 = vpack.c.b16 %v3610, %v3602
        %v3979 = vpack.c.b16 %v3611, %v3603
        %v3980 = vpack.c.b16 %v3612, %v3604
        %v3981 = vpack.c.b16 %v3613, %v3605
        %v3982 = vpack.c.b16 %v3622, %v3614
        %v3983 = vpack.c.b16 %v3623, %v3615
        %v3984 = vpack.c.b16 %v3624, %v3616
        %v3985 = vpack.c.b16 %v3625, %v3617
        %v3986 = vpack.c.b16 %v3626, %v3618
        %v3987 = vpack.c.b16 %v3627, %v3619
        %v3988 = vpack.c.b16 %v3628, %v3620
        %v3989 = vpack.c.b16 %v3629, %v3621
        %v3990 = vpack.c.b16 %v3638, %v3630
        %v3991 = vpack.c.b16 %v3639, %v3631
        %v3992 = vpack.c.b16 %v3640, %v3632
        %v3993 = vpack.c.b16 %v3641, %v3633
        %v3994 = vpack.c.b16 %v3642, %v3634
        %v3995 = vpack.c.b16 %v3643, %v3635
        %v3996 = vpack.c.b16 %v3644, %v3636
        %v3997 = vpack.c.b16 %v3645, %v3637
        %v3998 = vpack.c.b16 %v3654, %v3646
        %v3999 = vpack.c.b16 %v3655, %v3647
        %v4000 = vpack.c.b16 %v3656, %v3648
        %v4001 = vpack.c.b16 %v3657, %v3649
        %v4002 = vpack.c.b16 %v3658, %v3650
        %v4003 = vpack.c.b16 %v3659, %v3651
        %v4004 = vpack.c.b16 %v3660, %v3652
        %v4005 = vpack.c.b16 %v3661, %v3653
        %v4006 = vpack.c.b16 %v3670, %v3662
        %v4007 = vpack.c.b16 %v3671, %v3663
        %v4008 = vpack.c.b16 %v3672, %v3664
        %v4009 = vpack.c.b16 %v3673, %v3665
        %v4010 = vpack.c.b16 %v3674, %v3666
        %v4011 = vpack.c.b16 %v3675, %v3667
        %v4012 = vpack.c.b16 %v3676, %v3668
        %v4013 = vpack.c.b16 %v3677, %v3669
        %v4014 = vpack.c.b16 %v3686, %v3678
        %v4015 = vpack.c.b16 %v3687, %v3679
        %v4016 = vpack.c.b16 %v3688, %v3680
        %v4017 = vpack.c.b16 %v3689, %v3681
        %v4018 = vpack.c.b16 %v3690, %v3682
        %v4019 = vpack.c.b16 %v3691, %v3683
        %v4020 = vpack.c.b16 %v3692, %v3684
        %v4021 = vpack.c.b16 %v3693, %v3685
        %v4022 = vpack.c.b16 %v3702, %v3694
        %v4023 = vpack.c.b16 %v3703, %v3695
        %v4024 = vpack.c.b16 %v3704, %v3696
        %v4025 = vpack.c.b16 %v3705, %v3697
        %v4026 = vpack.c.b16 %v3706, %v3698
        %v4027 = vpack.c.b16 %v3707, %v3699
        %v4028 = vpack.c.b16 %v3708, %v3700
        %v4029 = vpack.c.b16 %v3709, %v3701
        %v4030 = vpack.c.b16 %v3718, %v3710
        %v4031 = vpack.c.b16 %v3719, %v3711
        %v4032 = vpack.c.b16 %v3720, %v3712
        %v4033 = vpack.c.b16 %v3721, %v3713
        %v4034 = vpack.c.b16 %v3722, %v3714
        %v4035 = vpack.c.b16 %v3723, %v3715
        %v4036 = vpack.c.b16 %v3724, %v3716
        %v4037 = vpack.c.b16 %v3725, %v3717
        %v4038 = vpack.c.b16 %v3734, %v3726
        %v4039 = vpack.c.b16 %v3735, %v3727
        %v4040 = vpack.c.b16 %v3736, %v3728
        %v4041 = vpack.c.b16 %v3737, %v3729
        %v4042 = vpack.c.b16 %v3738, %v3730
        %v4043 = vpack.c.b16 %v3739, %v3731
        %v4044 = vpack.c.b16 %v3740, %v3732
        %v4045 = vpack.c.b16 %v3741, %v3733
        %v4046 = vpack.c.b16 %v3750, %v3742
        %v4047 = vpack.c.b16 %v3751, %v3743
        %v4048 = vpack.c.b16 %v3752, %v3744
        %v4049 = vpack.c.b16 %v3753, %v3745
        %v4050 = vpack.c.b16 %v3754, %v3746
        %v4051 = vpack.c.b16 %v3755, %v3747
        %v4052 = vpack.c.b16 %v3756, %v3748
        %v4053 = vpack.c.b16 %v3757, %v3749
        %v4054 = vpack.c.b16 %v3766, %v3758
        %v4055 = vpack.c.b16 %v3767, %v3759
        %v4056 = vpack.c.b16 %v3768, %v3760
        %v4057 = vpack.c.b16 %v3769, %v3761
        %v4058 = vpack.c.b16 %v3770, %v3762
        %v4059 = vpack.c.b16 %v3771, %v3763
        %v4060 = vpack.c.b16 %v3772, %v3764
        %v4061 = vpack.c.b16 %v3773, %v3765
        %v4062 = vpack.c.b16 %v3782, %v3774
        %v4063 = vpack.c.b16 %v3783, %v3775
        %v4064 = vpack.c.b16 %v3784, %v3776
        %v4065 = vpack.c.b16 %v3785, %v3777
        %v4066 = vpack.c.b16 %v3786, %v3778
        %v4067 = vpack.c.b16 %v3787, %v3779
        %v4068 = vpack.c.b16 %v3788, %v3780
        %v4069 = vpack.c.b16 %v3789, %v3781
        %v4070 = vpack.c.b16 %v3798, %v3790
        %v4071 = vpack.c.b16 %v3799, %v3791
        %v4072 = vpack.c.b16 %v3800, %v3792
        %v4073 = vpack.c.b16 %v3801, %v3793
        %v4074 = vpack.c.b16 %v3802, %v3794
        %v4075 = vpack.c.b16 %v3803, %v3795
        %v4076 = vpack.c.b16 %v3804, %v3796
        %v4077 = vpack.c.b16 %v3805, %v3797
        %v4078 = vpack.c.b16 %v3814, %v3806
        %v4079 = vpack.c.b16 %v3815, %v3807
        %v4080 = vpack.c.b16 %v3816, %v3808
        %v4081 = vpack.c.b16 %v3817, %v3809
        %v4082 = vpack.c.b16 %v3818, %v3810
        %v4083 = vpack.c.b16 %v3819, %v3811
        %v4084 = vpack.c.b16 %v3820, %v3812
        %v4085 = vpack.c.b16 %v3821, %v3813
        %v4086 = vpack.c.b16 %v3830, %v3822
        %v4087 = vpack.c.b16 %v3831, %v3823
        %v4088 = vpack.c.b16 %v3832, %v3824
        %v4089 = vpack.c.b16 %v3833, %v3825
        %v4090 = vpack.c.b16 %v3834, %v3826
        %v4091 = vpack.c.b16 %v3835, %v3827
        %v4092 = vpack.c.b16 %v3836, %v3828
        %v4093 = vpack.c.b16 %v3837, %v3829
        %4350 = vmatpush.bf16.msra.mxu0 %v3894
        %4351 = vmatpush.bf16.msra.mxu0 %v3886
        %4352 = vmatpush.bf16.msra.mxu0 %v3878
        %4353 = vmatpush.bf16.msra.mxu0 %v3870
        %4354 = vmatpush.bf16.msra.mxu0 %v3862
        %4355 = vmatpush.bf16.msra.mxu0 %v3854
        %4356 = vmatpush.bf16.msra.mxu0 %v3846
        %4357 = vmatpush.bf16.msra.mxu0 %v3838
        %4358 = vmatmul.bf16.gmra.mxu0 %v2942
        %v4359 = vpop.f32.mrf.mxu0
        %v4360 = vadd.f32 %v2734, %v4359
        %v4361 = vpop.f32.mrf.mxu0
        %v4362 = vadd.f32 %v2734, %v4361
        %4363 = vmatmul.bf16.gmra.mxu0 %v2946
        %v4364 = vpop.f32.mrf.mxu0
        %v4365 = vadd.f32 %v2734, %v4364
        %v4366 = vpop.f32.mrf.mxu0
        %v4367 = vadd.f32 %v2734, %v4366
        %4368 = vmatmul.bf16.gmra.mxu0 %v2950
        %v4369 = vpop.f32.mrf.mxu0
        %v4370 = vadd.f32 %v2734, %v4369
        %v4371 = vpop.f32.mrf.mxu0
        %v4372 = vadd.f32 %v2734, %v4371
        %4373 = vmatmul.bf16.gmra.mxu0 %v2954
        %v4374 = vpop.f32.mrf.mxu0
        %v4375 = vadd.f32 %v2734, %v4374
        %v4376 = vpop.f32.mrf.mxu0
        %v4377 = vadd.f32 %v2734, %v4376
        %4378 = vmatmul.bf16.gmra.mxu0 %v2958
        %v4379 = vpop.f32.mrf.mxu0
        %v4380 = vadd.f32 %v2734, %v4379
        %v4381 = vpop.f32.mrf.mxu0
        %v4382 = vadd.f32 %v2734, %v4381
        %4383 = vmatmul.bf16.gmra.mxu0 %v2962
        %v4384 = vpop.f32.mrf.mxu0
        %v4385 = vadd.f32 %v2734, %v4384
        %v4386 = vpop.f32.mrf.mxu0
        %v4387 = vadd.f32 %v2734, %v4386
        %4388 = vmatmul.bf16.gmra.mxu0 %v2966
        %v4389 = vpop.f32.mrf.mxu0
        %v4390 = vadd.f32 %v2734, %v4389
        %v4391 = vpop.f32.mrf.mxu0
        %v4392 = vadd.f32 %v2734, %v4391
        %4393 = vmatmul.bf16.gmra.mxu0 %v2970
        %v4394 = vpop.f32.mrf.mxu0
        %v4395 = vadd.f32 %v2734, %v4394
        %v4396 = vpop.f32.mrf.mxu0
        %v4397 = vadd.f32 %v2734, %v4396
        %4398 = vmatmul.bf16.gmra.mxu0 %v2974
        %v4399 = vpop.f32.mrf.mxu0
        %v4400 = vadd.f32 %v2734, %v4399
        %v4401 = vpop.f32.mrf.mxu0
        %v4402 = vadd.f32 %v2734, %v4401
        %4403 = vmatmul.bf16.gmra.mxu0 %v2978
        %v4404 = vpop.f32.mrf.mxu0
        %v4405 = vadd.f32 %v2734, %v4404
        %v4406 = vpop.f32.mrf.mxu0
        %v4407 = vadd.f32 %v2734, %v4406
        %4408 = vmatmul.bf16.gmra.mxu0 %v2982
        %v4409 = vpop.f32.mrf.mxu0
        %v4410 = vadd.f32 %v2734, %v4409
        %v4411 = vpop.f32.mrf.mxu0
        %v4412 = vadd.f32 %v2734, %v4411
        %4413 = vmatmul.bf16.gmra.mxu0 %v2986
        %v4414 = vpop.f32.mrf.mxu0
        %v4415 = vadd.f32 %v2734, %v4414
        %v4416 = vpop.f32.mrf.mxu0
        %v4417 = vadd.f32 %v2734, %v4416
        %4418 = vmatmul.bf16.gmra.mxu0 %v2990
        %v4419 = vpop.f32.mrf.mxu0
        %v4420 = vadd.f32 %v2734, %v4419
        %v4421 = vpop.f32.mrf.mxu0
        %v4422 = vadd.f32 %v2734, %v4421
        %4423 = vmatmul.bf16.gmra.mxu0 %v2994
        %v4424 = vpop.f32.mrf.mxu0
        %v4425 = vadd.f32 %v2734, %v4424
        %v4426 = vpop.f32.mrf.mxu0
        %v4427 = vadd.f32 %v2734, %v4426
        %4428 = vmatmul.bf16.gmra.mxu0 %v2998
        %v4429 = vpop.f32.mrf.mxu0
        %v4430 = vadd.f32 %v2734, %v4429
        %v4431 = vpop.f32.mrf.mxu0
        %v4432 = vadd.f32 %v2734, %v4431
        %4433 = vmatmul.bf16.gmra.mxu0 %v3002
        %v4434 = vpop.f32.mrf.mxu0
        %v4435 = vadd.f32 %v2734, %v4434
        %v4436 = vpop.f32.mrf.mxu0
        %v4437 = vadd.f32 %v2734, %v4436
        %4438 = vdwg.mxu0
        %4439 = vmatpush.bf16.msra.mxu0 %v3958
        %4440 = vmatpush.bf16.msra.mxu0 %v3950
        %4441 = vmatpush.bf16.msra.mxu0 %v3942
        %4442 = vmatpush.bf16.msra.mxu0 %v3934
        %4443 = vmatpush.bf16.msra.mxu0 %v3926
        %4444 = vmatpush.bf16.msra.mxu0 %v3918
        %4445 = vmatpush.bf16.msra.mxu0 %v3910
        %4446 = vmatpush.bf16.msra.mxu0 %v3902
        %4447 = vmatmul.bf16.gmra.mxu0 %v2943
        %v4448 = vpop.f32.mrf.mxu0
        %v4449 = vadd.f32 %v4360, %v4448
        %v4450 = vpop.f32.mrf.mxu0
        %v4451 = vadd.f32 %v4362, %v4450
        %4452 = vmatmul.bf16.gmra.mxu0 %v2947
        %v4453 = vpop.f32.mrf.mxu0
        %v4454 = vadd.f32 %v4365, %v4453
        %v4455 = vpop.f32.mrf.mxu0
        %v4456 = vadd.f32 %v4367, %v4455
        %4457 = vmatmul.bf16.gmra.mxu0 %v2951
        %v4458 = vpop.f32.mrf.mxu0
        %v4459 = vadd.f32 %v4370, %v4458
        %v4460 = vpop.f32.mrf.mxu0
        %v4461 = vadd.f32 %v4372, %v4460
        %4462 = vmatmul.bf16.gmra.mxu0 %v2955
        %v4463 = vpop.f32.mrf.mxu0
        %v4464 = vadd.f32 %v4375, %v4463
        %v4465 = vpop.f32.mrf.mxu0
        %v4466 = vadd.f32 %v4377, %v4465
        %4467 = vmatmul.bf16.gmra.mxu0 %v2959
        %v4468 = vpop.f32.mrf.mxu0
        %v4469 = vadd.f32 %v4380, %v4468
        %v4470 = vpop.f32.mrf.mxu0
        %v4471 = vadd.f32 %v4382, %v4470
        %4472 = vmatmul.bf16.gmra.mxu0 %v2963
        %v4473 = vpop.f32.mrf.mxu0
        %v4474 = vadd.f32 %v4385, %v4473
        %v4475 = vpop.f32.mrf.mxu0
        %v4476 = vadd.f32 %v4387, %v4475
        %4477 = vmatmul.bf16.gmra.mxu0 %v2967
        %v4478 = vpop.f32.mrf.mxu0
        %v4479 = vadd.f32 %v4390, %v4478
        %v4480 = vpop.f32.mrf.mxu0
        %v4481 = vadd.f32 %v4392, %v4480
        %4482 = vmatmul.bf16.gmra.mxu0 %v2971
        %v4483 = vpop.f32.mrf.mxu0
        %v4484 = vadd.f32 %v4395, %v4483
        %v4485 = vpop.f32.mrf.mxu0
        %v4486 = vadd.f32 %v4397, %v4485
        %4487 = vmatmul.bf16.gmra.mxu0 %v2975
        %v4488 = vpop.f32.mrf.mxu0
        %v4489 = vadd.f32 %v4400, %v4488
        %v4490 = vpop.f32.mrf.mxu0
        %v4491 = vadd.f32 %v4402, %v4490
        %4492 = vmatmul.bf16.gmra.mxu0 %v2979
        %v4493 = vpop.f32.mrf.mxu0
        %v4494 = vadd.f32 %v4405, %v4493
        %v4495 = vpop.f32.mrf.mxu0
        %v4496 = vadd.f32 %v4407, %v4495
        %4497 = vmatmul.bf16.gmra.mxu0 %v2983
        %v4498 = vpop.f32.mrf.mxu0
        %v4499 = vadd.f32 %v4410, %v4498
        %v4500 = vpop.f32.mrf.mxu0
        %v4501 = vadd.f32 %v4412, %v4500
        %4502 = vmatmul.bf16.gmra.mxu0 %v2987
        %v4503 = vpop.f32.mrf.mxu0
        %v4504 = vadd.f32 %v4415, %v4503
        %v4505 = vpop.f32.mrf.mxu0
        %v4506 = vadd.f32 %v4417, %v4505
        %4507 = vmatmul.bf16.gmra.mxu0 %v2991
        %v4508 = vpop.f32.mrf.mxu0
        %v4509 = vadd.f32 %v4420, %v4508
        %v4510 = vpop.f32.mrf.mxu0
        %v4511 = vadd.f32 %v4422, %v4510
        %4512 = vmatmul.bf16.gmra.mxu0 %v2995
        %v4513 = vpop.f32.mrf.mxu0
        %v4514 = vadd.f32 %v4425, %v4513
        %v4515 = vpop.f32.mrf.mxu0
        %v4516 = vadd.f32 %v4427, %v4515
        %4517 = vmatmul.bf16.gmra.mxu0 %v2999
        %v4518 = vpop.f32.mrf.mxu0
        %v4519 = vadd.f32 %v4430, %v4518
        %v4520 = vpop.f32.mrf.mxu0
        %v4521 = vadd.f32 %v4432, %v4520
        %4522 = vmatmul.bf16.gmra.mxu0 %v3003
        %v4523 = vpop.f32.mrf.mxu0
        %v4524 = vadd.f32 %v4435, %v4523
        %v4525 = vpop.f32.mrf.mxu0
        %v4526 = vadd.f32 %v4437, %v4525
        %4527 = vdwg.mxu0
        %4528 = vmatpush.bf16.msra.mxu0 %v4022
        %4529 = vmatpush.bf16.msra.mxu0 %v4014
        %4530 = vmatpush.bf16.msra.mxu0 %v4006
        %4531 = vmatpush.bf16.msra.mxu0 %v3998
        %4532 = vmatpush.bf16.msra.mxu0 %v3990
        %4533 = vmatpush.bf16.msra.mxu0 %v3982
        %4534 = vmatpush.bf16.msra.mxu0 %v3974
        %4535 = vmatpush.bf16.msra.mxu0 %v3966
        %4536 = vmatmul.bf16.gmra.mxu0 %v2944
        %v4537 = vpop.f32.mrf.mxu0
        %v4538 = vadd.f32 %v4449, %v4537
        %v4539 = vpop.f32.mrf.mxu0
        %v4540 = vadd.f32 %v4451, %v4539
        %4541 = vmatmul.bf16.gmra.mxu0 %v2948
        %v4542 = vpop.f32.mrf.mxu0
        %v4543 = vadd.f32 %v4454, %v4542
        %v4544 = vpop.f32.mrf.mxu0
        %v4545 = vadd.f32 %v4456, %v4544
        %4546 = vmatmul.bf16.gmra.mxu0 %v2952
        %v4547 = vpop.f32.mrf.mxu0
        %v4548 = vadd.f32 %v4459, %v4547
        %v4549 = vpop.f32.mrf.mxu0
        %v4550 = vadd.f32 %v4461, %v4549
        %4551 = vmatmul.bf16.gmra.mxu0 %v2956
        %v4552 = vpop.f32.mrf.mxu0
        %v4553 = vadd.f32 %v4464, %v4552
        %v4554 = vpop.f32.mrf.mxu0
        %v4555 = vadd.f32 %v4466, %v4554
        %4556 = vmatmul.bf16.gmra.mxu0 %v2960
        %v4557 = vpop.f32.mrf.mxu0
        %v4558 = vadd.f32 %v4469, %v4557
        %v4559 = vpop.f32.mrf.mxu0
        %v4560 = vadd.f32 %v4471, %v4559
        %4561 = vmatmul.bf16.gmra.mxu0 %v2964
        %v4562 = vpop.f32.mrf.mxu0
        %v4563 = vadd.f32 %v4474, %v4562
        %v4564 = vpop.f32.mrf.mxu0
        %v4565 = vadd.f32 %v4476, %v4564
        %4566 = vmatmul.bf16.gmra.mxu0 %v2968
        %v4567 = vpop.f32.mrf.mxu0
        %v4568 = vadd.f32 %v4479, %v4567
        %v4569 = vpop.f32.mrf.mxu0
        %v4570 = vadd.f32 %v4481, %v4569
        %4571 = vmatmul.bf16.gmra.mxu0 %v2972
        %v4572 = vpop.f32.mrf.mxu0
        %v4573 = vadd.f32 %v4484, %v4572
        %v4574 = vpop.f32.mrf.mxu0
        %v4575 = vadd.f32 %v4486, %v4574
        %4576 = vmatmul.bf16.gmra.mxu0 %v2976
        %v4577 = vpop.f32.mrf.mxu0
        %v4578 = vadd.f32 %v4489, %v4577
        %v4579 = vpop.f32.mrf.mxu0
        %v4580 = vadd.f32 %v4491, %v4579
        %4581 = vmatmul.bf16.gmra.mxu0 %v2980
        %v4582 = vpop.f32.mrf.mxu0
        %v4583 = vadd.f32 %v4494, %v4582
        %v4584 = vpop.f32.mrf.mxu0
        %v4585 = vadd.f32 %v4496, %v4584
        %4586 = vmatmul.bf16.gmra.mxu0 %v2984
        %v4587 = vpop.f32.mrf.mxu0
        %v4588 = vadd.f32 %v4499, %v4587
        %v4589 = vpop.f32.mrf.mxu0
        %v4590 = vadd.f32 %v4501, %v4589
        %4591 = vmatmul.bf16.gmra.mxu0 %v2988
        %v4592 = vpop.f32.mrf.mxu0
        %v4593 = vadd.f32 %v4504, %v4592
        %v4594 = vpop.f32.mrf.mxu0
        %v4595 = vadd.f32 %v4506, %v4594
        %4596 = vmatmul.bf16.gmra.mxu0 %v2992
        %v4597 = vpop.f32.mrf.mxu0
        %v4598 = vadd.f32 %v4509, %v4597
        %v4599 = vpop.f32.mrf.mxu0
        %v4600 = vadd.f32 %v4511, %v4599
        %4601 = vmatmul.bf16.gmra.mxu0 %v2996
        %v4602 = vpop.f32.mrf.mxu0
        %v4603 = vadd.f32 %v4514, %v4602
        %v4604 = vpop.f32.mrf.mxu0
        %v4605 = vadd.f32 %v4516, %v4604
        %4606 = vmatmul.bf16.gmra.mxu0 %v3000
        %v4607 = vpop.f32.mrf.mxu0
        %v4608 = vadd.f32 %v4519, %v4607
        %v4609 = vpop.f32.mrf.mxu0
        %v4610 = vadd.f32 %v4521, %v4609
        %4611 = vmatmul.bf16.gmra.mxu0 %v3004
        %v4612 = vpop.f32.mrf.mxu0
        %v4613 = vadd.f32 %v4524, %v4612
        %v4614 = vpop.f32.mrf.mxu0
        %v4615 = vadd.f32 %v4526, %v4614
        %4616 = vdwg.mxu0
        %4617 = vmatpush.bf16.msra.mxu0 %v4086
        %4618 = vmatpush.bf16.msra.mxu0 %v4078
        %4619 = vmatpush.bf16.msra.mxu0 %v4070
        %4620 = vmatpush.bf16.msra.mxu0 %v4062
        %4621 = vmatpush.bf16.msra.mxu0 %v4054
        %4622 = vmatpush.bf16.msra.mxu0 %v4046
        %4623 = vmatpush.bf16.msra.mxu0 %v4038
        %4624 = vmatpush.bf16.msra.mxu0 %v4030
        %4625 = vmatmul.bf16.gmra.mxu0 %v2945
        %v4626 = vpop.f32.mrf.mxu0
        %v4627 = vadd.f32 %v4538, %v4626
        %v4628 = vpop.f32.mrf.mxu0
        %v4629 = vadd.f32 %v4540, %v4628
        %4630 = vmatmul.bf16.gmra.mxu0 %v2949
        %v4631 = vpop.f32.mrf.mxu0
        %v4632 = vadd.f32 %v4543, %v4631
        %v4633 = vpop.f32.mrf.mxu0
        %v4634 = vadd.f32 %v4545, %v4633
        %4635 = vmatmul.bf16.gmra.mxu0 %v2953
        %v4636 = vpop.f32.mrf.mxu0
        %v4637 = vadd.f32 %v4548, %v4636
        %v4638 = vpop.f32.mrf.mxu0
        %v4639 = vadd.f32 %v4550, %v4638
        %4640 = vmatmul.bf16.gmra.mxu0 %v2957
        %v4641 = vpop.f32.mrf.mxu0
        %v4642 = vadd.f32 %v4553, %v4641
        %v4643 = vpop.f32.mrf.mxu0
        %v4644 = vadd.f32 %v4555, %v4643
        %4645 = vmatmul.bf16.gmra.mxu0 %v2961
        %v4646 = vpop.f32.mrf.mxu0
        %v4647 = vadd.f32 %v4558, %v4646
        %v4648 = vpop.f32.mrf.mxu0
        %v4649 = vadd.f32 %v4560, %v4648
        %4650 = vmatmul.bf16.gmra.mxu0 %v2965
        %v4651 = vpop.f32.mrf.mxu0
        %v4652 = vadd.f32 %v4563, %v4651
        %v4653 = vpop.f32.mrf.mxu0
        %v4654 = vadd.f32 %v4565, %v4653
        %4655 = vmatmul.bf16.gmra.mxu0 %v2969
        %v4656 = vpop.f32.mrf.mxu0
        %v4657 = vadd.f32 %v4568, %v4656
        %v4658 = vpop.f32.mrf.mxu0
        %v4659 = vadd.f32 %v4570, %v4658
        %4660 = vmatmul.bf16.gmra.mxu0 %v2973
        %v4661 = vpop.f32.mrf.mxu0
        %v4662 = vadd.f32 %v4573, %v4661
        %v4663 = vpop.f32.mrf.mxu0
        %v4664 = vadd.f32 %v4575, %v4663
        %4665 = vmatmul.bf16.gmra.mxu0 %v2977
        %v4666 = vpop.f32.mrf.mxu0
        %v4667 = vadd.f32 %v4578, %v4666
        %v4668 = vpop.f32.mrf.mxu0
        %v4669 = vadd.f32 %v4580, %v4668
        %4670 = vmatmul.bf16.gmra.mxu0 %v2981
        %v4671 = vpop.f32.mrf.mxu0
        %v4672 = vadd.f32 %v4583, %v4671
        %v4673 = vpop.f32.mrf.mxu0
        %v4674 = vadd.f32 %v4585, %v4673
        %4675 = vmatmul.bf16.gmra.mxu0 %v2985
        %v4676 = vpop.f32.mrf.mxu0
        %v4677 = vadd.f32 %v4588, %v4676
        %v4678 = vpop.f32.mrf.mxu0
        %v4679 = vadd.f32 %v4590, %v4678
        %4680 = vmatmul.bf16.gmra.mxu0 %v2989
        %v4681 = vpop.f32.mrf.mxu0
        %v4682 = vadd.f32 %v4593, %v4681
        %v4683 = vpop.f32.mrf.mxu0
        %v4684 = vadd.f32 %v4595, %v4683
        %4685 = vmatmul.bf16.gmra.mxu0 %v2993
        %v4686 = vpop.f32.mrf.mxu0
        %v4687 = vadd.f32 %v4598, %v4686
        %v4688 = vpop.f32.mrf.mxu0
        %v4689 = vadd.f32 %v4600, %v4688
        %4690 = vmatmul.bf16.gmra.mxu0 %v2997
        %v4691 = vpop.f32.mrf.mxu0
        %v4692 = vadd.f32 %v4603, %v4691
        %v4693 = vpop.f32.mrf.mxu0
        %v4694 = vadd.f32 %v4605, %v4693
        %4695 = vmatmul.bf16.gmra.mxu0 %v3001
        %v4696 = vpop.f32.mrf.mxu0
        %v4697 = vadd.f32 %v4608, %v4696
        %v4698 = vpop.f32.mrf.mxu0
        %v4699 = vadd.f32 %v4610, %v4698
        %4700 = vmatmul.bf16.gmra.mxu0 %v3005
        %v4701 = vpop.f32.mrf.mxu0
        %v4702 = vadd.f32 %v4613, %v4701
        %v4703 = vpop.f32.mrf.mxu0
        %v4704 = vadd.f32 %v4615, %v4703
        %4705 = vdwg.mxu0
        %4706 = vmatpush.bf16.msra.mxu0 %v3895
        %4707 = vmatpush.bf16.msra.mxu0 %v3887
        %4708 = vmatpush.bf16.msra.mxu0 %v3879
        %4709 = vmatpush.bf16.msra.mxu0 %v3871
        %4710 = vmatpush.bf16.msra.mxu0 %v3863
        %4711 = vmatpush.bf16.msra.mxu0 %v3855
        %4712 = vmatpush.bf16.msra.mxu0 %v3847
        %4713 = vmatpush.bf16.msra.mxu0 %v3839
        %4714 = vmatmul.bf16.gmra.mxu0 %v2942
        %v4715 = vpop.f32.mrf.mxu0
        %v4716 = vadd.f32 %v2735, %v4715
        %v4717 = vpop.f32.mrf.mxu0
        %v4718 = vadd.f32 %v2735, %v4717
        %4719 = vmatmul.bf16.gmra.mxu0 %v2946
        %v4720 = vpop.f32.mrf.mxu0
        %v4721 = vadd.f32 %v2735, %v4720
        %v4722 = vpop.f32.mrf.mxu0
        %v4723 = vadd.f32 %v2735, %v4722
        %4724 = vmatmul.bf16.gmra.mxu0 %v2950
        %v4725 = vpop.f32.mrf.mxu0
        %v4726 = vadd.f32 %v2735, %v4725
        %v4727 = vpop.f32.mrf.mxu0
        %v4728 = vadd.f32 %v2735, %v4727
        %4729 = vmatmul.bf16.gmra.mxu0 %v2954
        %v4730 = vpop.f32.mrf.mxu0
        %v4731 = vadd.f32 %v2735, %v4730
        %v4732 = vpop.f32.mrf.mxu0
        %v4733 = vadd.f32 %v2735, %v4732
        %4734 = vmatmul.bf16.gmra.mxu0 %v2958
        %v4735 = vpop.f32.mrf.mxu0
        %v4736 = vadd.f32 %v2735, %v4735
        %v4737 = vpop.f32.mrf.mxu0
        %v4738 = vadd.f32 %v2735, %v4737
        %4739 = vmatmul.bf16.gmra.mxu0 %v2962
        %v4740 = vpop.f32.mrf.mxu0
        %v4741 = vadd.f32 %v2735, %v4740
        %v4742 = vpop.f32.mrf.mxu0
        %v4743 = vadd.f32 %v2735, %v4742
        %4744 = vmatmul.bf16.gmra.mxu0 %v2966
        %v4745 = vpop.f32.mrf.mxu0
        %v4746 = vadd.f32 %v2735, %v4745
        %v4747 = vpop.f32.mrf.mxu0
        %v4748 = vadd.f32 %v2735, %v4747
        %4749 = vmatmul.bf16.gmra.mxu0 %v2970
        %v4750 = vpop.f32.mrf.mxu0
        %v4751 = vadd.f32 %v2735, %v4750
        %v4752 = vpop.f32.mrf.mxu0
        %v4753 = vadd.f32 %v2735, %v4752
        %4754 = vmatmul.bf16.gmra.mxu0 %v2974
        %v4755 = vpop.f32.mrf.mxu0
        %v4756 = vadd.f32 %v2735, %v4755
        %v4757 = vpop.f32.mrf.mxu0
        %v4758 = vadd.f32 %v2735, %v4757
        %4759 = vmatmul.bf16.gmra.mxu0 %v2978
        %v4760 = vpop.f32.mrf.mxu0
        %v4761 = vadd.f32 %v2735, %v4760
        %v4762 = vpop.f32.mrf.mxu0
        %v4763 = vadd.f32 %v2735, %v4762
        %4764 = vmatmul.bf16.gmra.mxu0 %v2982
        %v4765 = vpop.f32.mrf.mxu0
        %v4766 = vadd.f32 %v2735, %v4765
        %v4767 = vpop.f32.mrf.mxu0
        %v4768 = vadd.f32 %v2735, %v4767
        %4769 = vmatmul.bf16.gmra.mxu0 %v2986
        %v4770 = vpop.f32.mrf.mxu0
        %v4771 = vadd.f32 %v2735, %v4770
        %v4772 = vpop.f32.mrf.mxu0
        %v4773 = vadd.f32 %v2735, %v4772
        %4774 = vmatmul.bf16.gmra.mxu0 %v2990
        %v4775 = vpop.f32.mrf.mxu0
        %v4776 = vadd.f32 %v2735, %v4775
        %v4777 = vpop.f32.mrf.mxu0
        %v4778 = vadd.f32 %v2735, %v4777
        %4779 = vmatmul.bf16.gmra.mxu0 %v2994
        %v4780 = vpop.f32.mrf.mxu0
        %v4781 = vadd.f32 %v2735, %v4780
        %v4782 = vpop.f32.mrf.mxu0
        %v4783 = vadd.f32 %v2735, %v4782
        %4784 = vmatmul.bf16.gmra.mxu0 %v2998
        %v4785 = vpop.f32.mrf.mxu0
        %v4786 = vadd.f32 %v2735, %v4785
        %v4787 = vpop.f32.mrf.mxu0
        %v4788 = vadd.f32 %v2735, %v4787
        %4789 = vmatmul.bf16.gmra.mxu0 %v3002
        %v4790 = vpop.f32.mrf.mxu0
        %v4791 = vadd.f32 %v2735, %v4790
        %v4792 = vpop.f32.mrf.mxu0
        %v4793 = vadd.f32 %v2735, %v4792
        %4794 = vdwg.mxu0
        %4795 = vmatpush.bf16.msra.mxu0 %v3959
        %4796 = vmatpush.bf16.msra.mxu0 %v3951
        %4797 = vmatpush.bf16.msra.mxu0 %v3943
        %4798 = vmatpush.bf16.msra.mxu0 %v3935
        %4799 = vmatpush.bf16.msra.mxu0 %v3927
        %4800 = vmatpush.bf16.msra.mxu0 %v3919
        %4801 = vmatpush.bf16.msra.mxu0 %v3911
        %4802 = vmatpush.bf16.msra.mxu0 %v3903
        %4803 = vmatmul.bf16.gmra.mxu0 %v2943
        %v4804 = vpop.f32.mrf.mxu0
        %v4805 = vadd.f32 %v4716, %v4804
        %v4806 = vpop.f32.mrf.mxu0
        %v4807 = vadd.f32 %v4718, %v4806
        %4808 = vmatmul.bf16.gmra.mxu0 %v2947
        %v4809 = vpop.f32.mrf.mxu0
        %v4810 = vadd.f32 %v4721, %v4809
        %v4811 = vpop.f32.mrf.mxu0
        %v4812 = vadd.f32 %v4723, %v4811
        %4813 = vmatmul.bf16.gmra.mxu0 %v2951
        %v4814 = vpop.f32.mrf.mxu0
        %v4815 = vadd.f32 %v4726, %v4814
        %v4816 = vpop.f32.mrf.mxu0
        %v4817 = vadd.f32 %v4728, %v4816
        %4818 = vmatmul.bf16.gmra.mxu0 %v2955
        %v4819 = vpop.f32.mrf.mxu0
        %v4820 = vadd.f32 %v4731, %v4819
        %v4821 = vpop.f32.mrf.mxu0
        %v4822 = vadd.f32 %v4733, %v4821
        %4823 = vmatmul.bf16.gmra.mxu0 %v2959
        %v4824 = vpop.f32.mrf.mxu0
        %v4825 = vadd.f32 %v4736, %v4824
        %v4826 = vpop.f32.mrf.mxu0
        %v4827 = vadd.f32 %v4738, %v4826
        %4828 = vmatmul.bf16.gmra.mxu0 %v2963
        %v4829 = vpop.f32.mrf.mxu0
        %v4830 = vadd.f32 %v4741, %v4829
        %v4831 = vpop.f32.mrf.mxu0
        %v4832 = vadd.f32 %v4743, %v4831
        %4833 = vmatmul.bf16.gmra.mxu0 %v2967
        %v4834 = vpop.f32.mrf.mxu0
        %v4835 = vadd.f32 %v4746, %v4834
        %v4836 = vpop.f32.mrf.mxu0
        %v4837 = vadd.f32 %v4748, %v4836
        %4838 = vmatmul.bf16.gmra.mxu0 %v2971
        %v4839 = vpop.f32.mrf.mxu0
        %v4840 = vadd.f32 %v4751, %v4839
        %v4841 = vpop.f32.mrf.mxu0
        %v4842 = vadd.f32 %v4753, %v4841
        %4843 = vmatmul.bf16.gmra.mxu0 %v2975
        %v4844 = vpop.f32.mrf.mxu0
        %v4845 = vadd.f32 %v4756, %v4844
        %v4846 = vpop.f32.mrf.mxu0
        %v4847 = vadd.f32 %v4758, %v4846
        %4848 = vmatmul.bf16.gmra.mxu0 %v2979
        %v4849 = vpop.f32.mrf.mxu0
        %v4850 = vadd.f32 %v4761, %v4849
        %v4851 = vpop.f32.mrf.mxu0
        %v4852 = vadd.f32 %v4763, %v4851
        %4853 = vmatmul.bf16.gmra.mxu0 %v2983
        %v4854 = vpop.f32.mrf.mxu0
        %v4855 = vadd.f32 %v4766, %v4854
        %v4856 = vpop.f32.mrf.mxu0
        %v4857 = vadd.f32 %v4768, %v4856
        %4858 = vmatmul.bf16.gmra.mxu0 %v2987
        %v4859 = vpop.f32.mrf.mxu0
        %v4860 = vadd.f32 %v4771, %v4859
        %v4861 = vpop.f32.mrf.mxu0
        %v4862 = vadd.f32 %v4773, %v4861
        %4863 = vmatmul.bf16.gmra.mxu0 %v2991
        %v4864 = vpop.f32.mrf.mxu0
        %v4865 = vadd.f32 %v4776, %v4864
        %v4866 = vpop.f32.mrf.mxu0
        %v4867 = vadd.f32 %v4778, %v4866
        %4868 = vmatmul.bf16.gmra.mxu0 %v2995
        %v4869 = vpop.f32.mrf.mxu0
        %v4870 = vadd.f32 %v4781, %v4869
        %v4871 = vpop.f32.mrf.mxu0
        %v4872 = vadd.f32 %v4783, %v4871
        %4873 = vmatmul.bf16.gmra.mxu0 %v2999
        %v4874 = vpop.f32.mrf.mxu0
        %v4875 = vadd.f32 %v4786, %v4874
        %v4876 = vpop.f32.mrf.mxu0
        %v4877 = vadd.f32 %v4788, %v4876
        %4878 = vmatmul.bf16.gmra.mxu0 %v3003
        %v4879 = vpop.f32.mrf.mxu0
        %v4880 = vadd.f32 %v4791, %v4879
        %v4881 = vpop.f32.mrf.mxu0
        %v4882 = vadd.f32 %v4793, %v4881
        %4883 = vdwg.mxu0
        %4884 = vmatpush.bf16.msra.mxu0 %v4023
        %4885 = vmatpush.bf16.msra.mxu0 %v4015
        %4886 = vmatpush.bf16.msra.mxu0 %v4007
        %4887 = vmatpush.bf16.msra.mxu0 %v3999
        %4888 = vmatpush.bf16.msra.mxu0 %v3991
        %4889 = vmatpush.bf16.msra.mxu0 %v3983
        %4890 = vmatpush.bf16.msra.mxu0 %v3975
        %4891 = vmatpush.bf16.msra.mxu0 %v3967
        %4892 = vmatmul.bf16.gmra.mxu0 %v2944
        %v4893 = vpop.f32.mrf.mxu0
        %v4894 = vadd.f32 %v4805, %v4893
        %v4895 = vpop.f32.mrf.mxu0
        %v4896 = vadd.f32 %v4807, %v4895
        %4897 = vmatmul.bf16.gmra.mxu0 %v2948
        %v4898 = vpop.f32.mrf.mxu0
        %v4899 = vadd.f32 %v4810, %v4898
        %v4900 = vpop.f32.mrf.mxu0
        %v4901 = vadd.f32 %v4812, %v4900
        %4902 = vmatmul.bf16.gmra.mxu0 %v2952
        %v4903 = vpop.f32.mrf.mxu0
        %v4904 = vadd.f32 %v4815, %v4903
        %v4905 = vpop.f32.mrf.mxu0
        %v4906 = vadd.f32 %v4817, %v4905
        %4907 = vmatmul.bf16.gmra.mxu0 %v2956
        %v4908 = vpop.f32.mrf.mxu0
        %v4909 = vadd.f32 %v4820, %v4908
        %v4910 = vpop.f32.mrf.mxu0
        %v4911 = vadd.f32 %v4822, %v4910
        %4912 = vmatmul.bf16.gmra.mxu0 %v2960
        %v4913 = vpop.f32.mrf.mxu0
        %v4914 = vadd.f32 %v4825, %v4913
        %v4915 = vpop.f32.mrf.mxu0
        %v4916 = vadd.f32 %v4827, %v4915
        %4917 = vmatmul.bf16.gmra.mxu0 %v2964
        %v4918 = vpop.f32.mrf.mxu0
        %v4919 = vadd.f32 %v4830, %v4918
        %v4920 = vpop.f32.mrf.mxu0
        %v4921 = vadd.f32 %v4832, %v4920
        %4922 = vmatmul.bf16.gmra.mxu0 %v2968
        %v4923 = vpop.f32.mrf.mxu0
        %v4924 = vadd.f32 %v4835, %v4923
        %v4925 = vpop.f32.mrf.mxu0
        %v4926 = vadd.f32 %v4837, %v4925
        %4927 = vmatmul.bf16.gmra.mxu0 %v2972
        %v4928 = vpop.f32.mrf.mxu0
        %v4929 = vadd.f32 %v4840, %v4928
        %v4930 = vpop.f32.mrf.mxu0
        %v4931 = vadd.f32 %v4842, %v4930
        %4932 = vmatmul.bf16.gmra.mxu0 %v2976
        %v4933 = vpop.f32.mrf.mxu0
        %v4934 = vadd.f32 %v4845, %v4933
        %v4935 = vpop.f32.mrf.mxu0
        %v4936 = vadd.f32 %v4847, %v4935
        %4937 = vmatmul.bf16.gmra.mxu0 %v2980
        %v4938 = vpop.f32.mrf.mxu0
        %v4939 = vadd.f32 %v4850, %v4938
        %v4940 = vpop.f32.mrf.mxu0
        %v4941 = vadd.f32 %v4852, %v4940
        %4942 = vmatmul.bf16.gmra.mxu0 %v2984
        %v4943 = vpop.f32.mrf.mxu0
        %v4944 = vadd.f32 %v4855, %v4943
        %v4945 = vpop.f32.mrf.mxu0
        %v4946 = vadd.f32 %v4857, %v4945
        %4947 = vmatmul.bf16.gmra.mxu0 %v2988
        %v4948 = vpop.f32.mrf.mxu0
        %v4949 = vadd.f32 %v4860, %v4948
        %v4950 = vpop.f32.mrf.mxu0
        %v4951 = vadd.f32 %v4862, %v4950
        %4952 = vmatmul.bf16.gmra.mxu0 %v2992
        %v4953 = vpop.f32.mrf.mxu0
        %v4954 = vadd.f32 %v4865, %v4953
        %v4955 = vpop.f32.mrf.mxu0
        %v4956 = vadd.f32 %v4867, %v4955
        %4957 = vmatmul.bf16.gmra.mxu0 %v2996
        %v4958 = vpop.f32.mrf.mxu0
        %v4959 = vadd.f32 %v4870, %v4958
        %v4960 = vpop.f32.mrf.mxu0
        %v4961 = vadd.f32 %v4872, %v4960
        %4962 = vmatmul.bf16.gmra.mxu0 %v3000
        %v4963 = vpop.f32.mrf.mxu0
        %v4964 = vadd.f32 %v4875, %v4963
        %v4965 = vpop.f32.mrf.mxu0
        %v4966 = vadd.f32 %v4877, %v4965
        %4967 = vmatmul.bf16.gmra.mxu0 %v3004
        %v4968 = vpop.f32.mrf.mxu0
        %v4969 = vadd.f32 %v4880, %v4968
        %v4970 = vpop.f32.mrf.mxu0
        %v4971 = vadd.f32 %v4882, %v4970
        %4972 = vdwg.mxu0
        %4973 = vmatpush.bf16.msra.mxu0 %v4087
        %4974 = vmatpush.bf16.msra.mxu0 %v4079
        %4975 = vmatpush.bf16.msra.mxu0 %v4071
        %4976 = vmatpush.bf16.msra.mxu0 %v4063
        %4977 = vmatpush.bf16.msra.mxu0 %v4055
        %4978 = vmatpush.bf16.msra.mxu0 %v4047
        %4979 = vmatpush.bf16.msra.mxu0 %v4039
        %4980 = vmatpush.bf16.msra.mxu0 %v4031
        %4981 = vmatmul.bf16.gmra.mxu0 %v2945
        %v4982 = vpop.f32.mrf.mxu0
        %v4983 = vadd.f32 %v4894, %v4982
        %v4984 = vpop.f32.mrf.mxu0
        %v4985 = vadd.f32 %v4896, %v4984
        %4986 = vmatmul.bf16.gmra.mxu0 %v2949
        %v4987 = vpop.f32.mrf.mxu0
        %v4988 = vadd.f32 %v4899, %v4987
        %v4989 = vpop.f32.mrf.mxu0
        %v4990 = vadd.f32 %v4901, %v4989
        %4991 = vmatmul.bf16.gmra.mxu0 %v2953
        %v4992 = vpop.f32.mrf.mxu0
        %v4993 = vadd.f32 %v4904, %v4992
        %v4994 = vpop.f32.mrf.mxu0
        %v4995 = vadd.f32 %v4906, %v4994
        %4996 = vmatmul.bf16.gmra.mxu0 %v2957
        %v4997 = vpop.f32.mrf.mxu0
        %v4998 = vadd.f32 %v4909, %v4997
        %v4999 = vpop.f32.mrf.mxu0
        %v5000 = vadd.f32 %v4911, %v4999
        %5001 = vmatmul.bf16.gmra.mxu0 %v2961
        %v5002 = vpop.f32.mrf.mxu0
        %v5003 = vadd.f32 %v4914, %v5002
        %v5004 = vpop.f32.mrf.mxu0
        %v5005 = vadd.f32 %v4916, %v5004
        %5006 = vmatmul.bf16.gmra.mxu0 %v2965
        %v5007 = vpop.f32.mrf.mxu0
        %v5008 = vadd.f32 %v4919, %v5007
        %v5009 = vpop.f32.mrf.mxu0
        %v5010 = vadd.f32 %v4921, %v5009
        %5011 = vmatmul.bf16.gmra.mxu0 %v2969
        %v5012 = vpop.f32.mrf.mxu0
        %v5013 = vadd.f32 %v4924, %v5012
        %v5014 = vpop.f32.mrf.mxu0
        %v5015 = vadd.f32 %v4926, %v5014
        %5016 = vmatmul.bf16.gmra.mxu0 %v2973
        %v5017 = vpop.f32.mrf.mxu0
        %v5018 = vadd.f32 %v4929, %v5017
        %v5019 = vpop.f32.mrf.mxu0
        %v5020 = vadd.f32 %v4931, %v5019
        %5021 = vmatmul.bf16.gmra.mxu0 %v2977
        %v5022 = vpop.f32.mrf.mxu0
        %v5023 = vadd.f32 %v4934, %v5022
        %v5024 = vpop.f32.mrf.mxu0
        %v5025 = vadd.f32 %v4936, %v5024
        %5026 = vmatmul.bf16.gmra.mxu0 %v2981
        %v5027 = vpop.f32.mrf.mxu0
        %v5028 = vadd.f32 %v4939, %v5027
        %v5029 = vpop.f32.mrf.mxu0
        %v5030 = vadd.f32 %v4941, %v5029
        %5031 = vmatmul.bf16.gmra.mxu0 %v2985
        %v5032 = vpop.f32.mrf.mxu0
        %v5033 = vadd.f32 %v4944, %v5032
        %v5034 = vpop.f32.mrf.mxu0
        %v5035 = vadd.f32 %v4946, %v5034
        %5036 = vmatmul.bf16.gmra.mxu0 %v2989
        %v5037 = vpop.f32.mrf.mxu0
        %v5038 = vadd.f32 %v4949, %v5037
        %v5039 = vpop.f32.mrf.mxu0
        %v5040 = vadd.f32 %v4951, %v5039
        %5041 = vmatmul.bf16.gmra.mxu0 %v2993
        %v5042 = vpop.f32.mrf.mxu0
        %v5043 = vadd.f32 %v4954, %v5042
        %v5044 = vpop.f32.mrf.mxu0
        %v5045 = vadd.f32 %v4956, %v5044
        %5046 = vmatmul.bf16.gmra.mxu0 %v2997
        %v5047 = vpop.f32.mrf.mxu0
        %v5048 = vadd.f32 %v4959, %v5047
        %v5049 = vpop.f32.mrf.mxu0
        %v5050 = vadd.f32 %v4961, %v5049
        %5051 = vmatmul.bf16.gmra.mxu0 %v3001
        %v5052 = vpop.f32.mrf.mxu0
        %v5053 = vadd.f32 %v4964, %v5052
        %v5054 = vpop.f32.mrf.mxu0
        %v5055 = vadd.f32 %v4966, %v5054
        %5056 = vmatmul.bf16.gmra.mxu0 %v3005
        %v5057 = vpop.f32.mrf.mxu0
        %v5058 = vadd.f32 %v4969, %v5057
        %v5059 = vpop.f32.mrf.mxu0
        %v5060 = vadd.f32 %v4971, %v5059
        %5061 = vdwg.mxu0
        %5062 = vmatpush.bf16.msra.mxu0 %v3896
        %5063 = vmatpush.bf16.msra.mxu0 %v3888
        %5064 = vmatpush.bf16.msra.mxu0 %v3880
        %5065 = vmatpush.bf16.msra.mxu0 %v3872
        %5066 = vmatpush.bf16.msra.mxu0 %v3864
        %5067 = vmatpush.bf16.msra.mxu0 %v3856
        %5068 = vmatpush.bf16.msra.mxu0 %v3848
        %5069 = vmatpush.bf16.msra.mxu0 %v3840
        %5070 = vmatmul.bf16.gmra.mxu0 %v2942
        %v5071 = vpop.f32.mrf.mxu0
        %v5072 = vadd.f32 %v2736, %v5071
        %v5073 = vpop.f32.mrf.mxu0
        %v5074 = vadd.f32 %v2736, %v5073
        %5075 = vmatmul.bf16.gmra.mxu0 %v2946
        %v5076 = vpop.f32.mrf.mxu0
        %v5077 = vadd.f32 %v2736, %v5076
        %v5078 = vpop.f32.mrf.mxu0
        %v5079 = vadd.f32 %v2736, %v5078
        %5080 = vmatmul.bf16.gmra.mxu0 %v2950
        %v5081 = vpop.f32.mrf.mxu0
        %v5082 = vadd.f32 %v2736, %v5081
        %v5083 = vpop.f32.mrf.mxu0
        %v5084 = vadd.f32 %v2736, %v5083
        %5085 = vmatmul.bf16.gmra.mxu0 %v2954
        %v5086 = vpop.f32.mrf.mxu0
        %v5087 = vadd.f32 %v2736, %v5086
        %v5088 = vpop.f32.mrf.mxu0
        %v5089 = vadd.f32 %v2736, %v5088
        %5090 = vmatmul.bf16.gmra.mxu0 %v2958
        %v5091 = vpop.f32.mrf.mxu0
        %v5092 = vadd.f32 %v2736, %v5091
        %v5093 = vpop.f32.mrf.mxu0
        %v5094 = vadd.f32 %v2736, %v5093
        %5095 = vmatmul.bf16.gmra.mxu0 %v2962
        %v5096 = vpop.f32.mrf.mxu0
        %v5097 = vadd.f32 %v2736, %v5096
        %v5098 = vpop.f32.mrf.mxu0
        %v5099 = vadd.f32 %v2736, %v5098
        %5100 = vmatmul.bf16.gmra.mxu0 %v2966
        %v5101 = vpop.f32.mrf.mxu0
        %v5102 = vadd.f32 %v2736, %v5101
        %v5103 = vpop.f32.mrf.mxu0
        %v5104 = vadd.f32 %v2736, %v5103
        %5105 = vmatmul.bf16.gmra.mxu0 %v2970
        %v5106 = vpop.f32.mrf.mxu0
        %v5107 = vadd.f32 %v2736, %v5106
        %v5108 = vpop.f32.mrf.mxu0
        %v5109 = vadd.f32 %v2736, %v5108
        %5110 = vmatmul.bf16.gmra.mxu0 %v2974
        %v5111 = vpop.f32.mrf.mxu0
        %v5112 = vadd.f32 %v2736, %v5111
        %v5113 = vpop.f32.mrf.mxu0
        %v5114 = vadd.f32 %v2736, %v5113
        %5115 = vmatmul.bf16.gmra.mxu0 %v2978
        %v5116 = vpop.f32.mrf.mxu0
        %v5117 = vadd.f32 %v2736, %v5116
        %v5118 = vpop.f32.mrf.mxu0
        %v5119 = vadd.f32 %v2736, %v5118
        %5120 = vmatmul.bf16.gmra.mxu0 %v2982
        %v5121 = vpop.f32.mrf.mxu0
        %v5122 = vadd.f32 %v2736, %v5121
        %v5123 = vpop.f32.mrf.mxu0
        %v5124 = vadd.f32 %v2736, %v5123
        %5125 = vmatmul.bf16.gmra.mxu0 %v2986
        %v5126 = vpop.f32.mrf.mxu0
        %v5127 = vadd.f32 %v2736, %v5126
        %v5128 = vpop.f32.mrf.mxu0
        %v5129 = vadd.f32 %v2736, %v5128
        %5130 = vmatmul.bf16.gmra.mxu0 %v2990
        %v5131 = vpop.f32.mrf.mxu0
        %v5132 = vadd.f32 %v2736, %v5131
        %v5133 = vpop.f32.mrf.mxu0
        %v5134 = vadd.f32 %v2736, %v5133
        %5135 = vmatmul.bf16.gmra.mxu0 %v2994
        %v5136 = vpop.f32.mrf.mxu0
        %v5137 = vadd.f32 %v2736, %v5136
        %v5138 = vpop.f32.mrf.mxu0
        %v5139 = vadd.f32 %v2736, %v5138
        %5140 = vmatmul.bf16.gmra.mxu0 %v2998
        %v5141 = vpop.f32.mrf.mxu0
        %v5142 = vadd.f32 %v2736, %v5141
        %v5143 = vpop.f32.mrf.mxu0
        %v5144 = vadd.f32 %v2736, %v5143
        %5145 = vmatmul.bf16.gmra.mxu0 %v3002
        %v5146 = vpop.f32.mrf.mxu0
        %v5147 = vadd.f32 %v2736, %v5146
        %v5148 = vpop.f32.mrf.mxu0
        %v5149 = vadd.f32 %v2736, %v5148
        %5150 = vdwg.mxu0
        %5151 = vmatpush.bf16.msra.mxu0 %v3960
        %5152 = vmatpush.bf16.msra.mxu0 %v3952
        %5153 = vmatpush.bf16.msra.mxu0 %v3944
        %5154 = vmatpush.bf16.msra.mxu0 %v3936
        %5155 = vmatpush.bf16.msra.mxu0 %v3928
        %5156 = vmatpush.bf16.msra.mxu0 %v3920
        %5157 = vmatpush.bf16.msra.mxu0 %v3912
        %5158 = vmatpush.bf16.msra.mxu0 %v3904
        %5159 = vmatmul.bf16.gmra.mxu0 %v2943
        %v5160 = vpop.f32.mrf.mxu0
        %v5161 = vadd.f32 %v5072, %v5160
        %v5162 = vpop.f32.mrf.mxu0
        %v5163 = vadd.f32 %v5074, %v5162
        %5164 = vmatmul.bf16.gmra.mxu0 %v2947
        %v5165 = vpop.f32.mrf.mxu0
        %v5166 = vadd.f32 %v5077, %v5165
        %v5167 = vpop.f32.mrf.mxu0
        %v5168 = vadd.f32 %v5079, %v5167
        %5169 = vmatmul.bf16.gmra.mxu0 %v2951
        %v5170 = vpop.f32.mrf.mxu0
        %v5171 = vadd.f32 %v5082, %v5170
        %v5172 = vpop.f32.mrf.mxu0
        %v5173 = vadd.f32 %v5084, %v5172
        %5174 = vmatmul.bf16.gmra.mxu0 %v2955
        %v5175 = vpop.f32.mrf.mxu0
        %v5176 = vadd.f32 %v5087, %v5175
        %v5177 = vpop.f32.mrf.mxu0
        %v5178 = vadd.f32 %v5089, %v5177
        %5179 = vmatmul.bf16.gmra.mxu0 %v2959
        %v5180 = vpop.f32.mrf.mxu0
        %v5181 = vadd.f32 %v5092, %v5180
        %v5182 = vpop.f32.mrf.mxu0
        %v5183 = vadd.f32 %v5094, %v5182
        %5184 = vmatmul.bf16.gmra.mxu0 %v2963
        %v5185 = vpop.f32.mrf.mxu0
        %v5186 = vadd.f32 %v5097, %v5185
        %v5187 = vpop.f32.mrf.mxu0
        %v5188 = vadd.f32 %v5099, %v5187
        %5189 = vmatmul.bf16.gmra.mxu0 %v2967
        %v5190 = vpop.f32.mrf.mxu0
        %v5191 = vadd.f32 %v5102, %v5190
        %v5192 = vpop.f32.mrf.mxu0
        %v5193 = vadd.f32 %v5104, %v5192
        %5194 = vmatmul.bf16.gmra.mxu0 %v2971
        %v5195 = vpop.f32.mrf.mxu0
        %v5196 = vadd.f32 %v5107, %v5195
        %v5197 = vpop.f32.mrf.mxu0
        %v5198 = vadd.f32 %v5109, %v5197
        %5199 = vmatmul.bf16.gmra.mxu0 %v2975
        %v5200 = vpop.f32.mrf.mxu0
        %v5201 = vadd.f32 %v5112, %v5200
        %v5202 = vpop.f32.mrf.mxu0
        %v5203 = vadd.f32 %v5114, %v5202
        %5204 = vmatmul.bf16.gmra.mxu0 %v2979
        %v5205 = vpop.f32.mrf.mxu0
        %v5206 = vadd.f32 %v5117, %v5205
        %v5207 = vpop.f32.mrf.mxu0
        %v5208 = vadd.f32 %v5119, %v5207
        %5209 = vmatmul.bf16.gmra.mxu0 %v2983
        %v5210 = vpop.f32.mrf.mxu0
        %v5211 = vadd.f32 %v5122, %v5210
        %v5212 = vpop.f32.mrf.mxu0
        %v5213 = vadd.f32 %v5124, %v5212
        %5214 = vmatmul.bf16.gmra.mxu0 %v2987
        %v5215 = vpop.f32.mrf.mxu0
        %v5216 = vadd.f32 %v5127, %v5215
        %v5217 = vpop.f32.mrf.mxu0
        %v5218 = vadd.f32 %v5129, %v5217
        %5219 = vmatmul.bf16.gmra.mxu0 %v2991
        %v5220 = vpop.f32.mrf.mxu0
        %v5221 = vadd.f32 %v5132, %v5220
        %v5222 = vpop.f32.mrf.mxu0
        %v5223 = vadd.f32 %v5134, %v5222
        %5224 = vmatmul.bf16.gmra.mxu0 %v2995
        %v5225 = vpop.f32.mrf.mxu0
        %v5226 = vadd.f32 %v5137, %v5225
        %v5227 = vpop.f32.mrf.mxu0
        %v5228 = vadd.f32 %v5139, %v5227
        %5229 = vmatmul.bf16.gmra.mxu0 %v2999
        %v5230 = vpop.f32.mrf.mxu0
        %v5231 = vadd.f32 %v5142, %v5230
        %v5232 = vpop.f32.mrf.mxu0
        %v5233 = vadd.f32 %v5144, %v5232
        %5234 = vmatmul.bf16.gmra.mxu0 %v3003
        %v5235 = vpop.f32.mrf.mxu0
        %v5236 = vadd.f32 %v5147, %v5235
        %v5237 = vpop.f32.mrf.mxu0
        %v5238 = vadd.f32 %v5149, %v5237
        %5239 = vdwg.mxu0
        %5240 = vmatpush.bf16.msra.mxu0 %v4024
        %5241 = vmatpush.bf16.msra.mxu0 %v4016
        %5242 = vmatpush.bf16.msra.mxu0 %v4008
        %5243 = vmatpush.bf16.msra.mxu0 %v4000
        %5244 = vmatpush.bf16.msra.mxu0 %v3992
        %5245 = vmatpush.bf16.msra.mxu0 %v3984
        %5246 = vmatpush.bf16.msra.mxu0 %v3976
        %5247 = vmatpush.bf16.msra.mxu0 %v3968
        %5248 = vmatmul.bf16.gmra.mxu0 %v2944
        %v5249 = vpop.f32.mrf.mxu0
        %v5250 = vadd.f32 %v5161, %v5249
        %v5251 = vpop.f32.mrf.mxu0
        %v5252 = vadd.f32 %v5163, %v5251
        %5253 = vmatmul.bf16.gmra.mxu0 %v2948
        %v5254 = vpop.f32.mrf.mxu0
        %v5255 = vadd.f32 %v5166, %v5254
        %v5256 = vpop.f32.mrf.mxu0
        %v5257 = vadd.f32 %v5168, %v5256
        %5258 = vmatmul.bf16.gmra.mxu0 %v2952
        %v5259 = vpop.f32.mrf.mxu0
        %v5260 = vadd.f32 %v5171, %v5259
        %v5261 = vpop.f32.mrf.mxu0
        %v5262 = vadd.f32 %v5173, %v5261
        %5263 = vmatmul.bf16.gmra.mxu0 %v2956
        %v5264 = vpop.f32.mrf.mxu0
        %v5265 = vadd.f32 %v5176, %v5264
        %v5266 = vpop.f32.mrf.mxu0
        %v5267 = vadd.f32 %v5178, %v5266
        %5268 = vmatmul.bf16.gmra.mxu0 %v2960
        %v5269 = vpop.f32.mrf.mxu0
        %v5270 = vadd.f32 %v5181, %v5269
        %v5271 = vpop.f32.mrf.mxu0
        %v5272 = vadd.f32 %v5183, %v5271
        %5273 = vmatmul.bf16.gmra.mxu0 %v2964
        %v5274 = vpop.f32.mrf.mxu0
        %v5275 = vadd.f32 %v5186, %v5274
        %v5276 = vpop.f32.mrf.mxu0
        %v5277 = vadd.f32 %v5188, %v5276
        %5278 = vmatmul.bf16.gmra.mxu0 %v2968
        %v5279 = vpop.f32.mrf.mxu0
        %v5280 = vadd.f32 %v5191, %v5279
        %v5281 = vpop.f32.mrf.mxu0
        %v5282 = vadd.f32 %v5193, %v5281
        %5283 = vmatmul.bf16.gmra.mxu0 %v2972
        %v5284 = vpop.f32.mrf.mxu0
        %v5285 = vadd.f32 %v5196, %v5284
        %v5286 = vpop.f32.mrf.mxu0
        %v5287 = vadd.f32 %v5198, %v5286
        %5288 = vmatmul.bf16.gmra.mxu0 %v2976
        %v5289 = vpop.f32.mrf.mxu0
        %v5290 = vadd.f32 %v5201, %v5289
        %v5291 = vpop.f32.mrf.mxu0
        %v5292 = vadd.f32 %v5203, %v5291
        %5293 = vmatmul.bf16.gmra.mxu0 %v2980
        %v5294 = vpop.f32.mrf.mxu0
        %v5295 = vadd.f32 %v5206, %v5294
        %v5296 = vpop.f32.mrf.mxu0
        %v5297 = vadd.f32 %v5208, %v5296
        %5298 = vmatmul.bf16.gmra.mxu0 %v2984
        %v5299 = vpop.f32.mrf.mxu0
        %v5300 = vadd.f32 %v5211, %v5299
        %v5301 = vpop.f32.mrf.mxu0
        %v5302 = vadd.f32 %v5213, %v5301
        %5303 = vmatmul.bf16.gmra.mxu0 %v2988
        %v5304 = vpop.f32.mrf.mxu0
        %v5305 = vadd.f32 %v5216, %v5304
        %v5306 = vpop.f32.mrf.mxu0
        %v5307 = vadd.f32 %v5218, %v5306
        %5308 = vmatmul.bf16.gmra.mxu0 %v2992
        %v5309 = vpop.f32.mrf.mxu0
        %v5310 = vadd.f32 %v5221, %v5309
        %v5311 = vpop.f32.mrf.mxu0
        %v5312 = vadd.f32 %v5223, %v5311
        %5313 = vmatmul.bf16.gmra.mxu0 %v2996
        %v5314 = vpop.f32.mrf.mxu0
        %v5315 = vadd.f32 %v5226, %v5314
        %v5316 = vpop.f32.mrf.mxu0
        %v5317 = vadd.f32 %v5228, %v5316
        %5318 = vmatmul.bf16.gmra.mxu0 %v3000
        %v5319 = vpop.f32.mrf.mxu0
        %v5320 = vadd.f32 %v5231, %v5319
        %v5321 = vpop.f32.mrf.mxu0
        %v5322 = vadd.f32 %v5233, %v5321
        %5323 = vmatmul.bf16.gmra.mxu0 %v3004
        %v5324 = vpop.f32.mrf.mxu0
        %v5325 = vadd.f32 %v5236, %v5324
        %v5326 = vpop.f32.mrf.mxu0
        %v5327 = vadd.f32 %v5238, %v5326
        %5328 = vdwg.mxu0
        %5329 = vmatpush.bf16.msra.mxu0 %v4088
        %5330 = vmatpush.bf16.msra.mxu0 %v4080
        %5331 = vmatpush.bf16.msra.mxu0 %v4072
        %5332 = vmatpush.bf16.msra.mxu0 %v4064
        %5333 = vmatpush.bf16.msra.mxu0 %v4056
        %5334 = vmatpush.bf16.msra.mxu0 %v4048
        %5335 = vmatpush.bf16.msra.mxu0 %v4040
        %5336 = vmatpush.bf16.msra.mxu0 %v4032
        %5337 = vmatmul.bf16.gmra.mxu0 %v2945
        %v5338 = vpop.f32.mrf.mxu0
        %v5339 = vadd.f32 %v5250, %v5338
        %v5340 = vpop.f32.mrf.mxu0
        %v5341 = vadd.f32 %v5252, %v5340
        %5342 = vmatmul.bf16.gmra.mxu0 %v2949
        %v5343 = vpop.f32.mrf.mxu0
        %v5344 = vadd.f32 %v5255, %v5343
        %v5345 = vpop.f32.mrf.mxu0
        %v5346 = vadd.f32 %v5257, %v5345
        %5347 = vmatmul.bf16.gmra.mxu0 %v2953
        %v5348 = vpop.f32.mrf.mxu0
        %v5349 = vadd.f32 %v5260, %v5348
        %v5350 = vpop.f32.mrf.mxu0
        %v5351 = vadd.f32 %v5262, %v5350
        %5352 = vmatmul.bf16.gmra.mxu0 %v2957
        %v5353 = vpop.f32.mrf.mxu0
        %v5354 = vadd.f32 %v5265, %v5353
        %v5355 = vpop.f32.mrf.mxu0
        %v5356 = vadd.f32 %v5267, %v5355
        %5357 = vmatmul.bf16.gmra.mxu0 %v2961
        %v5358 = vpop.f32.mrf.mxu0
        %v5359 = vadd.f32 %v5270, %v5358
        %v5360 = vpop.f32.mrf.mxu0
        %v5361 = vadd.f32 %v5272, %v5360
        %5362 = vmatmul.bf16.gmra.mxu0 %v2965
        %v5363 = vpop.f32.mrf.mxu0
        %v5364 = vadd.f32 %v5275, %v5363
        %v5365 = vpop.f32.mrf.mxu0
        %v5366 = vadd.f32 %v5277, %v5365
        %5367 = vmatmul.bf16.gmra.mxu0 %v2969
        %v5368 = vpop.f32.mrf.mxu0
        %v5369 = vadd.f32 %v5280, %v5368
        %v5370 = vpop.f32.mrf.mxu0
        %v5371 = vadd.f32 %v5282, %v5370
        %5372 = vmatmul.bf16.gmra.mxu0 %v2973
        %v5373 = vpop.f32.mrf.mxu0
        %v5374 = vadd.f32 %v5285, %v5373
        %v5375 = vpop.f32.mrf.mxu0
        %v5376 = vadd.f32 %v5287, %v5375
        %5377 = vmatmul.bf16.gmra.mxu0 %v2977
        %v5378 = vpop.f32.mrf.mxu0
        %v5379 = vadd.f32 %v5290, %v5378
        %v5380 = vpop.f32.mrf.mxu0
        %v5381 = vadd.f32 %v5292, %v5380
        %5382 = vmatmul.bf16.gmra.mxu0 %v2981
        %v5383 = vpop.f32.mrf.mxu0
        %v5384 = vadd.f32 %v5295, %v5383
        %v5385 = vpop.f32.mrf.mxu0
        %v5386 = vadd.f32 %v5297, %v5385
        %5387 = vmatmul.bf16.gmra.mxu0 %v2985
        %v5388 = vpop.f32.mrf.mxu0
        %v5389 = vadd.f32 %v5300, %v5388
        %v5390 = vpop.f32.mrf.mxu0
        %v5391 = vadd.f32 %v5302, %v5390
        %5392 = vmatmul.bf16.gmra.mxu0 %v2989
        %v5393 = vpop.f32.mrf.mxu0
        %v5394 = vadd.f32 %v5305, %v5393
        %v5395 = vpop.f32.mrf.mxu0
        %v5396 = vadd.f32 %v5307, %v5395
        %5397 = vmatmul.bf16.gmra.mxu0 %v2993
        %v5398 = vpop.f32.mrf.mxu0
        %v5399 = vadd.f32 %v5310, %v5398
        %v5400 = vpop.f32.mrf.mxu0
        %v5401 = vadd.f32 %v5312, %v5400
        %5402 = vmatmul.bf16.gmra.mxu0 %v2997
        %v5403 = vpop.f32.mrf.mxu0
        %v5404 = vadd.f32 %v5315, %v5403
        %v5405 = vpop.f32.mrf.mxu0
        %v5406 = vadd.f32 %v5317, %v5405
        %5407 = vmatmul.bf16.gmra.mxu0 %v3001
        %v5408 = vpop.f32.mrf.mxu0
        %v5409 = vadd.f32 %v5320, %v5408
        %v5410 = vpop.f32.mrf.mxu0
        %v5411 = vadd.f32 %v5322, %v5410
        %5412 = vmatmul.bf16.gmra.mxu0 %v3005
        %v5413 = vpop.f32.mrf.mxu0
        %v5414 = vadd.f32 %v5325, %v5413
        %v5415 = vpop.f32.mrf.mxu0
        %v5416 = vadd.f32 %v5327, %v5415
        %5417 = vdwg.mxu0
        %5418 = vmatpush.bf16.msra.mxu0 %v3897
        %5419 = vmatpush.bf16.msra.mxu0 %v3889
        %5420 = vmatpush.bf16.msra.mxu0 %v3881
        %5421 = vmatpush.bf16.msra.mxu0 %v3873
        %5422 = vmatpush.bf16.msra.mxu0 %v3865
        %5423 = vmatpush.bf16.msra.mxu0 %v3857
        %5424 = vmatpush.bf16.msra.mxu0 %v3849
        %5425 = vmatpush.bf16.msra.mxu0 %v3841
        %5426 = vmatmul.bf16.gmra.mxu0 %v2942
        %v5427 = vpop.f32.mrf.mxu0
        %v5428 = vadd.f32 %v2737, %v5427
        %v5429 = vpop.f32.mrf.mxu0
        %v5430 = vadd.f32 %v2737, %v5429
        %5431 = vmatmul.bf16.gmra.mxu0 %v2946
        %v5432 = vpop.f32.mrf.mxu0
        %v5433 = vadd.f32 %v2737, %v5432
        %v5434 = vpop.f32.mrf.mxu0
        %v5435 = vadd.f32 %v2737, %v5434
        %5436 = vmatmul.bf16.gmra.mxu0 %v2950
        %v5437 = vpop.f32.mrf.mxu0
        %v5438 = vadd.f32 %v2737, %v5437
        %v5439 = vpop.f32.mrf.mxu0
        %v5440 = vadd.f32 %v2737, %v5439
        %5441 = vmatmul.bf16.gmra.mxu0 %v2954
        %v5442 = vpop.f32.mrf.mxu0
        %v5443 = vadd.f32 %v2737, %v5442
        %v5444 = vpop.f32.mrf.mxu0
        %v5445 = vadd.f32 %v2737, %v5444
        %5446 = vmatmul.bf16.gmra.mxu0 %v2958
        %v5447 = vpop.f32.mrf.mxu0
        %v5448 = vadd.f32 %v2737, %v5447
        %v5449 = vpop.f32.mrf.mxu0
        %v5450 = vadd.f32 %v2737, %v5449
        %5451 = vmatmul.bf16.gmra.mxu0 %v2962
        %v5452 = vpop.f32.mrf.mxu0
        %v5453 = vadd.f32 %v2737, %v5452
        %v5454 = vpop.f32.mrf.mxu0
        %v5455 = vadd.f32 %v2737, %v5454
        %5456 = vmatmul.bf16.gmra.mxu0 %v2966
        %v5457 = vpop.f32.mrf.mxu0
        %v5458 = vadd.f32 %v2737, %v5457
        %v5459 = vpop.f32.mrf.mxu0
        %v5460 = vadd.f32 %v2737, %v5459
        %5461 = vmatmul.bf16.gmra.mxu0 %v2970
        %v5462 = vpop.f32.mrf.mxu0
        %v5463 = vadd.f32 %v2737, %v5462
        %v5464 = vpop.f32.mrf.mxu0
        %v5465 = vadd.f32 %v2737, %v5464
        %5466 = vmatmul.bf16.gmra.mxu0 %v2974
        %v5467 = vpop.f32.mrf.mxu0
        %v5468 = vadd.f32 %v2737, %v5467
        %v5469 = vpop.f32.mrf.mxu0
        %v5470 = vadd.f32 %v2737, %v5469
        %5471 = vmatmul.bf16.gmra.mxu0 %v2978
        %v5472 = vpop.f32.mrf.mxu0
        %v5473 = vadd.f32 %v2737, %v5472
        %v5474 = vpop.f32.mrf.mxu0
        %v5475 = vadd.f32 %v2737, %v5474
        %5476 = vmatmul.bf16.gmra.mxu0 %v2982
        %v5477 = vpop.f32.mrf.mxu0
        %v5478 = vadd.f32 %v2737, %v5477
        %v5479 = vpop.f32.mrf.mxu0
        %v5480 = vadd.f32 %v2737, %v5479
        %5481 = vmatmul.bf16.gmra.mxu0 %v2986
        %v5482 = vpop.f32.mrf.mxu0
        %v5483 = vadd.f32 %v2737, %v5482
        %v5484 = vpop.f32.mrf.mxu0
        %v5485 = vadd.f32 %v2737, %v5484
        %5486 = vmatmul.bf16.gmra.mxu0 %v2990
        %v5487 = vpop.f32.mrf.mxu0
        %v5488 = vadd.f32 %v2737, %v5487
        %v5489 = vpop.f32.mrf.mxu0
        %v5490 = vadd.f32 %v2737, %v5489
        %5491 = vmatmul.bf16.gmra.mxu0 %v2994
        %v5492 = vpop.f32.mrf.mxu0
        %v5493 = vadd.f32 %v2737, %v5492
        %v5494 = vpop.f32.mrf.mxu0
        %v5495 = vadd.f32 %v2737, %v5494
        %5496 = vmatmul.bf16.gmra.mxu0 %v2998
        %v5497 = vpop.f32.mrf.mxu0
        %v5498 = vadd.f32 %v2737, %v5497
        %v5499 = vpop.f32.mrf.mxu0
        %v5500 = vadd.f32 %v2737, %v5499
        %5501 = vmatmul.bf16.gmra.mxu0 %v3002
        %v5502 = vpop.f32.mrf.mxu0
        %v5503 = vadd.f32 %v2737, %v5502
        %v5504 = vpop.f32.mrf.mxu0
        %v5505 = vadd.f32 %v2737, %v5504
        %5506 = vdwg.mxu0
        %5507 = vmatpush.bf16.msra.mxu0 %v3961
        %5508 = vmatpush.bf16.msra.mxu0 %v3953
        %5509 = vmatpush.bf16.msra.mxu0 %v3945
        %5510 = vmatpush.bf16.msra.mxu0 %v3937
        %5511 = vmatpush.bf16.msra.mxu0 %v3929
        %5512 = vmatpush.bf16.msra.mxu0 %v3921
        %5513 = vmatpush.bf16.msra.mxu0 %v3913
        %5514 = vmatpush.bf16.msra.mxu0 %v3905
        %5515 = vmatmul.bf16.gmra.mxu0 %v2943
        %v5516 = vpop.f32.mrf.mxu0
        %v5517 = vadd.f32 %v5428, %v5516
        %v5518 = vpop.f32.mrf.mxu0
        %v5519 = vadd.f32 %v5430, %v5518
        %5520 = vmatmul.bf16.gmra.mxu0 %v2947
        %v5521 = vpop.f32.mrf.mxu0
        %v5522 = vadd.f32 %v5433, %v5521
        %v5523 = vpop.f32.mrf.mxu0
        %v5524 = vadd.f32 %v5435, %v5523
        %5525 = vmatmul.bf16.gmra.mxu0 %v2951
        %v5526 = vpop.f32.mrf.mxu0
        %v5527 = vadd.f32 %v5438, %v5526
        %v5528 = vpop.f32.mrf.mxu0
        %v5529 = vadd.f32 %v5440, %v5528
        %5530 = vmatmul.bf16.gmra.mxu0 %v2955
        %v5531 = vpop.f32.mrf.mxu0
        %v5532 = vadd.f32 %v5443, %v5531
        %v5533 = vpop.f32.mrf.mxu0
        %v5534 = vadd.f32 %v5445, %v5533
        %5535 = vmatmul.bf16.gmra.mxu0 %v2959
        %v5536 = vpop.f32.mrf.mxu0
        %v5537 = vadd.f32 %v5448, %v5536
        %v5538 = vpop.f32.mrf.mxu0
        %v5539 = vadd.f32 %v5450, %v5538
        %5540 = vmatmul.bf16.gmra.mxu0 %v2963
        %v5541 = vpop.f32.mrf.mxu0
        %v5542 = vadd.f32 %v5453, %v5541
        %v5543 = vpop.f32.mrf.mxu0
        %v5544 = vadd.f32 %v5455, %v5543
        %5545 = vmatmul.bf16.gmra.mxu0 %v2967
        %v5546 = vpop.f32.mrf.mxu0
        %v5547 = vadd.f32 %v5458, %v5546
        %v5548 = vpop.f32.mrf.mxu0
        %v5549 = vadd.f32 %v5460, %v5548
        %5550 = vmatmul.bf16.gmra.mxu0 %v2971
        %v5551 = vpop.f32.mrf.mxu0
        %v5552 = vadd.f32 %v5463, %v5551
        %v5553 = vpop.f32.mrf.mxu0
        %v5554 = vadd.f32 %v5465, %v5553
        %5555 = vmatmul.bf16.gmra.mxu0 %v2975
        %v5556 = vpop.f32.mrf.mxu0
        %v5557 = vadd.f32 %v5468, %v5556
        %v5558 = vpop.f32.mrf.mxu0
        %v5559 = vadd.f32 %v5470, %v5558
        %5560 = vmatmul.bf16.gmra.mxu0 %v2979
        %v5561 = vpop.f32.mrf.mxu0
        %v5562 = vadd.f32 %v5473, %v5561
        %v5563 = vpop.f32.mrf.mxu0
        %v5564 = vadd.f32 %v5475, %v5563
        %5565 = vmatmul.bf16.gmra.mxu0 %v2983
        %v5566 = vpop.f32.mrf.mxu0
        %v5567 = vadd.f32 %v5478, %v5566
        %v5568 = vpop.f32.mrf.mxu0
        %v5569 = vadd.f32 %v5480, %v5568
        %5570 = vmatmul.bf16.gmra.mxu0 %v2987
        %v5571 = vpop.f32.mrf.mxu0
        %v5572 = vadd.f32 %v5483, %v5571
        %v5573 = vpop.f32.mrf.mxu0
        %v5574 = vadd.f32 %v5485, %v5573
        %5575 = vmatmul.bf16.gmra.mxu0 %v2991
        %v5576 = vpop.f32.mrf.mxu0
        %v5577 = vadd.f32 %v5488, %v5576
        %v5578 = vpop.f32.mrf.mxu0
        %v5579 = vadd.f32 %v5490, %v5578
        %5580 = vmatmul.bf16.gmra.mxu0 %v2995
        %v5581 = vpop.f32.mrf.mxu0
        %v5582 = vadd.f32 %v5493, %v5581
        %v5583 = vpop.f32.mrf.mxu0
        %v5584 = vadd.f32 %v5495, %v5583
        %5585 = vmatmul.bf16.gmra.mxu0 %v2999
        %v5586 = vpop.f32.mrf.mxu0
        %v5587 = vadd.f32 %v5498, %v5586
        %v5588 = vpop.f32.mrf.mxu0
        %v5589 = vadd.f32 %v5500, %v5588
        %5590 = vmatmul.bf16.gmra.mxu0 %v3003
        %v5591 = vpop.f32.mrf.mxu0
        %v5592 = vadd.f32 %v5503, %v5591
        %v5593 = vpop.f32.mrf.mxu0
        %v5594 = vadd.f32 %v5505, %v5593
        %5595 = vdwg.mxu0
        %5596 = vmatpush.bf16.msra.mxu0 %v4025
        %5597 = vmatpush.bf16.msra.mxu0 %v4017
        %5598 = vmatpush.bf16.msra.mxu0 %v4009
        %5599 = vmatpush.bf16.msra.mxu0 %v4001
        %5600 = vmatpush.bf16.msra.mxu0 %v3993
        %5601 = vmatpush.bf16.msra.mxu0 %v3985
        %5602 = vmatpush.bf16.msra.mxu0 %v3977
        %5603 = vmatpush.bf16.msra.mxu0 %v3969
        %5604 = vmatmul.bf16.gmra.mxu0 %v2944
        %v5605 = vpop.f32.mrf.mxu0
        %v5606 = vadd.f32 %v5517, %v5605
        %v5607 = vpop.f32.mrf.mxu0
        %v5608 = vadd.f32 %v5519, %v5607
        %5609 = vmatmul.bf16.gmra.mxu0 %v2948
        %v5610 = vpop.f32.mrf.mxu0
        %v5611 = vadd.f32 %v5522, %v5610
        %v5612 = vpop.f32.mrf.mxu0
        %v5613 = vadd.f32 %v5524, %v5612
        %5614 = vmatmul.bf16.gmra.mxu0 %v2952
        %v5615 = vpop.f32.mrf.mxu0
        %v5616 = vadd.f32 %v5527, %v5615
        %v5617 = vpop.f32.mrf.mxu0
        %v5618 = vadd.f32 %v5529, %v5617
        %5619 = vmatmul.bf16.gmra.mxu0 %v2956
        %v5620 = vpop.f32.mrf.mxu0
        %v5621 = vadd.f32 %v5532, %v5620
        %v5622 = vpop.f32.mrf.mxu0
        %v5623 = vadd.f32 %v5534, %v5622
        %5624 = vmatmul.bf16.gmra.mxu0 %v2960
        %v5625 = vpop.f32.mrf.mxu0
        %v5626 = vadd.f32 %v5537, %v5625
        %v5627 = vpop.f32.mrf.mxu0
        %v5628 = vadd.f32 %v5539, %v5627
        %5629 = vmatmul.bf16.gmra.mxu0 %v2964
        %v5630 = vpop.f32.mrf.mxu0
        %v5631 = vadd.f32 %v5542, %v5630
        %v5632 = vpop.f32.mrf.mxu0
        %v5633 = vadd.f32 %v5544, %v5632
        %5634 = vmatmul.bf16.gmra.mxu0 %v2968
        %v5635 = vpop.f32.mrf.mxu0
        %v5636 = vadd.f32 %v5547, %v5635
        %v5637 = vpop.f32.mrf.mxu0
        %v5638 = vadd.f32 %v5549, %v5637
        %5639 = vmatmul.bf16.gmra.mxu0 %v2972
        %v5640 = vpop.f32.mrf.mxu0
        %v5641 = vadd.f32 %v5552, %v5640
        %v5642 = vpop.f32.mrf.mxu0
        %v5643 = vadd.f32 %v5554, %v5642
        %5644 = vmatmul.bf16.gmra.mxu0 %v2976
        %v5645 = vpop.f32.mrf.mxu0
        %v5646 = vadd.f32 %v5557, %v5645
        %v5647 = vpop.f32.mrf.mxu0
        %v5648 = vadd.f32 %v5559, %v5647
        %5649 = vmatmul.bf16.gmra.mxu0 %v2980
        %v5650 = vpop.f32.mrf.mxu0
        %v5651 = vadd.f32 %v5562, %v5650
        %v5652 = vpop.f32.mrf.mxu0
        %v5653 = vadd.f32 %v5564, %v5652
        %5654 = vmatmul.bf16.gmra.mxu0 %v2984
        %v5655 = vpop.f32.mrf.mxu0
        %v5656 = vadd.f32 %v5567, %v5655
        %v5657 = vpop.f32.mrf.mxu0
        %v5658 = vadd.f32 %v5569, %v5657
        %5659 = vmatmul.bf16.gmra.mxu0 %v2988
        %v5660 = vpop.f32.mrf.mxu0
        %v5661 = vadd.f32 %v5572, %v5660
        %v5662 = vpop.f32.mrf.mxu0
        %v5663 = vadd.f32 %v5574, %v5662
        %5664 = vmatmul.bf16.gmra.mxu0 %v2992
        %v5665 = vpop.f32.mrf.mxu0
        %v5666 = vadd.f32 %v5577, %v5665
        %v5667 = vpop.f32.mrf.mxu0
        %v5668 = vadd.f32 %v5579, %v5667
        %5669 = vmatmul.bf16.gmra.mxu0 %v2996
        %v5670 = vpop.f32.mrf.mxu0
        %v5671 = vadd.f32 %v5582, %v5670
        %v5672 = vpop.f32.mrf.mxu0
        %v5673 = vadd.f32 %v5584, %v5672
        %5674 = vmatmul.bf16.gmra.mxu0 %v3000
        %v5675 = vpop.f32.mrf.mxu0
        %v5676 = vadd.f32 %v5587, %v5675
        %v5677 = vpop.f32.mrf.mxu0
        %v5678 = vadd.f32 %v5589, %v5677
        %5679 = vmatmul.bf16.gmra.mxu0 %v3004
        %v5680 = vpop.f32.mrf.mxu0
        %v5681 = vadd.f32 %v5592, %v5680
        %v5682 = vpop.f32.mrf.mxu0
        %v5683 = vadd.f32 %v5594, %v5682
        %5684 = vdwg.mxu0
        %5685 = vmatpush.bf16.msra.mxu0 %v4089
        %5686 = vmatpush.bf16.msra.mxu0 %v4081
        %5687 = vmatpush.bf16.msra.mxu0 %v4073
        %5688 = vmatpush.bf16.msra.mxu0 %v4065
        %5689 = vmatpush.bf16.msra.mxu0 %v4057
        %5690 = vmatpush.bf16.msra.mxu0 %v4049
        %5691 = vmatpush.bf16.msra.mxu0 %v4041
        %5692 = vmatpush.bf16.msra.mxu0 %v4033
        %5693 = vmatmul.bf16.gmra.mxu0 %v2945
        %v5694 = vpop.f32.mrf.mxu0
        %v5695 = vadd.f32 %v5606, %v5694
        %v5696 = vpop.f32.mrf.mxu0
        %v5697 = vadd.f32 %v5608, %v5696
        %5698 = vmatmul.bf16.gmra.mxu0 %v2949
        %v5699 = vpop.f32.mrf.mxu0
        %v5700 = vadd.f32 %v5611, %v5699
        %v5701 = vpop.f32.mrf.mxu0
        %v5702 = vadd.f32 %v5613, %v5701
        %5703 = vmatmul.bf16.gmra.mxu0 %v2953
        %v5704 = vpop.f32.mrf.mxu0
        %v5705 = vadd.f32 %v5616, %v5704
        %v5706 = vpop.f32.mrf.mxu0
        %v5707 = vadd.f32 %v5618, %v5706
        %5708 = vmatmul.bf16.gmra.mxu0 %v2957
        %v5709 = vpop.f32.mrf.mxu0
        %v5710 = vadd.f32 %v5621, %v5709
        %v5711 = vpop.f32.mrf.mxu0
        %v5712 = vadd.f32 %v5623, %v5711
        %5713 = vmatmul.bf16.gmra.mxu0 %v2961
        %v5714 = vpop.f32.mrf.mxu0
        %v5715 = vadd.f32 %v5626, %v5714
        %v5716 = vpop.f32.mrf.mxu0
        %v5717 = vadd.f32 %v5628, %v5716
        %5718 = vmatmul.bf16.gmra.mxu0 %v2965
        %v5719 = vpop.f32.mrf.mxu0
        %v5720 = vadd.f32 %v5631, %v5719
        %v5721 = vpop.f32.mrf.mxu0
        %v5722 = vadd.f32 %v5633, %v5721
        %5723 = vmatmul.bf16.gmra.mxu0 %v2969
        %v5724 = vpop.f32.mrf.mxu0
        %v5725 = vadd.f32 %v5636, %v5724
        %v5726 = vpop.f32.mrf.mxu0
        %v5727 = vadd.f32 %v5638, %v5726
        %5728 = vmatmul.bf16.gmra.mxu0 %v2973
        %v5729 = vpop.f32.mrf.mxu0
        %v5730 = vadd.f32 %v5641, %v5729
        %v5731 = vpop.f32.mrf.mxu0
        %v5732 = vadd.f32 %v5643, %v5731
        %5733 = vmatmul.bf16.gmra.mxu0 %v2977
        %v5734 = vpop.f32.mrf.mxu0
        %v5735 = vadd.f32 %v5646, %v5734
        %v5736 = vpop.f32.mrf.mxu0
        %v5737 = vadd.f32 %v5648, %v5736
        %5738 = vmatmul.bf16.gmra.mxu0 %v2981
        %v5739 = vpop.f32.mrf.mxu0
        %v5740 = vadd.f32 %v5651, %v5739
        %v5741 = vpop.f32.mrf.mxu0
        %v5742 = vadd.f32 %v5653, %v5741
        %5743 = vmatmul.bf16.gmra.mxu0 %v2985
        %v5744 = vpop.f32.mrf.mxu0
        %v5745 = vadd.f32 %v5656, %v5744
        %v5746 = vpop.f32.mrf.mxu0
        %v5747 = vadd.f32 %v5658, %v5746
        %5748 = vmatmul.bf16.gmra.mxu0 %v2989
        %v5749 = vpop.f32.mrf.mxu0
        %v5750 = vadd.f32 %v5661, %v5749
        %v5751 = vpop.f32.mrf.mxu0
        %v5752 = vadd.f32 %v5663, %v5751
        %5753 = vmatmul.bf16.gmra.mxu0 %v2993
        %v5754 = vpop.f32.mrf.mxu0
        %v5755 = vadd.f32 %v5666, %v5754
        %v5756 = vpop.f32.mrf.mxu0
        %v5757 = vadd.f32 %v5668, %v5756
        %5758 = vmatmul.bf16.gmra.mxu0 %v2997
        %v5759 = vpop.f32.mrf.mxu0
        %v5760 = vadd.f32 %v5671, %v5759
        %v5761 = vpop.f32.mrf.mxu0
        %v5762 = vadd.f32 %v5673, %v5761
        %5763 = vmatmul.bf16.gmra.mxu0 %v3001
        %v5764 = vpop.f32.mrf.mxu0
        %v5765 = vadd.f32 %v5676, %v5764
        %v5766 = vpop.f32.mrf.mxu0
        %v5767 = vadd.f32 %v5678, %v5766
        %5768 = vmatmul.bf16.gmra.mxu0 %v3005
        %v5769 = vpop.f32.mrf.mxu0
        %v5770 = vadd.f32 %v5681, %v5769
        %v5771 = vpop.f32.mrf.mxu0
        %v5772 = vadd.f32 %v5683, %v5771
        %5773 = vdwg.mxu0
        %5774 = vmatpush.bf16.msra.mxu0 %v3898
        %5775 = vmatpush.bf16.msra.mxu0 %v3890
        %5776 = vmatpush.bf16.msra.mxu0 %v3882
        %5777 = vmatpush.bf16.msra.mxu0 %v3874
        %5778 = vmatpush.bf16.msra.mxu0 %v3866
        %5779 = vmatpush.bf16.msra.mxu0 %v3858
        %5780 = vmatpush.bf16.msra.mxu0 %v3850
        %5781 = vmatpush.bf16.msra.mxu0 %v3842
        %5782 = vmatmul.bf16.gmra.mxu0 %v2942
        %v5783 = vpop.f32.mrf.mxu0
        %v5784 = vadd.f32 %v2738, %v5783
        %v5785 = vpop.f32.mrf.mxu0
        %v5786 = vadd.f32 %v2738, %v5785
        %5787 = vmatmul.bf16.gmra.mxu0 %v2946
        %v5788 = vpop.f32.mrf.mxu0
        %v5789 = vadd.f32 %v2738, %v5788
        %v5790 = vpop.f32.mrf.mxu0
        %v5791 = vadd.f32 %v2738, %v5790
        %5792 = vmatmul.bf16.gmra.mxu0 %v2950
        %v5793 = vpop.f32.mrf.mxu0
        %v5794 = vadd.f32 %v2738, %v5793
        %v5795 = vpop.f32.mrf.mxu0
        %v5796 = vadd.f32 %v2738, %v5795
        %5797 = vmatmul.bf16.gmra.mxu0 %v2954
        %v5798 = vpop.f32.mrf.mxu0
        %v5799 = vadd.f32 %v2738, %v5798
        %v5800 = vpop.f32.mrf.mxu0
        %v5801 = vadd.f32 %v2738, %v5800
        %5802 = vmatmul.bf16.gmra.mxu0 %v2958
        %v5803 = vpop.f32.mrf.mxu0
        %v5804 = vadd.f32 %v2738, %v5803
        %v5805 = vpop.f32.mrf.mxu0
        %v5806 = vadd.f32 %v2738, %v5805
        %5807 = vmatmul.bf16.gmra.mxu0 %v2962
        %v5808 = vpop.f32.mrf.mxu0
        %v5809 = vadd.f32 %v2738, %v5808
        %v5810 = vpop.f32.mrf.mxu0
        %v5811 = vadd.f32 %v2738, %v5810
        %5812 = vmatmul.bf16.gmra.mxu0 %v2966
        %v5813 = vpop.f32.mrf.mxu0
        %v5814 = vadd.f32 %v2738, %v5813
        %v5815 = vpop.f32.mrf.mxu0
        %v5816 = vadd.f32 %v2738, %v5815
        %5817 = vmatmul.bf16.gmra.mxu0 %v2970
        %v5818 = vpop.f32.mrf.mxu0
        %v5819 = vadd.f32 %v2738, %v5818
        %v5820 = vpop.f32.mrf.mxu0
        %v5821 = vadd.f32 %v2738, %v5820
        %5822 = vmatmul.bf16.gmra.mxu0 %v2974
        %v5823 = vpop.f32.mrf.mxu0
        %v5824 = vadd.f32 %v2738, %v5823
        %v5825 = vpop.f32.mrf.mxu0
        %v5826 = vadd.f32 %v2738, %v5825
        %5827 = vmatmul.bf16.gmra.mxu0 %v2978
        %v5828 = vpop.f32.mrf.mxu0
        %v5829 = vadd.f32 %v2738, %v5828
        %v5830 = vpop.f32.mrf.mxu0
        %v5831 = vadd.f32 %v2738, %v5830
        %5832 = vmatmul.bf16.gmra.mxu0 %v2982
        %v5833 = vpop.f32.mrf.mxu0
        %v5834 = vadd.f32 %v2738, %v5833
        %v5835 = vpop.f32.mrf.mxu0
        %v5836 = vadd.f32 %v2738, %v5835
        %5837 = vmatmul.bf16.gmra.mxu0 %v2986
        %v5838 = vpop.f32.mrf.mxu0
        %v5839 = vadd.f32 %v2738, %v5838
        %v5840 = vpop.f32.mrf.mxu0
        %v5841 = vadd.f32 %v2738, %v5840
        %5842 = vmatmul.bf16.gmra.mxu0 %v2990
        %v5843 = vpop.f32.mrf.mxu0
        %v5844 = vadd.f32 %v2738, %v5843
        %v5845 = vpop.f32.mrf.mxu0
        %v5846 = vadd.f32 %v2738, %v5845
        %5847 = vmatmul.bf16.gmra.mxu0 %v2994
        %v5848 = vpop.f32.mrf.mxu0
        %v5849 = vadd.f32 %v2738, %v5848
        %v5850 = vpop.f32.mrf.mxu0
        %v5851 = vadd.f32 %v2738, %v5850
        %5852 = vmatmul.bf16.gmra.mxu0 %v2998
        %v5853 = vpop.f32.mrf.mxu0
        %v5854 = vadd.f32 %v2738, %v5853
        %v5855 = vpop.f32.mrf.mxu0
        %v5856 = vadd.f32 %v2738, %v5855
        %5857 = vmatmul.bf16.gmra.mxu0 %v3002
        %v5858 = vpop.f32.mrf.mxu0
        %v5859 = vadd.f32 %v2738, %v5858
        %v5860 = vpop.f32.mrf.mxu0
        %v5861 = vadd.f32 %v2738, %v5860
        %5862 = vdwg.mxu0
        %5863 = vmatpush.bf16.msra.mxu0 %v3962
        %5864 = vmatpush.bf16.msra.mxu0 %v3954
        %5865 = vmatpush.bf16.msra.mxu0 %v3946
        %5866 = vmatpush.bf16.msra.mxu0 %v3938
        %5867 = vmatpush.bf16.msra.mxu0 %v3930
        %5868 = vmatpush.bf16.msra.mxu0 %v3922
        %5869 = vmatpush.bf16.msra.mxu0 %v3914
        %5870 = vmatpush.bf16.msra.mxu0 %v3906
        %5871 = vmatmul.bf16.gmra.mxu0 %v2943
        %v5872 = vpop.f32.mrf.mxu0
        %v5873 = vadd.f32 %v5784, %v5872
        %v5874 = vpop.f32.mrf.mxu0
        %v5875 = vadd.f32 %v5786, %v5874
        %5876 = vmatmul.bf16.gmra.mxu0 %v2947
        %v5877 = vpop.f32.mrf.mxu0
        %v5878 = vadd.f32 %v5789, %v5877
        %v5879 = vpop.f32.mrf.mxu0
        %v5880 = vadd.f32 %v5791, %v5879
        %5881 = vmatmul.bf16.gmra.mxu0 %v2951
        %v5882 = vpop.f32.mrf.mxu0
        %v5883 = vadd.f32 %v5794, %v5882
        %v5884 = vpop.f32.mrf.mxu0
        %v5885 = vadd.f32 %v5796, %v5884
        %5886 = vmatmul.bf16.gmra.mxu0 %v2955
        %v5887 = vpop.f32.mrf.mxu0
        %v5888 = vadd.f32 %v5799, %v5887
        %v5889 = vpop.f32.mrf.mxu0
        %v5890 = vadd.f32 %v5801, %v5889
        %5891 = vmatmul.bf16.gmra.mxu0 %v2959
        %v5892 = vpop.f32.mrf.mxu0
        %v5893 = vadd.f32 %v5804, %v5892
        %v5894 = vpop.f32.mrf.mxu0
        %v5895 = vadd.f32 %v5806, %v5894
        %5896 = vmatmul.bf16.gmra.mxu0 %v2963
        %v5897 = vpop.f32.mrf.mxu0
        %v5898 = vadd.f32 %v5809, %v5897
        %v5899 = vpop.f32.mrf.mxu0
        %v5900 = vadd.f32 %v5811, %v5899
        %5901 = vmatmul.bf16.gmra.mxu0 %v2967
        %v5902 = vpop.f32.mrf.mxu0
        %v5903 = vadd.f32 %v5814, %v5902
        %v5904 = vpop.f32.mrf.mxu0
        %v5905 = vadd.f32 %v5816, %v5904
        %5906 = vmatmul.bf16.gmra.mxu0 %v2971
        %v5907 = vpop.f32.mrf.mxu0
        %v5908 = vadd.f32 %v5819, %v5907
        %v5909 = vpop.f32.mrf.mxu0
        %v5910 = vadd.f32 %v5821, %v5909
        %5911 = vmatmul.bf16.gmra.mxu0 %v2975
        %v5912 = vpop.f32.mrf.mxu0
        %v5913 = vadd.f32 %v5824, %v5912
        %v5914 = vpop.f32.mrf.mxu0
        %v5915 = vadd.f32 %v5826, %v5914
        %5916 = vmatmul.bf16.gmra.mxu0 %v2979
        %v5917 = vpop.f32.mrf.mxu0
        %v5918 = vadd.f32 %v5829, %v5917
        %v5919 = vpop.f32.mrf.mxu0
        %v5920 = vadd.f32 %v5831, %v5919
        %5921 = vmatmul.bf16.gmra.mxu0 %v2983
        %v5922 = vpop.f32.mrf.mxu0
        %v5923 = vadd.f32 %v5834, %v5922
        %v5924 = vpop.f32.mrf.mxu0
        %v5925 = vadd.f32 %v5836, %v5924
        %5926 = vmatmul.bf16.gmra.mxu0 %v2987
        %v5927 = vpop.f32.mrf.mxu0
        %v5928 = vadd.f32 %v5839, %v5927
        %v5929 = vpop.f32.mrf.mxu0
        %v5930 = vadd.f32 %v5841, %v5929
        %5931 = vmatmul.bf16.gmra.mxu0 %v2991
        %v5932 = vpop.f32.mrf.mxu0
        %v5933 = vadd.f32 %v5844, %v5932
        %v5934 = vpop.f32.mrf.mxu0
        %v5935 = vadd.f32 %v5846, %v5934
        %5936 = vmatmul.bf16.gmra.mxu0 %v2995
        %v5937 = vpop.f32.mrf.mxu0
        %v5938 = vadd.f32 %v5849, %v5937
        %v5939 = vpop.f32.mrf.mxu0
        %v5940 = vadd.f32 %v5851, %v5939
        %5941 = vmatmul.bf16.gmra.mxu0 %v2999
        %v5942 = vpop.f32.mrf.mxu0
        %v5943 = vadd.f32 %v5854, %v5942
        %v5944 = vpop.f32.mrf.mxu0
        %v5945 = vadd.f32 %v5856, %v5944
        %5946 = vmatmul.bf16.gmra.mxu0 %v3003
        %v5947 = vpop.f32.mrf.mxu0
        %v5948 = vadd.f32 %v5859, %v5947
        %v5949 = vpop.f32.mrf.mxu0
        %v5950 = vadd.f32 %v5861, %v5949
        %5951 = vdwg.mxu0
        %5952 = vmatpush.bf16.msra.mxu0 %v4026
        %5953 = vmatpush.bf16.msra.mxu0 %v4018
        %5954 = vmatpush.bf16.msra.mxu0 %v4010
        %5955 = vmatpush.bf16.msra.mxu0 %v4002
        %5956 = vmatpush.bf16.msra.mxu0 %v3994
        %5957 = vmatpush.bf16.msra.mxu0 %v3986
        %5958 = vmatpush.bf16.msra.mxu0 %v3978
        %5959 = vmatpush.bf16.msra.mxu0 %v3970
        %5960 = vmatmul.bf16.gmra.mxu0 %v2944
        %v5961 = vpop.f32.mrf.mxu0
        %v5962 = vadd.f32 %v5873, %v5961
        %v5963 = vpop.f32.mrf.mxu0
        %v5964 = vadd.f32 %v5875, %v5963
        %5965 = vmatmul.bf16.gmra.mxu0 %v2948
        %v5966 = vpop.f32.mrf.mxu0
        %v5967 = vadd.f32 %v5878, %v5966
        %v5968 = vpop.f32.mrf.mxu0
        %v5969 = vadd.f32 %v5880, %v5968
        %5970 = vmatmul.bf16.gmra.mxu0 %v2952
        %v5971 = vpop.f32.mrf.mxu0
        %v5972 = vadd.f32 %v5883, %v5971
        %v5973 = vpop.f32.mrf.mxu0
        %v5974 = vadd.f32 %v5885, %v5973
        %5975 = vmatmul.bf16.gmra.mxu0 %v2956
        %v5976 = vpop.f32.mrf.mxu0
        %v5977 = vadd.f32 %v5888, %v5976
        %v5978 = vpop.f32.mrf.mxu0
        %v5979 = vadd.f32 %v5890, %v5978
        %5980 = vmatmul.bf16.gmra.mxu0 %v2960
        %v5981 = vpop.f32.mrf.mxu0
        %v5982 = vadd.f32 %v5893, %v5981
        %v5983 = vpop.f32.mrf.mxu0
        %v5984 = vadd.f32 %v5895, %v5983
        %5985 = vmatmul.bf16.gmra.mxu0 %v2964
        %v5986 = vpop.f32.mrf.mxu0
        %v5987 = vadd.f32 %v5898, %v5986
        %v5988 = vpop.f32.mrf.mxu0
        %v5989 = vadd.f32 %v5900, %v5988
        %5990 = vmatmul.bf16.gmra.mxu0 %v2968
        %v5991 = vpop.f32.mrf.mxu0
        %v5992 = vadd.f32 %v5903, %v5991
        %v5993 = vpop.f32.mrf.mxu0
        %v5994 = vadd.f32 %v5905, %v5993
        %5995 = vmatmul.bf16.gmra.mxu0 %v2972
        %v5996 = vpop.f32.mrf.mxu0
        %v5997 = vadd.f32 %v5908, %v5996
        %v5998 = vpop.f32.mrf.mxu0
        %v5999 = vadd.f32 %v5910, %v5998
        %6000 = vmatmul.bf16.gmra.mxu0 %v2976
        %v6001 = vpop.f32.mrf.mxu0
        %v6002 = vadd.f32 %v5913, %v6001
        %v6003 = vpop.f32.mrf.mxu0
        %v6004 = vadd.f32 %v5915, %v6003
        %6005 = vmatmul.bf16.gmra.mxu0 %v2980
        %v6006 = vpop.f32.mrf.mxu0
        %v6007 = vadd.f32 %v5918, %v6006
        %v6008 = vpop.f32.mrf.mxu0
        %v6009 = vadd.f32 %v5920, %v6008
        %6010 = vmatmul.bf16.gmra.mxu0 %v2984
        %v6011 = vpop.f32.mrf.mxu0
        %v6012 = vadd.f32 %v5923, %v6011
        %v6013 = vpop.f32.mrf.mxu0
        %v6014 = vadd.f32 %v5925, %v6013
        %6015 = vmatmul.bf16.gmra.mxu0 %v2988
        %v6016 = vpop.f32.mrf.mxu0
        %v6017 = vadd.f32 %v5928, %v6016
        %v6018 = vpop.f32.mrf.mxu0
        %v6019 = vadd.f32 %v5930, %v6018
        %6020 = vmatmul.bf16.gmra.mxu0 %v2992
        %v6021 = vpop.f32.mrf.mxu0
        %v6022 = vadd.f32 %v5933, %v6021
        %v6023 = vpop.f32.mrf.mxu0
        %v6024 = vadd.f32 %v5935, %v6023
        %6025 = vmatmul.bf16.gmra.mxu0 %v2996
        %v6026 = vpop.f32.mrf.mxu0
        %v6027 = vadd.f32 %v5938, %v6026
        %v6028 = vpop.f32.mrf.mxu0
        %v6029 = vadd.f32 %v5940, %v6028
        %6030 = vmatmul.bf16.gmra.mxu0 %v3000
        %v6031 = vpop.f32.mrf.mxu0
        %v6032 = vadd.f32 %v5943, %v6031
        %v6033 = vpop.f32.mrf.mxu0
        %v6034 = vadd.f32 %v5945, %v6033
        %6035 = vmatmul.bf16.gmra.mxu0 %v3004
        %v6036 = vpop.f32.mrf.mxu0
        %v6037 = vadd.f32 %v5948, %v6036
        %v6038 = vpop.f32.mrf.mxu0
        %v6039 = vadd.f32 %v5950, %v6038
        %6040 = vdwg.mxu0
        %6041 = vmatpush.bf16.msra.mxu0 %v4090
        %6042 = vmatpush.bf16.msra.mxu0 %v4082
        %6043 = vmatpush.bf16.msra.mxu0 %v4074
        %6044 = vmatpush.bf16.msra.mxu0 %v4066
        %6045 = vmatpush.bf16.msra.mxu0 %v4058
        %6046 = vmatpush.bf16.msra.mxu0 %v4050
        %6047 = vmatpush.bf16.msra.mxu0 %v4042
        %6048 = vmatpush.bf16.msra.mxu0 %v4034
        %6049 = vmatmul.bf16.gmra.mxu0 %v2945
        %v6050 = vpop.f32.mrf.mxu0
        %v6051 = vadd.f32 %v5962, %v6050
        %v6052 = vpop.f32.mrf.mxu0
        %v6053 = vadd.f32 %v5964, %v6052
        %6054 = vmatmul.bf16.gmra.mxu0 %v2949
        %v6055 = vpop.f32.mrf.mxu0
        %v6056 = vadd.f32 %v5967, %v6055
        %v6057 = vpop.f32.mrf.mxu0
        %v6058 = vadd.f32 %v5969, %v6057
        %6059 = vmatmul.bf16.gmra.mxu0 %v2953
        %v6060 = vpop.f32.mrf.mxu0
        %v6061 = vadd.f32 %v5972, %v6060
        %v6062 = vpop.f32.mrf.mxu0
        %v6063 = vadd.f32 %v5974, %v6062
        %6064 = vmatmul.bf16.gmra.mxu0 %v2957
        %v6065 = vpop.f32.mrf.mxu0
        %v6066 = vadd.f32 %v5977, %v6065
        %v6067 = vpop.f32.mrf.mxu0
        %v6068 = vadd.f32 %v5979, %v6067
        %6069 = vmatmul.bf16.gmra.mxu0 %v2961
        %v6070 = vpop.f32.mrf.mxu0
        %v6071 = vadd.f32 %v5982, %v6070
        %v6072 = vpop.f32.mrf.mxu0
        %v6073 = vadd.f32 %v5984, %v6072
        %6074 = vmatmul.bf16.gmra.mxu0 %v2965
        %v6075 = vpop.f32.mrf.mxu0
        %v6076 = vadd.f32 %v5987, %v6075
        %v6077 = vpop.f32.mrf.mxu0
        %v6078 = vadd.f32 %v5989, %v6077
        %6079 = vmatmul.bf16.gmra.mxu0 %v2969
        %v6080 = vpop.f32.mrf.mxu0
        %v6081 = vadd.f32 %v5992, %v6080
        %v6082 = vpop.f32.mrf.mxu0
        %v6083 = vadd.f32 %v5994, %v6082
        %6084 = vmatmul.bf16.gmra.mxu0 %v2973
        %v6085 = vpop.f32.mrf.mxu0
        %v6086 = vadd.f32 %v5997, %v6085
        %v6087 = vpop.f32.mrf.mxu0
        %v6088 = vadd.f32 %v5999, %v6087
        %6089 = vmatmul.bf16.gmra.mxu0 %v2977
        %v6090 = vpop.f32.mrf.mxu0
        %v6091 = vadd.f32 %v6002, %v6090
        %v6092 = vpop.f32.mrf.mxu0
        %v6093 = vadd.f32 %v6004, %v6092
        %6094 = vmatmul.bf16.gmra.mxu0 %v2981
        %v6095 = vpop.f32.mrf.mxu0
        %v6096 = vadd.f32 %v6007, %v6095
        %v6097 = vpop.f32.mrf.mxu0
        %v6098 = vadd.f32 %v6009, %v6097
        %6099 = vmatmul.bf16.gmra.mxu0 %v2985
        %v6100 = vpop.f32.mrf.mxu0
        %v6101 = vadd.f32 %v6012, %v6100
        %v6102 = vpop.f32.mrf.mxu0
        %v6103 = vadd.f32 %v6014, %v6102
        %6104 = vmatmul.bf16.gmra.mxu0 %v2989
        %v6105 = vpop.f32.mrf.mxu0
        %v6106 = vadd.f32 %v6017, %v6105
        %v6107 = vpop.f32.mrf.mxu0
        %v6108 = vadd.f32 %v6019, %v6107
        %6109 = vmatmul.bf16.gmra.mxu0 %v2993
        %v6110 = vpop.f32.mrf.mxu0
        %v6111 = vadd.f32 %v6022, %v6110
        %v6112 = vpop.f32.mrf.mxu0
        %v6113 = vadd.f32 %v6024, %v6112
        %6114 = vmatmul.bf16.gmra.mxu0 %v2997
        %v6115 = vpop.f32.mrf.mxu0
        %v6116 = vadd.f32 %v6027, %v6115
        %v6117 = vpop.f32.mrf.mxu0
        %v6118 = vadd.f32 %v6029, %v6117
        %6119 = vmatmul.bf16.gmra.mxu0 %v3001
        %v6120 = vpop.f32.mrf.mxu0
        %v6121 = vadd.f32 %v6032, %v6120
        %v6122 = vpop.f32.mrf.mxu0
        %v6123 = vadd.f32 %v6034, %v6122
        %6124 = vmatmul.bf16.gmra.mxu0 %v3005
        %v6125 = vpop.f32.mrf.mxu0
        %v6126 = vadd.f32 %v6037, %v6125
        %v6127 = vpop.f32.mrf.mxu0
        %v6128 = vadd.f32 %v6039, %v6127
        %6129 = vdwg.mxu0
        %6130 = vmatpush.bf16.msra.mxu0 %v3899
        %6131 = vmatpush.bf16.msra.mxu0 %v3891
        %6132 = vmatpush.bf16.msra.mxu0 %v3883
        %6133 = vmatpush.bf16.msra.mxu0 %v3875
        %6134 = vmatpush.bf16.msra.mxu0 %v3867
        %6135 = vmatpush.bf16.msra.mxu0 %v3859
        %6136 = vmatpush.bf16.msra.mxu0 %v3851
        %6137 = vmatpush.bf16.msra.mxu0 %v3843
        %6138 = vmatmul.bf16.gmra.mxu0 %v2942
        %v6139 = vpop.f32.mrf.mxu0
        %v6140 = vadd.f32 %v2739, %v6139
        %v6141 = vpop.f32.mrf.mxu0
        %v6142 = vadd.f32 %v2739, %v6141
        %6143 = vmatmul.bf16.gmra.mxu0 %v2946
        %v6144 = vpop.f32.mrf.mxu0
        %v6145 = vadd.f32 %v2739, %v6144
        %v6146 = vpop.f32.mrf.mxu0
        %v6147 = vadd.f32 %v2739, %v6146
        %6148 = vmatmul.bf16.gmra.mxu0 %v2950
        %v6149 = vpop.f32.mrf.mxu0
        %v6150 = vadd.f32 %v2739, %v6149
        %v6151 = vpop.f32.mrf.mxu0
        %v6152 = vadd.f32 %v2739, %v6151
        %6153 = vmatmul.bf16.gmra.mxu0 %v2954
        %v6154 = vpop.f32.mrf.mxu0
        %v6155 = vadd.f32 %v2739, %v6154
        %v6156 = vpop.f32.mrf.mxu0
        %v6157 = vadd.f32 %v2739, %v6156
        %6158 = vmatmul.bf16.gmra.mxu0 %v2958
        %v6159 = vpop.f32.mrf.mxu0
        %v6160 = vadd.f32 %v2739, %v6159
        %v6161 = vpop.f32.mrf.mxu0
        %v6162 = vadd.f32 %v2739, %v6161
        %6163 = vmatmul.bf16.gmra.mxu0 %v2962
        %v6164 = vpop.f32.mrf.mxu0
        %v6165 = vadd.f32 %v2739, %v6164
        %v6166 = vpop.f32.mrf.mxu0
        %v6167 = vadd.f32 %v2739, %v6166
        %6168 = vmatmul.bf16.gmra.mxu0 %v2966
        %v6169 = vpop.f32.mrf.mxu0
        %v6170 = vadd.f32 %v2739, %v6169
        %v6171 = vpop.f32.mrf.mxu0
        %v6172 = vadd.f32 %v2739, %v6171
        %6173 = vmatmul.bf16.gmra.mxu0 %v2970
        %v6174 = vpop.f32.mrf.mxu0
        %v6175 = vadd.f32 %v2739, %v6174
        %v6176 = vpop.f32.mrf.mxu0
        %v6177 = vadd.f32 %v2739, %v6176
        %6178 = vmatmul.bf16.gmra.mxu0 %v2974
        %v6179 = vpop.f32.mrf.mxu0
        %v6180 = vadd.f32 %v2739, %v6179
        %v6181 = vpop.f32.mrf.mxu0
        %v6182 = vadd.f32 %v2739, %v6181
        %6183 = vmatmul.bf16.gmra.mxu0 %v2978
        %v6184 = vpop.f32.mrf.mxu0
        %v6185 = vadd.f32 %v2739, %v6184
        %v6186 = vpop.f32.mrf.mxu0
        %v6187 = vadd.f32 %v2739, %v6186
        %6188 = vmatmul.bf16.gmra.mxu0 %v2982
        %v6189 = vpop.f32.mrf.mxu0
        %v6190 = vadd.f32 %v2739, %v6189
        %v6191 = vpop.f32.mrf.mxu0
        %v6192 = vadd.f32 %v2739, %v6191
        %6193 = vmatmul.bf16.gmra.mxu0 %v2986
        %v6194 = vpop.f32.mrf.mxu0
        %v6195 = vadd.f32 %v2739, %v6194
        %v6196 = vpop.f32.mrf.mxu0
        %v6197 = vadd.f32 %v2739, %v6196
        %6198 = vmatmul.bf16.gmra.mxu0 %v2990
        %v6199 = vpop.f32.mrf.mxu0
        %v6200 = vadd.f32 %v2739, %v6199
        %v6201 = vpop.f32.mrf.mxu0
        %v6202 = vadd.f32 %v2739, %v6201
        %6203 = vmatmul.bf16.gmra.mxu0 %v2994
        %v6204 = vpop.f32.mrf.mxu0
        %v6205 = vadd.f32 %v2739, %v6204
        %v6206 = vpop.f32.mrf.mxu0
        %v6207 = vadd.f32 %v2739, %v6206
        %6208 = vmatmul.bf16.gmra.mxu0 %v2998
        %v6209 = vpop.f32.mrf.mxu0
        %v6210 = vadd.f32 %v2739, %v6209
        %v6211 = vpop.f32.mrf.mxu0
        %v6212 = vadd.f32 %v2739, %v6211
        %6213 = vmatmul.bf16.gmra.mxu0 %v3002
        %v6214 = vpop.f32.mrf.mxu0
        %v6215 = vadd.f32 %v2739, %v6214
        %v6216 = vpop.f32.mrf.mxu0
        %v6217 = vadd.f32 %v2739, %v6216
        %6218 = vdwg.mxu0
        %6219 = vmatpush.bf16.msra.mxu0 %v3963
        %6220 = vmatpush.bf16.msra.mxu0 %v3955
        %6221 = vmatpush.bf16.msra.mxu0 %v3947
        %6222 = vmatpush.bf16.msra.mxu0 %v3939
        %6223 = vmatpush.bf16.msra.mxu0 %v3931
        %6224 = vmatpush.bf16.msra.mxu0 %v3923
        %6225 = vmatpush.bf16.msra.mxu0 %v3915
        %6226 = vmatpush.bf16.msra.mxu0 %v3907
        %6227 = vmatmul.bf16.gmra.mxu0 %v2943
        %v6228 = vpop.f32.mrf.mxu0
        %v6229 = vadd.f32 %v6140, %v6228
        %v6230 = vpop.f32.mrf.mxu0
        %v6231 = vadd.f32 %v6142, %v6230
        %6232 = vmatmul.bf16.gmra.mxu0 %v2947
        %v6233 = vpop.f32.mrf.mxu0
        %v6234 = vadd.f32 %v6145, %v6233
        %v6235 = vpop.f32.mrf.mxu0
        %v6236 = vadd.f32 %v6147, %v6235
        %6237 = vmatmul.bf16.gmra.mxu0 %v2951
        %v6238 = vpop.f32.mrf.mxu0
        %v6239 = vadd.f32 %v6150, %v6238
        %v6240 = vpop.f32.mrf.mxu0
        %v6241 = vadd.f32 %v6152, %v6240
        %6242 = vmatmul.bf16.gmra.mxu0 %v2955
        %v6243 = vpop.f32.mrf.mxu0
        %v6244 = vadd.f32 %v6155, %v6243
        %v6245 = vpop.f32.mrf.mxu0
        %v6246 = vadd.f32 %v6157, %v6245
        %6247 = vmatmul.bf16.gmra.mxu0 %v2959
        %v6248 = vpop.f32.mrf.mxu0
        %v6249 = vadd.f32 %v6160, %v6248
        %v6250 = vpop.f32.mrf.mxu0
        %v6251 = vadd.f32 %v6162, %v6250
        %6252 = vmatmul.bf16.gmra.mxu0 %v2963
        %v6253 = vpop.f32.mrf.mxu0
        %v6254 = vadd.f32 %v6165, %v6253
        %v6255 = vpop.f32.mrf.mxu0
        %v6256 = vadd.f32 %v6167, %v6255
        %6257 = vmatmul.bf16.gmra.mxu0 %v2967
        %v6258 = vpop.f32.mrf.mxu0
        %v6259 = vadd.f32 %v6170, %v6258
        %v6260 = vpop.f32.mrf.mxu0
        %v6261 = vadd.f32 %v6172, %v6260
        %6262 = vmatmul.bf16.gmra.mxu0 %v2971
        %v6263 = vpop.f32.mrf.mxu0
        %v6264 = vadd.f32 %v6175, %v6263
        %v6265 = vpop.f32.mrf.mxu0
        %v6266 = vadd.f32 %v6177, %v6265
        %6267 = vmatmul.bf16.gmra.mxu0 %v2975
        %v6268 = vpop.f32.mrf.mxu0
        %v6269 = vadd.f32 %v6180, %v6268
        %v6270 = vpop.f32.mrf.mxu0
        %v6271 = vadd.f32 %v6182, %v6270
        %6272 = vmatmul.bf16.gmra.mxu0 %v2979
        %v6273 = vpop.f32.mrf.mxu0
        %v6274 = vadd.f32 %v6185, %v6273
        %v6275 = vpop.f32.mrf.mxu0
        %v6276 = vadd.f32 %v6187, %v6275
        %6277 = vmatmul.bf16.gmra.mxu0 %v2983
        %v6278 = vpop.f32.mrf.mxu0
        %v6279 = vadd.f32 %v6190, %v6278
        %v6280 = vpop.f32.mrf.mxu0
        %v6281 = vadd.f32 %v6192, %v6280
        %6282 = vmatmul.bf16.gmra.mxu0 %v2987
        %v6283 = vpop.f32.mrf.mxu0
        %v6284 = vadd.f32 %v6195, %v6283
        %v6285 = vpop.f32.mrf.mxu0
        %v6286 = vadd.f32 %v6197, %v6285
        %6287 = vmatmul.bf16.gmra.mxu0 %v2991
        %v6288 = vpop.f32.mrf.mxu0
        %v6289 = vadd.f32 %v6200, %v6288
        %v6290 = vpop.f32.mrf.mxu0
        %v6291 = vadd.f32 %v6202, %v6290
        %6292 = vmatmul.bf16.gmra.mxu0 %v2995
        %v6293 = vpop.f32.mrf.mxu0
        %v6294 = vadd.f32 %v6205, %v6293
        %v6295 = vpop.f32.mrf.mxu0
        %v6296 = vadd.f32 %v6207, %v6295
        %6297 = vmatmul.bf16.gmra.mxu0 %v2999
        %v6298 = vpop.f32.mrf.mxu0
        %v6299 = vadd.f32 %v6210, %v6298
        %v6300 = vpop.f32.mrf.mxu0
        %v6301 = vadd.f32 %v6212, %v6300
        %6302 = vmatmul.bf16.gmra.mxu0 %v3003
        %v6303 = vpop.f32.mrf.mxu0
        %v6304 = vadd.f32 %v6215, %v6303
        %v6305 = vpop.f32.mrf.mxu0
        %v6306 = vadd.f32 %v6217, %v6305
        %6307 = vdwg.mxu0
        %6308 = vmatpush.bf16.msra.mxu0 %v4027
        %6309 = vmatpush.bf16.msra.mxu0 %v4019
        %6310 = vmatpush.bf16.msra.mxu0 %v4011
        %6311 = vmatpush.bf16.msra.mxu0 %v4003
        %6312 = vmatpush.bf16.msra.mxu0 %v3995
        %6313 = vmatpush.bf16.msra.mxu0 %v3987
        %6314 = vmatpush.bf16.msra.mxu0 %v3979
        %6315 = vmatpush.bf16.msra.mxu0 %v3971
        %6316 = vmatmul.bf16.gmra.mxu0 %v2944
        %v6317 = vpop.f32.mrf.mxu0
        %v6318 = vadd.f32 %v6229, %v6317
        %v6319 = vpop.f32.mrf.mxu0
        %v6320 = vadd.f32 %v6231, %v6319
        %6321 = vmatmul.bf16.gmra.mxu0 %v2948
        %v6322 = vpop.f32.mrf.mxu0
        %v6323 = vadd.f32 %v6234, %v6322
        %v6324 = vpop.f32.mrf.mxu0
        %v6325 = vadd.f32 %v6236, %v6324
        %6326 = vmatmul.bf16.gmra.mxu0 %v2952
        %v6327 = vpop.f32.mrf.mxu0
        %v6328 = vadd.f32 %v6239, %v6327
        %v6329 = vpop.f32.mrf.mxu0
        %v6330 = vadd.f32 %v6241, %v6329
        %6331 = vmatmul.bf16.gmra.mxu0 %v2956
        %v6332 = vpop.f32.mrf.mxu0
        %v6333 = vadd.f32 %v6244, %v6332
        %v6334 = vpop.f32.mrf.mxu0
        %v6335 = vadd.f32 %v6246, %v6334
        %6336 = vmatmul.bf16.gmra.mxu0 %v2960
        %v6337 = vpop.f32.mrf.mxu0
        %v6338 = vadd.f32 %v6249, %v6337
        %v6339 = vpop.f32.mrf.mxu0
        %v6340 = vadd.f32 %v6251, %v6339
        %6341 = vmatmul.bf16.gmra.mxu0 %v2964
        %v6342 = vpop.f32.mrf.mxu0
        %v6343 = vadd.f32 %v6254, %v6342
        %v6344 = vpop.f32.mrf.mxu0
        %v6345 = vadd.f32 %v6256, %v6344
        %6346 = vmatmul.bf16.gmra.mxu0 %v2968
        %v6347 = vpop.f32.mrf.mxu0
        %v6348 = vadd.f32 %v6259, %v6347
        %v6349 = vpop.f32.mrf.mxu0
        %v6350 = vadd.f32 %v6261, %v6349
        %6351 = vmatmul.bf16.gmra.mxu0 %v2972
        %v6352 = vpop.f32.mrf.mxu0
        %v6353 = vadd.f32 %v6264, %v6352
        %v6354 = vpop.f32.mrf.mxu0
        %v6355 = vadd.f32 %v6266, %v6354
        %6356 = vmatmul.bf16.gmra.mxu0 %v2976
        %v6357 = vpop.f32.mrf.mxu0
        %v6358 = vadd.f32 %v6269, %v6357
        %v6359 = vpop.f32.mrf.mxu0
        %v6360 = vadd.f32 %v6271, %v6359
        %6361 = vmatmul.bf16.gmra.mxu0 %v2980
        %v6362 = vpop.f32.mrf.mxu0
        %v6363 = vadd.f32 %v6274, %v6362
        %v6364 = vpop.f32.mrf.mxu0
        %v6365 = vadd.f32 %v6276, %v6364
        %6366 = vmatmul.bf16.gmra.mxu0 %v2984
        %v6367 = vpop.f32.mrf.mxu0
        %v6368 = vadd.f32 %v6279, %v6367
        %v6369 = vpop.f32.mrf.mxu0
        %v6370 = vadd.f32 %v6281, %v6369
        %6371 = vmatmul.bf16.gmra.mxu0 %v2988
        %v6372 = vpop.f32.mrf.mxu0
        %v6373 = vadd.f32 %v6284, %v6372
        %v6374 = vpop.f32.mrf.mxu0
        %v6375 = vadd.f32 %v6286, %v6374
        %6376 = vmatmul.bf16.gmra.mxu0 %v2992
        %v6377 = vpop.f32.mrf.mxu0
        %v6378 = vadd.f32 %v6289, %v6377
        %v6379 = vpop.f32.mrf.mxu0
        %v6380 = vadd.f32 %v6291, %v6379
        %6381 = vmatmul.bf16.gmra.mxu0 %v2996
        %v6382 = vpop.f32.mrf.mxu0
        %v6383 = vadd.f32 %v6294, %v6382
        %v6384 = vpop.f32.mrf.mxu0
        %v6385 = vadd.f32 %v6296, %v6384
        %6386 = vmatmul.bf16.gmra.mxu0 %v3000
        %v6387 = vpop.f32.mrf.mxu0
        %v6388 = vadd.f32 %v6299, %v6387
        %v6389 = vpop.f32.mrf.mxu0
        %v6390 = vadd.f32 %v6301, %v6389
        %6391 = vmatmul.bf16.gmra.mxu0 %v3004
        %v6392 = vpop.f32.mrf.mxu0
        %v6393 = vadd.f32 %v6304, %v6392
        %v6394 = vpop.f32.mrf.mxu0
        %v6395 = vadd.f32 %v6306, %v6394
        %6396 = vdwg.mxu0
        %6397 = vmatpush.bf16.msra.mxu0 %v4091
        %6398 = vmatpush.bf16.msra.mxu0 %v4083
        %6399 = vmatpush.bf16.msra.mxu0 %v4075
        %6400 = vmatpush.bf16.msra.mxu0 %v4067
        %6401 = vmatpush.bf16.msra.mxu0 %v4059
        %6402 = vmatpush.bf16.msra.mxu0 %v4051
        %6403 = vmatpush.bf16.msra.mxu0 %v4043
        %6404 = vmatpush.bf16.msra.mxu0 %v4035
        %6405 = vmatmul.bf16.gmra.mxu0 %v2945
        %v6406 = vpop.f32.mrf.mxu0
        %v6407 = vadd.f32 %v6318, %v6406
        %v6408 = vpop.f32.mrf.mxu0
        %v6409 = vadd.f32 %v6320, %v6408
        %6410 = vmatmul.bf16.gmra.mxu0 %v2949
        %v6411 = vpop.f32.mrf.mxu0
        %v6412 = vadd.f32 %v6323, %v6411
        %v6413 = vpop.f32.mrf.mxu0
        %v6414 = vadd.f32 %v6325, %v6413
        %6415 = vmatmul.bf16.gmra.mxu0 %v2953
        %v6416 = vpop.f32.mrf.mxu0
        %v6417 = vadd.f32 %v6328, %v6416
        %v6418 = vpop.f32.mrf.mxu0
        %v6419 = vadd.f32 %v6330, %v6418
        %6420 = vmatmul.bf16.gmra.mxu0 %v2957
        %v6421 = vpop.f32.mrf.mxu0
        %v6422 = vadd.f32 %v6333, %v6421
        %v6423 = vpop.f32.mrf.mxu0
        %v6424 = vadd.f32 %v6335, %v6423
        %6425 = vmatmul.bf16.gmra.mxu0 %v2961
        %v6426 = vpop.f32.mrf.mxu0
        %v6427 = vadd.f32 %v6338, %v6426
        %v6428 = vpop.f32.mrf.mxu0
        %v6429 = vadd.f32 %v6340, %v6428
        %6430 = vmatmul.bf16.gmra.mxu0 %v2965
        %v6431 = vpop.f32.mrf.mxu0
        %v6432 = vadd.f32 %v6343, %v6431
        %v6433 = vpop.f32.mrf.mxu0
        %v6434 = vadd.f32 %v6345, %v6433
        %6435 = vmatmul.bf16.gmra.mxu0 %v2969
        %v6436 = vpop.f32.mrf.mxu0
        %v6437 = vadd.f32 %v6348, %v6436
        %v6438 = vpop.f32.mrf.mxu0
        %v6439 = vadd.f32 %v6350, %v6438
        %6440 = vmatmul.bf16.gmra.mxu0 %v2973
        %v6441 = vpop.f32.mrf.mxu0
        %v6442 = vadd.f32 %v6353, %v6441
        %v6443 = vpop.f32.mrf.mxu0
        %v6444 = vadd.f32 %v6355, %v6443
        %6445 = vmatmul.bf16.gmra.mxu0 %v2977
        %v6446 = vpop.f32.mrf.mxu0
        %v6447 = vadd.f32 %v6358, %v6446
        %v6448 = vpop.f32.mrf.mxu0
        %v6449 = vadd.f32 %v6360, %v6448
        %6450 = vmatmul.bf16.gmra.mxu0 %v2981
        %v6451 = vpop.f32.mrf.mxu0
        %v6452 = vadd.f32 %v6363, %v6451
        %v6453 = vpop.f32.mrf.mxu0
        %v6454 = vadd.f32 %v6365, %v6453
        %6455 = vmatmul.bf16.gmra.mxu0 %v2985
        %v6456 = vpop.f32.mrf.mxu0
        %v6457 = vadd.f32 %v6368, %v6456
        %v6458 = vpop.f32.mrf.mxu0
        %v6459 = vadd.f32 %v6370, %v6458
        %6460 = vmatmul.bf16.gmra.mxu0 %v2989
        %v6461 = vpop.f32.mrf.mxu0
        %v6462 = vadd.f32 %v6373, %v6461
        %v6463 = vpop.f32.mrf.mxu0
        %v6464 = vadd.f32 %v6375, %v6463
        %6465 = vmatmul.bf16.gmra.mxu0 %v2993
        %v6466 = vpop.f32.mrf.mxu0
        %v6467 = vadd.f32 %v6378, %v6466
        %v6468 = vpop.f32.mrf.mxu0
        %v6469 = vadd.f32 %v6380, %v6468
        %6470 = vmatmul.bf16.gmra.mxu0 %v2997
        %v6471 = vpop.f32.mrf.mxu0
        %v6472 = vadd.f32 %v6383, %v6471
        %v6473 = vpop.f32.mrf.mxu0
        %v6474 = vadd.f32 %v6385, %v6473
        %6475 = vmatmul.bf16.gmra.mxu0 %v3001
        %v6476 = vpop.f32.mrf.mxu0
        %v6477 = vadd.f32 %v6388, %v6476
        %v6478 = vpop.f32.mrf.mxu0
        %v6479 = vadd.f32 %v6390, %v6478
        %6480 = vmatmul.bf16.gmra.mxu0 %v3005
        %v6481 = vpop.f32.mrf.mxu0
        %v6482 = vadd.f32 %v6393, %v6481
        %v6483 = vpop.f32.mrf.mxu0
        %v6484 = vadd.f32 %v6395, %v6483
        %6485 = vdwg.mxu0
        %6486 = vmatpush.bf16.msra.mxu0 %v3900
        %6487 = vmatpush.bf16.msra.mxu0 %v3892
        %6488 = vmatpush.bf16.msra.mxu0 %v3884
        %6489 = vmatpush.bf16.msra.mxu0 %v3876
        %6490 = vmatpush.bf16.msra.mxu0 %v3868
        %6491 = vmatpush.bf16.msra.mxu0 %v3860
        %6492 = vmatpush.bf16.msra.mxu0 %v3852
        %6493 = vmatpush.bf16.msra.mxu0 %v3844
        %6494 = vmatmul.bf16.gmra.mxu0 %v2942
        %v6495 = vpop.f32.mrf.mxu0
        %v6496 = vadd.f32 %v2740, %v6495
        %v6497 = vpop.f32.mrf.mxu0
        %v6498 = vadd.f32 %v2740, %v6497
        %6499 = vmatmul.bf16.gmra.mxu0 %v2946
        %v6500 = vpop.f32.mrf.mxu0
        %v6501 = vadd.f32 %v2740, %v6500
        %v6502 = vpop.f32.mrf.mxu0
        %v6503 = vadd.f32 %v2740, %v6502
        %6504 = vmatmul.bf16.gmra.mxu0 %v2950
        %v6505 = vpop.f32.mrf.mxu0
        %v6506 = vadd.f32 %v2740, %v6505
        %v6507 = vpop.f32.mrf.mxu0
        %v6508 = vadd.f32 %v2740, %v6507
        %6509 = vmatmul.bf16.gmra.mxu0 %v2954
        %v6510 = vpop.f32.mrf.mxu0
        %v6511 = vadd.f32 %v2740, %v6510
        %v6512 = vpop.f32.mrf.mxu0
        %v6513 = vadd.f32 %v2740, %v6512
        %6514 = vmatmul.bf16.gmra.mxu0 %v2958
        %v6515 = vpop.f32.mrf.mxu0
        %v6516 = vadd.f32 %v2740, %v6515
        %v6517 = vpop.f32.mrf.mxu0
        %v6518 = vadd.f32 %v2740, %v6517
        %6519 = vmatmul.bf16.gmra.mxu0 %v2962
        %v6520 = vpop.f32.mrf.mxu0
        %v6521 = vadd.f32 %v2740, %v6520
        %v6522 = vpop.f32.mrf.mxu0
        %v6523 = vadd.f32 %v2740, %v6522
        %6524 = vmatmul.bf16.gmra.mxu0 %v2966
        %v6525 = vpop.f32.mrf.mxu0
        %v6526 = vadd.f32 %v2740, %v6525
        %v6527 = vpop.f32.mrf.mxu0
        %v6528 = vadd.f32 %v2740, %v6527
        %6529 = vmatmul.bf16.gmra.mxu0 %v2970
        %v6530 = vpop.f32.mrf.mxu0
        %v6531 = vadd.f32 %v2740, %v6530
        %v6532 = vpop.f32.mrf.mxu0
        %v6533 = vadd.f32 %v2740, %v6532
        %6534 = vmatmul.bf16.gmra.mxu0 %v2974
        %v6535 = vpop.f32.mrf.mxu0
        %v6536 = vadd.f32 %v2740, %v6535
        %v6537 = vpop.f32.mrf.mxu0
        %v6538 = vadd.f32 %v2740, %v6537
        %6539 = vmatmul.bf16.gmra.mxu0 %v2978
        %v6540 = vpop.f32.mrf.mxu0
        %v6541 = vadd.f32 %v2740, %v6540
        %v6542 = vpop.f32.mrf.mxu0
        %v6543 = vadd.f32 %v2740, %v6542
        %6544 = vmatmul.bf16.gmra.mxu0 %v2982
        %v6545 = vpop.f32.mrf.mxu0
        %v6546 = vadd.f32 %v2740, %v6545
        %v6547 = vpop.f32.mrf.mxu0
        %v6548 = vadd.f32 %v2740, %v6547
        %6549 = vmatmul.bf16.gmra.mxu0 %v2986
        %v6550 = vpop.f32.mrf.mxu0
        %v6551 = vadd.f32 %v2740, %v6550
        %v6552 = vpop.f32.mrf.mxu0
        %v6553 = vadd.f32 %v2740, %v6552
        %6554 = vmatmul.bf16.gmra.mxu0 %v2990
        %v6555 = vpop.f32.mrf.mxu0
        %v6556 = vadd.f32 %v2740, %v6555
        %v6557 = vpop.f32.mrf.mxu0
        %v6558 = vadd.f32 %v2740, %v6557
        %6559 = vmatmul.bf16.gmra.mxu0 %v2994
        %v6560 = vpop.f32.mrf.mxu0
        %v6561 = vadd.f32 %v2740, %v6560
        %v6562 = vpop.f32.mrf.mxu0
        %v6563 = vadd.f32 %v2740, %v6562
        %6564 = vmatmul.bf16.gmra.mxu0 %v2998
        %v6565 = vpop.f32.mrf.mxu0
        %v6566 = vadd.f32 %v2740, %v6565
        %v6567 = vpop.f32.mrf.mxu0
        %v6568 = vadd.f32 %v2740, %v6567
        %6569 = vmatmul.bf16.gmra.mxu0 %v3002
        %v6570 = vpop.f32.mrf.mxu0
        %v6571 = vadd.f32 %v2740, %v6570
        %v6572 = vpop.f32.mrf.mxu0
        %v6573 = vadd.f32 %v2740, %v6572
        %6574 = vdwg.mxu0
        %6575 = vmatpush.bf16.msra.mxu0 %v3964
        %6576 = vmatpush.bf16.msra.mxu0 %v3956
        %6577 = vmatpush.bf16.msra.mxu0 %v3948
        %6578 = vmatpush.bf16.msra.mxu0 %v3940
        %6579 = vmatpush.bf16.msra.mxu0 %v3932
        %6580 = vmatpush.bf16.msra.mxu0 %v3924
        %6581 = vmatpush.bf16.msra.mxu0 %v3916
        %6582 = vmatpush.bf16.msra.mxu0 %v3908
        %6583 = vmatmul.bf16.gmra.mxu0 %v2943
        %v6584 = vpop.f32.mrf.mxu0
        %v6585 = vadd.f32 %v6496, %v6584
        %v6586 = vpop.f32.mrf.mxu0
        %v6587 = vadd.f32 %v6498, %v6586
        %6588 = vmatmul.bf16.gmra.mxu0 %v2947
        %v6589 = vpop.f32.mrf.mxu0
        %v6590 = vadd.f32 %v6501, %v6589
        %v6591 = vpop.f32.mrf.mxu0
        %v6592 = vadd.f32 %v6503, %v6591
        %6593 = vmatmul.bf16.gmra.mxu0 %v2951
        %v6594 = vpop.f32.mrf.mxu0
        %v6595 = vadd.f32 %v6506, %v6594
        %v6596 = vpop.f32.mrf.mxu0
        %v6597 = vadd.f32 %v6508, %v6596
        %6598 = vmatmul.bf16.gmra.mxu0 %v2955
        %v6599 = vpop.f32.mrf.mxu0
        %v6600 = vadd.f32 %v6511, %v6599
        %v6601 = vpop.f32.mrf.mxu0
        %v6602 = vadd.f32 %v6513, %v6601
        %6603 = vmatmul.bf16.gmra.mxu0 %v2959
        %v6604 = vpop.f32.mrf.mxu0
        %v6605 = vadd.f32 %v6516, %v6604
        %v6606 = vpop.f32.mrf.mxu0
        %v6607 = vadd.f32 %v6518, %v6606
        %6608 = vmatmul.bf16.gmra.mxu0 %v2963
        %v6609 = vpop.f32.mrf.mxu0
        %v6610 = vadd.f32 %v6521, %v6609
        %v6611 = vpop.f32.mrf.mxu0
        %v6612 = vadd.f32 %v6523, %v6611
        %6613 = vmatmul.bf16.gmra.mxu0 %v2967
        %v6614 = vpop.f32.mrf.mxu0
        %v6615 = vadd.f32 %v6526, %v6614
        %v6616 = vpop.f32.mrf.mxu0
        %v6617 = vadd.f32 %v6528, %v6616
        %6618 = vmatmul.bf16.gmra.mxu0 %v2971
        %v6619 = vpop.f32.mrf.mxu0
        %v6620 = vadd.f32 %v6531, %v6619
        %v6621 = vpop.f32.mrf.mxu0
        %v6622 = vadd.f32 %v6533, %v6621
        %6623 = vmatmul.bf16.gmra.mxu0 %v2975
        %v6624 = vpop.f32.mrf.mxu0
        %v6625 = vadd.f32 %v6536, %v6624
        %v6626 = vpop.f32.mrf.mxu0
        %v6627 = vadd.f32 %v6538, %v6626
        %6628 = vmatmul.bf16.gmra.mxu0 %v2979
        %v6629 = vpop.f32.mrf.mxu0
        %v6630 = vadd.f32 %v6541, %v6629
        %v6631 = vpop.f32.mrf.mxu0
        %v6632 = vadd.f32 %v6543, %v6631
        %6633 = vmatmul.bf16.gmra.mxu0 %v2983
        %v6634 = vpop.f32.mrf.mxu0
        %v6635 = vadd.f32 %v6546, %v6634
        %v6636 = vpop.f32.mrf.mxu0
        %v6637 = vadd.f32 %v6548, %v6636
        %6638 = vmatmul.bf16.gmra.mxu0 %v2987
        %v6639 = vpop.f32.mrf.mxu0
        %v6640 = vadd.f32 %v6551, %v6639
        %v6641 = vpop.f32.mrf.mxu0
        %v6642 = vadd.f32 %v6553, %v6641
        %6643 = vmatmul.bf16.gmra.mxu0 %v2991
        %v6644 = vpop.f32.mrf.mxu0
        %v6645 = vadd.f32 %v6556, %v6644
        %v6646 = vpop.f32.mrf.mxu0
        %v6647 = vadd.f32 %v6558, %v6646
        %6648 = vmatmul.bf16.gmra.mxu0 %v2995
        %v6649 = vpop.f32.mrf.mxu0
        %v6650 = vadd.f32 %v6561, %v6649
        %v6651 = vpop.f32.mrf.mxu0
        %v6652 = vadd.f32 %v6563, %v6651
        %6653 = vmatmul.bf16.gmra.mxu0 %v2999
        %v6654 = vpop.f32.mrf.mxu0
        %v6655 = vadd.f32 %v6566, %v6654
        %v6656 = vpop.f32.mrf.mxu0
        %v6657 = vadd.f32 %v6568, %v6656
        %6658 = vmatmul.bf16.gmra.mxu0 %v3003
        %v6659 = vpop.f32.mrf.mxu0
        %v6660 = vadd.f32 %v6571, %v6659
        %v6661 = vpop.f32.mrf.mxu0
        %v6662 = vadd.f32 %v6573, %v6661
        %6663 = vdwg.mxu0
        %6664 = vmatpush.bf16.msra.mxu0 %v4028
        %6665 = vmatpush.bf16.msra.mxu0 %v4020
        %6666 = vmatpush.bf16.msra.mxu0 %v4012
        %6667 = vmatpush.bf16.msra.mxu0 %v4004
        %6668 = vmatpush.bf16.msra.mxu0 %v3996
        %6669 = vmatpush.bf16.msra.mxu0 %v3988
        %6670 = vmatpush.bf16.msra.mxu0 %v3980
        %6671 = vmatpush.bf16.msra.mxu0 %v3972
        %6672 = vmatmul.bf16.gmra.mxu0 %v2944
        %v6673 = vpop.f32.mrf.mxu0
        %v6674 = vadd.f32 %v6585, %v6673
        %v6675 = vpop.f32.mrf.mxu0
        %v6676 = vadd.f32 %v6587, %v6675
        %6677 = vmatmul.bf16.gmra.mxu0 %v2948
        %v6678 = vpop.f32.mrf.mxu0
        %v6679 = vadd.f32 %v6590, %v6678
        %v6680 = vpop.f32.mrf.mxu0
        %v6681 = vadd.f32 %v6592, %v6680
        %6682 = vmatmul.bf16.gmra.mxu0 %v2952
        %v6683 = vpop.f32.mrf.mxu0
        %v6684 = vadd.f32 %v6595, %v6683
        %v6685 = vpop.f32.mrf.mxu0
        %v6686 = vadd.f32 %v6597, %v6685
        %6687 = vmatmul.bf16.gmra.mxu0 %v2956
        %v6688 = vpop.f32.mrf.mxu0
        %v6689 = vadd.f32 %v6600, %v6688
        %v6690 = vpop.f32.mrf.mxu0
        %v6691 = vadd.f32 %v6602, %v6690
        %6692 = vmatmul.bf16.gmra.mxu0 %v2960
        %v6693 = vpop.f32.mrf.mxu0
        %v6694 = vadd.f32 %v6605, %v6693
        %v6695 = vpop.f32.mrf.mxu0
        %v6696 = vadd.f32 %v6607, %v6695
        %6697 = vmatmul.bf16.gmra.mxu0 %v2964
        %v6698 = vpop.f32.mrf.mxu0
        %v6699 = vadd.f32 %v6610, %v6698
        %v6700 = vpop.f32.mrf.mxu0
        %v6701 = vadd.f32 %v6612, %v6700
        %6702 = vmatmul.bf16.gmra.mxu0 %v2968
        %v6703 = vpop.f32.mrf.mxu0
        %v6704 = vadd.f32 %v6615, %v6703
        %v6705 = vpop.f32.mrf.mxu0
        %v6706 = vadd.f32 %v6617, %v6705
        %6707 = vmatmul.bf16.gmra.mxu0 %v2972
        %v6708 = vpop.f32.mrf.mxu0
        %v6709 = vadd.f32 %v6620, %v6708
        %v6710 = vpop.f32.mrf.mxu0
        %v6711 = vadd.f32 %v6622, %v6710
        %6712 = vmatmul.bf16.gmra.mxu0 %v2976
        %v6713 = vpop.f32.mrf.mxu0
        %v6714 = vadd.f32 %v6625, %v6713
        %v6715 = vpop.f32.mrf.mxu0
        %v6716 = vadd.f32 %v6627, %v6715
        %6717 = vmatmul.bf16.gmra.mxu0 %v2980
        %v6718 = vpop.f32.mrf.mxu0
        %v6719 = vadd.f32 %v6630, %v6718
        %v6720 = vpop.f32.mrf.mxu0
        %v6721 = vadd.f32 %v6632, %v6720
        %6722 = vmatmul.bf16.gmra.mxu0 %v2984
        %v6723 = vpop.f32.mrf.mxu0
        %v6724 = vadd.f32 %v6635, %v6723
        %v6725 = vpop.f32.mrf.mxu0
        %v6726 = vadd.f32 %v6637, %v6725
        %6727 = vmatmul.bf16.gmra.mxu0 %v2988
        %v6728 = vpop.f32.mrf.mxu0
        %v6729 = vadd.f32 %v6640, %v6728
        %v6730 = vpop.f32.mrf.mxu0
        %v6731 = vadd.f32 %v6642, %v6730
        %6732 = vmatmul.bf16.gmra.mxu0 %v2992
        %v6733 = vpop.f32.mrf.mxu0
        %v6734 = vadd.f32 %v6645, %v6733
        %v6735 = vpop.f32.mrf.mxu0
        %v6736 = vadd.f32 %v6647, %v6735
        %6737 = vmatmul.bf16.gmra.mxu0 %v2996
        %v6738 = vpop.f32.mrf.mxu0
        %v6739 = vadd.f32 %v6650, %v6738
        %v6740 = vpop.f32.mrf.mxu0
        %v6741 = vadd.f32 %v6652, %v6740
        %6742 = vmatmul.bf16.gmra.mxu0 %v3000
        %v6743 = vpop.f32.mrf.mxu0
        %v6744 = vadd.f32 %v6655, %v6743
        %v6745 = vpop.f32.mrf.mxu0
        %v6746 = vadd.f32 %v6657, %v6745
        %6747 = vmatmul.bf16.gmra.mxu0 %v3004
        %v6748 = vpop.f32.mrf.mxu0
        %v6749 = vadd.f32 %v6660, %v6748
        %v6750 = vpop.f32.mrf.mxu0
        %v6751 = vadd.f32 %v6662, %v6750
        %6752 = vdwg.mxu0
        %6753 = vmatpush.bf16.msra.mxu0 %v4092
        %6754 = vmatpush.bf16.msra.mxu0 %v4084
        %6755 = vmatpush.bf16.msra.mxu0 %v4076
        %6756 = vmatpush.bf16.msra.mxu0 %v4068
        %6757 = vmatpush.bf16.msra.mxu0 %v4060
        %6758 = vmatpush.bf16.msra.mxu0 %v4052
        %6759 = vmatpush.bf16.msra.mxu0 %v4044
        %6760 = vmatpush.bf16.msra.mxu0 %v4036
        %6761 = vmatmul.bf16.gmra.mxu0 %v2945
        %v6762 = vpop.f32.mrf.mxu0
        %v6763 = vadd.f32 %v6674, %v6762
        %v6764 = vpop.f32.mrf.mxu0
        %v6765 = vadd.f32 %v6676, %v6764
        %6766 = vmatmul.bf16.gmra.mxu0 %v2949
        %v6767 = vpop.f32.mrf.mxu0
        %v6768 = vadd.f32 %v6679, %v6767
        %v6769 = vpop.f32.mrf.mxu0
        %v6770 = vadd.f32 %v6681, %v6769
        %6771 = vmatmul.bf16.gmra.mxu0 %v2953
        %v6772 = vpop.f32.mrf.mxu0
        %v6773 = vadd.f32 %v6684, %v6772
        %v6774 = vpop.f32.mrf.mxu0
        %v6775 = vadd.f32 %v6686, %v6774
        %6776 = vmatmul.bf16.gmra.mxu0 %v2957
        %v6777 = vpop.f32.mrf.mxu0
        %v6778 = vadd.f32 %v6689, %v6777
        %v6779 = vpop.f32.mrf.mxu0
        %v6780 = vadd.f32 %v6691, %v6779
        %6781 = vmatmul.bf16.gmra.mxu0 %v2961
        %v6782 = vpop.f32.mrf.mxu0
        %v6783 = vadd.f32 %v6694, %v6782
        %v6784 = vpop.f32.mrf.mxu0
        %v6785 = vadd.f32 %v6696, %v6784
        %6786 = vmatmul.bf16.gmra.mxu0 %v2965
        %v6787 = vpop.f32.mrf.mxu0
        %v6788 = vadd.f32 %v6699, %v6787
        %v6789 = vpop.f32.mrf.mxu0
        %v6790 = vadd.f32 %v6701, %v6789
        %6791 = vmatmul.bf16.gmra.mxu0 %v2969
        %v6792 = vpop.f32.mrf.mxu0
        %v6793 = vadd.f32 %v6704, %v6792
        %v6794 = vpop.f32.mrf.mxu0
        %v6795 = vadd.f32 %v6706, %v6794
        %6796 = vmatmul.bf16.gmra.mxu0 %v2973
        %v6797 = vpop.f32.mrf.mxu0
        %v6798 = vadd.f32 %v6709, %v6797
        %v6799 = vpop.f32.mrf.mxu0
        %v6800 = vadd.f32 %v6711, %v6799
        %6801 = vmatmul.bf16.gmra.mxu0 %v2977
        %v6802 = vpop.f32.mrf.mxu0
        %v6803 = vadd.f32 %v6714, %v6802
        %v6804 = vpop.f32.mrf.mxu0
        %v6805 = vadd.f32 %v6716, %v6804
        %6806 = vmatmul.bf16.gmra.mxu0 %v2981
        %v6807 = vpop.f32.mrf.mxu0
        %v6808 = vadd.f32 %v6719, %v6807
        %v6809 = vpop.f32.mrf.mxu0
        %v6810 = vadd.f32 %v6721, %v6809
        %6811 = vmatmul.bf16.gmra.mxu0 %v2985
        %v6812 = vpop.f32.mrf.mxu0
        %v6813 = vadd.f32 %v6724, %v6812
        %v6814 = vpop.f32.mrf.mxu0
        %v6815 = vadd.f32 %v6726, %v6814
        %6816 = vmatmul.bf16.gmra.mxu0 %v2989
        %v6817 = vpop.f32.mrf.mxu0
        %v6818 = vadd.f32 %v6729, %v6817
        %v6819 = vpop.f32.mrf.mxu0
        %v6820 = vadd.f32 %v6731, %v6819
        %6821 = vmatmul.bf16.gmra.mxu0 %v2993
        %v6822 = vpop.f32.mrf.mxu0
        %v6823 = vadd.f32 %v6734, %v6822
        %v6824 = vpop.f32.mrf.mxu0
        %v6825 = vadd.f32 %v6736, %v6824
        %6826 = vmatmul.bf16.gmra.mxu0 %v2997
        %v6827 = vpop.f32.mrf.mxu0
        %v6828 = vadd.f32 %v6739, %v6827
        %v6829 = vpop.f32.mrf.mxu0
        %v6830 = vadd.f32 %v6741, %v6829
        %6831 = vmatmul.bf16.gmra.mxu0 %v3001
        %v6832 = vpop.f32.mrf.mxu0
        %v6833 = vadd.f32 %v6744, %v6832
        %v6834 = vpop.f32.mrf.mxu0
        %v6835 = vadd.f32 %v6746, %v6834
        %6836 = vmatmul.bf16.gmra.mxu0 %v3005
        %v6837 = vpop.f32.mrf.mxu0
        %v6838 = vadd.f32 %v6749, %v6837
        %v6839 = vpop.f32.mrf.mxu0
        %v6840 = vadd.f32 %v6751, %v6839
        %6841 = vdwg.mxu0
        %6842 = vmatpush.bf16.msra.mxu0 %v3901
        %6843 = vmatpush.bf16.msra.mxu0 %v3893
        %6844 = vmatpush.bf16.msra.mxu0 %v3885
        %6845 = vmatpush.bf16.msra.mxu0 %v3877
        %6846 = vmatpush.bf16.msra.mxu0 %v3869
        %6847 = vmatpush.bf16.msra.mxu0 %v3861
        %6848 = vmatpush.bf16.msra.mxu0 %v3853
        %6849 = vmatpush.bf16.msra.mxu0 %v3845
        %6850 = vmatmul.bf16.gmra.mxu0 %v2942
        %v6851 = vpop.f32.mrf.mxu0
        %v6852 = vadd.f32 %v2741, %v6851
        %v6853 = vpop.f32.mrf.mxu0
        %v6854 = vadd.f32 %v2741, %v6853
        %6855 = vmatmul.bf16.gmra.mxu0 %v2946
        %v6856 = vpop.f32.mrf.mxu0
        %v6857 = vadd.f32 %v2741, %v6856
        %v6858 = vpop.f32.mrf.mxu0
        %v6859 = vadd.f32 %v2741, %v6858
        %6860 = vmatmul.bf16.gmra.mxu0 %v2950
        %v6861 = vpop.f32.mrf.mxu0
        %v6862 = vadd.f32 %v2741, %v6861
        %v6863 = vpop.f32.mrf.mxu0
        %v6864 = vadd.f32 %v2741, %v6863
        %6865 = vmatmul.bf16.gmra.mxu0 %v2954
        %v6866 = vpop.f32.mrf.mxu0
        %v6867 = vadd.f32 %v2741, %v6866
        %v6868 = vpop.f32.mrf.mxu0
        %v6869 = vadd.f32 %v2741, %v6868
        %6870 = vmatmul.bf16.gmra.mxu0 %v2958
        %v6871 = vpop.f32.mrf.mxu0
        %v6872 = vadd.f32 %v2741, %v6871
        %v6873 = vpop.f32.mrf.mxu0
        %v6874 = vadd.f32 %v2741, %v6873
        %6875 = vmatmul.bf16.gmra.mxu0 %v2962
        %v6876 = vpop.f32.mrf.mxu0
        %v6877 = vadd.f32 %v2741, %v6876
        %v6878 = vpop.f32.mrf.mxu0
        %v6879 = vadd.f32 %v2741, %v6878
        %6880 = vmatmul.bf16.gmra.mxu0 %v2966
        %v6881 = vpop.f32.mrf.mxu0
        %v6882 = vadd.f32 %v2741, %v6881
        %v6883 = vpop.f32.mrf.mxu0
        %v6884 = vadd.f32 %v2741, %v6883
        %6885 = vmatmul.bf16.gmra.mxu0 %v2970
        %v6886 = vpop.f32.mrf.mxu0
        %v6887 = vadd.f32 %v2741, %v6886
        %v6888 = vpop.f32.mrf.mxu0
        %v6889 = vadd.f32 %v2741, %v6888
        %6890 = vmatmul.bf16.gmra.mxu0 %v2974
        %v6891 = vpop.f32.mrf.mxu0
        %v6892 = vadd.f32 %v2741, %v6891
        %v6893 = vpop.f32.mrf.mxu0
        %v6894 = vadd.f32 %v2741, %v6893
        %6895 = vmatmul.bf16.gmra.mxu0 %v2978
        %v6896 = vpop.f32.mrf.mxu0
        %v6897 = vadd.f32 %v2741, %v6896
        %v6898 = vpop.f32.mrf.mxu0
        %v6899 = vadd.f32 %v2741, %v6898
        %6900 = vmatmul.bf16.gmra.mxu0 %v2982
        %v6901 = vpop.f32.mrf.mxu0
        %v6902 = vadd.f32 %v2741, %v6901
        %v6903 = vpop.f32.mrf.mxu0
        %v6904 = vadd.f32 %v2741, %v6903
        %6905 = vmatmul.bf16.gmra.mxu0 %v2986
        %v6906 = vpop.f32.mrf.mxu0
        %v6907 = vadd.f32 %v2741, %v6906
        %v6908 = vpop.f32.mrf.mxu0
        %v6909 = vadd.f32 %v2741, %v6908
        %6910 = vmatmul.bf16.gmra.mxu0 %v2990
        %v6911 = vpop.f32.mrf.mxu0
        %v6912 = vadd.f32 %v2741, %v6911
        %v6913 = vpop.f32.mrf.mxu0
        %v6914 = vadd.f32 %v2741, %v6913
        %6915 = vmatmul.bf16.gmra.mxu0 %v2994
        %v6916 = vpop.f32.mrf.mxu0
        %v6917 = vadd.f32 %v2741, %v6916
        %v6918 = vpop.f32.mrf.mxu0
        %v6919 = vadd.f32 %v2741, %v6918
        %6920 = vmatmul.bf16.gmra.mxu0 %v2998
        %v6921 = vpop.f32.mrf.mxu0
        %v6922 = vadd.f32 %v2741, %v6921
        %v6923 = vpop.f32.mrf.mxu0
        %v6924 = vadd.f32 %v2741, %v6923
        %6925 = vmatmul.bf16.gmra.mxu0 %v3002
        %v6926 = vpop.f32.mrf.mxu0
        %v6927 = vadd.f32 %v2741, %v6926
        %v6928 = vpop.f32.mrf.mxu0
        %v6929 = vadd.f32 %v2741, %v6928
        %6930 = vdwg.mxu0
        %6931 = vmatpush.bf16.msra.mxu0 %v3965
        %6932 = vmatpush.bf16.msra.mxu0 %v3957
        %6933 = vmatpush.bf16.msra.mxu0 %v3949
        %6934 = vmatpush.bf16.msra.mxu0 %v3941
        %6935 = vmatpush.bf16.msra.mxu0 %v3933
        %6936 = vmatpush.bf16.msra.mxu0 %v3925
        %6937 = vmatpush.bf16.msra.mxu0 %v3917
        %6938 = vmatpush.bf16.msra.mxu0 %v3909
        %6939 = vmatmul.bf16.gmra.mxu0 %v2943
        %v6940 = vpop.f32.mrf.mxu0
        %v6941 = vadd.f32 %v6852, %v6940
        %v6942 = vpop.f32.mrf.mxu0
        %v6943 = vadd.f32 %v6854, %v6942
        %6944 = vmatmul.bf16.gmra.mxu0 %v2947
        %v6945 = vpop.f32.mrf.mxu0
        %v6946 = vadd.f32 %v6857, %v6945
        %v6947 = vpop.f32.mrf.mxu0
        %v6948 = vadd.f32 %v6859, %v6947
        %6949 = vmatmul.bf16.gmra.mxu0 %v2951
        %v6950 = vpop.f32.mrf.mxu0
        %v6951 = vadd.f32 %v6862, %v6950
        %v6952 = vpop.f32.mrf.mxu0
        %v6953 = vadd.f32 %v6864, %v6952
        %6954 = vmatmul.bf16.gmra.mxu0 %v2955
        %v6955 = vpop.f32.mrf.mxu0
        %v6956 = vadd.f32 %v6867, %v6955
        %v6957 = vpop.f32.mrf.mxu0
        %v6958 = vadd.f32 %v6869, %v6957
        %6959 = vmatmul.bf16.gmra.mxu0 %v2959
        %v6960 = vpop.f32.mrf.mxu0
        %v6961 = vadd.f32 %v6872, %v6960
        %v6962 = vpop.f32.mrf.mxu0
        %v6963 = vadd.f32 %v6874, %v6962
        %6964 = vmatmul.bf16.gmra.mxu0 %v2963
        %v6965 = vpop.f32.mrf.mxu0
        %v6966 = vadd.f32 %v6877, %v6965
        %v6967 = vpop.f32.mrf.mxu0
        %v6968 = vadd.f32 %v6879, %v6967
        %6969 = vmatmul.bf16.gmra.mxu0 %v2967
        %v6970 = vpop.f32.mrf.mxu0
        %v6971 = vadd.f32 %v6882, %v6970
        %v6972 = vpop.f32.mrf.mxu0
        %v6973 = vadd.f32 %v6884, %v6972
        %6974 = vmatmul.bf16.gmra.mxu0 %v2971
        %v6975 = vpop.f32.mrf.mxu0
        %v6976 = vadd.f32 %v6887, %v6975
        %v6977 = vpop.f32.mrf.mxu0
        %v6978 = vadd.f32 %v6889, %v6977
        %6979 = vmatmul.bf16.gmra.mxu0 %v2975
        %v6980 = vpop.f32.mrf.mxu0
        %v6981 = vadd.f32 %v6892, %v6980
        %v6982 = vpop.f32.mrf.mxu0
        %v6983 = vadd.f32 %v6894, %v6982
        %6984 = vmatmul.bf16.gmra.mxu0 %v2979
        %v6985 = vpop.f32.mrf.mxu0
        %v6986 = vadd.f32 %v6897, %v6985
        %v6987 = vpop.f32.mrf.mxu0
        %v6988 = vadd.f32 %v6899, %v6987
        %6989 = vmatmul.bf16.gmra.mxu0 %v2983
        %v6990 = vpop.f32.mrf.mxu0
        %v6991 = vadd.f32 %v6902, %v6990
        %v6992 = vpop.f32.mrf.mxu0
        %v6993 = vadd.f32 %v6904, %v6992
        %6994 = vmatmul.bf16.gmra.mxu0 %v2987
        %v6995 = vpop.f32.mrf.mxu0
        %v6996 = vadd.f32 %v6907, %v6995
        %v6997 = vpop.f32.mrf.mxu0
        %v6998 = vadd.f32 %v6909, %v6997
        %6999 = vmatmul.bf16.gmra.mxu0 %v2991
        %v7000 = vpop.f32.mrf.mxu0
        %v7001 = vadd.f32 %v6912, %v7000
        %v7002 = vpop.f32.mrf.mxu0
        %v7003 = vadd.f32 %v6914, %v7002
        %7004 = vmatmul.bf16.gmra.mxu0 %v2995
        %v7005 = vpop.f32.mrf.mxu0
        %v7006 = vadd.f32 %v6917, %v7005
        %v7007 = vpop.f32.mrf.mxu0
        %v7008 = vadd.f32 %v6919, %v7007
        %7009 = vmatmul.bf16.gmra.mxu0 %v2999
        %v7010 = vpop.f32.mrf.mxu0
        %v7011 = vadd.f32 %v6922, %v7010
        %v7012 = vpop.f32.mrf.mxu0
        %v7013 = vadd.f32 %v6924, %v7012
        %7014 = vmatmul.bf16.gmra.mxu0 %v3003
        %v7015 = vpop.f32.mrf.mxu0
        %v7016 = vadd.f32 %v6927, %v7015
        %v7017 = vpop.f32.mrf.mxu0
        %v7018 = vadd.f32 %v6929, %v7017
        %7019 = vdwg.mxu0
        %7020 = vmatpush.bf16.msra.mxu0 %v4029
        %7021 = vmatpush.bf16.msra.mxu0 %v4021
        %7022 = vmatpush.bf16.msra.mxu0 %v4013
        %7023 = vmatpush.bf16.msra.mxu0 %v4005
        %7024 = vmatpush.bf16.msra.mxu0 %v3997
        %7025 = vmatpush.bf16.msra.mxu0 %v3989
        %7026 = vmatpush.bf16.msra.mxu0 %v3981
        %7027 = vmatpush.bf16.msra.mxu0 %v3973
        %7028 = vmatmul.bf16.gmra.mxu0 %v2944
        %v7029 = vpop.f32.mrf.mxu0
        %v7030 = vadd.f32 %v6941, %v7029
        %v7031 = vpop.f32.mrf.mxu0
        %v7032 = vadd.f32 %v6943, %v7031
        %7033 = vmatmul.bf16.gmra.mxu0 %v2948
        %v7034 = vpop.f32.mrf.mxu0
        %v7035 = vadd.f32 %v6946, %v7034
        %v7036 = vpop.f32.mrf.mxu0
        %v7037 = vadd.f32 %v6948, %v7036
        %7038 = vmatmul.bf16.gmra.mxu0 %v2952
        %v7039 = vpop.f32.mrf.mxu0
        %v7040 = vadd.f32 %v6951, %v7039
        %v7041 = vpop.f32.mrf.mxu0
        %v7042 = vadd.f32 %v6953, %v7041
        %7043 = vmatmul.bf16.gmra.mxu0 %v2956
        %v7044 = vpop.f32.mrf.mxu0
        %v7045 = vadd.f32 %v6956, %v7044
        %v7046 = vpop.f32.mrf.mxu0
        %v7047 = vadd.f32 %v6958, %v7046
        %7048 = vmatmul.bf16.gmra.mxu0 %v2960
        %v7049 = vpop.f32.mrf.mxu0
        %v7050 = vadd.f32 %v6961, %v7049
        %v7051 = vpop.f32.mrf.mxu0
        %v7052 = vadd.f32 %v6963, %v7051
        %7053 = vmatmul.bf16.gmra.mxu0 %v2964
        %v7054 = vpop.f32.mrf.mxu0
        %v7055 = vadd.f32 %v6966, %v7054
        %v7056 = vpop.f32.mrf.mxu0
        %v7057 = vadd.f32 %v6968, %v7056
        %7058 = vmatmul.bf16.gmra.mxu0 %v2968
        %v7059 = vpop.f32.mrf.mxu0
        %v7060 = vadd.f32 %v6971, %v7059
        %v7061 = vpop.f32.mrf.mxu0
        %v7062 = vadd.f32 %v6973, %v7061
        %7063 = vmatmul.bf16.gmra.mxu0 %v2972
        %v7064 = vpop.f32.mrf.mxu0
        %v7065 = vadd.f32 %v6976, %v7064
        %v7066 = vpop.f32.mrf.mxu0
        %v7067 = vadd.f32 %v6978, %v7066
        %7068 = vmatmul.bf16.gmra.mxu0 %v2976
        %v7069 = vpop.f32.mrf.mxu0
        %v7070 = vadd.f32 %v6981, %v7069
        %v7071 = vpop.f32.mrf.mxu0
        %v7072 = vadd.f32 %v6983, %v7071
        %7073 = vmatmul.bf16.gmra.mxu0 %v2980
        %v7074 = vpop.f32.mrf.mxu0
        %v7075 = vadd.f32 %v6986, %v7074
        %v7076 = vpop.f32.mrf.mxu0
        %v7077 = vadd.f32 %v6988, %v7076
        %7078 = vmatmul.bf16.gmra.mxu0 %v2984
        %v7079 = vpop.f32.mrf.mxu0
        %v7080 = vadd.f32 %v6991, %v7079
        %v7081 = vpop.f32.mrf.mxu0
        %v7082 = vadd.f32 %v6993, %v7081
        %7083 = vmatmul.bf16.gmra.mxu0 %v2988
        %v7084 = vpop.f32.mrf.mxu0
        %v7085 = vadd.f32 %v6996, %v7084
        %v7086 = vpop.f32.mrf.mxu0
        %v7087 = vadd.f32 %v6998, %v7086
        %7088 = vmatmul.bf16.gmra.mxu0 %v2992
        %v7089 = vpop.f32.mrf.mxu0
        %v7090 = vadd.f32 %v7001, %v7089
        %v7091 = vpop.f32.mrf.mxu0
        %v7092 = vadd.f32 %v7003, %v7091
        %7093 = vmatmul.bf16.gmra.mxu0 %v2996
        %v7094 = vpop.f32.mrf.mxu0
        %v7095 = vadd.f32 %v7006, %v7094
        %v7096 = vpop.f32.mrf.mxu0
        %v7097 = vadd.f32 %v7008, %v7096
        %7098 = vmatmul.bf16.gmra.mxu0 %v3000
        %v7099 = vpop.f32.mrf.mxu0
        %v7100 = vadd.f32 %v7011, %v7099
        %v7101 = vpop.f32.mrf.mxu0
        %v7102 = vadd.f32 %v7013, %v7101
        %7103 = vmatmul.bf16.gmra.mxu0 %v3004
        %v7104 = vpop.f32.mrf.mxu0
        %v7105 = vadd.f32 %v7016, %v7104
        %v7106 = vpop.f32.mrf.mxu0
        %v7107 = vadd.f32 %v7018, %v7106
        %7108 = vdwg.mxu0
        %7109 = vmatpush.bf16.msra.mxu0 %v4093
        %7110 = vmatpush.bf16.msra.mxu0 %v4085
        %7111 = vmatpush.bf16.msra.mxu0 %v4077
        %7112 = vmatpush.bf16.msra.mxu0 %v4069
        %7113 = vmatpush.bf16.msra.mxu0 %v4061
        %7114 = vmatpush.bf16.msra.mxu0 %v4053
        %7115 = vmatpush.bf16.msra.mxu0 %v4045
        %7116 = vmatpush.bf16.msra.mxu0 %v4037
        %7117 = vmatmul.bf16.gmra.mxu0 %v2945
        %v7118 = vpop.f32.mrf.mxu0
        %v7119 = vadd.f32 %v7030, %v7118
        %v7120 = vpop.f32.mrf.mxu0
        %v7121 = vadd.f32 %v7032, %v7120
        %7122 = vmatmul.bf16.gmra.mxu0 %v2949
        %v7123 = vpop.f32.mrf.mxu0
        %v7124 = vadd.f32 %v7035, %v7123
        %v7125 = vpop.f32.mrf.mxu0
        %v7126 = vadd.f32 %v7037, %v7125
        %7127 = vmatmul.bf16.gmra.mxu0 %v2953
        %v7128 = vpop.f32.mrf.mxu0
        %v7129 = vadd.f32 %v7040, %v7128
        %v7130 = vpop.f32.mrf.mxu0
        %v7131 = vadd.f32 %v7042, %v7130
        %7132 = vmatmul.bf16.gmra.mxu0 %v2957
        %v7133 = vpop.f32.mrf.mxu0
        %v7134 = vadd.f32 %v7045, %v7133
        %v7135 = vpop.f32.mrf.mxu0
        %v7136 = vadd.f32 %v7047, %v7135
        %7137 = vmatmul.bf16.gmra.mxu0 %v2961
        %v7138 = vpop.f32.mrf.mxu0
        %v7139 = vadd.f32 %v7050, %v7138
        %v7140 = vpop.f32.mrf.mxu0
        %v7141 = vadd.f32 %v7052, %v7140
        %7142 = vmatmul.bf16.gmra.mxu0 %v2965
        %v7143 = vpop.f32.mrf.mxu0
        %v7144 = vadd.f32 %v7055, %v7143
        %v7145 = vpop.f32.mrf.mxu0
        %v7146 = vadd.f32 %v7057, %v7145
        %7147 = vmatmul.bf16.gmra.mxu0 %v2969
        %v7148 = vpop.f32.mrf.mxu0
        %v7149 = vadd.f32 %v7060, %v7148
        %v7150 = vpop.f32.mrf.mxu0
        %v7151 = vadd.f32 %v7062, %v7150
        %7152 = vmatmul.bf16.gmra.mxu0 %v2973
        %v7153 = vpop.f32.mrf.mxu0
        %v7154 = vadd.f32 %v7065, %v7153
        %v7155 = vpop.f32.mrf.mxu0
        %v7156 = vadd.f32 %v7067, %v7155
        %7157 = vmatmul.bf16.gmra.mxu0 %v2977
        %v7158 = vpop.f32.mrf.mxu0
        %v7159 = vadd.f32 %v7070, %v7158
        %v7160 = vpop.f32.mrf.mxu0
        %v7161 = vadd.f32 %v7072, %v7160
        %7162 = vmatmul.bf16.gmra.mxu0 %v2981
        %v7163 = vpop.f32.mrf.mxu0
        %v7164 = vadd.f32 %v7075, %v7163
        %v7165 = vpop.f32.mrf.mxu0
        %v7166 = vadd.f32 %v7077, %v7165
        %7167 = vmatmul.bf16.gmra.mxu0 %v2985
        %v7168 = vpop.f32.mrf.mxu0
        %v7169 = vadd.f32 %v7080, %v7168
        %v7170 = vpop.f32.mrf.mxu0
        %v7171 = vadd.f32 %v7082, %v7170
        %7172 = vmatmul.bf16.gmra.mxu0 %v2989
        %v7173 = vpop.f32.mrf.mxu0
        %v7174 = vadd.f32 %v7085, %v7173
        %v7175 = vpop.f32.mrf.mxu0
        %v7176 = vadd.f32 %v7087, %v7175
        %7177 = vmatmul.bf16.gmra.mxu0 %v2993
        %v7178 = vpop.f32.mrf.mxu0
        %v7179 = vadd.f32 %v7090, %v7178
        %v7180 = vpop.f32.mrf.mxu0
        %v7181 = vadd.f32 %v7092, %v7180
        %7182 = vmatmul.bf16.gmra.mxu0 %v2997
        %v7183 = vpop.f32.mrf.mxu0
        %v7184 = vadd.f32 %v7095, %v7183
        %v7185 = vpop.f32.mrf.mxu0
        %v7186 = vadd.f32 %v7097, %v7185
        %7187 = vmatmul.bf16.gmra.mxu0 %v3001
        %v7188 = vpop.f32.mrf.mxu0
        %v7189 = vadd.f32 %v7100, %v7188
        %v7190 = vpop.f32.mrf.mxu0
        %v7191 = vadd.f32 %v7102, %v7190
        %7192 = vmatmul.bf16.gmra.mxu0 %v3005
        %v7193 = vpop.f32.mrf.mxu0
        %v7194 = vadd.f32 %v7105, %v7193
        %v7195 = vpop.f32.mrf.mxu0
        %v7196 = vadd.f32 %v7107, %v7195
        %7197 = vdwg.mxu0
        %v7198 = vadd.s32 %v1058, 512
        %v7199 = vadd.s32 %v1058, 640
        %v7200 = vadd.s32 %v1058, 768
        %v7201 = vadd.s32 %v1058, 896
        %s7202 = sxor.u32 %s383, 1540483477
        %v7203 = vstv %s7202
        %v7204 = vadd.s32 %v7203, %v1063
        %v7205 = vadd.s32 %v7203, %v1064
        %v7206 = vadd.s32 %v7203, %v1065
        %v7207 = vadd.s32 %v7203, %v1066
        %v7208 = vadd.s32 %v7203, %v1067
        %v7209 = vadd.s32 %v7203, %v1068
        %v7210 = vadd.s32 %v7203, %v1069
        %v7211 = vadd.s32 %v7203, %v1070
        %v7212 = vadd.s32 %v7203, %v1071
        %v7213 = vadd.s32 %v7203, %v1072
        %v7214 = vadd.s32 %v7203, %v1073
        %v7215 = vadd.s32 %v7203, %v1074
        %v7216 = vadd.s32 %v7203, %v1075
        %v7217 = vadd.s32 %v7203, %v1076
        %v7218 = vadd.s32 %v7203, %v1077
        %v7219 = vadd.s32 %v7203, %v1078
        %v7220 = vadd.s32 %v7203, %v1079
        %v7221 = vadd.s32 %v7203, %v1080
        %v7222 = vadd.s32 %v7203, %v1081
        %v7223 = vadd.s32 %v7203, %v1082
        %v7224 = vadd.s32 %v7203, %v1083
        %v7225 = vadd.s32 %v7203, %v1084
        %v7226 = vadd.s32 %v7203, %v1085
        %v7227 = vadd.s32 %v7203, %v1086
        %v7228 = vadd.s32 %v7203, %v1087
        %v7229 = vadd.s32 %v7203, %v1088
        %v7230 = vadd.s32 %v7203, %v1089
        %v7231 = vadd.s32 %v7203, %v1090
        %v7232 = vadd.s32 %v7203, %v1091
        %v7233 = vadd.s32 %v7203, %v1092
        %v7234 = vadd.s32 %v7203, %v1093
        %v7235 = vadd.s32 %v7203, %v1094
        %v7236 = vmul.u32 %v7198, 2246822519
        %v7237 = vmul.u32 %v7199, 2246822519
        %v7238 = vmul.u32 %v7200, 2246822519
        %v7239 = vmul.u32 %v7201, 2246822519
        %v7240 = vadd.s32 %v7204, %v1128
        %v7241 = vadd.s32 %v7204, %v1129
        %v7242 = vadd.s32 %v7204, %v1130
        %v7243 = vadd.s32 %v7204, %v1131
        %v7244 = vadd.s32 %v7204, %v7236
        %v7245 = vadd.s32 %v7204, %v7237
        %v7246 = vadd.s32 %v7204, %v7238
        %v7247 = vadd.s32 %v7204, %v7239
        %v7248 = vadd.s32 %v7205, %v1128
        %v7249 = vadd.s32 %v7205, %v1129
        %v7250 = vadd.s32 %v7205, %v1130
        %v7251 = vadd.s32 %v7205, %v1131
        %v7252 = vadd.s32 %v7205, %v7236
        %v7253 = vadd.s32 %v7205, %v7237
        %v7254 = vadd.s32 %v7205, %v7238
        %v7255 = vadd.s32 %v7205, %v7239
        %v7256 = vadd.s32 %v7206, %v1128
        %v7257 = vadd.s32 %v7206, %v1129
        %v7258 = vadd.s32 %v7206, %v1130
        %v7259 = vadd.s32 %v7206, %v1131
        %v7260 = vadd.s32 %v7206, %v7236
        %v7261 = vadd.s32 %v7206, %v7237
        %v7262 = vadd.s32 %v7206, %v7238
        %v7263 = vadd.s32 %v7206, %v7239
        %v7264 = vadd.s32 %v7207, %v1128
        %v7265 = vadd.s32 %v7207, %v1129
        %v7266 = vadd.s32 %v7207, %v1130
        %v7267 = vadd.s32 %v7207, %v1131
        %v7268 = vadd.s32 %v7207, %v7236
        %v7269 = vadd.s32 %v7207, %v7237
        %v7270 = vadd.s32 %v7207, %v7238
        %v7271 = vadd.s32 %v7207, %v7239
        %v7272 = vadd.s32 %v7208, %v1128
        %v7273 = vadd.s32 %v7208, %v1129
        %v7274 = vadd.s32 %v7208, %v1130
        %v7275 = vadd.s32 %v7208, %v1131
        %v7276 = vadd.s32 %v7208, %v7236
        %v7277 = vadd.s32 %v7208, %v7237
        %v7278 = vadd.s32 %v7208, %v7238
        %v7279 = vadd.s32 %v7208, %v7239
        %v7280 = vadd.s32 %v7209, %v1128
        %v7281 = vadd.s32 %v7209, %v1129
        %v7282 = vadd.s32 %v7209, %v1130
        %v7283 = vadd.s32 %v7209, %v1131
        %v7284 = vadd.s32 %v7209, %v7236
        %v7285 = vadd.s32 %v7209, %v7237
        %v7286 = vadd.s32 %v7209, %v7238
        %v7287 = vadd.s32 %v7209, %v7239
        %v7288 = vadd.s32 %v7210, %v1128
        %v7289 = vadd.s32 %v7210, %v1129
        %v7290 = vadd.s32 %v7210, %v1130
        %v7291 = vadd.s32 %v7210, %v1131
        %v7292 = vadd.s32 %v7210, %v7236
        %v7293 = vadd.s32 %v7210, %v7237
        %v7294 = vadd.s32 %v7210, %v7238
        %v7295 = vadd.s32 %v7210, %v7239
        %v7296 = vadd.s32 %v7211, %v1128
        %v7297 = vadd.s32 %v7211, %v1129
        %v7298 = vadd.s32 %v7211, %v1130
        %v7299 = vadd.s32 %v7211, %v1131
        %v7300 = vadd.s32 %v7211, %v7236
        %v7301 = vadd.s32 %v7211, %v7237
        %v7302 = vadd.s32 %v7211, %v7238
        %v7303 = vadd.s32 %v7211, %v7239
        %v7304 = vadd.s32 %v7212, %v1128
        %v7305 = vadd.s32 %v7212, %v1129
        %v7306 = vadd.s32 %v7212, %v1130
        %v7307 = vadd.s32 %v7212, %v1131
        %v7308 = vadd.s32 %v7212, %v7236
        %v7309 = vadd.s32 %v7212, %v7237
        %v7310 = vadd.s32 %v7212, %v7238
        %v7311 = vadd.s32 %v7212, %v7239
        %v7312 = vadd.s32 %v7213, %v1128
        %v7313 = vadd.s32 %v7213, %v1129
        %v7314 = vadd.s32 %v7213, %v1130
        %v7315 = vadd.s32 %v7213, %v1131
        %v7316 = vadd.s32 %v7213, %v7236
        %v7317 = vadd.s32 %v7213, %v7237
        %v7318 = vadd.s32 %v7213, %v7238
        %v7319 = vadd.s32 %v7213, %v7239
        %v7320 = vadd.s32 %v7214, %v1128
        %v7321 = vadd.s32 %v7214, %v1129
        %v7322 = vadd.s32 %v7214, %v1130
        %v7323 = vadd.s32 %v7214, %v1131
        %v7324 = vadd.s32 %v7214, %v7236
        %v7325 = vadd.s32 %v7214, %v7237
        %v7326 = vadd.s32 %v7214, %v7238
        %v7327 = vadd.s32 %v7214, %v7239
        %v7328 = vadd.s32 %v7215, %v1128
        %v7329 = vadd.s32 %v7215, %v1129
        %v7330 = vadd.s32 %v7215, %v1130
        %v7331 = vadd.s32 %v7215, %v1131
        %v7332 = vadd.s32 %v7215, %v7236
        %v7333 = vadd.s32 %v7215, %v7237
        %v7334 = vadd.s32 %v7215, %v7238
        %v7335 = vadd.s32 %v7215, %v7239
        %v7336 = vadd.s32 %v7216, %v1128
        %v7337 = vadd.s32 %v7216, %v1129
        %v7338 = vadd.s32 %v7216, %v1130
        %v7339 = vadd.s32 %v7216, %v1131
        %v7340 = vadd.s32 %v7216, %v7236
        %v7341 = vadd.s32 %v7216, %v7237
        %v7342 = vadd.s32 %v7216, %v7238
        %v7343 = vadd.s32 %v7216, %v7239
        %v7344 = vadd.s32 %v7217, %v1128
        %v7345 = vadd.s32 %v7217, %v1129
        %v7346 = vadd.s32 %v7217, %v1130
        %v7347 = vadd.s32 %v7217, %v1131
        %v7348 = vadd.s32 %v7217, %v7236
        %v7349 = vadd.s32 %v7217, %v7237
        %v7350 = vadd.s32 %v7217, %v7238
        %v7351 = vadd.s32 %v7217, %v7239
        %v7352 = vadd.s32 %v7218, %v1128
        %v7353 = vadd.s32 %v7218, %v1129
        %v7354 = vadd.s32 %v7218, %v1130
        %v7355 = vadd.s32 %v7218, %v1131
        %v7356 = vadd.s32 %v7218, %v7236
        %v7357 = vadd.s32 %v7218, %v7237
        %v7358 = vadd.s32 %v7218, %v7238
        %v7359 = vadd.s32 %v7218, %v7239
        %v7360 = vadd.s32 %v7219, %v1128
        %v7361 = vadd.s32 %v7219, %v1129
        %v7362 = vadd.s32 %v7219, %v1130
        %v7363 = vadd.s32 %v7219, %v1131
        %v7364 = vadd.s32 %v7219, %v7236
        %v7365 = vadd.s32 %v7219, %v7237
        %v7366 = vadd.s32 %v7219, %v7238
        %v7367 = vadd.s32 %v7219, %v7239
        %v7368 = vadd.s32 %v7220, %v1128
        %v7369 = vadd.s32 %v7220, %v1129
        %v7370 = vadd.s32 %v7220, %v1130
        %v7371 = vadd.s32 %v7220, %v1131
        %v7372 = vadd.s32 %v7220, %v7236
        %v7373 = vadd.s32 %v7220, %v7237
        %v7374 = vadd.s32 %v7220, %v7238
        %v7375 = vadd.s32 %v7220, %v7239
        %v7376 = vadd.s32 %v7221, %v1128
        %v7377 = vadd.s32 %v7221, %v1129
        %v7378 = vadd.s32 %v7221, %v1130
        %v7379 = vadd.s32 %v7221, %v1131
        %v7380 = vadd.s32 %v7221, %v7236
        %v7381 = vadd.s32 %v7221, %v7237
        %v7382 = vadd.s32 %v7221, %v7238
        %v7383 = vadd.s32 %v7221, %v7239
        %v7384 = vadd.s32 %v7222, %v1128
        %v7385 = vadd.s32 %v7222, %v1129
        %v7386 = vadd.s32 %v7222, %v1130
        %v7387 = vadd.s32 %v7222, %v1131
        %v7388 = vadd.s32 %v7222, %v7236
        %v7389 = vadd.s32 %v7222, %v7237
        %v7390 = vadd.s32 %v7222, %v7238
        %v7391 = vadd.s32 %v7222, %v7239
        %v7392 = vadd.s32 %v7223, %v1128
        %v7393 = vadd.s32 %v7223, %v1129
        %v7394 = vadd.s32 %v7223, %v1130
        %v7395 = vadd.s32 %v7223, %v1131
        %v7396 = vadd.s32 %v7223, %v7236
        %v7397 = vadd.s32 %v7223, %v7237
        %v7398 = vadd.s32 %v7223, %v7238
        %v7399 = vadd.s32 %v7223, %v7239
        %v7400 = vadd.s32 %v7224, %v1128
        %v7401 = vadd.s32 %v7224, %v1129
        %v7402 = vadd.s32 %v7224, %v1130
        %v7403 = vadd.s32 %v7224, %v1131
        %v7404 = vadd.s32 %v7224, %v7236
        %v7405 = vadd.s32 %v7224, %v7237
        %v7406 = vadd.s32 %v7224, %v7238
        %v7407 = vadd.s32 %v7224, %v7239
        %v7408 = vadd.s32 %v7225, %v1128
        %v7409 = vadd.s32 %v7225, %v1129
        %v7410 = vadd.s32 %v7225, %v1130
        %v7411 = vadd.s32 %v7225, %v1131
        %v7412 = vadd.s32 %v7225, %v7236
        %v7413 = vadd.s32 %v7225, %v7237
        %v7414 = vadd.s32 %v7225, %v7238
        %v7415 = vadd.s32 %v7225, %v7239
        %v7416 = vadd.s32 %v7226, %v1128
        %v7417 = vadd.s32 %v7226, %v1129
        %v7418 = vadd.s32 %v7226, %v1130
        %v7419 = vadd.s32 %v7226, %v1131
        %v7420 = vadd.s32 %v7226, %v7236
        %v7421 = vadd.s32 %v7226, %v7237
        %v7422 = vadd.s32 %v7226, %v7238
        %v7423 = vadd.s32 %v7226, %v7239
        %v7424 = vadd.s32 %v7227, %v1128
        %v7425 = vadd.s32 %v7227, %v1129
        %v7426 = vadd.s32 %v7227, %v1130
        %v7427 = vadd.s32 %v7227, %v1131
        %v7428 = vadd.s32 %v7227, %v7236
        %v7429 = vadd.s32 %v7227, %v7237
        %v7430 = vadd.s32 %v7227, %v7238
        %v7431 = vadd.s32 %v7227, %v7239
        %v7432 = vadd.s32 %v7228, %v1128
        %v7433 = vadd.s32 %v7228, %v1129
        %v7434 = vadd.s32 %v7228, %v1130
        %v7435 = vadd.s32 %v7228, %v1131
        %v7436 = vadd.s32 %v7228, %v7236
        %v7437 = vadd.s32 %v7228, %v7237
        %v7438 = vadd.s32 %v7228, %v7238
        %v7439 = vadd.s32 %v7228, %v7239
        %v7440 = vadd.s32 %v7229, %v1128
        %v7441 = vadd.s32 %v7229, %v1129
        %v7442 = vadd.s32 %v7229, %v1130
        %v7443 = vadd.s32 %v7229, %v1131
        %v7444 = vadd.s32 %v7229, %v7236
        %v7445 = vadd.s32 %v7229, %v7237
        %v7446 = vadd.s32 %v7229, %v7238
        %v7447 = vadd.s32 %v7229, %v7239
        %v7448 = vadd.s32 %v7230, %v1128
        %v7449 = vadd.s32 %v7230, %v1129
        %v7450 = vadd.s32 %v7230, %v1130
        %v7451 = vadd.s32 %v7230, %v1131
        %v7452 = vadd.s32 %v7230, %v7236
        %v7453 = vadd.s32 %v7230, %v7237
        %v7454 = vadd.s32 %v7230, %v7238
        %v7455 = vadd.s32 %v7230, %v7239
        %v7456 = vadd.s32 %v7231, %v1128
        %v7457 = vadd.s32 %v7231, %v1129
        %v7458 = vadd.s32 %v7231, %v1130
        %v7459 = vadd.s32 %v7231, %v1131
        %v7460 = vadd.s32 %v7231, %v7236
        %v7461 = vadd.s32 %v7231, %v7237
        %v7462 = vadd.s32 %v7231, %v7238
        %v7463 = vadd.s32 %v7231, %v7239
        %v7464 = vadd.s32 %v7232, %v1128
        %v7465 = vadd.s32 %v7232, %v1129
        %v7466 = vadd.s32 %v7232, %v1130
        %v7467 = vadd.s32 %v7232, %v1131
        %v7468 = vadd.s32 %v7232, %v7236
        %v7469 = vadd.s32 %v7232, %v7237
        %v7470 = vadd.s32 %v7232, %v7238
        %v7471 = vadd.s32 %v7232, %v7239
        %v7472 = vadd.s32 %v7233, %v1128
        %v7473 = vadd.s32 %v7233, %v1129
        %v7474 = vadd.s32 %v7233, %v1130
        %v7475 = vadd.s32 %v7233, %v1131
        %v7476 = vadd.s32 %v7233, %v7236
        %v7477 = vadd.s32 %v7233, %v7237
        %v7478 = vadd.s32 %v7233, %v7238
        %v7479 = vadd.s32 %v7233, %v7239
        %v7480 = vadd.s32 %v7234, %v1128
        %v7481 = vadd.s32 %v7234, %v1129
        %v7482 = vadd.s32 %v7234, %v1130
        %v7483 = vadd.s32 %v7234, %v1131
        %v7484 = vadd.s32 %v7234, %v7236
        %v7485 = vadd.s32 %v7234, %v7237
        %v7486 = vadd.s32 %v7234, %v7238
        %v7487 = vadd.s32 %v7234, %v7239
        %v7488 = vadd.s32 %v7235, %v1128
        %v7489 = vadd.s32 %v7235, %v1129
        %v7490 = vadd.s32 %v7235, %v1130
        %v7491 = vadd.s32 %v7235, %v1131
        %v7492 = vadd.s32 %v7235, %v7236
        %v7493 = vadd.s32 %v7235, %v7237
        %v7494 = vadd.s32 %v7235, %v7238
        %v7495 = vadd.s32 %v7235, %v7239
        %v7496 = vshrl.u32 %v7240, 16
        %v7497 = vshrl.u32 %v7241, 16
        %v7498 = vshrl.u32 %v7242, 16
        %v7499 = vshrl.u32 %v7243, 16
        %v7500 = vshrl.u32 %v7244, 16
        %v7501 = vshrl.u32 %v7245, 16
        %v7502 = vshrl.u32 %v7246, 16
        %v7503 = vshrl.u32 %v7247, 16
        %v7504 = vshrl.u32 %v7248, 16
        %v7505 = vshrl.u32 %v7249, 16
        %v7506 = vshrl.u32 %v7250, 16
        %v7507 = vshrl.u32 %v7251, 16
        %v7508 = vshrl.u32 %v7252, 16
        %v7509 = vshrl.u32 %v7253, 16
        %v7510 = vshrl.u32 %v7254, 16
        %v7511 = vshrl.u32 %v7255, 16
        %v7512 = vshrl.u32 %v7256, 16
        %v7513 = vshrl.u32 %v7257, 16
        %v7514 = vshrl.u32 %v7258, 16
        %v7515 = vshrl.u32 %v7259, 16
        %v7516 = vshrl.u32 %v7260, 16
        %v7517 = vshrl.u32 %v7261, 16
        %v7518 = vshrl.u32 %v7262, 16
        %v7519 = vshrl.u32 %v7263, 16
        %v7520 = vshrl.u32 %v7264, 16
        %v7521 = vshrl.u32 %v7265, 16
        %v7522 = vshrl.u32 %v7266, 16
        %v7523 = vshrl.u32 %v7267, 16
        %v7524 = vshrl.u32 %v7268, 16
        %v7525 = vshrl.u32 %v7269, 16
        %v7526 = vshrl.u32 %v7270, 16
        %v7527 = vshrl.u32 %v7271, 16
        %v7528 = vshrl.u32 %v7272, 16
        %v7529 = vshrl.u32 %v7273, 16
        %v7530 = vshrl.u32 %v7274, 16
        %v7531 = vshrl.u32 %v7275, 16
        %v7532 = vshrl.u32 %v7276, 16
        %v7533 = vshrl.u32 %v7277, 16
        %v7534 = vshrl.u32 %v7278, 16
        %v7535 = vshrl.u32 %v7279, 16
        %v7536 = vshrl.u32 %v7280, 16
        %v7537 = vshrl.u32 %v7281, 16
        %v7538 = vshrl.u32 %v7282, 16
        %v7539 = vshrl.u32 %v7283, 16
        %v7540 = vshrl.u32 %v7284, 16
        %v7541 = vshrl.u32 %v7285, 16
        %v7542 = vshrl.u32 %v7286, 16
        %v7543 = vshrl.u32 %v7287, 16
        %v7544 = vshrl.u32 %v7288, 16
        %v7545 = vshrl.u32 %v7289, 16
        %v7546 = vshrl.u32 %v7290, 16
        %v7547 = vshrl.u32 %v7291, 16
        %v7548 = vshrl.u32 %v7292, 16
        %v7549 = vshrl.u32 %v7293, 16
        %v7550 = vshrl.u32 %v7294, 16
        %v7551 = vshrl.u32 %v7295, 16
        %v7552 = vshrl.u32 %v7296, 16
        %v7553 = vshrl.u32 %v7297, 16
        %v7554 = vshrl.u32 %v7298, 16
        %v7555 = vshrl.u32 %v7299, 16
        %v7556 = vshrl.u32 %v7300, 16
        %v7557 = vshrl.u32 %v7301, 16
        %v7558 = vshrl.u32 %v7302, 16
        %v7559 = vshrl.u32 %v7303, 16
        %v7560 = vshrl.u32 %v7304, 16
        %v7561 = vshrl.u32 %v7305, 16
        %v7562 = vshrl.u32 %v7306, 16
        %v7563 = vshrl.u32 %v7307, 16
        %v7564 = vshrl.u32 %v7308, 16
        %v7565 = vshrl.u32 %v7309, 16
        %v7566 = vshrl.u32 %v7310, 16
        %v7567 = vshrl.u32 %v7311, 16
        %v7568 = vshrl.u32 %v7312, 16
        %v7569 = vshrl.u32 %v7313, 16
        %v7570 = vshrl.u32 %v7314, 16
        %v7571 = vshrl.u32 %v7315, 16
        %v7572 = vshrl.u32 %v7316, 16
        %v7573 = vshrl.u32 %v7317, 16
        %v7574 = vshrl.u32 %v7318, 16
        %v7575 = vshrl.u32 %v7319, 16
        %v7576 = vshrl.u32 %v7320, 16
        %v7577 = vshrl.u32 %v7321, 16
        %v7578 = vshrl.u32 %v7322, 16
        %v7579 = vshrl.u32 %v7323, 16
        %v7580 = vshrl.u32 %v7324, 16
        %v7581 = vshrl.u32 %v7325, 16
        %v7582 = vshrl.u32 %v7326, 16
        %v7583 = vshrl.u32 %v7327, 16
        %v7584 = vshrl.u32 %v7328, 16
        %v7585 = vshrl.u32 %v7329, 16
        %v7586 = vshrl.u32 %v7330, 16
        %v7587 = vshrl.u32 %v7331, 16
        %v7588 = vshrl.u32 %v7332, 16
        %v7589 = vshrl.u32 %v7333, 16
        %v7590 = vshrl.u32 %v7334, 16
        %v7591 = vshrl.u32 %v7335, 16
        %v7592 = vshrl.u32 %v7336, 16
        %v7593 = vshrl.u32 %v7337, 16
        %v7594 = vshrl.u32 %v7338, 16
        %v7595 = vshrl.u32 %v7339, 16
        %v7596 = vshrl.u32 %v7340, 16
        %v7597 = vshrl.u32 %v7341, 16
        %v7598 = vshrl.u32 %v7342, 16
        %v7599 = vshrl.u32 %v7343, 16
        %v7600 = vshrl.u32 %v7344, 16
        %v7601 = vshrl.u32 %v7345, 16
        %v7602 = vshrl.u32 %v7346, 16
        %v7603 = vshrl.u32 %v7347, 16
        %v7604 = vshrl.u32 %v7348, 16
        %v7605 = vshrl.u32 %v7349, 16
        %v7606 = vshrl.u32 %v7350, 16
        %v7607 = vshrl.u32 %v7351, 16
        %v7608 = vshrl.u32 %v7352, 16
        %v7609 = vshrl.u32 %v7353, 16
        %v7610 = vshrl.u32 %v7354, 16
        %v7611 = vshrl.u32 %v7355, 16
        %v7612 = vshrl.u32 %v7356, 16
        %v7613 = vshrl.u32 %v7357, 16
        %v7614 = vshrl.u32 %v7358, 16
        %v7615 = vshrl.u32 %v7359, 16
        %v7616 = vshrl.u32 %v7360, 16
        %v7617 = vshrl.u32 %v7361, 16
        %v7618 = vshrl.u32 %v7362, 16
        %v7619 = vshrl.u32 %v7363, 16
        %v7620 = vshrl.u32 %v7364, 16
        %v7621 = vshrl.u32 %v7365, 16
        %v7622 = vshrl.u32 %v7366, 16
        %v7623 = vshrl.u32 %v7367, 16
        %v7624 = vshrl.u32 %v7368, 16
        %v7625 = vshrl.u32 %v7369, 16
        %v7626 = vshrl.u32 %v7370, 16
        %v7627 = vshrl.u32 %v7371, 16
        %v7628 = vshrl.u32 %v7372, 16
        %v7629 = vshrl.u32 %v7373, 16
        %v7630 = vshrl.u32 %v7374, 16
        %v7631 = vshrl.u32 %v7375, 16
        %v7632 = vshrl.u32 %v7376, 16
        %v7633 = vshrl.u32 %v7377, 16
        %v7634 = vshrl.u32 %v7378, 16
        %v7635 = vshrl.u32 %v7379, 16
        %v7636 = vshrl.u32 %v7380, 16
        %v7637 = vshrl.u32 %v7381, 16
        %v7638 = vshrl.u32 %v7382, 16
        %v7639 = vshrl.u32 %v7383, 16
        %v7640 = vshrl.u32 %v7384, 16
        %v7641 = vshrl.u32 %v7385, 16
        %v7642 = vshrl.u32 %v7386, 16
        %v7643 = vshrl.u32 %v7387, 16
        %v7644 = vshrl.u32 %v7388, 16
        %v7645 = vshrl.u32 %v7389, 16
        %v7646 = vshrl.u32 %v7390, 16
        %v7647 = vshrl.u32 %v7391, 16
        %v7648 = vshrl.u32 %v7392, 16
        %v7649 = vshrl.u32 %v7393, 16
        %v7650 = vshrl.u32 %v7394, 16
        %v7651 = vshrl.u32 %v7395, 16
        %v7652 = vshrl.u32 %v7396, 16
        %v7653 = vshrl.u32 %v7397, 16
        %v7654 = vshrl.u32 %v7398, 16
        %v7655 = vshrl.u32 %v7399, 16
        %v7656 = vshrl.u32 %v7400, 16
        %v7657 = vshrl.u32 %v7401, 16
        %v7658 = vshrl.u32 %v7402, 16
        %v7659 = vshrl.u32 %v7403, 16
        %v7660 = vshrl.u32 %v7404, 16
        %v7661 = vshrl.u32 %v7405, 16
        %v7662 = vshrl.u32 %v7406, 16
        %v7663 = vshrl.u32 %v7407, 16
        %v7664 = vshrl.u32 %v7408, 16
        %v7665 = vshrl.u32 %v7409, 16
        %v7666 = vshrl.u32 %v7410, 16
        %v7667 = vshrl.u32 %v7411, 16
        %v7668 = vshrl.u32 %v7412, 16
        %v7669 = vshrl.u32 %v7413, 16
        %v7670 = vshrl.u32 %v7414, 16
        %v7671 = vshrl.u32 %v7415, 16
        %v7672 = vshrl.u32 %v7416, 16
        %v7673 = vshrl.u32 %v7417, 16
        %v7674 = vshrl.u32 %v7418, 16
        %v7675 = vshrl.u32 %v7419, 16
        %v7676 = vshrl.u32 %v7420, 16
        %v7677 = vshrl.u32 %v7421, 16
        %v7678 = vshrl.u32 %v7422, 16
        %v7679 = vshrl.u32 %v7423, 16
        %v7680 = vshrl.u32 %v7424, 16
        %v7681 = vshrl.u32 %v7425, 16
        %v7682 = vshrl.u32 %v7426, 16
        %v7683 = vshrl.u32 %v7427, 16
        %v7684 = vshrl.u32 %v7428, 16
        %v7685 = vshrl.u32 %v7429, 16
        %v7686 = vshrl.u32 %v7430, 16
        %v7687 = vshrl.u32 %v7431, 16
        %v7688 = vshrl.u32 %v7432, 16
        %v7689 = vshrl.u32 %v7433, 16
        %v7690 = vshrl.u32 %v7434, 16
        %v7691 = vshrl.u32 %v7435, 16
        %v7692 = vshrl.u32 %v7436, 16
        %v7693 = vshrl.u32 %v7437, 16
        %v7694 = vshrl.u32 %v7438, 16
        %v7695 = vshrl.u32 %v7439, 16
        %v7696 = vshrl.u32 %v7440, 16
        %v7697 = vshrl.u32 %v7441, 16
        %v7698 = vshrl.u32 %v7442, 16
        %v7699 = vshrl.u32 %v7443, 16
        %v7700 = vshrl.u32 %v7444, 16
        %v7701 = vshrl.u32 %v7445, 16
        %v7702 = vshrl.u32 %v7446, 16
        %v7703 = vshrl.u32 %v7447, 16
        %v7704 = vshrl.u32 %v7448, 16
        %v7705 = vshrl.u32 %v7449, 16
        %v7706 = vshrl.u32 %v7450, 16
        %v7707 = vshrl.u32 %v7451, 16
        %v7708 = vshrl.u32 %v7452, 16
        %v7709 = vshrl.u32 %v7453, 16
        %v7710 = vshrl.u32 %v7454, 16
        %v7711 = vshrl.u32 %v7455, 16
        %v7712 = vshrl.u32 %v7456, 16
        %v7713 = vshrl.u32 %v7457, 16
        %v7714 = vshrl.u32 %v7458, 16
        %v7715 = vshrl.u32 %v7459, 16
        %v7716 = vshrl.u32 %v7460, 16
        %v7717 = vshrl.u32 %v7461, 16
        %v7718 = vshrl.u32 %v7462, 16
        %v7719 = vshrl.u32 %v7463, 16
        %v7720 = vshrl.u32 %v7464, 16
        %v7721 = vshrl.u32 %v7465, 16
        %v7722 = vshrl.u32 %v7466, 16
        %v7723 = vshrl.u32 %v7467, 16
        %v7724 = vshrl.u32 %v7468, 16
        %v7725 = vshrl.u32 %v7469, 16
        %v7726 = vshrl.u32 %v7470, 16
        %v7727 = vshrl.u32 %v7471, 16
        %v7728 = vshrl.u32 %v7472, 16
        %v7729 = vshrl.u32 %v7473, 16
        %v7730 = vshrl.u32 %v7474, 16
        %v7731 = vshrl.u32 %v7475, 16
        %v7732 = vshrl.u32 %v7476, 16
        %v7733 = vshrl.u32 %v7477, 16
        %v7734 = vshrl.u32 %v7478, 16
        %v7735 = vshrl.u32 %v7479, 16
        %v7736 = vshrl.u32 %v7480, 16
        %v7737 = vshrl.u32 %v7481, 16
        %v7738 = vshrl.u32 %v7482, 16
        %v7739 = vshrl.u32 %v7483, 16
        %v7740 = vshrl.u32 %v7484, 16
        %v7741 = vshrl.u32 %v7485, 16
        %v7742 = vshrl.u32 %v7486, 16
        %v7743 = vshrl.u32 %v7487, 16
        %v7744 = vshrl.u32 %v7488, 16
        %v7745 = vshrl.u32 %v7489, 16
        %v7746 = vshrl.u32 %v7490, 16
        %v7747 = vshrl.u32 %v7491, 16
        %v7748 = vshrl.u32 %v7492, 16
        %v7749 = vshrl.u32 %v7493, 16
        %v7750 = vshrl.u32 %v7494, 16
        %v7751 = vshrl.u32 %v7495, 16
        %v7752 = vxor.u32 %v7240, %v7496
        %v7753 = vxor.u32 %v7241, %v7497
        %v7754 = vxor.u32 %v7242, %v7498
        %v7755 = vxor.u32 %v7243, %v7499
        %v7756 = vxor.u32 %v7244, %v7500
        %v7757 = vxor.u32 %v7245, %v7501
        %v7758 = vxor.u32 %v7246, %v7502
        %v7759 = vxor.u32 %v7247, %v7503
        %v7760 = vxor.u32 %v7248, %v7504
        %v7761 = vxor.u32 %v7249, %v7505
        %v7762 = vxor.u32 %v7250, %v7506
        %v7763 = vxor.u32 %v7251, %v7507
        %v7764 = vxor.u32 %v7252, %v7508
        %v7765 = vxor.u32 %v7253, %v7509
        %v7766 = vxor.u32 %v7254, %v7510
        %v7767 = vxor.u32 %v7255, %v7511
        %v7768 = vxor.u32 %v7256, %v7512
        %v7769 = vxor.u32 %v7257, %v7513
        %v7770 = vxor.u32 %v7258, %v7514
        %v7771 = vxor.u32 %v7259, %v7515
        %v7772 = vxor.u32 %v7260, %v7516
        %v7773 = vxor.u32 %v7261, %v7517
        %v7774 = vxor.u32 %v7262, %v7518
        %v7775 = vxor.u32 %v7263, %v7519
        %v7776 = vxor.u32 %v7264, %v7520
        %v7777 = vxor.u32 %v7265, %v7521
        %v7778 = vxor.u32 %v7266, %v7522
        %v7779 = vxor.u32 %v7267, %v7523
        %v7780 = vxor.u32 %v7268, %v7524
        %v7781 = vxor.u32 %v7269, %v7525
        %v7782 = vxor.u32 %v7270, %v7526
        %v7783 = vxor.u32 %v7271, %v7527
        %v7784 = vxor.u32 %v7272, %v7528
        %v7785 = vxor.u32 %v7273, %v7529
        %v7786 = vxor.u32 %v7274, %v7530
        %v7787 = vxor.u32 %v7275, %v7531
        %v7788 = vxor.u32 %v7276, %v7532
        %v7789 = vxor.u32 %v7277, %v7533
        %v7790 = vxor.u32 %v7278, %v7534
        %v7791 = vxor.u32 %v7279, %v7535
        %v7792 = vxor.u32 %v7280, %v7536
        %v7793 = vxor.u32 %v7281, %v7537
        %v7794 = vxor.u32 %v7282, %v7538
        %v7795 = vxor.u32 %v7283, %v7539
        %v7796 = vxor.u32 %v7284, %v7540
        %v7797 = vxor.u32 %v7285, %v7541
        %v7798 = vxor.u32 %v7286, %v7542
        %v7799 = vxor.u32 %v7287, %v7543
        %v7800 = vxor.u32 %v7288, %v7544
        %v7801 = vxor.u32 %v7289, %v7545
        %v7802 = vxor.u32 %v7290, %v7546
        %v7803 = vxor.u32 %v7291, %v7547
        %v7804 = vxor.u32 %v7292, %v7548
        %v7805 = vxor.u32 %v7293, %v7549
        %v7806 = vxor.u32 %v7294, %v7550
        %v7807 = vxor.u32 %v7295, %v7551
        %v7808 = vxor.u32 %v7296, %v7552
        %v7809 = vxor.u32 %v7297, %v7553
        %v7810 = vxor.u32 %v7298, %v7554
        %v7811 = vxor.u32 %v7299, %v7555
        %v7812 = vxor.u32 %v7300, %v7556
        %v7813 = vxor.u32 %v7301, %v7557
        %v7814 = vxor.u32 %v7302, %v7558
        %v7815 = vxor.u32 %v7303, %v7559
        %v7816 = vxor.u32 %v7304, %v7560
        %v7817 = vxor.u32 %v7305, %v7561
        %v7818 = vxor.u32 %v7306, %v7562
        %v7819 = vxor.u32 %v7307, %v7563
        %v7820 = vxor.u32 %v7308, %v7564
        %v7821 = vxor.u32 %v7309, %v7565
        %v7822 = vxor.u32 %v7310, %v7566
        %v7823 = vxor.u32 %v7311, %v7567
        %v7824 = vxor.u32 %v7312, %v7568
        %v7825 = vxor.u32 %v7313, %v7569
        %v7826 = vxor.u32 %v7314, %v7570
        %v7827 = vxor.u32 %v7315, %v7571
        %v7828 = vxor.u32 %v7316, %v7572
        %v7829 = vxor.u32 %v7317, %v7573
        %v7830 = vxor.u32 %v7318, %v7574
        %v7831 = vxor.u32 %v7319, %v7575
        %v7832 = vxor.u32 %v7320, %v7576
        %v7833 = vxor.u32 %v7321, %v7577
        %v7834 = vxor.u32 %v7322, %v7578
        %v7835 = vxor.u32 %v7323, %v7579
        %v7836 = vxor.u32 %v7324, %v7580
        %v7837 = vxor.u32 %v7325, %v7581
        %v7838 = vxor.u32 %v7326, %v7582
        %v7839 = vxor.u32 %v7327, %v7583
        %v7840 = vxor.u32 %v7328, %v7584
        %v7841 = vxor.u32 %v7329, %v7585
        %v7842 = vxor.u32 %v7330, %v7586
        %v7843 = vxor.u32 %v7331, %v7587
        %v7844 = vxor.u32 %v7332, %v7588
        %v7845 = vxor.u32 %v7333, %v7589
        %v7846 = vxor.u32 %v7334, %v7590
        %v7847 = vxor.u32 %v7335, %v7591
        %v7848 = vxor.u32 %v7336, %v7592
        %v7849 = vxor.u32 %v7337, %v7593
        %v7850 = vxor.u32 %v7338, %v7594
        %v7851 = vxor.u32 %v7339, %v7595
        %v7852 = vxor.u32 %v7340, %v7596
        %v7853 = vxor.u32 %v7341, %v7597
        %v7854 = vxor.u32 %v7342, %v7598
        %v7855 = vxor.u32 %v7343, %v7599
        %v7856 = vxor.u32 %v7344, %v7600
        %v7857 = vxor.u32 %v7345, %v7601
        %v7858 = vxor.u32 %v7346, %v7602
        %v7859 = vxor.u32 %v7347, %v7603
        %v7860 = vxor.u32 %v7348, %v7604
        %v7861 = vxor.u32 %v7349, %v7605
        %v7862 = vxor.u32 %v7350, %v7606
        %v7863 = vxor.u32 %v7351, %v7607
        %v7864 = vxor.u32 %v7352, %v7608
        %v7865 = vxor.u32 %v7353, %v7609
        %v7866 = vxor.u32 %v7354, %v7610
        %v7867 = vxor.u32 %v7355, %v7611
        %v7868 = vxor.u32 %v7356, %v7612
        %v7869 = vxor.u32 %v7357, %v7613
        %v7870 = vxor.u32 %v7358, %v7614
        %v7871 = vxor.u32 %v7359, %v7615
        %v7872 = vxor.u32 %v7360, %v7616
        %v7873 = vxor.u32 %v7361, %v7617
        %v7874 = vxor.u32 %v7362, %v7618
        %v7875 = vxor.u32 %v7363, %v7619
        %v7876 = vxor.u32 %v7364, %v7620
        %v7877 = vxor.u32 %v7365, %v7621
        %v7878 = vxor.u32 %v7366, %v7622
        %v7879 = vxor.u32 %v7367, %v7623
        %v7880 = vxor.u32 %v7368, %v7624
        %v7881 = vxor.u32 %v7369, %v7625
        %v7882 = vxor.u32 %v7370, %v7626
        %v7883 = vxor.u32 %v7371, %v7627
        %v7884 = vxor.u32 %v7372, %v7628
        %v7885 = vxor.u32 %v7373, %v7629
        %v7886 = vxor.u32 %v7374, %v7630
        %v7887 = vxor.u32 %v7375, %v7631
        %v7888 = vxor.u32 %v7376, %v7632
        %v7889 = vxor.u32 %v7377, %v7633
        %v7890 = vxor.u32 %v7378, %v7634
        %v7891 = vxor.u32 %v7379, %v7635
        %v7892 = vxor.u32 %v7380, %v7636
        %v7893 = vxor.u32 %v7381, %v7637
        %v7894 = vxor.u32 %v7382, %v7638
        %v7895 = vxor.u32 %v7383, %v7639
        %v7896 = vxor.u32 %v7384, %v7640
        %v7897 = vxor.u32 %v7385, %v7641
        %v7898 = vxor.u32 %v7386, %v7642
        %v7899 = vxor.u32 %v7387, %v7643
        %v7900 = vxor.u32 %v7388, %v7644
        %v7901 = vxor.u32 %v7389, %v7645
        %v7902 = vxor.u32 %v7390, %v7646
        %v7903 = vxor.u32 %v7391, %v7647
        %v7904 = vxor.u32 %v7392, %v7648
        %v7905 = vxor.u32 %v7393, %v7649
        %v7906 = vxor.u32 %v7394, %v7650
        %v7907 = vxor.u32 %v7395, %v7651
        %v7908 = vxor.u32 %v7396, %v7652
        %v7909 = vxor.u32 %v7397, %v7653
        %v7910 = vxor.u32 %v7398, %v7654
        %v7911 = vxor.u32 %v7399, %v7655
        %v7912 = vxor.u32 %v7400, %v7656
        %v7913 = vxor.u32 %v7401, %v7657
        %v7914 = vxor.u32 %v7402, %v7658
        %v7915 = vxor.u32 %v7403, %v7659
        %v7916 = vxor.u32 %v7404, %v7660
        %v7917 = vxor.u32 %v7405, %v7661
        %v7918 = vxor.u32 %v7406, %v7662
        %v7919 = vxor.u32 %v7407, %v7663
        %v7920 = vxor.u32 %v7408, %v7664
        %v7921 = vxor.u32 %v7409, %v7665
        %v7922 = vxor.u32 %v7410, %v7666
        %v7923 = vxor.u32 %v7411, %v7667
        %v7924 = vxor.u32 %v7412, %v7668
        %v7925 = vxor.u32 %v7413, %v7669
        %v7926 = vxor.u32 %v7414, %v7670
        %v7927 = vxor.u32 %v7415, %v7671
        %v7928 = vxor.u32 %v7416, %v7672
        %v7929 = vxor.u32 %v7417, %v7673
        %v7930 = vxor.u32 %v7418, %v7674
        %v7931 = vxor.u32 %v7419, %v7675
        %v7932 = vxor.u32 %v7420, %v7676
        %v7933 = vxor.u32 %v7421, %v7677
        %v7934 = vxor.u32 %v7422, %v7678
        %v7935 = vxor.u32 %v7423, %v7679
        %v7936 = vxor.u32 %v7424, %v7680
        %v7937 = vxor.u32 %v7425, %v7681
        %v7938 = vxor.u32 %v7426, %v7682
        %v7939 = vxor.u32 %v7427, %v7683
        %v7940 = vxor.u32 %v7428, %v7684
        %v7941 = vxor.u32 %v7429, %v7685
        %v7942 = vxor.u32 %v7430, %v7686
        %v7943 = vxor.u32 %v7431, %v7687
        %v7944 = vxor.u32 %v7432, %v7688
        %v7945 = vxor.u32 %v7433, %v7689
        %v7946 = vxor.u32 %v7434, %v7690
        %v7947 = vxor.u32 %v7435, %v7691
        %v7948 = vxor.u32 %v7436, %v7692
        %v7949 = vxor.u32 %v7437, %v7693
        %v7950 = vxor.u32 %v7438, %v7694
        %v7951 = vxor.u32 %v7439, %v7695
        %v7952 = vxor.u32 %v7440, %v7696
        %v7953 = vxor.u32 %v7441, %v7697
        %v7954 = vxor.u32 %v7442, %v7698
        %v7955 = vxor.u32 %v7443, %v7699
        %v7956 = vxor.u32 %v7444, %v7700
        %v7957 = vxor.u32 %v7445, %v7701
        %v7958 = vxor.u32 %v7446, %v7702
        %v7959 = vxor.u32 %v7447, %v7703
        %v7960 = vxor.u32 %v7448, %v7704
        %v7961 = vxor.u32 %v7449, %v7705
        %v7962 = vxor.u32 %v7450, %v7706
        %v7963 = vxor.u32 %v7451, %v7707
        %v7964 = vxor.u32 %v7452, %v7708
        %v7965 = vxor.u32 %v7453, %v7709
        %v7966 = vxor.u32 %v7454, %v7710
        %v7967 = vxor.u32 %v7455, %v7711
        %v7968 = vxor.u32 %v7456, %v7712
        %v7969 = vxor.u32 %v7457, %v7713
        %v7970 = vxor.u32 %v7458, %v7714
        %v7971 = vxor.u32 %v7459, %v7715
        %v7972 = vxor.u32 %v7460, %v7716
        %v7973 = vxor.u32 %v7461, %v7717
        %v7974 = vxor.u32 %v7462, %v7718
        %v7975 = vxor.u32 %v7463, %v7719
        %v7976 = vxor.u32 %v7464, %v7720
        %v7977 = vxor.u32 %v7465, %v7721
        %v7978 = vxor.u32 %v7466, %v7722
        %v7979 = vxor.u32 %v7467, %v7723
        %v7980 = vxor.u32 %v7468, %v7724
        %v7981 = vxor.u32 %v7469, %v7725
        %v7982 = vxor.u32 %v7470, %v7726
        %v7983 = vxor.u32 %v7471, %v7727
        %v7984 = vxor.u32 %v7472, %v7728
        %v7985 = vxor.u32 %v7473, %v7729
        %v7986 = vxor.u32 %v7474, %v7730
        %v7987 = vxor.u32 %v7475, %v7731
        %v7988 = vxor.u32 %v7476, %v7732
        %v7989 = vxor.u32 %v7477, %v7733
        %v7990 = vxor.u32 %v7478, %v7734
        %v7991 = vxor.u32 %v7479, %v7735
        %v7992 = vxor.u32 %v7480, %v7736
        %v7993 = vxor.u32 %v7481, %v7737
        %v7994 = vxor.u32 %v7482, %v7738
        %v7995 = vxor.u32 %v7483, %v7739
        %v7996 = vxor.u32 %v7484, %v7740
        %v7997 = vxor.u32 %v7485, %v7741
        %v7998 = vxor.u32 %v7486, %v7742
        %v7999 = vxor.u32 %v7487, %v7743
        %v8000 = vxor.u32 %v7488, %v7744
        %v8001 = vxor.u32 %v7489, %v7745
        %v8002 = vxor.u32 %v7490, %v7746
        %v8003 = vxor.u32 %v7491, %v7747
        %v8004 = vxor.u32 %v7492, %v7748
        %v8005 = vxor.u32 %v7493, %v7749
        %v8006 = vxor.u32 %v7494, %v7750
        %v8007 = vxor.u32 %v7495, %v7751
        %v8008 = vmul.u32 %v7752, 2146121005
        %v8009 = vmul.u32 %v7753, 2146121005
        %v8010 = vmul.u32 %v7754, 2146121005
        %v8011 = vmul.u32 %v7755, 2146121005
        %v8012 = vmul.u32 %v7756, 2146121005
        %v8013 = vmul.u32 %v7757, 2146121005
        %v8014 = vmul.u32 %v7758, 2146121005
        %v8015 = vmul.u32 %v7759, 2146121005
        %v8016 = vmul.u32 %v7760, 2146121005
        %v8017 = vmul.u32 %v7761, 2146121005
        %v8018 = vmul.u32 %v7762, 2146121005
        %v8019 = vmul.u32 %v7763, 2146121005
        %v8020 = vmul.u32 %v7764, 2146121005
        %v8021 = vmul.u32 %v7765, 2146121005
        %v8022 = vmul.u32 %v7766, 2146121005
        %v8023 = vmul.u32 %v7767, 2146121005
        %v8024 = vmul.u32 %v7768, 2146121005
        %v8025 = vmul.u32 %v7769, 2146121005
        %v8026 = vmul.u32 %v7770, 2146121005
        %v8027 = vmul.u32 %v7771, 2146121005
        %v8028 = vmul.u32 %v7772, 2146121005
        %v8029 = vmul.u32 %v7773, 2146121005
        %v8030 = vmul.u32 %v7774, 2146121005
        %v8031 = vmul.u32 %v7775, 2146121005
        %v8032 = vmul.u32 %v7776, 2146121005
        %v8033 = vmul.u32 %v7777, 2146121005
        %v8034 = vmul.u32 %v7778, 2146121005
        %v8035 = vmul.u32 %v7779, 2146121005
        %v8036 = vmul.u32 %v7780, 2146121005
        %v8037 = vmul.u32 %v7781, 2146121005
        %v8038 = vmul.u32 %v7782, 2146121005
        %v8039 = vmul.u32 %v7783, 2146121005
        %v8040 = vmul.u32 %v7784, 2146121005
        %v8041 = vmul.u32 %v7785, 2146121005
        %v8042 = vmul.u32 %v7786, 2146121005
        %v8043 = vmul.u32 %v7787, 2146121005
        %v8044 = vmul.u32 %v7788, 2146121005
        %v8045 = vmul.u32 %v7789, 2146121005
        %v8046 = vmul.u32 %v7790, 2146121005
        %v8047 = vmul.u32 %v7791, 2146121005
        %v8048 = vmul.u32 %v7792, 2146121005
        %v8049 = vmul.u32 %v7793, 2146121005
        %v8050 = vmul.u32 %v7794, 2146121005
        %v8051 = vmul.u32 %v7795, 2146121005
        %v8052 = vmul.u32 %v7796, 2146121005
        %v8053 = vmul.u32 %v7797, 2146121005
        %v8054 = vmul.u32 %v7798, 2146121005
        %v8055 = vmul.u32 %v7799, 2146121005
        %v8056 = vmul.u32 %v7800, 2146121005
        %v8057 = vmul.u32 %v7801, 2146121005
        %v8058 = vmul.u32 %v7802, 2146121005
        %v8059 = vmul.u32 %v7803, 2146121005
        %v8060 = vmul.u32 %v7804, 2146121005
        %v8061 = vmul.u32 %v7805, 2146121005
        %v8062 = vmul.u32 %v7806, 2146121005
        %v8063 = vmul.u32 %v7807, 2146121005
        %v8064 = vmul.u32 %v7808, 2146121005
        %v8065 = vmul.u32 %v7809, 2146121005
        %v8066 = vmul.u32 %v7810, 2146121005
        %v8067 = vmul.u32 %v7811, 2146121005
        %v8068 = vmul.u32 %v7812, 2146121005
        %v8069 = vmul.u32 %v7813, 2146121005
        %v8070 = vmul.u32 %v7814, 2146121005
        %v8071 = vmul.u32 %v7815, 2146121005
        %v8072 = vmul.u32 %v7816, 2146121005
        %v8073 = vmul.u32 %v7817, 2146121005
        %v8074 = vmul.u32 %v7818, 2146121005
        %v8075 = vmul.u32 %v7819, 2146121005
        %v8076 = vmul.u32 %v7820, 2146121005
        %v8077 = vmul.u32 %v7821, 2146121005
        %v8078 = vmul.u32 %v7822, 2146121005
        %v8079 = vmul.u32 %v7823, 2146121005
        %v8080 = vmul.u32 %v7824, 2146121005
        %v8081 = vmul.u32 %v7825, 2146121005
        %v8082 = vmul.u32 %v7826, 2146121005
        %v8083 = vmul.u32 %v7827, 2146121005
        %v8084 = vmul.u32 %v7828, 2146121005
        %v8085 = vmul.u32 %v7829, 2146121005
        %v8086 = vmul.u32 %v7830, 2146121005
        %v8087 = vmul.u32 %v7831, 2146121005
        %v8088 = vmul.u32 %v7832, 2146121005
        %v8089 = vmul.u32 %v7833, 2146121005
        %v8090 = vmul.u32 %v7834, 2146121005
        %v8091 = vmul.u32 %v7835, 2146121005
        %v8092 = vmul.u32 %v7836, 2146121005
        %v8093 = vmul.u32 %v7837, 2146121005
        %v8094 = vmul.u32 %v7838, 2146121005
        %v8095 = vmul.u32 %v7839, 2146121005
        %v8096 = vmul.u32 %v7840, 2146121005
        %v8097 = vmul.u32 %v7841, 2146121005
        %v8098 = vmul.u32 %v7842, 2146121005
        %v8099 = vmul.u32 %v7843, 2146121005
        %v8100 = vmul.u32 %v7844, 2146121005
        %v8101 = vmul.u32 %v7845, 2146121005
        %v8102 = vmul.u32 %v7846, 2146121005
        %v8103 = vmul.u32 %v7847, 2146121005
        %v8104 = vmul.u32 %v7848, 2146121005
        %v8105 = vmul.u32 %v7849, 2146121005
        %v8106 = vmul.u32 %v7850, 2146121005
        %v8107 = vmul.u32 %v7851, 2146121005
        %v8108 = vmul.u32 %v7852, 2146121005
        %v8109 = vmul.u32 %v7853, 2146121005
        %v8110 = vmul.u32 %v7854, 2146121005
        %v8111 = vmul.u32 %v7855, 2146121005
        %v8112 = vmul.u32 %v7856, 2146121005
        %v8113 = vmul.u32 %v7857, 2146121005
        %v8114 = vmul.u32 %v7858, 2146121005
        %v8115 = vmul.u32 %v7859, 2146121005
        %v8116 = vmul.u32 %v7860, 2146121005
        %v8117 = vmul.u32 %v7861, 2146121005
        %v8118 = vmul.u32 %v7862, 2146121005
        %v8119 = vmul.u32 %v7863, 2146121005
        %v8120 = vmul.u32 %v7864, 2146121005
        %v8121 = vmul.u32 %v7865, 2146121005
        %v8122 = vmul.u32 %v7866, 2146121005
        %v8123 = vmul.u32 %v7867, 2146121005
        %v8124 = vmul.u32 %v7868, 2146121005
        %v8125 = vmul.u32 %v7869, 2146121005
        %v8126 = vmul.u32 %v7870, 2146121005
        %v8127 = vmul.u32 %v7871, 2146121005
        %v8128 = vmul.u32 %v7872, 2146121005
        %v8129 = vmul.u32 %v7873, 2146121005
        %v8130 = vmul.u32 %v7874, 2146121005
        %v8131 = vmul.u32 %v7875, 2146121005
        %v8132 = vmul.u32 %v7876, 2146121005
        %v8133 = vmul.u32 %v7877, 2146121005
        %v8134 = vmul.u32 %v7878, 2146121005
        %v8135 = vmul.u32 %v7879, 2146121005
        %v8136 = vmul.u32 %v7880, 2146121005
        %v8137 = vmul.u32 %v7881, 2146121005
        %v8138 = vmul.u32 %v7882, 2146121005
        %v8139 = vmul.u32 %v7883, 2146121005
        %v8140 = vmul.u32 %v7884, 2146121005
        %v8141 = vmul.u32 %v7885, 2146121005
        %v8142 = vmul.u32 %v7886, 2146121005
        %v8143 = vmul.u32 %v7887, 2146121005
        %v8144 = vmul.u32 %v7888, 2146121005
        %v8145 = vmul.u32 %v7889, 2146121005
        %v8146 = vmul.u32 %v7890, 2146121005
        %v8147 = vmul.u32 %v7891, 2146121005
        %v8148 = vmul.u32 %v7892, 2146121005
        %v8149 = vmul.u32 %v7893, 2146121005
        %v8150 = vmul.u32 %v7894, 2146121005
        %v8151 = vmul.u32 %v7895, 2146121005
        %v8152 = vmul.u32 %v7896, 2146121005
        %v8153 = vmul.u32 %v7897, 2146121005
        %v8154 = vmul.u32 %v7898, 2146121005
        %v8155 = vmul.u32 %v7899, 2146121005
        %v8156 = vmul.u32 %v7900, 2146121005
        %v8157 = vmul.u32 %v7901, 2146121005
        %v8158 = vmul.u32 %v7902, 2146121005
        %v8159 = vmul.u32 %v7903, 2146121005
        %v8160 = vmul.u32 %v7904, 2146121005
        %v8161 = vmul.u32 %v7905, 2146121005
        %v8162 = vmul.u32 %v7906, 2146121005
        %v8163 = vmul.u32 %v7907, 2146121005
        %v8164 = vmul.u32 %v7908, 2146121005
        %v8165 = vmul.u32 %v7909, 2146121005
        %v8166 = vmul.u32 %v7910, 2146121005
        %v8167 = vmul.u32 %v7911, 2146121005
        %v8168 = vmul.u32 %v7912, 2146121005
        %v8169 = vmul.u32 %v7913, 2146121005
        %v8170 = vmul.u32 %v7914, 2146121005
        %v8171 = vmul.u32 %v7915, 2146121005
        %v8172 = vmul.u32 %v7916, 2146121005
        %v8173 = vmul.u32 %v7917, 2146121005
        %v8174 = vmul.u32 %v7918, 2146121005
        %v8175 = vmul.u32 %v7919, 2146121005
        %v8176 = vmul.u32 %v7920, 2146121005
        %v8177 = vmul.u32 %v7921, 2146121005
        %v8178 = vmul.u32 %v7922, 2146121005
        %v8179 = vmul.u32 %v7923, 2146121005
        %v8180 = vmul.u32 %v7924, 2146121005
        %v8181 = vmul.u32 %v7925, 2146121005
        %v8182 = vmul.u32 %v7926, 2146121005
        %v8183 = vmul.u32 %v7927, 2146121005
        %v8184 = vmul.u32 %v7928, 2146121005
        %v8185 = vmul.u32 %v7929, 2146121005
        %v8186 = vmul.u32 %v7930, 2146121005
        %v8187 = vmul.u32 %v7931, 2146121005
        %v8188 = vmul.u32 %v7932, 2146121005
        %v8189 = vmul.u32 %v7933, 2146121005
        %v8190 = vmul.u32 %v7934, 2146121005
        %v8191 = vmul.u32 %v7935, 2146121005
        %v8192 = vmul.u32 %v7936, 2146121005
        %v8193 = vmul.u32 %v7937, 2146121005
        %v8194 = vmul.u32 %v7938, 2146121005
        %v8195 = vmul.u32 %v7939, 2146121005
        %v8196 = vmul.u32 %v7940, 2146121005
        %v8197 = vmul.u32 %v7941, 2146121005
        %v8198 = vmul.u32 %v7942, 2146121005
        %v8199 = vmul.u32 %v7943, 2146121005
        %v8200 = vmul.u32 %v7944, 2146121005
        %v8201 = vmul.u32 %v7945, 2146121005
        %v8202 = vmul.u32 %v7946, 2146121005
        %v8203 = vmul.u32 %v7947, 2146121005
        %v8204 = vmul.u32 %v7948, 2146121005
        %v8205 = vmul.u32 %v7949, 2146121005
        %v8206 = vmul.u32 %v7950, 2146121005
        %v8207 = vmul.u32 %v7951, 2146121005
        %v8208 = vmul.u32 %v7952, 2146121005
        %v8209 = vmul.u32 %v7953, 2146121005
        %v8210 = vmul.u32 %v7954, 2146121005
        %v8211 = vmul.u32 %v7955, 2146121005
        %v8212 = vmul.u32 %v7956, 2146121005
        %v8213 = vmul.u32 %v7957, 2146121005
        %v8214 = vmul.u32 %v7958, 2146121005
        %v8215 = vmul.u32 %v7959, 2146121005
        %v8216 = vmul.u32 %v7960, 2146121005
        %v8217 = vmul.u32 %v7961, 2146121005
        %v8218 = vmul.u32 %v7962, 2146121005
        %v8219 = vmul.u32 %v7963, 2146121005
        %v8220 = vmul.u32 %v7964, 2146121005
        %v8221 = vmul.u32 %v7965, 2146121005
        %v8222 = vmul.u32 %v7966, 2146121005
        %v8223 = vmul.u32 %v7967, 2146121005
        %v8224 = vmul.u32 %v7968, 2146121005
        %v8225 = vmul.u32 %v7969, 2146121005
        %v8226 = vmul.u32 %v7970, 2146121005
        %v8227 = vmul.u32 %v7971, 2146121005
        %v8228 = vmul.u32 %v7972, 2146121005
        %v8229 = vmul.u32 %v7973, 2146121005
        %v8230 = vmul.u32 %v7974, 2146121005
        %v8231 = vmul.u32 %v7975, 2146121005
        %v8232 = vmul.u32 %v7976, 2146121005
        %v8233 = vmul.u32 %v7977, 2146121005
        %v8234 = vmul.u32 %v7978, 2146121005
        %v8235 = vmul.u32 %v7979, 2146121005
        %v8236 = vmul.u32 %v7980, 2146121005
        %v8237 = vmul.u32 %v7981, 2146121005
        %v8238 = vmul.u32 %v7982, 2146121005
        %v8239 = vmul.u32 %v7983, 2146121005
        %v8240 = vmul.u32 %v7984, 2146121005
        %v8241 = vmul.u32 %v7985, 2146121005
        %v8242 = vmul.u32 %v7986, 2146121005
        %v8243 = vmul.u32 %v7987, 2146121005
        %v8244 = vmul.u32 %v7988, 2146121005
        %v8245 = vmul.u32 %v7989, 2146121005
        %v8246 = vmul.u32 %v7990, 2146121005
        %v8247 = vmul.u32 %v7991, 2146121005
        %v8248 = vmul.u32 %v7992, 2146121005
        %v8249 = vmul.u32 %v7993, 2146121005
        %v8250 = vmul.u32 %v7994, 2146121005
        %v8251 = vmul.u32 %v7995, 2146121005
        %v8252 = vmul.u32 %v7996, 2146121005
        %v8253 = vmul.u32 %v7997, 2146121005
        %v8254 = vmul.u32 %v7998, 2146121005
        %v8255 = vmul.u32 %v7999, 2146121005
        %v8256 = vmul.u32 %v8000, 2146121005
        %v8257 = vmul.u32 %v8001, 2146121005
        %v8258 = vmul.u32 %v8002, 2146121005
        %v8259 = vmul.u32 %v8003, 2146121005
        %v8260 = vmul.u32 %v8004, 2146121005
        %v8261 = vmul.u32 %v8005, 2146121005
        %v8262 = vmul.u32 %v8006, 2146121005
        %v8263 = vmul.u32 %v8007, 2146121005
        %v8264 = vshrl.u32 %v8008, 15
        %v8265 = vshrl.u32 %v8009, 15
        %v8266 = vshrl.u32 %v8010, 15
        %v8267 = vshrl.u32 %v8011, 15
        %v8268 = vshrl.u32 %v8012, 15
        %v8269 = vshrl.u32 %v8013, 15
        %v8270 = vshrl.u32 %v8014, 15
        %v8271 = vshrl.u32 %v8015, 15
        %v8272 = vshrl.u32 %v8016, 15
        %v8273 = vshrl.u32 %v8017, 15
        %v8274 = vshrl.u32 %v8018, 15
        %v8275 = vshrl.u32 %v8019, 15
        %v8276 = vshrl.u32 %v8020, 15
        %v8277 = vshrl.u32 %v8021, 15
        %v8278 = vshrl.u32 %v8022, 15
        %v8279 = vshrl.u32 %v8023, 15
        %v8280 = vshrl.u32 %v8024, 15
        %v8281 = vshrl.u32 %v8025, 15
        %v8282 = vshrl.u32 %v8026, 15
        %v8283 = vshrl.u32 %v8027, 15
        %v8284 = vshrl.u32 %v8028, 15
        %v8285 = vshrl.u32 %v8029, 15
        %v8286 = vshrl.u32 %v8030, 15
        %v8287 = vshrl.u32 %v8031, 15
        %v8288 = vshrl.u32 %v8032, 15
        %v8289 = vshrl.u32 %v8033, 15
        %v8290 = vshrl.u32 %v8034, 15
        %v8291 = vshrl.u32 %v8035, 15
        %v8292 = vshrl.u32 %v8036, 15
        %v8293 = vshrl.u32 %v8037, 15
        %v8294 = vshrl.u32 %v8038, 15
        %v8295 = vshrl.u32 %v8039, 15
        %v8296 = vshrl.u32 %v8040, 15
        %v8297 = vshrl.u32 %v8041, 15
        %v8298 = vshrl.u32 %v8042, 15
        %v8299 = vshrl.u32 %v8043, 15
        %v8300 = vshrl.u32 %v8044, 15
        %v8301 = vshrl.u32 %v8045, 15
        %v8302 = vshrl.u32 %v8046, 15
        %v8303 = vshrl.u32 %v8047, 15
        %v8304 = vshrl.u32 %v8048, 15
        %v8305 = vshrl.u32 %v8049, 15
        %v8306 = vshrl.u32 %v8050, 15
        %v8307 = vshrl.u32 %v8051, 15
        %v8308 = vshrl.u32 %v8052, 15
        %v8309 = vshrl.u32 %v8053, 15
        %v8310 = vshrl.u32 %v8054, 15
        %v8311 = vshrl.u32 %v8055, 15
        %v8312 = vshrl.u32 %v8056, 15
        %v8313 = vshrl.u32 %v8057, 15
        %v8314 = vshrl.u32 %v8058, 15
        %v8315 = vshrl.u32 %v8059, 15
        %v8316 = vshrl.u32 %v8060, 15
        %v8317 = vshrl.u32 %v8061, 15
        %v8318 = vshrl.u32 %v8062, 15
        %v8319 = vshrl.u32 %v8063, 15
        %v8320 = vshrl.u32 %v8064, 15
        %v8321 = vshrl.u32 %v8065, 15
        %v8322 = vshrl.u32 %v8066, 15
        %v8323 = vshrl.u32 %v8067, 15
        %v8324 = vshrl.u32 %v8068, 15
        %v8325 = vshrl.u32 %v8069, 15
        %v8326 = vshrl.u32 %v8070, 15
        %v8327 = vshrl.u32 %v8071, 15
        %v8328 = vshrl.u32 %v8072, 15
        %v8329 = vshrl.u32 %v8073, 15
        %v8330 = vshrl.u32 %v8074, 15
        %v8331 = vshrl.u32 %v8075, 15
        %v8332 = vshrl.u32 %v8076, 15
        %v8333 = vshrl.u32 %v8077, 15
        %v8334 = vshrl.u32 %v8078, 15
        %v8335 = vshrl.u32 %v8079, 15
        %v8336 = vshrl.u32 %v8080, 15
        %v8337 = vshrl.u32 %v8081, 15
        %v8338 = vshrl.u32 %v8082, 15
        %v8339 = vshrl.u32 %v8083, 15
        %v8340 = vshrl.u32 %v8084, 15
        %v8341 = vshrl.u32 %v8085, 15
        %v8342 = vshrl.u32 %v8086, 15
        %v8343 = vshrl.u32 %v8087, 15
        %v8344 = vshrl.u32 %v8088, 15
        %v8345 = vshrl.u32 %v8089, 15
        %v8346 = vshrl.u32 %v8090, 15
        %v8347 = vshrl.u32 %v8091, 15
        %v8348 = vshrl.u32 %v8092, 15
        %v8349 = vshrl.u32 %v8093, 15
        %v8350 = vshrl.u32 %v8094, 15
        %v8351 = vshrl.u32 %v8095, 15
        %v8352 = vshrl.u32 %v8096, 15
        %v8353 = vshrl.u32 %v8097, 15
        %v8354 = vshrl.u32 %v8098, 15
        %v8355 = vshrl.u32 %v8099, 15
        %v8356 = vshrl.u32 %v8100, 15
        %v8357 = vshrl.u32 %v8101, 15
        %v8358 = vshrl.u32 %v8102, 15
        %v8359 = vshrl.u32 %v8103, 15
        %v8360 = vshrl.u32 %v8104, 15
        %v8361 = vshrl.u32 %v8105, 15
        %v8362 = vshrl.u32 %v8106, 15
        %v8363 = vshrl.u32 %v8107, 15
        %v8364 = vshrl.u32 %v8108, 15
        %v8365 = vshrl.u32 %v8109, 15
        %v8366 = vshrl.u32 %v8110, 15
        %v8367 = vshrl.u32 %v8111, 15
        %v8368 = vshrl.u32 %v8112, 15
        %v8369 = vshrl.u32 %v8113, 15
        %v8370 = vshrl.u32 %v8114, 15
        %v8371 = vshrl.u32 %v8115, 15
        %v8372 = vshrl.u32 %v8116, 15
        %v8373 = vshrl.u32 %v8117, 15
        %v8374 = vshrl.u32 %v8118, 15
        %v8375 = vshrl.u32 %v8119, 15
        %v8376 = vshrl.u32 %v8120, 15
        %v8377 = vshrl.u32 %v8121, 15
        %v8378 = vshrl.u32 %v8122, 15
        %v8379 = vshrl.u32 %v8123, 15
        %v8380 = vshrl.u32 %v8124, 15
        %v8381 = vshrl.u32 %v8125, 15
        %v8382 = vshrl.u32 %v8126, 15
        %v8383 = vshrl.u32 %v8127, 15
        %v8384 = vshrl.u32 %v8128, 15
        %v8385 = vshrl.u32 %v8129, 15
        %v8386 = vshrl.u32 %v8130, 15
        %v8387 = vshrl.u32 %v8131, 15
        %v8388 = vshrl.u32 %v8132, 15
        %v8389 = vshrl.u32 %v8133, 15
        %v8390 = vshrl.u32 %v8134, 15
        %v8391 = vshrl.u32 %v8135, 15
        %v8392 = vshrl.u32 %v8136, 15
        %v8393 = vshrl.u32 %v8137, 15
        %v8394 = vshrl.u32 %v8138, 15
        %v8395 = vshrl.u32 %v8139, 15
        %v8396 = vshrl.u32 %v8140, 15
        %v8397 = vshrl.u32 %v8141, 15
        %v8398 = vshrl.u32 %v8142, 15
        %v8399 = vshrl.u32 %v8143, 15
        %v8400 = vshrl.u32 %v8144, 15
        %v8401 = vshrl.u32 %v8145, 15
        %v8402 = vshrl.u32 %v8146, 15
        %v8403 = vshrl.u32 %v8147, 15
        %v8404 = vshrl.u32 %v8148, 15
        %v8405 = vshrl.u32 %v8149, 15
        %v8406 = vshrl.u32 %v8150, 15
        %v8407 = vshrl.u32 %v8151, 15
        %v8408 = vshrl.u32 %v8152, 15
        %v8409 = vshrl.u32 %v8153, 15
        %v8410 = vshrl.u32 %v8154, 15
        %v8411 = vshrl.u32 %v8155, 15
        %v8412 = vshrl.u32 %v8156, 15
        %v8413 = vshrl.u32 %v8157, 15
        %v8414 = vshrl.u32 %v8158, 15
        %v8415 = vshrl.u32 %v8159, 15
        %v8416 = vshrl.u32 %v8160, 15
        %v8417 = vshrl.u32 %v8161, 15
        %v8418 = vshrl.u32 %v8162, 15
        %v8419 = vshrl.u32 %v8163, 15
        %v8420 = vshrl.u32 %v8164, 15
        %v8421 = vshrl.u32 %v8165, 15
        %v8422 = vshrl.u32 %v8166, 15
        %v8423 = vshrl.u32 %v8167, 15
        %v8424 = vshrl.u32 %v8168, 15
        %v8425 = vshrl.u32 %v8169, 15
        %v8426 = vshrl.u32 %v8170, 15
        %v8427 = vshrl.u32 %v8171, 15
        %v8428 = vshrl.u32 %v8172, 15
        %v8429 = vshrl.u32 %v8173, 15
        %v8430 = vshrl.u32 %v8174, 15
        %v8431 = vshrl.u32 %v8175, 15
        %v8432 = vshrl.u32 %v8176, 15
        %v8433 = vshrl.u32 %v8177, 15
        %v8434 = vshrl.u32 %v8178, 15
        %v8435 = vshrl.u32 %v8179, 15
        %v8436 = vshrl.u32 %v8180, 15
        %v8437 = vshrl.u32 %v8181, 15
        %v8438 = vshrl.u32 %v8182, 15
        %v8439 = vshrl.u32 %v8183, 15
        %v8440 = vshrl.u32 %v8184, 15
        %v8441 = vshrl.u32 %v8185, 15
        %v8442 = vshrl.u32 %v8186, 15
        %v8443 = vshrl.u32 %v8187, 15
        %v8444 = vshrl.u32 %v8188, 15
        %v8445 = vshrl.u32 %v8189, 15
        %v8446 = vshrl.u32 %v8190, 15
        %v8447 = vshrl.u32 %v8191, 15
        %v8448 = vshrl.u32 %v8192, 15
        %v8449 = vshrl.u32 %v8193, 15
        %v8450 = vshrl.u32 %v8194, 15
        %v8451 = vshrl.u32 %v8195, 15
        %v8452 = vshrl.u32 %v8196, 15
        %v8453 = vshrl.u32 %v8197, 15
        %v8454 = vshrl.u32 %v8198, 15
        %v8455 = vshrl.u32 %v8199, 15
        %v8456 = vshrl.u32 %v8200, 15
        %v8457 = vshrl.u32 %v8201, 15
        %v8458 = vshrl.u32 %v8202, 15
        %v8459 = vshrl.u32 %v8203, 15
        %v8460 = vshrl.u32 %v8204, 15
        %v8461 = vshrl.u32 %v8205, 15
        %v8462 = vshrl.u32 %v8206, 15
        %v8463 = vshrl.u32 %v8207, 15
        %v8464 = vshrl.u32 %v8208, 15
        %v8465 = vshrl.u32 %v8209, 15
        %v8466 = vshrl.u32 %v8210, 15
        %v8467 = vshrl.u32 %v8211, 15
        %v8468 = vshrl.u32 %v8212, 15
        %v8469 = vshrl.u32 %v8213, 15
        %v8470 = vshrl.u32 %v8214, 15
        %v8471 = vshrl.u32 %v8215, 15
        %v8472 = vshrl.u32 %v8216, 15
        %v8473 = vshrl.u32 %v8217, 15
        %v8474 = vshrl.u32 %v8218, 15
        %v8475 = vshrl.u32 %v8219, 15
        %v8476 = vshrl.u32 %v8220, 15
        %v8477 = vshrl.u32 %v8221, 15
        %v8478 = vshrl.u32 %v8222, 15
        %v8479 = vshrl.u32 %v8223, 15
        %v8480 = vshrl.u32 %v8224, 15
        %v8481 = vshrl.u32 %v8225, 15
        %v8482 = vshrl.u32 %v8226, 15
        %v8483 = vshrl.u32 %v8227, 15
        %v8484 = vshrl.u32 %v8228, 15
        %v8485 = vshrl.u32 %v8229, 15
        %v8486 = vshrl.u32 %v8230, 15
        %v8487 = vshrl.u32 %v8231, 15
        %v8488 = vshrl.u32 %v8232, 15
        %v8489 = vshrl.u32 %v8233, 15
        %v8490 = vshrl.u32 %v8234, 15
        %v8491 = vshrl.u32 %v8235, 15
        %v8492 = vshrl.u32 %v8236, 15
        %v8493 = vshrl.u32 %v8237, 15
        %v8494 = vshrl.u32 %v8238, 15
        %v8495 = vshrl.u32 %v8239, 15
        %v8496 = vshrl.u32 %v8240, 15
        %v8497 = vshrl.u32 %v8241, 15
        %v8498 = vshrl.u32 %v8242, 15
        %v8499 = vshrl.u32 %v8243, 15
        %v8500 = vshrl.u32 %v8244, 15
        %v8501 = vshrl.u32 %v8245, 15
        %v8502 = vshrl.u32 %v8246, 15
        %v8503 = vshrl.u32 %v8247, 15
        %v8504 = vshrl.u32 %v8248, 15
        %v8505 = vshrl.u32 %v8249, 15
        %v8506 = vshrl.u32 %v8250, 15
        %v8507 = vshrl.u32 %v8251, 15
        %v8508 = vshrl.u32 %v8252, 15
        %v8509 = vshrl.u32 %v8253, 15
        %v8510 = vshrl.u32 %v8254, 15
        %v8511 = vshrl.u32 %v8255, 15
        %v8512 = vshrl.u32 %v8256, 15
        %v8513 = vshrl.u32 %v8257, 15
        %v8514 = vshrl.u32 %v8258, 15
        %v8515 = vshrl.u32 %v8259, 15
        %v8516 = vshrl.u32 %v8260, 15
        %v8517 = vshrl.u32 %v8261, 15
        %v8518 = vshrl.u32 %v8262, 15
        %v8519 = vshrl.u32 %v8263, 15
        %v8520 = vxor.u32 %v8008, %v8264
        %v8521 = vxor.u32 %v8009, %v8265
        %v8522 = vxor.u32 %v8010, %v8266
        %v8523 = vxor.u32 %v8011, %v8267
        %v8524 = vxor.u32 %v8012, %v8268
        %v8525 = vxor.u32 %v8013, %v8269
        %v8526 = vxor.u32 %v8014, %v8270
        %v8527 = vxor.u32 %v8015, %v8271
        %v8528 = vxor.u32 %v8016, %v8272
        %v8529 = vxor.u32 %v8017, %v8273
        %v8530 = vxor.u32 %v8018, %v8274
        %v8531 = vxor.u32 %v8019, %v8275
        %v8532 = vxor.u32 %v8020, %v8276
        %v8533 = vxor.u32 %v8021, %v8277
        %v8534 = vxor.u32 %v8022, %v8278
        %v8535 = vxor.u32 %v8023, %v8279
        %v8536 = vxor.u32 %v8024, %v8280
        %v8537 = vxor.u32 %v8025, %v8281
        %v8538 = vxor.u32 %v8026, %v8282
        %v8539 = vxor.u32 %v8027, %v8283
        %v8540 = vxor.u32 %v8028, %v8284
        %v8541 = vxor.u32 %v8029, %v8285
        %v8542 = vxor.u32 %v8030, %v8286
        %v8543 = vxor.u32 %v8031, %v8287
        %v8544 = vxor.u32 %v8032, %v8288
        %v8545 = vxor.u32 %v8033, %v8289
        %v8546 = vxor.u32 %v8034, %v8290
        %v8547 = vxor.u32 %v8035, %v8291
        %v8548 = vxor.u32 %v8036, %v8292
        %v8549 = vxor.u32 %v8037, %v8293
        %v8550 = vxor.u32 %v8038, %v8294
        %v8551 = vxor.u32 %v8039, %v8295
        %v8552 = vxor.u32 %v8040, %v8296
        %v8553 = vxor.u32 %v8041, %v8297
        %v8554 = vxor.u32 %v8042, %v8298
        %v8555 = vxor.u32 %v8043, %v8299
        %v8556 = vxor.u32 %v8044, %v8300
        %v8557 = vxor.u32 %v8045, %v8301
        %v8558 = vxor.u32 %v8046, %v8302
        %v8559 = vxor.u32 %v8047, %v8303
        %v8560 = vxor.u32 %v8048, %v8304
        %v8561 = vxor.u32 %v8049, %v8305
        %v8562 = vxor.u32 %v8050, %v8306
        %v8563 = vxor.u32 %v8051, %v8307
        %v8564 = vxor.u32 %v8052, %v8308
        %v8565 = vxor.u32 %v8053, %v8309
        %v8566 = vxor.u32 %v8054, %v8310
        %v8567 = vxor.u32 %v8055, %v8311
        %v8568 = vxor.u32 %v8056, %v8312
        %v8569 = vxor.u32 %v8057, %v8313
        %v8570 = vxor.u32 %v8058, %v8314
        %v8571 = vxor.u32 %v8059, %v8315
        %v8572 = vxor.u32 %v8060, %v8316
        %v8573 = vxor.u32 %v8061, %v8317
        %v8574 = vxor.u32 %v8062, %v8318
        %v8575 = vxor.u32 %v8063, %v8319
        %v8576 = vxor.u32 %v8064, %v8320
        %v8577 = vxor.u32 %v8065, %v8321
        %v8578 = vxor.u32 %v8066, %v8322
        %v8579 = vxor.u32 %v8067, %v8323
        %v8580 = vxor.u32 %v8068, %v8324
        %v8581 = vxor.u32 %v8069, %v8325
        %v8582 = vxor.u32 %v8070, %v8326
        %v8583 = vxor.u32 %v8071, %v8327
        %v8584 = vxor.u32 %v8072, %v8328
        %v8585 = vxor.u32 %v8073, %v8329
        %v8586 = vxor.u32 %v8074, %v8330
        %v8587 = vxor.u32 %v8075, %v8331
        %v8588 = vxor.u32 %v8076, %v8332
        %v8589 = vxor.u32 %v8077, %v8333
        %v8590 = vxor.u32 %v8078, %v8334
        %v8591 = vxor.u32 %v8079, %v8335
        %v8592 = vxor.u32 %v8080, %v8336
        %v8593 = vxor.u32 %v8081, %v8337
        %v8594 = vxor.u32 %v8082, %v8338
        %v8595 = vxor.u32 %v8083, %v8339
        %v8596 = vxor.u32 %v8084, %v8340
        %v8597 = vxor.u32 %v8085, %v8341
        %v8598 = vxor.u32 %v8086, %v8342
        %v8599 = vxor.u32 %v8087, %v8343
        %v8600 = vxor.u32 %v8088, %v8344
        %v8601 = vxor.u32 %v8089, %v8345
        %v8602 = vxor.u32 %v8090, %v8346
        %v8603 = vxor.u32 %v8091, %v8347
        %v8604 = vxor.u32 %v8092, %v8348
        %v8605 = vxor.u32 %v8093, %v8349
        %v8606 = vxor.u32 %v8094, %v8350
        %v8607 = vxor.u32 %v8095, %v8351
        %v8608 = vxor.u32 %v8096, %v8352
        %v8609 = vxor.u32 %v8097, %v8353
        %v8610 = vxor.u32 %v8098, %v8354
        %v8611 = vxor.u32 %v8099, %v8355
        %v8612 = vxor.u32 %v8100, %v8356
        %v8613 = vxor.u32 %v8101, %v8357
        %v8614 = vxor.u32 %v8102, %v8358
        %v8615 = vxor.u32 %v8103, %v8359
        %v8616 = vxor.u32 %v8104, %v8360
        %v8617 = vxor.u32 %v8105, %v8361
        %v8618 = vxor.u32 %v8106, %v8362
        %v8619 = vxor.u32 %v8107, %v8363
        %v8620 = vxor.u32 %v8108, %v8364
        %v8621 = vxor.u32 %v8109, %v8365
        %v8622 = vxor.u32 %v8110, %v8366
        %v8623 = vxor.u32 %v8111, %v8367
        %v8624 = vxor.u32 %v8112, %v8368
        %v8625 = vxor.u32 %v8113, %v8369
        %v8626 = vxor.u32 %v8114, %v8370
        %v8627 = vxor.u32 %v8115, %v8371
        %v8628 = vxor.u32 %v8116, %v8372
        %v8629 = vxor.u32 %v8117, %v8373
        %v8630 = vxor.u32 %v8118, %v8374
        %v8631 = vxor.u32 %v8119, %v8375
        %v8632 = vxor.u32 %v8120, %v8376
        %v8633 = vxor.u32 %v8121, %v8377
        %v8634 = vxor.u32 %v8122, %v8378
        %v8635 = vxor.u32 %v8123, %v8379
        %v8636 = vxor.u32 %v8124, %v8380
        %v8637 = vxor.u32 %v8125, %v8381
        %v8638 = vxor.u32 %v8126, %v8382
        %v8639 = vxor.u32 %v8127, %v8383
        %v8640 = vxor.u32 %v8128, %v8384
        %v8641 = vxor.u32 %v8129, %v8385
        %v8642 = vxor.u32 %v8130, %v8386
        %v8643 = vxor.u32 %v8131, %v8387
        %v8644 = vxor.u32 %v8132, %v8388
        %v8645 = vxor.u32 %v8133, %v8389
        %v8646 = vxor.u32 %v8134, %v8390
        %v8647 = vxor.u32 %v8135, %v8391
        %v8648 = vxor.u32 %v8136, %v8392
        %v8649 = vxor.u32 %v8137, %v8393
        %v8650 = vxor.u32 %v8138, %v8394
        %v8651 = vxor.u32 %v8139, %v8395
        %v8652 = vxor.u32 %v8140, %v8396
        %v8653 = vxor.u32 %v8141, %v8397
        %v8654 = vxor.u32 %v8142, %v8398
        %v8655 = vxor.u32 %v8143, %v8399
        %v8656 = vxor.u32 %v8144, %v8400
        %v8657 = vxor.u32 %v8145, %v8401
        %v8658 = vxor.u32 %v8146, %v8402
        %v8659 = vxor.u32 %v8147, %v8403
        %v8660 = vxor.u32 %v8148, %v8404
        %v8661 = vxor.u32 %v8149, %v8405
        %v8662 = vxor.u32 %v8150, %v8406
        %v8663 = vxor.u32 %v8151, %v8407
        %v8664 = vxor.u32 %v8152, %v8408
        %v8665 = vxor.u32 %v8153, %v8409
        %v8666 = vxor.u32 %v8154, %v8410
        %v8667 = vxor.u32 %v8155, %v8411
        %v8668 = vxor.u32 %v8156, %v8412
        %v8669 = vxor.u32 %v8157, %v8413
        %v8670 = vxor.u32 %v8158, %v8414
        %v8671 = vxor.u32 %v8159, %v8415
        %v8672 = vxor.u32 %v8160, %v8416
        %v8673 = vxor.u32 %v8161, %v8417
        %v8674 = vxor.u32 %v8162, %v8418
        %v8675 = vxor.u32 %v8163, %v8419
        %v8676 = vxor.u32 %v8164, %v8420
        %v8677 = vxor.u32 %v8165, %v8421
        %v8678 = vxor.u32 %v8166, %v8422
        %v8679 = vxor.u32 %v8167, %v8423
        %v8680 = vxor.u32 %v8168, %v8424
        %v8681 = vxor.u32 %v8169, %v8425
        %v8682 = vxor.u32 %v8170, %v8426
        %v8683 = vxor.u32 %v8171, %v8427
        %v8684 = vxor.u32 %v8172, %v8428
        %v8685 = vxor.u32 %v8173, %v8429
        %v8686 = vxor.u32 %v8174, %v8430
        %v8687 = vxor.u32 %v8175, %v8431
        %v8688 = vxor.u32 %v8176, %v8432
        %v8689 = vxor.u32 %v8177, %v8433
        %v8690 = vxor.u32 %v8178, %v8434
        %v8691 = vxor.u32 %v8179, %v8435
        %v8692 = vxor.u32 %v8180, %v8436
        %v8693 = vxor.u32 %v8181, %v8437
        %v8694 = vxor.u32 %v8182, %v8438
        %v8695 = vxor.u32 %v8183, %v8439
        %v8696 = vxor.u32 %v8184, %v8440
        %v8697 = vxor.u32 %v8185, %v8441
        %v8698 = vxor.u32 %v8186, %v8442
        %v8699 = vxor.u32 %v8187, %v8443
        %v8700 = vxor.u32 %v8188, %v8444
        %v8701 = vxor.u32 %v8189, %v8445
        %v8702 = vxor.u32 %v8190, %v8446
        %v8703 = vxor.u32 %v8191, %v8447
        %v8704 = vxor.u32 %v8192, %v8448
        %v8705 = vxor.u32 %v8193, %v8449
        %v8706 = vxor.u32 %v8194, %v8450
        %v8707 = vxor.u32 %v8195, %v8451
        %v8708 = vxor.u32 %v8196, %v8452
        %v8709 = vxor.u32 %v8197, %v8453
        %v8710 = vxor.u32 %v8198, %v8454
        %v8711 = vxor.u32 %v8199, %v8455
        %v8712 = vxor.u32 %v8200, %v8456
        %v8713 = vxor.u32 %v8201, %v8457
        %v8714 = vxor.u32 %v8202, %v8458
        %v8715 = vxor.u32 %v8203, %v8459
        %v8716 = vxor.u32 %v8204, %v8460
        %v8717 = vxor.u32 %v8205, %v8461
        %v8718 = vxor.u32 %v8206, %v8462
        %v8719 = vxor.u32 %v8207, %v8463
        %v8720 = vxor.u32 %v8208, %v8464
        %v8721 = vxor.u32 %v8209, %v8465
        %v8722 = vxor.u32 %v8210, %v8466
        %v8723 = vxor.u32 %v8211, %v8467
        %v8724 = vxor.u32 %v8212, %v8468
        %v8725 = vxor.u32 %v8213, %v8469
        %v8726 = vxor.u32 %v8214, %v8470
        %v8727 = vxor.u32 %v8215, %v8471
        %v8728 = vxor.u32 %v8216, %v8472
        %v8729 = vxor.u32 %v8217, %v8473
        %v8730 = vxor.u32 %v8218, %v8474
        %v8731 = vxor.u32 %v8219, %v8475
        %v8732 = vxor.u32 %v8220, %v8476
        %v8733 = vxor.u32 %v8221, %v8477
        %v8734 = vxor.u32 %v8222, %v8478
        %v8735 = vxor.u32 %v8223, %v8479
        %v8736 = vxor.u32 %v8224, %v8480
        %v8737 = vxor.u32 %v8225, %v8481
        %v8738 = vxor.u32 %v8226, %v8482
        %v8739 = vxor.u32 %v8227, %v8483
        %v8740 = vxor.u32 %v8228, %v8484
        %v8741 = vxor.u32 %v8229, %v8485
        %v8742 = vxor.u32 %v8230, %v8486
        %v8743 = vxor.u32 %v8231, %v8487
        %v8744 = vxor.u32 %v8232, %v8488
        %v8745 = vxor.u32 %v8233, %v8489
        %v8746 = vxor.u32 %v8234, %v8490
        %v8747 = vxor.u32 %v8235, %v8491
        %v8748 = vxor.u32 %v8236, %v8492
        %v8749 = vxor.u32 %v8237, %v8493
        %v8750 = vxor.u32 %v8238, %v8494
        %v8751 = vxor.u32 %v8239, %v8495
        %v8752 = vxor.u32 %v8240, %v8496
        %v8753 = vxor.u32 %v8241, %v8497
        %v8754 = vxor.u32 %v8242, %v8498
        %v8755 = vxor.u32 %v8243, %v8499
        %v8756 = vxor.u32 %v8244, %v8500
        %v8757 = vxor.u32 %v8245, %v8501
        %v8758 = vxor.u32 %v8246, %v8502
        %v8759 = vxor.u32 %v8247, %v8503
        %v8760 = vxor.u32 %v8248, %v8504
        %v8761 = vxor.u32 %v8249, %v8505
        %v8762 = vxor.u32 %v8250, %v8506
        %v8763 = vxor.u32 %v8251, %v8507
        %v8764 = vxor.u32 %v8252, %v8508
        %v8765 = vxor.u32 %v8253, %v8509
        %v8766 = vxor.u32 %v8254, %v8510
        %v8767 = vxor.u32 %v8255, %v8511
        %v8768 = vxor.u32 %v8256, %v8512
        %v8769 = vxor.u32 %v8257, %v8513
        %v8770 = vxor.u32 %v8258, %v8514
        %v8771 = vxor.u32 %v8259, %v8515
        %v8772 = vxor.u32 %v8260, %v8516
        %v8773 = vxor.u32 %v8261, %v8517
        %v8774 = vxor.u32 %v8262, %v8518
        %v8775 = vxor.u32 %v8263, %v8519
        %v8776 = vadd.s32 %v8520, 2147483648
        %vm8778 = vcmp.ge.s32.totalorder %v8776, 3865470566
        %v8779 = vadd.s32 %v8521, 2147483648
        %vm8781 = vcmp.ge.s32.totalorder %v8779, 3865470566
        %v8782 = vadd.s32 %v8522, 2147483648
        %vm8784 = vcmp.ge.s32.totalorder %v8782, 3865470566
        %v8785 = vadd.s32 %v8523, 2147483648
        %vm8787 = vcmp.ge.s32.totalorder %v8785, 3865470566
        %v8788 = vadd.s32 %v8524, 2147483648
        %vm8790 = vcmp.ge.s32.totalorder %v8788, 3865470566
        %v8791 = vadd.s32 %v8525, 2147483648
        %vm8793 = vcmp.ge.s32.totalorder %v8791, 3865470566
        %v8794 = vadd.s32 %v8526, 2147483648
        %vm8796 = vcmp.ge.s32.totalorder %v8794, 3865470566
        %v8797 = vadd.s32 %v8527, 2147483648
        %vm8799 = vcmp.ge.s32.totalorder %v8797, 3865470566
        %v8800 = vadd.s32 %v8528, 2147483648
        %vm8802 = vcmp.ge.s32.totalorder %v8800, 3865470566
        %v8803 = vadd.s32 %v8529, 2147483648
        %vm8805 = vcmp.ge.s32.totalorder %v8803, 3865470566
        %v8806 = vadd.s32 %v8530, 2147483648
        %vm8808 = vcmp.ge.s32.totalorder %v8806, 3865470566
        %v8809 = vadd.s32 %v8531, 2147483648
        %vm8811 = vcmp.ge.s32.totalorder %v8809, 3865470566
        %v8812 = vadd.s32 %v8532, 2147483648
        %vm8814 = vcmp.ge.s32.totalorder %v8812, 3865470566
        %v8815 = vadd.s32 %v8533, 2147483648
        %vm8817 = vcmp.ge.s32.totalorder %v8815, 3865470566
        %v8818 = vadd.s32 %v8534, 2147483648
        %vm8820 = vcmp.ge.s32.totalorder %v8818, 3865470566
        %v8821 = vadd.s32 %v8535, 2147483648
        %vm8823 = vcmp.ge.s32.totalorder %v8821, 3865470566
        %v8824 = vadd.s32 %v8536, 2147483648
        %vm8826 = vcmp.ge.s32.totalorder %v8824, 3865470566
        %v8827 = vadd.s32 %v8537, 2147483648
        %vm8829 = vcmp.ge.s32.totalorder %v8827, 3865470566
        %v8830 = vadd.s32 %v8538, 2147483648
        %vm8832 = vcmp.ge.s32.totalorder %v8830, 3865470566
        %v8833 = vadd.s32 %v8539, 2147483648
        %vm8835 = vcmp.ge.s32.totalorder %v8833, 3865470566
        %v8836 = vadd.s32 %v8540, 2147483648
        %vm8838 = vcmp.ge.s32.totalorder %v8836, 3865470566
        %v8839 = vadd.s32 %v8541, 2147483648
        %vm8841 = vcmp.ge.s32.totalorder %v8839, 3865470566
        %v8842 = vadd.s32 %v8542, 2147483648
        %vm8844 = vcmp.ge.s32.totalorder %v8842, 3865470566
        %v8845 = vadd.s32 %v8543, 2147483648
        %vm8847 = vcmp.ge.s32.totalorder %v8845, 3865470566
        %v8848 = vadd.s32 %v8544, 2147483648
        %vm8850 = vcmp.ge.s32.totalorder %v8848, 3865470566
        %v8851 = vadd.s32 %v8545, 2147483648
        %vm8853 = vcmp.ge.s32.totalorder %v8851, 3865470566
        %v8854 = vadd.s32 %v8546, 2147483648
        %vm8856 = vcmp.ge.s32.totalorder %v8854, 3865470566
        %v8857 = vadd.s32 %v8547, 2147483648
        %vm8859 = vcmp.ge.s32.totalorder %v8857, 3865470566
        %v8860 = vadd.s32 %v8548, 2147483648
        %vm8862 = vcmp.ge.s32.totalorder %v8860, 3865470566
        %v8863 = vadd.s32 %v8549, 2147483648
        %vm8865 = vcmp.ge.s32.totalorder %v8863, 3865470566
        %v8866 = vadd.s32 %v8550, 2147483648
        %vm8868 = vcmp.ge.s32.totalorder %v8866, 3865470566
        %v8869 = vadd.s32 %v8551, 2147483648
        %vm8871 = vcmp.ge.s32.totalorder %v8869, 3865470566
        %v8872 = vadd.s32 %v8552, 2147483648
        %vm8874 = vcmp.ge.s32.totalorder %v8872, 3865470566
        %v8875 = vadd.s32 %v8553, 2147483648
        %vm8877 = vcmp.ge.s32.totalorder %v8875, 3865470566
        %v8878 = vadd.s32 %v8554, 2147483648
        %vm8880 = vcmp.ge.s32.totalorder %v8878, 3865470566
        %v8881 = vadd.s32 %v8555, 2147483648
        %vm8883 = vcmp.ge.s32.totalorder %v8881, 3865470566
        %v8884 = vadd.s32 %v8556, 2147483648
        %vm8886 = vcmp.ge.s32.totalorder %v8884, 3865470566
        %v8887 = vadd.s32 %v8557, 2147483648
        %vm8889 = vcmp.ge.s32.totalorder %v8887, 3865470566
        %v8890 = vadd.s32 %v8558, 2147483648
        %vm8892 = vcmp.ge.s32.totalorder %v8890, 3865470566
        %v8893 = vadd.s32 %v8559, 2147483648
        %vm8895 = vcmp.ge.s32.totalorder %v8893, 3865470566
        %v8896 = vadd.s32 %v8560, 2147483648
        %vm8898 = vcmp.ge.s32.totalorder %v8896, 3865470566
        %v8899 = vadd.s32 %v8561, 2147483648
        %vm8901 = vcmp.ge.s32.totalorder %v8899, 3865470566
        %v8902 = vadd.s32 %v8562, 2147483648
        %vm8904 = vcmp.ge.s32.totalorder %v8902, 3865470566
        %v8905 = vadd.s32 %v8563, 2147483648
        %vm8907 = vcmp.ge.s32.totalorder %v8905, 3865470566
        %v8908 = vadd.s32 %v8564, 2147483648
        %vm8910 = vcmp.ge.s32.totalorder %v8908, 3865470566
        %v8911 = vadd.s32 %v8565, 2147483648
        %vm8913 = vcmp.ge.s32.totalorder %v8911, 3865470566
        %v8914 = vadd.s32 %v8566, 2147483648
        %vm8916 = vcmp.ge.s32.totalorder %v8914, 3865470566
        %v8917 = vadd.s32 %v8567, 2147483648
        %vm8919 = vcmp.ge.s32.totalorder %v8917, 3865470566
        %v8920 = vadd.s32 %v8568, 2147483648
        %vm8922 = vcmp.ge.s32.totalorder %v8920, 3865470566
        %v8923 = vadd.s32 %v8569, 2147483648
        %vm8925 = vcmp.ge.s32.totalorder %v8923, 3865470566
        %v8926 = vadd.s32 %v8570, 2147483648
        %vm8928 = vcmp.ge.s32.totalorder %v8926, 3865470566
        %v8929 = vadd.s32 %v8571, 2147483648
        %vm8931 = vcmp.ge.s32.totalorder %v8929, 3865470566
        %v8932 = vadd.s32 %v8572, 2147483648
        %vm8934 = vcmp.ge.s32.totalorder %v8932, 3865470566
        %v8935 = vadd.s32 %v8573, 2147483648
        %vm8937 = vcmp.ge.s32.totalorder %v8935, 3865470566
        %v8938 = vadd.s32 %v8574, 2147483648
        %vm8940 = vcmp.ge.s32.totalorder %v8938, 3865470566
        %v8941 = vadd.s32 %v8575, 2147483648
        %vm8943 = vcmp.ge.s32.totalorder %v8941, 3865470566
        %v8944 = vadd.s32 %v8576, 2147483648
        %vm8946 = vcmp.ge.s32.totalorder %v8944, 3865470566
        %v8947 = vadd.s32 %v8577, 2147483648
        %vm8949 = vcmp.ge.s32.totalorder %v8947, 3865470566
        %v8950 = vadd.s32 %v8578, 2147483648
        %vm8952 = vcmp.ge.s32.totalorder %v8950, 3865470566
        %v8953 = vadd.s32 %v8579, 2147483648
        %vm8955 = vcmp.ge.s32.totalorder %v8953, 3865470566
        %v8956 = vadd.s32 %v8580, 2147483648
        %vm8958 = vcmp.ge.s32.totalorder %v8956, 3865470566
        %v8959 = vadd.s32 %v8581, 2147483648
        %vm8961 = vcmp.ge.s32.totalorder %v8959, 3865470566
        %v8962 = vadd.s32 %v8582, 2147483648
        %vm8964 = vcmp.ge.s32.totalorder %v8962, 3865470566
        %v8965 = vadd.s32 %v8583, 2147483648
        %vm8967 = vcmp.ge.s32.totalorder %v8965, 3865470566
        %v8968 = vadd.s32 %v8584, 2147483648
        %vm8970 = vcmp.ge.s32.totalorder %v8968, 3865470566
        %v8971 = vadd.s32 %v8585, 2147483648
        %vm8973 = vcmp.ge.s32.totalorder %v8971, 3865470566
        %v8974 = vadd.s32 %v8586, 2147483648
        %vm8976 = vcmp.ge.s32.totalorder %v8974, 3865470566
        %v8977 = vadd.s32 %v8587, 2147483648
        %vm8979 = vcmp.ge.s32.totalorder %v8977, 3865470566
        %v8980 = vadd.s32 %v8588, 2147483648
        %vm8982 = vcmp.ge.s32.totalorder %v8980, 3865470566
        %v8983 = vadd.s32 %v8589, 2147483648
        %vm8985 = vcmp.ge.s32.totalorder %v8983, 3865470566
        %v8986 = vadd.s32 %v8590, 2147483648
        %vm8988 = vcmp.ge.s32.totalorder %v8986, 3865470566
        %v8989 = vadd.s32 %v8591, 2147483648
        %vm8991 = vcmp.ge.s32.totalorder %v8989, 3865470566
        %v8992 = vadd.s32 %v8592, 2147483648
        %vm8994 = vcmp.ge.s32.totalorder %v8992, 3865470566
        %v8995 = vadd.s32 %v8593, 2147483648
        %vm8997 = vcmp.ge.s32.totalorder %v8995, 3865470566
        %v8998 = vadd.s32 %v8594, 2147483648
        %vm9000 = vcmp.ge.s32.totalorder %v8998, 3865470566
        %v9001 = vadd.s32 %v8595, 2147483648
        %vm9003 = vcmp.ge.s32.totalorder %v9001, 3865470566
        %v9004 = vadd.s32 %v8596, 2147483648
        %vm9006 = vcmp.ge.s32.totalorder %v9004, 3865470566
        %v9007 = vadd.s32 %v8597, 2147483648
        %vm9009 = vcmp.ge.s32.totalorder %v9007, 3865470566
        %v9010 = vadd.s32 %v8598, 2147483648
        %vm9012 = vcmp.ge.s32.totalorder %v9010, 3865470566
        %v9013 = vadd.s32 %v8599, 2147483648
        %vm9015 = vcmp.ge.s32.totalorder %v9013, 3865470566
        %v9016 = vadd.s32 %v8600, 2147483648
        %vm9018 = vcmp.ge.s32.totalorder %v9016, 3865470566
        %v9019 = vadd.s32 %v8601, 2147483648
        %vm9021 = vcmp.ge.s32.totalorder %v9019, 3865470566
        %v9022 = vadd.s32 %v8602, 2147483648
        %vm9024 = vcmp.ge.s32.totalorder %v9022, 3865470566
        %v9025 = vadd.s32 %v8603, 2147483648
        %vm9027 = vcmp.ge.s32.totalorder %v9025, 3865470566
        %v9028 = vadd.s32 %v8604, 2147483648
        %vm9030 = vcmp.ge.s32.totalorder %v9028, 3865470566
        %v9031 = vadd.s32 %v8605, 2147483648
        %vm9033 = vcmp.ge.s32.totalorder %v9031, 3865470566
        %v9034 = vadd.s32 %v8606, 2147483648
        %vm9036 = vcmp.ge.s32.totalorder %v9034, 3865470566
        %v9037 = vadd.s32 %v8607, 2147483648
        %vm9039 = vcmp.ge.s32.totalorder %v9037, 3865470566
        %v9040 = vadd.s32 %v8608, 2147483648
        %vm9042 = vcmp.ge.s32.totalorder %v9040, 3865470566
        %v9043 = vadd.s32 %v8609, 2147483648
        %vm9045 = vcmp.ge.s32.totalorder %v9043, 3865470566
        %v9046 = vadd.s32 %v8610, 2147483648
        %vm9048 = vcmp.ge.s32.totalorder %v9046, 3865470566
        %v9049 = vadd.s32 %v8611, 2147483648
        %vm9051 = vcmp.ge.s32.totalorder %v9049, 3865470566
        %v9052 = vadd.s32 %v8612, 2147483648
        %vm9054 = vcmp.ge.s32.totalorder %v9052, 3865470566
        %v9055 = vadd.s32 %v8613, 2147483648
        %vm9057 = vcmp.ge.s32.totalorder %v9055, 3865470566
        %v9058 = vadd.s32 %v8614, 2147483648
        %vm9060 = vcmp.ge.s32.totalorder %v9058, 3865470566
        %v9061 = vadd.s32 %v8615, 2147483648
        %vm9063 = vcmp.ge.s32.totalorder %v9061, 3865470566
        %v9064 = vadd.s32 %v8616, 2147483648
        %vm9066 = vcmp.ge.s32.totalorder %v9064, 3865470566
        %v9067 = vadd.s32 %v8617, 2147483648
        %vm9069 = vcmp.ge.s32.totalorder %v9067, 3865470566
        %v9070 = vadd.s32 %v8618, 2147483648
        %vm9072 = vcmp.ge.s32.totalorder %v9070, 3865470566
        %v9073 = vadd.s32 %v8619, 2147483648
        %vm9075 = vcmp.ge.s32.totalorder %v9073, 3865470566
        %v9076 = vadd.s32 %v8620, 2147483648
        %vm9078 = vcmp.ge.s32.totalorder %v9076, 3865470566
        %v9079 = vadd.s32 %v8621, 2147483648
        %vm9081 = vcmp.ge.s32.totalorder %v9079, 3865470566
        %v9082 = vadd.s32 %v8622, 2147483648
        %vm9084 = vcmp.ge.s32.totalorder %v9082, 3865470566
        %v9085 = vadd.s32 %v8623, 2147483648
        %vm9087 = vcmp.ge.s32.totalorder %v9085, 3865470566
        %v9088 = vadd.s32 %v8624, 2147483648
        %vm9090 = vcmp.ge.s32.totalorder %v9088, 3865470566
        %v9091 = vadd.s32 %v8625, 2147483648
        %vm9093 = vcmp.ge.s32.totalorder %v9091, 3865470566
        %v9094 = vadd.s32 %v8626, 2147483648
        %vm9096 = vcmp.ge.s32.totalorder %v9094, 3865470566
        %v9097 = vadd.s32 %v8627, 2147483648
        %vm9099 = vcmp.ge.s32.totalorder %v9097, 3865470566
        %v9100 = vadd.s32 %v8628, 2147483648
        %vm9102 = vcmp.ge.s32.totalorder %v9100, 3865470566
        %v9103 = vadd.s32 %v8629, 2147483648
        %vm9105 = vcmp.ge.s32.totalorder %v9103, 3865470566
        %v9106 = vadd.s32 %v8630, 2147483648
        %vm9108 = vcmp.ge.s32.totalorder %v9106, 3865470566
        %v9109 = vadd.s32 %v8631, 2147483648
        %vm9111 = vcmp.ge.s32.totalorder %v9109, 3865470566
        %v9112 = vadd.s32 %v8632, 2147483648
        %vm9114 = vcmp.ge.s32.totalorder %v9112, 3865470566
        %v9115 = vadd.s32 %v8633, 2147483648
        %vm9117 = vcmp.ge.s32.totalorder %v9115, 3865470566
        %v9118 = vadd.s32 %v8634, 2147483648
        %vm9120 = vcmp.ge.s32.totalorder %v9118, 3865470566
        %v9121 = vadd.s32 %v8635, 2147483648
        %vm9123 = vcmp.ge.s32.totalorder %v9121, 3865470566
        %v9124 = vadd.s32 %v8636, 2147483648
        %vm9126 = vcmp.ge.s32.totalorder %v9124, 3865470566
        %v9127 = vadd.s32 %v8637, 2147483648
        %vm9129 = vcmp.ge.s32.totalorder %v9127, 3865470566
        %v9130 = vadd.s32 %v8638, 2147483648
        %vm9132 = vcmp.ge.s32.totalorder %v9130, 3865470566
        %v9133 = vadd.s32 %v8639, 2147483648
        %vm9135 = vcmp.ge.s32.totalorder %v9133, 3865470566
        %v9136 = vadd.s32 %v8640, 2147483648
        %vm9138 = vcmp.ge.s32.totalorder %v9136, 3865470566
        %v9139 = vadd.s32 %v8641, 2147483648
        %vm9141 = vcmp.ge.s32.totalorder %v9139, 3865470566
        %v9142 = vadd.s32 %v8642, 2147483648
        %vm9144 = vcmp.ge.s32.totalorder %v9142, 3865470566
        %v9145 = vadd.s32 %v8643, 2147483648
        %vm9147 = vcmp.ge.s32.totalorder %v9145, 3865470566
        %v9148 = vadd.s32 %v8644, 2147483648
        %vm9150 = vcmp.ge.s32.totalorder %v9148, 3865470566
        %v9151 = vadd.s32 %v8645, 2147483648
        %vm9153 = vcmp.ge.s32.totalorder %v9151, 3865470566
        %v9154 = vadd.s32 %v8646, 2147483648
        %vm9156 = vcmp.ge.s32.totalorder %v9154, 3865470566
        %v9157 = vadd.s32 %v8647, 2147483648
        %vm9159 = vcmp.ge.s32.totalorder %v9157, 3865470566
        %v9160 = vadd.s32 %v8648, 2147483648
        %vm9162 = vcmp.ge.s32.totalorder %v9160, 3865470566
        %v9163 = vadd.s32 %v8649, 2147483648
        %vm9165 = vcmp.ge.s32.totalorder %v9163, 3865470566
        %v9166 = vadd.s32 %v8650, 2147483648
        %vm9168 = vcmp.ge.s32.totalorder %v9166, 3865470566
        %v9169 = vadd.s32 %v8651, 2147483648
        %vm9171 = vcmp.ge.s32.totalorder %v9169, 3865470566
        %v9172 = vadd.s32 %v8652, 2147483648
        %vm9174 = vcmp.ge.s32.totalorder %v9172, 3865470566
        %v9175 = vadd.s32 %v8653, 2147483648
        %vm9177 = vcmp.ge.s32.totalorder %v9175, 3865470566
        %v9178 = vadd.s32 %v8654, 2147483648
        %vm9180 = vcmp.ge.s32.totalorder %v9178, 3865470566
        %v9181 = vadd.s32 %v8655, 2147483648
        %vm9183 = vcmp.ge.s32.totalorder %v9181, 3865470566
        %v9184 = vadd.s32 %v8656, 2147483648
        %vm9186 = vcmp.ge.s32.totalorder %v9184, 3865470566
        %v9187 = vadd.s32 %v8657, 2147483648
        %vm9189 = vcmp.ge.s32.totalorder %v9187, 3865470566
        %v9190 = vadd.s32 %v8658, 2147483648
        %vm9192 = vcmp.ge.s32.totalorder %v9190, 3865470566
        %v9193 = vadd.s32 %v8659, 2147483648
        %vm9195 = vcmp.ge.s32.totalorder %v9193, 3865470566
        %v9196 = vadd.s32 %v8660, 2147483648
        %vm9198 = vcmp.ge.s32.totalorder %v9196, 3865470566
        %v9199 = vadd.s32 %v8661, 2147483648
        %vm9201 = vcmp.ge.s32.totalorder %v9199, 3865470566
        %v9202 = vadd.s32 %v8662, 2147483648
        %vm9204 = vcmp.ge.s32.totalorder %v9202, 3865470566
        %v9205 = vadd.s32 %v8663, 2147483648
        %vm9207 = vcmp.ge.s32.totalorder %v9205, 3865470566
        %v9208 = vadd.s32 %v8664, 2147483648
        %vm9210 = vcmp.ge.s32.totalorder %v9208, 3865470566
        %v9211 = vadd.s32 %v8665, 2147483648
        %vm9213 = vcmp.ge.s32.totalorder %v9211, 3865470566
        %v9214 = vadd.s32 %v8666, 2147483648
        %vm9216 = vcmp.ge.s32.totalorder %v9214, 3865470566
        %v9217 = vadd.s32 %v8667, 2147483648
        %vm9219 = vcmp.ge.s32.totalorder %v9217, 3865470566
        %v9220 = vadd.s32 %v8668, 2147483648
        %vm9222 = vcmp.ge.s32.totalorder %v9220, 3865470566
        %v9223 = vadd.s32 %v8669, 2147483648
        %vm9225 = vcmp.ge.s32.totalorder %v9223, 3865470566
        %v9226 = vadd.s32 %v8670, 2147483648
        %vm9228 = vcmp.ge.s32.totalorder %v9226, 3865470566
        %v9229 = vadd.s32 %v8671, 2147483648
        %vm9231 = vcmp.ge.s32.totalorder %v9229, 3865470566
        %v9232 = vadd.s32 %v8672, 2147483648
        %vm9234 = vcmp.ge.s32.totalorder %v9232, 3865470566
        %v9235 = vadd.s32 %v8673, 2147483648
        %vm9237 = vcmp.ge.s32.totalorder %v9235, 3865470566
        %v9238 = vadd.s32 %v8674, 2147483648
        %vm9240 = vcmp.ge.s32.totalorder %v9238, 3865470566
        %v9241 = vadd.s32 %v8675, 2147483648
        %vm9243 = vcmp.ge.s32.totalorder %v9241, 3865470566
        %v9244 = vadd.s32 %v8676, 2147483648
        %vm9246 = vcmp.ge.s32.totalorder %v9244, 3865470566
        %v9247 = vadd.s32 %v8677, 2147483648
        %vm9249 = vcmp.ge.s32.totalorder %v9247, 3865470566
        %v9250 = vadd.s32 %v8678, 2147483648
        %vm9252 = vcmp.ge.s32.totalorder %v9250, 3865470566
        %v9253 = vadd.s32 %v8679, 2147483648
        %vm9255 = vcmp.ge.s32.totalorder %v9253, 3865470566
        %v9256 = vadd.s32 %v8680, 2147483648
        %vm9258 = vcmp.ge.s32.totalorder %v9256, 3865470566
        %v9259 = vadd.s32 %v8681, 2147483648
        %vm9261 = vcmp.ge.s32.totalorder %v9259, 3865470566
        %v9262 = vadd.s32 %v8682, 2147483648
        %vm9264 = vcmp.ge.s32.totalorder %v9262, 3865470566
        %v9265 = vadd.s32 %v8683, 2147483648
        %vm9267 = vcmp.ge.s32.totalorder %v9265, 3865470566
        %v9268 = vadd.s32 %v8684, 2147483648
        %vm9270 = vcmp.ge.s32.totalorder %v9268, 3865470566
        %v9271 = vadd.s32 %v8685, 2147483648
        %vm9273 = vcmp.ge.s32.totalorder %v9271, 3865470566
        %v9274 = vadd.s32 %v8686, 2147483648
        %vm9276 = vcmp.ge.s32.totalorder %v9274, 3865470566
        %v9277 = vadd.s32 %v8687, 2147483648
        %vm9279 = vcmp.ge.s32.totalorder %v9277, 3865470566
        %v9280 = vadd.s32 %v8688, 2147483648
        %vm9282 = vcmp.ge.s32.totalorder %v9280, 3865470566
        %v9283 = vadd.s32 %v8689, 2147483648
        %vm9285 = vcmp.ge.s32.totalorder %v9283, 3865470566
        %v9286 = vadd.s32 %v8690, 2147483648
        %vm9288 = vcmp.ge.s32.totalorder %v9286, 3865470566
        %v9289 = vadd.s32 %v8691, 2147483648
        %vm9291 = vcmp.ge.s32.totalorder %v9289, 3865470566
        %v9292 = vadd.s32 %v8692, 2147483648
        %vm9294 = vcmp.ge.s32.totalorder %v9292, 3865470566
        %v9295 = vadd.s32 %v8693, 2147483648
        %vm9297 = vcmp.ge.s32.totalorder %v9295, 3865470566
        %v9298 = vadd.s32 %v8694, 2147483648
        %vm9300 = vcmp.ge.s32.totalorder %v9298, 3865470566
        %v9301 = vadd.s32 %v8695, 2147483648
        %vm9303 = vcmp.ge.s32.totalorder %v9301, 3865470566
        %v9304 = vadd.s32 %v8696, 2147483648
        %vm9306 = vcmp.ge.s32.totalorder %v9304, 3865470566
        %v9307 = vadd.s32 %v8697, 2147483648
        %vm9309 = vcmp.ge.s32.totalorder %v9307, 3865470566
        %v9310 = vadd.s32 %v8698, 2147483648
        %vm9312 = vcmp.ge.s32.totalorder %v9310, 3865470566
        %v9313 = vadd.s32 %v8699, 2147483648
        %vm9315 = vcmp.ge.s32.totalorder %v9313, 3865470566
        %v9316 = vadd.s32 %v8700, 2147483648
        %vm9318 = vcmp.ge.s32.totalorder %v9316, 3865470566
        %v9319 = vadd.s32 %v8701, 2147483648
        %vm9321 = vcmp.ge.s32.totalorder %v9319, 3865470566
        %v9322 = vadd.s32 %v8702, 2147483648
        %vm9324 = vcmp.ge.s32.totalorder %v9322, 3865470566
        %v9325 = vadd.s32 %v8703, 2147483648
        %vm9327 = vcmp.ge.s32.totalorder %v9325, 3865470566
        %v9328 = vadd.s32 %v8704, 2147483648
        %vm9330 = vcmp.ge.s32.totalorder %v9328, 3865470566
        %v9331 = vadd.s32 %v8705, 2147483648
        %vm9333 = vcmp.ge.s32.totalorder %v9331, 3865470566
        %v9334 = vadd.s32 %v8706, 2147483648
        %vm9336 = vcmp.ge.s32.totalorder %v9334, 3865470566
        %v9337 = vadd.s32 %v8707, 2147483648
        %vm9339 = vcmp.ge.s32.totalorder %v9337, 3865470566
        %v9340 = vadd.s32 %v8708, 2147483648
        %vm9342 = vcmp.ge.s32.totalorder %v9340, 3865470566
        %v9343 = vadd.s32 %v8709, 2147483648
        %vm9345 = vcmp.ge.s32.totalorder %v9343, 3865470566
        %v9346 = vadd.s32 %v8710, 2147483648
        %vm9348 = vcmp.ge.s32.totalorder %v9346, 3865470566
        %v9349 = vadd.s32 %v8711, 2147483648
        %vm9351 = vcmp.ge.s32.totalorder %v9349, 3865470566
        %v9352 = vadd.s32 %v8712, 2147483648
        %vm9354 = vcmp.ge.s32.totalorder %v9352, 3865470566
        %v9355 = vadd.s32 %v8713, 2147483648
        %vm9357 = vcmp.ge.s32.totalorder %v9355, 3865470566
        %v9358 = vadd.s32 %v8714, 2147483648
        %vm9360 = vcmp.ge.s32.totalorder %v9358, 3865470566
        %v9361 = vadd.s32 %v8715, 2147483648
        %vm9363 = vcmp.ge.s32.totalorder %v9361, 3865470566
        %v9364 = vadd.s32 %v8716, 2147483648
        %vm9366 = vcmp.ge.s32.totalorder %v9364, 3865470566
        %v9367 = vadd.s32 %v8717, 2147483648
        %vm9369 = vcmp.ge.s32.totalorder %v9367, 3865470566
        %v9370 = vadd.s32 %v8718, 2147483648
        %vm9372 = vcmp.ge.s32.totalorder %v9370, 3865470566
        %v9373 = vadd.s32 %v8719, 2147483648
        %vm9375 = vcmp.ge.s32.totalorder %v9373, 3865470566
        %v9376 = vadd.s32 %v8720, 2147483648
        %vm9378 = vcmp.ge.s32.totalorder %v9376, 3865470566
        %v9379 = vadd.s32 %v8721, 2147483648
        %vm9381 = vcmp.ge.s32.totalorder %v9379, 3865470566
        %v9382 = vadd.s32 %v8722, 2147483648
        %vm9384 = vcmp.ge.s32.totalorder %v9382, 3865470566
        %v9385 = vadd.s32 %v8723, 2147483648
        %vm9387 = vcmp.ge.s32.totalorder %v9385, 3865470566
        %v9388 = vadd.s32 %v8724, 2147483648
        %vm9390 = vcmp.ge.s32.totalorder %v9388, 3865470566
        %v9391 = vadd.s32 %v8725, 2147483648
        %vm9393 = vcmp.ge.s32.totalorder %v9391, 3865470566
        %v9394 = vadd.s32 %v8726, 2147483648
        %vm9396 = vcmp.ge.s32.totalorder %v9394, 3865470566
        %v9397 = vadd.s32 %v8727, 2147483648
        %vm9399 = vcmp.ge.s32.totalorder %v9397, 3865470566
        %v9400 = vadd.s32 %v8728, 2147483648
        %vm9402 = vcmp.ge.s32.totalorder %v9400, 3865470566
        %v9403 = vadd.s32 %v8729, 2147483648
        %vm9405 = vcmp.ge.s32.totalorder %v9403, 3865470566
        %v9406 = vadd.s32 %v8730, 2147483648
        %vm9408 = vcmp.ge.s32.totalorder %v9406, 3865470566
        %v9409 = vadd.s32 %v8731, 2147483648
        %vm9411 = vcmp.ge.s32.totalorder %v9409, 3865470566
        %v9412 = vadd.s32 %v8732, 2147483648
        %vm9414 = vcmp.ge.s32.totalorder %v9412, 3865470566
        %v9415 = vadd.s32 %v8733, 2147483648
        %vm9417 = vcmp.ge.s32.totalorder %v9415, 3865470566
        %v9418 = vadd.s32 %v8734, 2147483648
        %vm9420 = vcmp.ge.s32.totalorder %v9418, 3865470566
        %v9421 = vadd.s32 %v8735, 2147483648
        %vm9423 = vcmp.ge.s32.totalorder %v9421, 3865470566
        %v9424 = vadd.s32 %v8736, 2147483648
        %vm9426 = vcmp.ge.s32.totalorder %v9424, 3865470566
        %v9427 = vadd.s32 %v8737, 2147483648
        %vm9429 = vcmp.ge.s32.totalorder %v9427, 3865470566
        %v9430 = vadd.s32 %v8738, 2147483648
        %vm9432 = vcmp.ge.s32.totalorder %v9430, 3865470566
        %v9433 = vadd.s32 %v8739, 2147483648
        %vm9435 = vcmp.ge.s32.totalorder %v9433, 3865470566
        %v9436 = vadd.s32 %v8740, 2147483648
        %vm9438 = vcmp.ge.s32.totalorder %v9436, 3865470566
        %v9439 = vadd.s32 %v8741, 2147483648
        %vm9441 = vcmp.ge.s32.totalorder %v9439, 3865470566
        %v9442 = vadd.s32 %v8742, 2147483648
        %vm9444 = vcmp.ge.s32.totalorder %v9442, 3865470566
        %v9445 = vadd.s32 %v8743, 2147483648
        %vm9447 = vcmp.ge.s32.totalorder %v9445, 3865470566
        %v9448 = vadd.s32 %v8744, 2147483648
        %vm9450 = vcmp.ge.s32.totalorder %v9448, 3865470566
        %v9451 = vadd.s32 %v8745, 2147483648
        %vm9453 = vcmp.ge.s32.totalorder %v9451, 3865470566
        %v9454 = vadd.s32 %v8746, 2147483648
        %vm9456 = vcmp.ge.s32.totalorder %v9454, 3865470566
        %v9457 = vadd.s32 %v8747, 2147483648
        %vm9459 = vcmp.ge.s32.totalorder %v9457, 3865470566
        %v9460 = vadd.s32 %v8748, 2147483648
        %vm9462 = vcmp.ge.s32.totalorder %v9460, 3865470566
        %v9463 = vadd.s32 %v8749, 2147483648
        %vm9465 = vcmp.ge.s32.totalorder %v9463, 3865470566
        %v9466 = vadd.s32 %v8750, 2147483648
        %vm9468 = vcmp.ge.s32.totalorder %v9466, 3865470566
        %v9469 = vadd.s32 %v8751, 2147483648
        %vm9471 = vcmp.ge.s32.totalorder %v9469, 3865470566
        %v9472 = vadd.s32 %v8752, 2147483648
        %vm9474 = vcmp.ge.s32.totalorder %v9472, 3865470566
        %v9475 = vadd.s32 %v8753, 2147483648
        %vm9477 = vcmp.ge.s32.totalorder %v9475, 3865470566
        %v9478 = vadd.s32 %v8754, 2147483648
        %vm9480 = vcmp.ge.s32.totalorder %v9478, 3865470566
        %v9481 = vadd.s32 %v8755, 2147483648
        %vm9483 = vcmp.ge.s32.totalorder %v9481, 3865470566
        %v9484 = vadd.s32 %v8756, 2147483648
        %vm9486 = vcmp.ge.s32.totalorder %v9484, 3865470566
        %v9487 = vadd.s32 %v8757, 2147483648
        %vm9489 = vcmp.ge.s32.totalorder %v9487, 3865470566
        %v9490 = vadd.s32 %v8758, 2147483648
        %vm9492 = vcmp.ge.s32.totalorder %v9490, 3865470566
        %v9493 = vadd.s32 %v8759, 2147483648
        %vm9495 = vcmp.ge.s32.totalorder %v9493, 3865470566
        %v9496 = vadd.s32 %v8760, 2147483648
        %vm9498 = vcmp.ge.s32.totalorder %v9496, 3865470566
        %v9499 = vadd.s32 %v8761, 2147483648
        %vm9501 = vcmp.ge.s32.totalorder %v9499, 3865470566
        %v9502 = vadd.s32 %v8762, 2147483648
        %vm9504 = vcmp.ge.s32.totalorder %v9502, 3865470566
        %v9505 = vadd.s32 %v8763, 2147483648
        %vm9507 = vcmp.ge.s32.totalorder %v9505, 3865470566
        %v9508 = vadd.s32 %v8764, 2147483648
        %vm9510 = vcmp.ge.s32.totalorder %v9508, 3865470566
        %v9511 = vadd.s32 %v8765, 2147483648
        %vm9513 = vcmp.ge.s32.totalorder %v9511, 3865470566
        %v9514 = vadd.s32 %v8766, 2147483648
        %vm9516 = vcmp.ge.s32.totalorder %v9514, 3865470566
        %v9517 = vadd.s32 %v8767, 2147483648
        %vm9519 = vcmp.ge.s32.totalorder %v9517, 3865470566
        %v9520 = vadd.s32 %v8768, 2147483648
        %vm9522 = vcmp.ge.s32.totalorder %v9520, 3865470566
        %v9523 = vadd.s32 %v8769, 2147483648
        %vm9525 = vcmp.ge.s32.totalorder %v9523, 3865470566
        %v9526 = vadd.s32 %v8770, 2147483648
        %vm9528 = vcmp.ge.s32.totalorder %v9526, 3865470566
        %v9529 = vadd.s32 %v8771, 2147483648
        %vm9531 = vcmp.ge.s32.totalorder %v9529, 3865470566
        %v9532 = vadd.s32 %v8772, 2147483648
        %vm9534 = vcmp.ge.s32.totalorder %v9532, 3865470566
        %v9535 = vadd.s32 %v8773, 2147483648
        %vm9537 = vcmp.ge.s32.totalorder %v9535, 3865470566
        %v9538 = vadd.s32 %v8774, 2147483648
        %vm9540 = vcmp.ge.s32.totalorder %v9538, 3865470566
        %v9541 = vadd.s32 %v8775, 2147483648
        %vm9543 = vcmp.ge.s32.totalorder %v9541, 3865470566
        %v9544 = vpack.c.bf16 %v4983, %v4627
        %v9545 = vpack.c.bf16 %v5695, %v5339
        %v9546 = vpack.c.bf16 %v6407, %v6051
        %v9547 = vpack.c.bf16 %v7119, %v6763
        %v9548 = vpack.c.bf16 %v4985, %v4629
        %v9549 = vpack.c.bf16 %v5697, %v5341
        %v9550 = vpack.c.bf16 %v6409, %v6053
        %v9551 = vpack.c.bf16 %v7121, %v6765
        %v9552 = vpack.c.bf16 %v4988, %v4632
        %v9553 = vpack.c.bf16 %v5700, %v5344
        %v9554 = vpack.c.bf16 %v6412, %v6056
        %v9555 = vpack.c.bf16 %v7124, %v6768
        %v9556 = vpack.c.bf16 %v4990, %v4634
        %v9557 = vpack.c.bf16 %v5702, %v5346
        %v9558 = vpack.c.bf16 %v6414, %v6058
        %v9559 = vpack.c.bf16 %v7126, %v6770
        %v9560 = vpack.c.bf16 %v4993, %v4637
        %v9561 = vpack.c.bf16 %v5705, %v5349
        %v9562 = vpack.c.bf16 %v6417, %v6061
        %v9563 = vpack.c.bf16 %v7129, %v6773
        %v9564 = vpack.c.bf16 %v4995, %v4639
        %v9565 = vpack.c.bf16 %v5707, %v5351
        %v9566 = vpack.c.bf16 %v6419, %v6063
        %v9567 = vpack.c.bf16 %v7131, %v6775
        %v9568 = vpack.c.bf16 %v4998, %v4642
        %v9569 = vpack.c.bf16 %v5710, %v5354
        %v9570 = vpack.c.bf16 %v6422, %v6066
        %v9571 = vpack.c.bf16 %v7134, %v6778
        %v9572 = vpack.c.bf16 %v5000, %v4644
        %v9573 = vpack.c.bf16 %v5712, %v5356
        %v9574 = vpack.c.bf16 %v6424, %v6068
        %v9575 = vpack.c.bf16 %v7136, %v6780
        %v9576 = vpack.c.bf16 %v5003, %v4647
        %v9577 = vpack.c.bf16 %v5715, %v5359
        %v9578 = vpack.c.bf16 %v6427, %v6071
        %v9579 = vpack.c.bf16 %v7139, %v6783
        %v9580 = vpack.c.bf16 %v5005, %v4649
        %v9581 = vpack.c.bf16 %v5717, %v5361
        %v9582 = vpack.c.bf16 %v6429, %v6073
        %v9583 = vpack.c.bf16 %v7141, %v6785
        %v9584 = vpack.c.bf16 %v5008, %v4652
        %v9585 = vpack.c.bf16 %v5720, %v5364
        %v9586 = vpack.c.bf16 %v6432, %v6076
        %v9587 = vpack.c.bf16 %v7144, %v6788
        %v9588 = vpack.c.bf16 %v5010, %v4654
        %v9589 = vpack.c.bf16 %v5722, %v5366
        %v9590 = vpack.c.bf16 %v6434, %v6078
        %v9591 = vpack.c.bf16 %v7146, %v6790
        %v9592 = vpack.c.bf16 %v5013, %v4657
        %v9593 = vpack.c.bf16 %v5725, %v5369
        %v9594 = vpack.c.bf16 %v6437, %v6081
        %v9595 = vpack.c.bf16 %v7149, %v6793
        %v9596 = vpack.c.bf16 %v5015, %v4659
        %v9597 = vpack.c.bf16 %v5727, %v5371
        %v9598 = vpack.c.bf16 %v6439, %v6083
        %v9599 = vpack.c.bf16 %v7151, %v6795
        %v9600 = vpack.c.bf16 %v5018, %v4662
        %v9601 = vpack.c.bf16 %v5730, %v5374
        %v9602 = vpack.c.bf16 %v6442, %v6086
        %v9603 = vpack.c.bf16 %v7154, %v6798
        %v9604 = vpack.c.bf16 %v5020, %v4664
        %v9605 = vpack.c.bf16 %v5732, %v5376
        %v9606 = vpack.c.bf16 %v6444, %v6088
        %v9607 = vpack.c.bf16 %v7156, %v6800
        %v9608 = vpack.c.bf16 %v5023, %v4667
        %v9609 = vpack.c.bf16 %v5735, %v5379
        %v9610 = vpack.c.bf16 %v6447, %v6091
        %v9611 = vpack.c.bf16 %v7159, %v6803
        %v9612 = vpack.c.bf16 %v5025, %v4669
        %v9613 = vpack.c.bf16 %v5737, %v5381
        %v9614 = vpack.c.bf16 %v6449, %v6093
        %v9615 = vpack.c.bf16 %v7161, %v6805
        %v9616 = vpack.c.bf16 %v5028, %v4672
        %v9617 = vpack.c.bf16 %v5740, %v5384
        %v9618 = vpack.c.bf16 %v6452, %v6096
        %v9619 = vpack.c.bf16 %v7164, %v6808
        %v9620 = vpack.c.bf16 %v5030, %v4674
        %v9621 = vpack.c.bf16 %v5742, %v5386
        %v9622 = vpack.c.bf16 %v6454, %v6098
        %v9623 = vpack.c.bf16 %v7166, %v6810
        %v9624 = vpack.c.bf16 %v5033, %v4677
        %v9625 = vpack.c.bf16 %v5745, %v5389
        %v9626 = vpack.c.bf16 %v6457, %v6101
        %v9627 = vpack.c.bf16 %v7169, %v6813
        %v9628 = vpack.c.bf16 %v5035, %v4679
        %v9629 = vpack.c.bf16 %v5747, %v5391
        %v9630 = vpack.c.bf16 %v6459, %v6103
        %v9631 = vpack.c.bf16 %v7171, %v6815
        %v9632 = vpack.c.bf16 %v5038, %v4682
        %v9633 = vpack.c.bf16 %v5750, %v5394
        %v9634 = vpack.c.bf16 %v6462, %v6106
        %v9635 = vpack.c.bf16 %v7174, %v6818
        %v9636 = vpack.c.bf16 %v5040, %v4684
        %v9637 = vpack.c.bf16 %v5752, %v5396
        %v9638 = vpack.c.bf16 %v6464, %v6108
        %v9639 = vpack.c.bf16 %v7176, %v6820
        %v9640 = vpack.c.bf16 %v5043, %v4687
        %v9641 = vpack.c.bf16 %v5755, %v5399
        %v9642 = vpack.c.bf16 %v6467, %v6111
        %v9643 = vpack.c.bf16 %v7179, %v6823
        %v9644 = vpack.c.bf16 %v5045, %v4689
        %v9645 = vpack.c.bf16 %v5757, %v5401
        %v9646 = vpack.c.bf16 %v6469, %v6113
        %v9647 = vpack.c.bf16 %v7181, %v6825
        %v9648 = vpack.c.bf16 %v5048, %v4692
        %v9649 = vpack.c.bf16 %v5760, %v5404
        %v9650 = vpack.c.bf16 %v6472, %v6116
        %v9651 = vpack.c.bf16 %v7184, %v6828
        %v9652 = vpack.c.bf16 %v5050, %v4694
        %v9653 = vpack.c.bf16 %v5762, %v5406
        %v9654 = vpack.c.bf16 %v6474, %v6118
        %v9655 = vpack.c.bf16 %v7186, %v6830
        %v9656 = vpack.c.bf16 %v5053, %v4697
        %v9657 = vpack.c.bf16 %v5765, %v5409
        %v9658 = vpack.c.bf16 %v6477, %v6121
        %v9659 = vpack.c.bf16 %v7189, %v6833
        %v9660 = vpack.c.bf16 %v5055, %v4699
        %v9661 = vpack.c.bf16 %v5767, %v5411
        %v9662 = vpack.c.bf16 %v6479, %v6123
        %v9663 = vpack.c.bf16 %v7191, %v6835
        %v9664 = vpack.c.bf16 %v5058, %v4702
        %v9665 = vpack.c.bf16 %v5770, %v5414
        %v9666 = vpack.c.bf16 %v6482, %v6126
        %v9667 = vpack.c.bf16 %v7194, %v6838
        %v9668 = vpack.c.bf16 %v5060, %v4704
        %v9669 = vpack.c.bf16 %v5772, %v5416
        %v9670 = vpack.c.bf16 %v6484, %v6128
        %v9671 = vpack.c.bf16 %v7196, %v6840
        %vm9672 = vmpackc.low %vm8781, %vm8778
        %vm9673 = vmpackc.low %vm8787, %vm8784
        %vm9674 = vmpackc.low %vm8793, %vm8790
        %vm9675 = vmpackc.low %vm8799, %vm8796
        %vm9676 = vmpackc.low %vm8805, %vm8802
        %vm9677 = vmpackc.low %vm8811, %vm8808
        %vm9678 = vmpackc.low %vm8817, %vm8814
        %vm9679 = vmpackc.low %vm8823, %vm8820
        %vm9680 = vmpackc.low %vm8829, %vm8826
        %vm9681 = vmpackc.low %vm8835, %vm8832
        %vm9682 = vmpackc.low %vm8841, %vm8838
        %vm9683 = vmpackc.low %vm8847, %vm8844
        %vm9684 = vmpackc.low %vm8853, %vm8850
        %vm9685 = vmpackc.low %vm8859, %vm8856
        %vm9686 = vmpackc.low %vm8865, %vm8862
        %vm9687 = vmpackc.low %vm8871, %vm8868
        %vm9688 = vmpackc.low %vm8877, %vm8874
        %vm9689 = vmpackc.low %vm8883, %vm8880
        %vm9690 = vmpackc.low %vm8889, %vm8886
        %vm9691 = vmpackc.low %vm8895, %vm8892
        %vm9692 = vmpackc.low %vm8901, %vm8898
        %vm9693 = vmpackc.low %vm8907, %vm8904
        %vm9694 = vmpackc.low %vm8913, %vm8910
        %vm9695 = vmpackc.low %vm8919, %vm8916
        %vm9696 = vmpackc.low %vm8925, %vm8922
        %vm9697 = vmpackc.low %vm8931, %vm8928
        %vm9698 = vmpackc.low %vm8937, %vm8934
        %vm9699 = vmpackc.low %vm8943, %vm8940
        %vm9700 = vmpackc.low %vm8949, %vm8946
        %vm9701 = vmpackc.low %vm8955, %vm8952
        %vm9702 = vmpackc.low %vm8961, %vm8958
        %vm9703 = vmpackc.low %vm8967, %vm8964
        %vm9704 = vmpackc.low %vm8973, %vm8970
        %vm9705 = vmpackc.low %vm8979, %vm8976
        %vm9706 = vmpackc.low %vm8985, %vm8982
        %vm9707 = vmpackc.low %vm8991, %vm8988
        %vm9708 = vmpackc.low %vm8997, %vm8994
        %vm9709 = vmpackc.low %vm9003, %vm9000
        %vm9710 = vmpackc.low %vm9009, %vm9006
        %vm9711 = vmpackc.low %vm9015, %vm9012
        %vm9712 = vmpackc.low %vm9021, %vm9018
        %vm9713 = vmpackc.low %vm9027, %vm9024
        %vm9714 = vmpackc.low %vm9033, %vm9030
        %vm9715 = vmpackc.low %vm9039, %vm9036
        %vm9716 = vmpackc.low %vm9045, %vm9042
        %vm9717 = vmpackc.low %vm9051, %vm9048
        %vm9718 = vmpackc.low %vm9057, %vm9054
        %vm9719 = vmpackc.low %vm9063, %vm9060
        %vm9720 = vmpackc.low %vm9069, %vm9066
        %vm9721 = vmpackc.low %vm9075, %vm9072
        %vm9722 = vmpackc.low %vm9081, %vm9078
        %vm9723 = vmpackc.low %vm9087, %vm9084
        %vm9724 = vmpackc.low %vm9093, %vm9090
        %vm9725 = vmpackc.low %vm9099, %vm9096
        %vm9726 = vmpackc.low %vm9105, %vm9102
        %vm9727 = vmpackc.low %vm9111, %vm9108
        %vm9728 = vmpackc.low %vm9117, %vm9114
        %vm9729 = vmpackc.low %vm9123, %vm9120
        %vm9730 = vmpackc.low %vm9129, %vm9126
        %vm9731 = vmpackc.low %vm9135, %vm9132
        %vm9732 = vmpackc.low %vm9141, %vm9138
        %vm9733 = vmpackc.low %vm9147, %vm9144
        %vm9734 = vmpackc.low %vm9153, %vm9150
        %vm9735 = vmpackc.low %vm9159, %vm9156
        %vm9736 = vmpackc.low %vm9165, %vm9162
        %vm9737 = vmpackc.low %vm9171, %vm9168
        %vm9738 = vmpackc.low %vm9177, %vm9174
        %vm9739 = vmpackc.low %vm9183, %vm9180
        %vm9740 = vmpackc.low %vm9189, %vm9186
        %vm9741 = vmpackc.low %vm9195, %vm9192
        %vm9742 = vmpackc.low %vm9201, %vm9198
        %vm9743 = vmpackc.low %vm9207, %vm9204
        %vm9744 = vmpackc.low %vm9213, %vm9210
        %vm9745 = vmpackc.low %vm9219, %vm9216
        %vm9746 = vmpackc.low %vm9225, %vm9222
        %vm9747 = vmpackc.low %vm9231, %vm9228
        %vm9748 = vmpackc.low %vm9237, %vm9234
        %vm9749 = vmpackc.low %vm9243, %vm9240
        %vm9750 = vmpackc.low %vm9249, %vm9246
        %vm9751 = vmpackc.low %vm9255, %vm9252
        %vm9752 = vmpackc.low %vm9261, %vm9258
        %vm9753 = vmpackc.low %vm9267, %vm9264
        %vm9754 = vmpackc.low %vm9273, %vm9270
        %vm9755 = vmpackc.low %vm9279, %vm9276
        %vm9756 = vmpackc.low %vm9285, %vm9282
        %vm9757 = vmpackc.low %vm9291, %vm9288
        %vm9758 = vmpackc.low %vm9297, %vm9294
        %vm9759 = vmpackc.low %vm9303, %vm9300
        %vm9760 = vmpackc.low %vm9309, %vm9306
        %vm9761 = vmpackc.low %vm9315, %vm9312
        %vm9762 = vmpackc.low %vm9321, %vm9318
        %vm9763 = vmpackc.low %vm9327, %vm9324
        %vm9764 = vmpackc.low %vm9333, %vm9330
        %vm9765 = vmpackc.low %vm9339, %vm9336
        %vm9766 = vmpackc.low %vm9345, %vm9342
        %vm9767 = vmpackc.low %vm9351, %vm9348
        %vm9768 = vmpackc.low %vm9357, %vm9354
        %vm9769 = vmpackc.low %vm9363, %vm9360
        %vm9770 = vmpackc.low %vm9369, %vm9366
        %vm9771 = vmpackc.low %vm9375, %vm9372
        %vm9772 = vmpackc.low %vm9381, %vm9378
        %vm9773 = vmpackc.low %vm9387, %vm9384
        %vm9774 = vmpackc.low %vm9393, %vm9390
        %vm9775 = vmpackc.low %vm9399, %vm9396
        %vm9776 = vmpackc.low %vm9405, %vm9402
        %vm9777 = vmpackc.low %vm9411, %vm9408
        %vm9778 = vmpackc.low %vm9417, %vm9414
        %vm9779 = vmpackc.low %vm9423, %vm9420
        %vm9780 = vmpackc.low %vm9429, %vm9426
        %vm9781 = vmpackc.low %vm9435, %vm9432
        %vm9782 = vmpackc.low %vm9441, %vm9438
        %vm9783 = vmpackc.low %vm9447, %vm9444
        %vm9784 = vmpackc.low %vm9453, %vm9450
        %vm9785 = vmpackc.low %vm9459, %vm9456
        %vm9786 = vmpackc.low %vm9465, %vm9462
        %vm9787 = vmpackc.low %vm9471, %vm9468
        %vm9788 = vmpackc.low %vm9477, %vm9474
        %vm9789 = vmpackc.low %vm9483, %vm9480
        %vm9790 = vmpackc.low %vm9489, %vm9486
        %vm9791 = vmpackc.low %vm9495, %vm9492
        %vm9792 = vmpackc.low %vm9501, %vm9498
        %vm9793 = vmpackc.low %vm9507, %vm9504
        %vm9794 = vmpackc.low %vm9513, %vm9510
        %vm9795 = vmpackc.low %vm9519, %vm9516
        %vm9796 = vmpackc.low %vm9525, %vm9522
        %vm9797 = vmpackc.low %vm9531, %vm9528
        %vm9798 = vmpackc.low %vm9537, %vm9534
        %vm9799 = vmpackc.low %vm9543, %vm9540
        %v9800 = vsel %vm9672, %v9544, 0
        %v9801 = vsel %vm9673, %v9545, 0
        %v9802 = vsel %vm9674, %v9546, 0
        %v9803 = vsel %vm9675, %v9547, 0
        %v9804 = vsel %vm9676, %v9548, 0
        %v9805 = vsel %vm9677, %v9549, 0
        %v9806 = vsel %vm9678, %v9550, 0
        %v9807 = vsel %vm9679, %v9551, 0
        %v9808 = vsel %vm9680, %v9552, 0
        %v9809 = vsel %vm9681, %v9553, 0
        %v9810 = vsel %vm9682, %v9554, 0
        %v9811 = vsel %vm9683, %v9555, 0
        %v9812 = vsel %vm9684, %v9556, 0
        %v9813 = vsel %vm9685, %v9557, 0
        %v9814 = vsel %vm9686, %v9558, 0
        %v9815 = vsel %vm9687, %v9559, 0
        %v9816 = vsel %vm9688, %v9560, 0
        %v9817 = vsel %vm9689, %v9561, 0
        %v9818 = vsel %vm9690, %v9562, 0
        %v9819 = vsel %vm9691, %v9563, 0
        %v9820 = vsel %vm9692, %v9564, 0
        %v9821 = vsel %vm9693, %v9565, 0
        %v9822 = vsel %vm9694, %v9566, 0
        %v9823 = vsel %vm9695, %v9567, 0
        %v9824 = vsel %vm9696, %v9568, 0
        %v9825 = vsel %vm9697, %v9569, 0
        %v9826 = vsel %vm9698, %v9570, 0
        %v9827 = vsel %vm9699, %v9571, 0
        %v9828 = vsel %vm9700, %v9572, 0
        %v9829 = vsel %vm9701, %v9573, 0
        %v9830 = vsel %vm9702, %v9574, 0
        %v9831 = vsel %vm9703, %v9575, 0
        %v9832 = vsel %vm9704, %v9576, 0
        %v9833 = vsel %vm9705, %v9577, 0
        %v9834 = vsel %vm9706, %v9578, 0
        %v9835 = vsel %vm9707, %v9579, 0
        %v9836 = vsel %vm9708, %v9580, 0
        %v9837 = vsel %vm9709, %v9581, 0
        %v9838 = vsel %vm9710, %v9582, 0
        %v9839 = vsel %vm9711, %v9583, 0
        %v9840 = vsel %vm9712, %v9584, 0
        %v9841 = vsel %vm9713, %v9585, 0
        %v9842 = vsel %vm9714, %v9586, 0
        %v9843 = vsel %vm9715, %v9587, 0
        %v9844 = vsel %vm9716, %v9588, 0
        %v9845 = vsel %vm9717, %v9589, 0
        %v9846 = vsel %vm9718, %v9590, 0
        %v9847 = vsel %vm9719, %v9591, 0
        %v9848 = vsel %vm9720, %v9592, 0
        %v9849 = vsel %vm9721, %v9593, 0
        %v9850 = vsel %vm9722, %v9594, 0
        %v9851 = vsel %vm9723, %v9595, 0
        %v9852 = vsel %vm9724, %v9596, 0
        %v9853 = vsel %vm9725, %v9597, 0
        %v9854 = vsel %vm9726, %v9598, 0
        %v9855 = vsel %vm9727, %v9599, 0
        %v9856 = vsel %vm9728, %v9600, 0
        %v9857 = vsel %vm9729, %v9601, 0
        %v9858 = vsel %vm9730, %v9602, 0
        %v9859 = vsel %vm9731, %v9603, 0
        %v9860 = vsel %vm9732, %v9604, 0
        %v9861 = vsel %vm9733, %v9605, 0
        %v9862 = vsel %vm9734, %v9606, 0
        %v9863 = vsel %vm9735, %v9607, 0
        %v9864 = vsel %vm9736, %v9608, 0
        %v9865 = vsel %vm9737, %v9609, 0
        %v9866 = vsel %vm9738, %v9610, 0
        %v9867 = vsel %vm9739, %v9611, 0
        %v9868 = vsel %vm9740, %v9612, 0
        %v9869 = vsel %vm9741, %v9613, 0
        %v9870 = vsel %vm9742, %v9614, 0
        %v9871 = vsel %vm9743, %v9615, 0
        %v9872 = vsel %vm9744, %v9616, 0
        %v9873 = vsel %vm9745, %v9617, 0
        %v9874 = vsel %vm9746, %v9618, 0
        %v9875 = vsel %vm9747, %v9619, 0
        %v9876 = vsel %vm9748, %v9620, 0
        %v9877 = vsel %vm9749, %v9621, 0
        %v9878 = vsel %vm9750, %v9622, 0
        %v9879 = vsel %vm9751, %v9623, 0
        %v9880 = vsel %vm9752, %v9624, 0
        %v9881 = vsel %vm9753, %v9625, 0
        %v9882 = vsel %vm9754, %v9626, 0
        %v9883 = vsel %vm9755, %v9627, 0
        %v9884 = vsel %vm9756, %v9628, 0
        %v9885 = vsel %vm9757, %v9629, 0
        %v9886 = vsel %vm9758, %v9630, 0
        %v9887 = vsel %vm9759, %v9631, 0
        %v9888 = vsel %vm9760, %v9632, 0
        %v9889 = vsel %vm9761, %v9633, 0
        %v9890 = vsel %vm9762, %v9634, 0
        %v9891 = vsel %vm9763, %v9635, 0
        %v9892 = vsel %vm9764, %v9636, 0
        %v9893 = vsel %vm9765, %v9637, 0
        %v9894 = vsel %vm9766, %v9638, 0
        %v9895 = vsel %vm9767, %v9639, 0
        %v9896 = vsel %vm9768, %v9640, 0
        %v9897 = vsel %vm9769, %v9641, 0
        %v9898 = vsel %vm9770, %v9642, 0
        %v9899 = vsel %vm9771, %v9643, 0
        %v9900 = vsel %vm9772, %v9644, 0
        %v9901 = vsel %vm9773, %v9645, 0
        %v9902 = vsel %vm9774, %v9646, 0
        %v9903 = vsel %vm9775, %v9647, 0
        %v9904 = vsel %vm9776, %v9648, 0
        %v9905 = vsel %vm9777, %v9649, 0
        %v9906 = vsel %vm9778, %v9650, 0
        %v9907 = vsel %vm9779, %v9651, 0
        %v9908 = vsel %vm9780, %v9652, 0
        %v9909 = vsel %vm9781, %v9653, 0
        %v9910 = vsel %vm9782, %v9654, 0
        %v9911 = vsel %vm9783, %v9655, 0
        %v9912 = vsel %vm9784, %v9656, 0
        %v9913 = vsel %vm9785, %v9657, 0
        %v9914 = vsel %vm9786, %v9658, 0
        %v9915 = vsel %vm9787, %v9659, 0
        %v9916 = vsel %vm9788, %v9660, 0
        %v9917 = vsel %vm9789, %v9661, 0
        %v9918 = vsel %vm9790, %v9662, 0
        %v9919 = vsel %vm9791, %v9663, 0
        %v9920 = vsel %vm9792, %v9664, 0
        %v9921 = vsel %vm9793, %v9665, 0
        %v9922 = vsel %vm9794, %v9666, 0
        %v9923 = vsel %vm9795, %v9667, 0
        %v9924 = vsel %vm9796, %v9668, 0
        %v9925 = vsel %vm9797, %v9669, 0
        %v9926 = vsel %vm9798, %v9670, 0
        %v9927 = vsel %vm9799, %v9671, 0
        %v9928 = vld [vmem:[#allocation13] sm:$0xf]
        %v9929 = vld [vmem:[#allocation13 + $0x4] sm:$0xf]
        %v9930 = vld [vmem:[#allocation13 + $0x8] sm:$0xf]
        %v9931 = vld [vmem:[#allocation13 + $0xc] sm:$0xf]
        %v9932 = vld [vmem:[#allocation13 + $0x10] sm:$0xf]
        %v9933 = vld [vmem:[#allocation13 + $0x14] sm:$0xf]
        %v9934 = vld [vmem:[#allocation13 + $0x18] sm:$0xf]
        %v9935 = vld [vmem:[#allocation13 + $0x1c] sm:$0xf]
        %v9936 = vld [vmem:[#allocation13 + $0x20] sm:$0xf]
        %v9937 = vld [vmem:[#allocation13 + $0x24] sm:$0xf]
        %v9938 = vld [vmem:[#allocation13 + $0x28] sm:$0xf]
        %v9939 = vld [vmem:[#allocation13 + $0x2c] sm:$0xf]
        %v9940 = vld [vmem:[#allocation13 + $0x30] sm:$0xf]
        %v9941 = vld [vmem:[#allocation13 + $0x34] sm:$0xf]
        %v9942 = vld [vmem:[#allocation13 + $0x38] sm:$0xf]
        %v9943 = vld [vmem:[#allocation13 + $0x3c] sm:$0xf]
        %v9944 = vld [vmem:[#allocation13 + $0x40] sm:$0xf]
        %v9945 = vld [vmem:[#allocation13 + $0x44] sm:$0xf]
        %v9946 = vld [vmem:[#allocation13 + $0x48] sm:$0xf]
        %v9947 = vld [vmem:[#allocation13 + $0x4c] sm:$0xf]
        %v9948 = vld [vmem:[#allocation13 + $0x50] sm:$0xf]
        %v9949 = vld [vmem:[#allocation13 + $0x54] sm:$0xf]
        %v9950 = vld [vmem:[#allocation13 + $0x58] sm:$0xf]
        %v9951 = vld [vmem:[#allocation13 + $0x5c] sm:$0xf]
        %v9952 = vld [vmem:[#allocation13 + $0x60] sm:$0xf]
        %v9953 = vld [vmem:[#allocation13 + $0x64] sm:$0xf]
        %v9954 = vld [vmem:[#allocation13 + $0x68] sm:$0xf]
        %v9955 = vld [vmem:[#allocation13 + $0x6c] sm:$0xf]
        %v9956 = vld [vmem:[#allocation13 + $0x70] sm:$0xf]
        %v9957 = vld [vmem:[#allocation13 + $0x74] sm:$0xf]
        %v9958 = vld [vmem:[#allocation13 + $0x78] sm:$0xf]
        %v9959 = vld [vmem:[#allocation13 + $0x7c] sm:$0xf]
        %v9960 = vld [vmem:[#allocation13 + $0x80] sm:$0xf]
        %v9961 = vld [vmem:[#allocation13 + $0x84] sm:$0xf]
        %v9962 = vld [vmem:[#allocation13 + $0x88] sm:$0xf]
        %v9963 = vld [vmem:[#allocation13 + $0x8c] sm:$0xf]
        %v9964 = vld [vmem:[#allocation13 + $0x90] sm:$0xf]
        %v9965 = vld [vmem:[#allocation13 + $0x94] sm:$0xf]
        %v9966 = vld [vmem:[#allocation13 + $0x98] sm:$0xf]
        %v9967 = vld [vmem:[#allocation13 + $0x9c] sm:$0xf]
        %v9968 = vld [vmem:[#allocation13 + $0xa0] sm:$0xf]
        %v9969 = vld [vmem:[#allocation13 + $0xa4] sm:$0xf]
        %v9970 = vld [vmem:[#allocation13 + $0xa8] sm:$0xf]
        %v9971 = vld [vmem:[#allocation13 + $0xac] sm:$0xf]
        %v9972 = vld [vmem:[#allocation13 + $0xb0] sm:$0xf]
        %v9973 = vld [vmem:[#allocation13 + $0xb4] sm:$0xf]
        %v9974 = vld [vmem:[#allocation13 + $0xb8] sm:$0xf]
        %v9975 = vld [vmem:[#allocation13 + $0xbc] sm:$0xf]
        %v9976 = vld [vmem:[#allocation13 + $0xc0] sm:$0xf]
        %v9977 = vld [vmem:[#allocation13 + $0xc4] sm:$0xf]
        %v9978 = vld [vmem:[#allocation13 + $0xc8] sm:$0xf]
        %v9979 = vld [vmem:[#allocation13 + $0xcc] sm:$0xf]
        %v9980 = vld [vmem:[#allocation13 + $0xd0] sm:$0xf]
        %v9981 = vld [vmem:[#allocation13 + $0xd4] sm:$0xf]
        %v9982 = vld [vmem:[#allocation13 + $0xd8] sm:$0xf]
        %v9983 = vld [vmem:[#allocation13 + $0xdc] sm:$0xf]
        %v9984 = vld [vmem:[#allocation13 + $0xe0] sm:$0xf]
        %v9985 = vld [vmem:[#allocation13 + $0xe4] sm:$0xf]
        %v9986 = vld [vmem:[#allocation13 + $0xe8] sm:$0xf]
        %v9987 = vld [vmem:[#allocation13 + $0xec] sm:$0xf]
        %v9988 = vld [vmem:[#allocation13 + $0xf0] sm:$0xf]
        %v9989 = vld [vmem:[#allocation13 + $0xf4] sm:$0xf]
        %v9990 = vld [vmem:[#allocation13 + $0xf8] sm:$0xf]
        %v9991 = vld [vmem:[#allocation13 + $0xfc] sm:$0xf]
        %v9992 = vld [vmem:[#allocation13 + $0x100] sm:$0xf]
        %v9993 = vld [vmem:[#allocation13 + $0x104] sm:$0xf]
        %v9994 = vld [vmem:[#allocation13 + $0x108] sm:$0xf]
        %v9995 = vld [vmem:[#allocation13 + $0x10c] sm:$0xf]
        %v9996 = vld [vmem:[#allocation13 + $0x110] sm:$0xf]
        %v9997 = vld [vmem:[#allocation13 + $0x114] sm:$0xf]
        %v9998 = vld [vmem:[#allocation13 + $0x118] sm:$0xf]
        %v9999 = vld [vmem:[#allocation13 + $0x11c] sm:$0xf]
        %v10000 = vld [vmem:[#allocation13 + $0x120] sm:$0xf]
        %v10001 = vld [vmem:[#allocation13 + $0x124] sm:$0xf]
        %v10002 = vld [vmem:[#allocation13 + $0x128] sm:$0xf]
        %v10003 = vld [vmem:[#allocation13 + $0x12c] sm:$0xf]
        %v10004 = vld [vmem:[#allocation13 + $0x130] sm:$0xf]
        %v10005 = vld [vmem:[#allocation13 + $0x134] sm:$0xf]
        %v10006 = vld [vmem:[#allocation13 + $0x138] sm:$0xf]
        %v10007 = vld [vmem:[#allocation13 + $0x13c] sm:$0xf]
        %v10008 = vld [vmem:[#allocation13 + $0x140] sm:$0xf]
        %v10009 = vld [vmem:[#allocation13 + $0x144] sm:$0xf]
        %v10010 = vld [vmem:[#allocation13 + $0x148] sm:$0xf]
        %v10011 = vld [vmem:[#allocation13 + $0x14c] sm:$0xf]
        %v10012 = vld [vmem:[#allocation13 + $0x150] sm:$0xf]
        %v10013 = vld [vmem:[#allocation13 + $0x154] sm:$0xf]
        %v10014 = vld [vmem:[#allocation13 + $0x158] sm:$0xf]
        %v10015 = vld [vmem:[#allocation13 + $0x15c] sm:$0xf]
        %v10016 = vld [vmem:[#allocation13 + $0x160] sm:$0xf]
        %v10017 = vld [vmem:[#allocation13 + $0x164] sm:$0xf]
        %v10018 = vld [vmem:[#allocation13 + $0x168] sm:$0xf]
        %v10019 = vld [vmem:[#allocation13 + $0x16c] sm:$0xf]
        %v10020 = vld [vmem:[#allocation13 + $0x170] sm:$0xf]
        %v10021 = vld [vmem:[#allocation13 + $0x174] sm:$0xf]
        %v10022 = vld [vmem:[#allocation13 + $0x178] sm:$0xf]
        %v10023 = vld [vmem:[#allocation13 + $0x17c] sm:$0xf]
        %v10024 = vld [vmem:[#allocation13 + $0x180] sm:$0xf]
        %v10025 = vld [vmem:[#allocation13 + $0x184] sm:$0xf]
        %v10026 = vld [vmem:[#allocation13 + $0x188] sm:$0xf]
        %v10027 = vld [vmem:[#allocation13 + $0x18c] sm:$0xf]
        %v10028 = vld [vmem:[#allocation13 + $0x190] sm:$0xf]
        %v10029 = vld [vmem:[#allocation13 + $0x194] sm:$0xf]
        %v10030 = vld [vmem:[#allocation13 + $0x198] sm:$0xf]
        %v10031 = vld [vmem:[#allocation13 + $0x19c] sm:$0xf]
        %v10032 = vld [vmem:[#allocation13 + $0x1a0] sm:$0xf]
        %v10033 = vld [vmem:[#allocation13 + $0x1a4] sm:$0xf]
        %v10034 = vld [vmem:[#allocation13 + $0x1a8] sm:$0xf]
        %v10035 = vld [vmem:[#allocation13 + $0x1ac] sm:$0xf]
        %v10036 = vld [vmem:[#allocation13 + $0x1b0] sm:$0xf]
        %v10037 = vld [vmem:[#allocation13 + $0x1b4] sm:$0xf]
        %v10038 = vld [vmem:[#allocation13 + $0x1b8] sm:$0xf]
        %v10039 = vld [vmem:[#allocation13 + $0x1bc] sm:$0xf]
        %v10040 = vld [vmem:[#allocation13 + $0x1c0] sm:$0xf]
        %v10041 = vld [vmem:[#allocation13 + $0x1c4] sm:$0xf]
        %v10042 = vld [vmem:[#allocation13 + $0x1c8] sm:$0xf]
        %v10043 = vld [vmem:[#allocation13 + $0x1cc] sm:$0xf]
        %v10044 = vld [vmem:[#allocation13 + $0x1d0] sm:$0xf]
        %v10045 = vld [vmem:[#allocation13 + $0x1d4] sm:$0xf]
        %v10046 = vld [vmem:[#allocation13 + $0x1d8] sm:$0xf]
        %v10047 = vld [vmem:[#allocation13 + $0x1dc] sm:$0xf]
        %v10048 = vld [vmem:[#allocation13 + $0x1e0] sm:$0xf]
        %v10049 = vld [vmem:[#allocation13 + $0x1e4] sm:$0xf]
        %v10050 = vld [vmem:[#allocation13 + $0x1e8] sm:$0xf]
        %v10051 = vld [vmem:[#allocation13 + $0x1ec] sm:$0xf]
        %v10052 = vld [vmem:[#allocation13 + $0x1f0] sm:$0xf]
        %v10053 = vld [vmem:[#allocation13 + $0x1f4] sm:$0xf]
        %v10054 = vld [vmem:[#allocation13 + $0x1f8] sm:$0xf]
        %v10055 = vld [vmem:[#allocation13 + $0x1fc] sm:$0xf]
        %v10056 = vld [vmem:[%s7] sm:$0x1]
        %v10058 = vperm.slane %v10056, 0
        %v10188 = vunpack.c.l.b16 %v9800
        %v10189 = vunpack.c.h.b16 %v9800
        %v10190 = vunpack.c.l.b16 %v9801
        %v10191 = vunpack.c.h.b16 %v9801
        %v10192 = vunpack.c.l.b16 %v9802
        %v10193 = vunpack.c.h.b16 %v9802
        %v10194 = vunpack.c.l.b16 %v9803
        %v10195 = vunpack.c.h.b16 %v9803
        %v10196 = vunpack.c.l.b16 %v9804
        %v10197 = vunpack.c.h.b16 %v9804
        %v10198 = vunpack.c.l.b16 %v9805
        %v10199 = vunpack.c.h.b16 %v9805
        %v10200 = vunpack.c.l.b16 %v9806
        %v10201 = vunpack.c.h.b16 %v9806
        %v10202 = vunpack.c.l.b16 %v9807
        %v10203 = vunpack.c.h.b16 %v9807
        %v10204 = vunpack.c.l.b16 %v9808
        %v10205 = vunpack.c.h.b16 %v9808
        %v10206 = vunpack.c.l.b16 %v9809
        %v10207 = vunpack.c.h.b16 %v9809
        %v10208 = vunpack.c.l.b16 %v9810
        %v10209 = vunpack.c.h.b16 %v9810
        %v10210 = vunpack.c.l.b16 %v9811
        %v10211 = vunpack.c.h.b16 %v9811
        %v10212 = vunpack.c.l.b16 %v9812
        %v10213 = vunpack.c.h.b16 %v9812
        %v10214 = vunpack.c.l.b16 %v9813
        %v10215 = vunpack.c.h.b16 %v9813
        %v10216 = vunpack.c.l.b16 %v9814
        %v10217 = vunpack.c.h.b16 %v9814
        %v10218 = vunpack.c.l.b16 %v9815
        %v10219 = vunpack.c.h.b16 %v9815
        %v10220 = vunpack.c.l.b16 %v9816
        %v10221 = vunpack.c.h.b16 %v9816
        %v10222 = vunpack.c.l.b16 %v9817
        %v10223 = vunpack.c.h.b16 %v9817
        %v10224 = vunpack.c.l.b16 %v9818
        %v10225 = vunpack.c.h.b16 %v9818
        %v10226 = vunpack.c.l.b16 %v9819
        %v10227 = vunpack.c.h.b16 %v9819
        %v10228 = vunpack.c.l.b16 %v9820
        %v10229 = vunpack.c.h.b16 %v9820
        %v10230 = vunpack.c.l.b16 %v9821
        %v10231 = vunpack.c.h.b16 %v9821
        %v10232 = vunpack.c.l.b16 %v9822
        %v10233 = vunpack.c.h.b16 %v9822
        %v10234 = vunpack.c.l.b16 %v9823
        %v10235 = vunpack.c.h.b16 %v9823
        %v10236 = vunpack.c.l.b16 %v9824
        %v10237 = vunpack.c.h.b16 %v9824
        %v10238 = vunpack.c.l.b16 %v9825
        %v10239 = vunpack.c.h.b16 %v9825
        %v10240 = vunpack.c.l.b16 %v9826
        %v10241 = vunpack.c.h.b16 %v9826
        %v10242 = vunpack.c.l.b16 %v9827
        %v10243 = vunpack.c.h.b16 %v9827
        %v10244 = vunpack.c.l.b16 %v9828
        %v10245 = vunpack.c.h.b16 %v9828
        %v10246 = vunpack.c.l.b16 %v9829
        %v10247 = vunpack.c.h.b16 %v9829
        %v10248 = vunpack.c.l.b16 %v9830
        %v10249 = vunpack.c.h.b16 %v9830
        %v10250 = vunpack.c.l.b16 %v9831
        %v10251 = vunpack.c.h.b16 %v9831
        %v10252 = vunpack.c.l.b16 %v9832
        %v10253 = vunpack.c.h.b16 %v9832
        %v10254 = vunpack.c.l.b16 %v9833
        %v10255 = vunpack.c.h.b16 %v9833
        %v10256 = vunpack.c.l.b16 %v9834
        %v10257 = vunpack.c.h.b16 %v9834
        %v10258 = vunpack.c.l.b16 %v9835
        %v10259 = vunpack.c.h.b16 %v9835
        %v10260 = vunpack.c.l.b16 %v9836
        %v10261 = vunpack.c.h.b16 %v9836
        %v10262 = vunpack.c.l.b16 %v9837
        %v10263 = vunpack.c.h.b16 %v9837
        %v10264 = vunpack.c.l.b16 %v9838
        %v10265 = vunpack.c.h.b16 %v9838
        %v10266 = vunpack.c.l.b16 %v9839
        %v10267 = vunpack.c.h.b16 %v9839
        %v10268 = vunpack.c.l.b16 %v9840
        %v10269 = vunpack.c.h.b16 %v9840
        %v10270 = vunpack.c.l.b16 %v9841
        %v10271 = vunpack.c.h.b16 %v9841
        %v10272 = vunpack.c.l.b16 %v9842
        %v10273 = vunpack.c.h.b16 %v9842
        %v10274 = vunpack.c.l.b16 %v9843
        %v10275 = vunpack.c.h.b16 %v9843
        %v10276 = vunpack.c.l.b16 %v9844
        %v10277 = vunpack.c.h.b16 %v9844
        %v10278 = vunpack.c.l.b16 %v9845
        %v10279 = vunpack.c.h.b16 %v9845
        %v10280 = vunpack.c.l.b16 %v9846
        %v10281 = vunpack.c.h.b16 %v9846
        %v10282 = vunpack.c.l.b16 %v9847
        %v10283 = vunpack.c.h.b16 %v9847
        %v10284 = vunpack.c.l.b16 %v9848
        %v10285 = vunpack.c.h.b16 %v9848
        %v10286 = vunpack.c.l.b16 %v9849
        %v10287 = vunpack.c.h.b16 %v9849
        %v10288 = vunpack.c.l.b16 %v9850
        %v10289 = vunpack.c.h.b16 %v9850
        %v10290 = vunpack.c.l.b16 %v9851
        %v10291 = vunpack.c.h.b16 %v9851
        %v10292 = vunpack.c.l.b16 %v9852
        %v10293 = vunpack.c.h.b16 %v9852
        %v10294 = vunpack.c.l.b16 %v9853
        %v10295 = vunpack.c.h.b16 %v9853
        %v10296 = vunpack.c.l.b16 %v9854
        %v10297 = vunpack.c.h.b16 %v9854
        %v10298 = vunpack.c.l.b16 %v9855
        %v10299 = vunpack.c.h.b16 %v9855
        %v10300 = vunpack.c.l.b16 %v9856
        %v10301 = vunpack.c.h.b16 %v9856
        %v10302 = vunpack.c.l.b16 %v9857
        %v10303 = vunpack.c.h.b16 %v9857
        %v10304 = vunpack.c.l.b16 %v9858
        %v10305 = vunpack.c.h.b16 %v9858
        %v10306 = vunpack.c.l.b16 %v9859
        %v10307 = vunpack.c.h.b16 %v9859
        %v10308 = vunpack.c.l.b16 %v9860
        %v10309 = vunpack.c.h.b16 %v9860
        %v10310 = vunpack.c.l.b16 %v9861
        %v10311 = vunpack.c.h.b16 %v9861
        %v10312 = vunpack.c.l.b16 %v9862
        %v10313 = vunpack.c.h.b16 %v9862
        %v10314 = vunpack.c.l.b16 %v9863
        %v10315 = vunpack.c.h.b16 %v9863
        %v10316 = vunpack.c.l.b16 %v9864
        %v10317 = vunpack.c.h.b16 %v9864
        %v10318 = vunpack.c.l.b16 %v9865
        %v10319 = vunpack.c.h.b16 %v9865
        %v10320 = vunpack.c.l.b16 %v9866
        %v10321 = vunpack.c.h.b16 %v9866
        %v10322 = vunpack.c.l.b16 %v9867
        %v10323 = vunpack.c.h.b16 %v9867
        %v10324 = vunpack.c.l.b16 %v9868
        %v10325 = vunpack.c.h.b16 %v9868
        %v10326 = vunpack.c.l.b16 %v9869
        %v10327 = vunpack.c.h.b16 %v9869
        %v10328 = vunpack.c.l.b16 %v9870
        %v10329 = vunpack.c.h.b16 %v9870
        %v10330 = vunpack.c.l.b16 %v9871
        %v10331 = vunpack.c.h.b16 %v9871
        %v10332 = vunpack.c.l.b16 %v9872
        %v10333 = vunpack.c.h.b16 %v9872
        %v10334 = vunpack.c.l.b16 %v9873
        %v10335 = vunpack.c.h.b16 %v9873
        %v10336 = vunpack.c.l.b16 %v9874
        %v10337 = vunpack.c.h.b16 %v9874
        %v10338 = vunpack.c.l.b16 %v9875
        %v10339 = vunpack.c.h.b16 %v9875
        %v10340 = vunpack.c.l.b16 %v9876
        %v10341 = vunpack.c.h.b16 %v9876
        %v10342 = vunpack.c.l.b16 %v9877
        %v10343 = vunpack.c.h.b16 %v9877
        %v10344 = vunpack.c.l.b16 %v9878
        %v10345 = vunpack.c.h.b16 %v9878
        %v10346 = vunpack.c.l.b16 %v9879
        %v10347 = vunpack.c.h.b16 %v9879
        %v10348 = vunpack.c.l.b16 %v9880
        %v10349 = vunpack.c.h.b16 %v9880
        %v10350 = vunpack.c.l.b16 %v9881
        %v10351 = vunpack.c.h.b16 %v9881
        %v10352 = vunpack.c.l.b16 %v9882
        %v10353 = vunpack.c.h.b16 %v9882
        %v10354 = vunpack.c.l.b16 %v9883
        %v10355 = vunpack.c.h.b16 %v9883
        %v10356 = vunpack.c.l.b16 %v9884
        %v10357 = vunpack.c.h.b16 %v9884
        %v10358 = vunpack.c.l.b16 %v9885
        %v10359 = vunpack.c.h.b16 %v9885
        %v10360 = vunpack.c.l.b16 %v9886
        %v10361 = vunpack.c.h.b16 %v9886
        %v10362 = vunpack.c.l.b16 %v9887
        %v10363 = vunpack.c.h.b16 %v9887
        %v10364 = vunpack.c.l.b16 %v9888
        %v10365 = vunpack.c.h.b16 %v9888
        %v10366 = vunpack.c.l.b16 %v9889
        %v10367 = vunpack.c.h.b16 %v9889
        %v10368 = vunpack.c.l.b16 %v9890
        %v10369 = vunpack.c.h.b16 %v9890
        %v10370 = vunpack.c.l.b16 %v9891
        %v10371 = vunpack.c.h.b16 %v9891
        %v10372 = vunpack.c.l.b16 %v9892
        %v10373 = vunpack.c.h.b16 %v9892
        %v10374 = vunpack.c.l.b16 %v9893
        %v10375 = vunpack.c.h.b16 %v9893
        %v10376 = vunpack.c.l.b16 %v9894
        %v10377 = vunpack.c.h.b16 %v9894
        %v10378 = vunpack.c.l.b16 %v9895
        %v10379 = vunpack.c.h.b16 %v9895
        %v10380 = vunpack.c.l.b16 %v9896
        %v10381 = vunpack.c.h.b16 %v9896
        %v10382 = vunpack.c.l.b16 %v9897
        %v10383 = vunpack.c.h.b16 %v9897
        %v10384 = vunpack.c.l.b16 %v9898
        %v10385 = vunpack.c.h.b16 %v9898
        %v10386 = vunpack.c.l.b16 %v9899
        %v10387 = vunpack.c.h.b16 %v9899
        %v10388 = vunpack.c.l.b16 %v9900
        %v10389 = vunpack.c.h.b16 %v9900
        %v10390 = vunpack.c.l.b16 %v9901
        %v10391 = vunpack.c.h.b16 %v9901
        %v10392 = vunpack.c.l.b16 %v9902
        %v10393 = vunpack.c.h.b16 %v9902
        %v10394 = vunpack.c.l.b16 %v9903
        %v10395 = vunpack.c.h.b16 %v9903
        %v10396 = vunpack.c.l.b16 %v9904
        %v10397 = vunpack.c.h.b16 %v9904
        %v10398 = vunpack.c.l.b16 %v9905
        %v10399 = vunpack.c.h.b16 %v9905
        %v10400 = vunpack.c.l.b16 %v9906
        %v10401 = vunpack.c.h.b16 %v9906
        %v10402 = vunpack.c.l.b16 %v9907
        %v10403 = vunpack.c.h.b16 %v9907
        %v10404 = vunpack.c.l.b16 %v9908
        %v10405 = vunpack.c.h.b16 %v9908
        %v10406 = vunpack.c.l.b16 %v9909
        %v10407 = vunpack.c.h.b16 %v9909
        %v10408 = vunpack.c.l.b16 %v9910
        %v10409 = vunpack.c.h.b16 %v9910
        %v10410 = vunpack.c.l.b16 %v9911
        %v10411 = vunpack.c.h.b16 %v9911
        %v10412 = vunpack.c.l.b16 %v9912
        %v10413 = vunpack.c.h.b16 %v9912
        %v10414 = vunpack.c.l.b16 %v9913
        %v10415 = vunpack.c.h.b16 %v9913
        %v10416 = vunpack.c.l.b16 %v9914
        %v10417 = vunpack.c.h.b16 %v9914
        %v10418 = vunpack.c.l.b16 %v9915
        %v10419 = vunpack.c.h.b16 %v9915
        %v10420 = vunpack.c.l.b16 %v9916
        %v10421 = vunpack.c.h.b16 %v9916
        %v10422 = vunpack.c.l.b16 %v9917
        %v10423 = vunpack.c.h.b16 %v9917
        %v10424 = vunpack.c.l.b16 %v9918
        %v10425 = vunpack.c.h.b16 %v9918
        %v10426 = vunpack.c.l.b16 %v9919
        %v10427 = vunpack.c.h.b16 %v9919
        %v10428 = vunpack.c.l.b16 %v9920
        %v10429 = vunpack.c.h.b16 %v9920
        %v10430 = vunpack.c.l.b16 %v9921
        %v10431 = vunpack.c.h.b16 %v9921
        %v10432 = vunpack.c.l.b16 %v9922
        %v10433 = vunpack.c.h.b16 %v9922
        %v10434 = vunpack.c.l.b16 %v9923
        %v10435 = vunpack.c.h.b16 %v9923
        %v10436 = vunpack.c.l.b16 %v9924
        %v10437 = vunpack.c.h.b16 %v9924
        %v10438 = vunpack.c.l.b16 %v9925
        %v10439 = vunpack.c.h.b16 %v9925
        %v10440 = vunpack.c.l.b16 %v9926
        %v10441 = vunpack.c.h.b16 %v9926
        %v10442 = vunpack.c.l.b16 %v9927
        %v10443 = vunpack.c.h.b16 %v9927
        %v10444 = vpack.c.b16 %v10196, %v10188
        %v10445 = vpack.c.b16 %v10197, %v10189
        %v10446 = vpack.c.b16 %v10198, %v10190
        %v10447 = vpack.c.b16 %v10199, %v10191
        %v10448 = vpack.c.b16 %v10200, %v10192
        %v10449 = vpack.c.b16 %v10201, %v10193
        %v10450 = vpack.c.b16 %v10202, %v10194
        %v10451 = vpack.c.b16 %v10203, %v10195
        %v10452 = vpack.c.b16 %v10212, %v10204
        %v10453 = vpack.c.b16 %v10213, %v10205
        %v10454 = vpack.c.b16 %v10214, %v10206
        %v10455 = vpack.c.b16 %v10215, %v10207
        %v10456 = vpack.c.b16 %v10216, %v10208
        %v10457 = vpack.c.b16 %v10217, %v10209
        %v10458 = vpack.c.b16 %v10218, %v10210
        %v10459 = vpack.c.b16 %v10219, %v10211
        %v10460 = vpack.c.b16 %v10228, %v10220
        %v10461 = vpack.c.b16 %v10229, %v10221
        %v10462 = vpack.c.b16 %v10230, %v10222
        %v10463 = vpack.c.b16 %v10231, %v10223
        %v10464 = vpack.c.b16 %v10232, %v10224
        %v10465 = vpack.c.b16 %v10233, %v10225
        %v10466 = vpack.c.b16 %v10234, %v10226
        %v10467 = vpack.c.b16 %v10235, %v10227
        %v10468 = vpack.c.b16 %v10244, %v10236
        %v10469 = vpack.c.b16 %v10245, %v10237
        %v10470 = vpack.c.b16 %v10246, %v10238
        %v10471 = vpack.c.b16 %v10247, %v10239
        %v10472 = vpack.c.b16 %v10248, %v10240
        %v10473 = vpack.c.b16 %v10249, %v10241
        %v10474 = vpack.c.b16 %v10250, %v10242
        %v10475 = vpack.c.b16 %v10251, %v10243
        %v10476 = vpack.c.b16 %v10260, %v10252
        %v10477 = vpack.c.b16 %v10261, %v10253
        %v10478 = vpack.c.b16 %v10262, %v10254
        %v10479 = vpack.c.b16 %v10263, %v10255
        %v10480 = vpack.c.b16 %v10264, %v10256
        %v10481 = vpack.c.b16 %v10265, %v10257
        %v10482 = vpack.c.b16 %v10266, %v10258
        %v10483 = vpack.c.b16 %v10267, %v10259
        %v10484 = vpack.c.b16 %v10276, %v10268
        %v10485 = vpack.c.b16 %v10277, %v10269
        %v10486 = vpack.c.b16 %v10278, %v10270
        %v10487 = vpack.c.b16 %v10279, %v10271
        %v10488 = vpack.c.b16 %v10280, %v10272
        %v10489 = vpack.c.b16 %v10281, %v10273
        %v10490 = vpack.c.b16 %v10282, %v10274
        %v10491 = vpack.c.b16 %v10283, %v10275
        %v10492 = vpack.c.b16 %v10292, %v10284
        %v10493 = vpack.c.b16 %v10293, %v10285
        %v10494 = vpack.c.b16 %v10294, %v10286
        %v10495 = vpack.c.b16 %v10295, %v10287
        %v10496 = vpack.c.b16 %v10296, %v10288
        %v10497 = vpack.c.b16 %v10297, %v10289
        %v10498 = vpack.c.b16 %v10298, %v10290
        %v10499 = vpack.c.b16 %v10299, %v10291
        %v10500 = vpack.c.b16 %v10308, %v10300
        %v10501 = vpack.c.b16 %v10309, %v10301
        %v10502 = vpack.c.b16 %v10310, %v10302
        %v10503 = vpack.c.b16 %v10311, %v10303
        %v10504 = vpack.c.b16 %v10312, %v10304
        %v10505 = vpack.c.b16 %v10313, %v10305
        %v10506 = vpack.c.b16 %v10314, %v10306
        %v10507 = vpack.c.b16 %v10315, %v10307
        %v10508 = vpack.c.b16 %v10324, %v10316
        %v10509 = vpack.c.b16 %v10325, %v10317
        %v10510 = vpack.c.b16 %v10326, %v10318
        %v10511 = vpack.c.b16 %v10327, %v10319
        %v10512 = vpack.c.b16 %v10328, %v10320
        %v10513 = vpack.c.b16 %v10329, %v10321
        %v10514 = vpack.c.b16 %v10330, %v10322
        %v10515 = vpack.c.b16 %v10331, %v10323
        %v10516 = vpack.c.b16 %v10340, %v10332
        %v10517 = vpack.c.b16 %v10341, %v10333
        %v10518 = vpack.c.b16 %v10342, %v10334
        %v10519 = vpack.c.b16 %v10343, %v10335
        %v10520 = vpack.c.b16 %v10344, %v10336
        %v10521 = vpack.c.b16 %v10345, %v10337
        %v10522 = vpack.c.b16 %v10346, %v10338
        %v10523 = vpack.c.b16 %v10347, %v10339
        %v10524 = vpack.c.b16 %v10356, %v10348
        %v10525 = vpack.c.b16 %v10357, %v10349
        %v10526 = vpack.c.b16 %v10358, %v10350
        %v10527 = vpack.c.b16 %v10359, %v10351
        %v10528 = vpack.c.b16 %v10360, %v10352
        %v10529 = vpack.c.b16 %v10361, %v10353
        %v10530 = vpack.c.b16 %v10362, %v10354
        %v10531 = vpack.c.b16 %v10363, %v10355
        %v10532 = vpack.c.b16 %v10372, %v10364
        %v10533 = vpack.c.b16 %v10373, %v10365
        %v10534 = vpack.c.b16 %v10374, %v10366
        %v10535 = vpack.c.b16 %v10375, %v10367
        %v10536 = vpack.c.b16 %v10376, %v10368
        %v10537 = vpack.c.b16 %v10377, %v10369
        %v10538 = vpack.c.b16 %v10378, %v10370
        %v10539 = vpack.c.b16 %v10379, %v10371
        %v10540 = vpack.c.b16 %v10388, %v10380
        %v10541 = vpack.c.b16 %v10389, %v10381
        %v10542 = vpack.c.b16 %v10390, %v10382
        %v10543 = vpack.c.b16 %v10391, %v10383
        %v10544 = vpack.c.b16 %v10392, %v10384
        %v10545 = vpack.c.b16 %v10393, %v10385
        %v10546 = vpack.c.b16 %v10394, %v10386
        %v10547 = vpack.c.b16 %v10395, %v10387
        %v10548 = vpack.c.b16 %v10404, %v10396
        %v10549 = vpack.c.b16 %v10405, %v10397
        %v10550 = vpack.c.b16 %v10406, %v10398
        %v10551 = vpack.c.b16 %v10407, %v10399
        %v10552 = vpack.c.b16 %v10408, %v10400
        %v10553 = vpack.c.b16 %v10409, %v10401
        %v10554 = vpack.c.b16 %v10410, %v10402
        %v10555 = vpack.c.b16 %v10411, %v10403
        %v10556 = vpack.c.b16 %v10420, %v10412
        %v10557 = vpack.c.b16 %v10421, %v10413
        %v10558 = vpack.c.b16 %v10422, %v10414
        %v10559 = vpack.c.b16 %v10423, %v10415
        %v10560 = vpack.c.b16 %v10424, %v10416
        %v10561 = vpack.c.b16 %v10425, %v10417
        %v10562 = vpack.c.b16 %v10426, %v10418
        %v10563 = vpack.c.b16 %v10427, %v10419
        %v10564 = vpack.c.b16 %v10436, %v10428
        %v10565 = vpack.c.b16 %v10437, %v10429
        %v10566 = vpack.c.b16 %v10438, %v10430
        %v10567 = vpack.c.b16 %v10439, %v10431
        %v10568 = vpack.c.b16 %v10440, %v10432
        %v10569 = vpack.c.b16 %v10441, %v10433
        %v10570 = vpack.c.b16 %v10442, %v10434
        %v10571 = vpack.c.b16 %v10443, %v10435
        %v10828 = vunpack.c.l.b16 %v9928
        %v10829 = vunpack.c.l.b16 %v9929
        %v10830 = vunpack.c.l.b16 %v9930
        %v10831 = vunpack.c.l.b16 %v9931
        %v10832 = vunpack.c.l.b16 %v9932
        %v10833 = vunpack.c.l.b16 %v9933
        %v10834 = vunpack.c.l.b16 %v9934
        %v10835 = vunpack.c.l.b16 %v9935
        %v10836 = vunpack.c.l.b16 %v9936
        %v10837 = vunpack.c.l.b16 %v9937
        %v10838 = vunpack.c.l.b16 %v9938
        %v10839 = vunpack.c.l.b16 %v9939
        %v10840 = vunpack.c.l.b16 %v9940
        %v10841 = vunpack.c.l.b16 %v9941
        %v10842 = vunpack.c.l.b16 %v9942
        %v10843 = vunpack.c.l.b16 %v9943
        %v10844 = vunpack.c.l.b16 %v9944
        %v10845 = vunpack.c.l.b16 %v9945
        %v10846 = vunpack.c.l.b16 %v9946
        %v10847 = vunpack.c.l.b16 %v9947
        %v10848 = vunpack.c.l.b16 %v9948
        %v10849 = vunpack.c.l.b16 %v9949
        %v10850 = vunpack.c.l.b16 %v9950
        %v10851 = vunpack.c.l.b16 %v9951
        %v10852 = vunpack.c.l.b16 %v9952
        %v10853 = vunpack.c.l.b16 %v9953
        %v10854 = vunpack.c.l.b16 %v9954
        %v10855 = vunpack.c.l.b16 %v9955
        %v10856 = vunpack.c.l.b16 %v9956
        %v10857 = vunpack.c.l.b16 %v9957
        %v10858 = vunpack.c.l.b16 %v9958
        %v10859 = vunpack.c.l.b16 %v9959
        %v10860 = vunpack.c.l.b16 %v9960
        %v10861 = vunpack.c.l.b16 %v9961
        %v10862 = vunpack.c.l.b16 %v9962
        %v10863 = vunpack.c.l.b16 %v9963
        %v10864 = vunpack.c.l.b16 %v9964
        %v10865 = vunpack.c.l.b16 %v9965
        %v10866 = vunpack.c.l.b16 %v9966
        %v10867 = vunpack.c.l.b16 %v9967
        %v10868 = vunpack.c.l.b16 %v9968
        %v10869 = vunpack.c.l.b16 %v9969
        %v10870 = vunpack.c.l.b16 %v9970
        %v10871 = vunpack.c.l.b16 %v9971
        %v10872 = vunpack.c.l.b16 %v9972
        %v10873 = vunpack.c.l.b16 %v9973
        %v10874 = vunpack.c.l.b16 %v9974
        %v10875 = vunpack.c.l.b16 %v9975
        %v10876 = vunpack.c.l.b16 %v9976
        %v10877 = vunpack.c.l.b16 %v9977
        %v10878 = vunpack.c.l.b16 %v9978
        %v10879 = vunpack.c.l.b16 %v9979
        %v10880 = vunpack.c.l.b16 %v9980
        %v10881 = vunpack.c.l.b16 %v9981
        %v10882 = vunpack.c.l.b16 %v9982
        %v10883 = vunpack.c.l.b16 %v9983
        %v10884 = vunpack.c.l.b16 %v9984
        %v10885 = vunpack.c.l.b16 %v9985
        %v10886 = vunpack.c.l.b16 %v9986
        %v10887 = vunpack.c.l.b16 %v9987
        %v10888 = vunpack.c.l.b16 %v9988
        %v10889 = vunpack.c.l.b16 %v9989
        %v10890 = vunpack.c.l.b16 %v9990
        %v10891 = vunpack.c.l.b16 %v9991
        %v10892 = vunpack.c.l.b16 %v9992
        %v10893 = vunpack.c.l.b16 %v9993
        %v10894 = vunpack.c.l.b16 %v9994
        %v10895 = vunpack.c.l.b16 %v9995
        %v10896 = vunpack.c.l.b16 %v9996
        %v10897 = vunpack.c.l.b16 %v9997
        %v10898 = vunpack.c.l.b16 %v9998
        %v10899 = vunpack.c.l.b16 %v9999
        %v10900 = vunpack.c.l.b16 %v10000
        %v10901 = vunpack.c.l.b16 %v10001
        %v10902 = vunpack.c.l.b16 %v10002
        %v10903 = vunpack.c.l.b16 %v10003
        %v10904 = vunpack.c.l.b16 %v10004
        %v10905 = vunpack.c.l.b16 %v10005
        %v10906 = vunpack.c.l.b16 %v10006
        %v10907 = vunpack.c.l.b16 %v10007
        %v10908 = vunpack.c.l.b16 %v10008
        %v10909 = vunpack.c.l.b16 %v10009
        %v10910 = vunpack.c.l.b16 %v10010
        %v10911 = vunpack.c.l.b16 %v10011
        %v10912 = vunpack.c.l.b16 %v10012
        %v10913 = vunpack.c.l.b16 %v10013
        %v10914 = vunpack.c.l.b16 %v10014
        %v10915 = vunpack.c.l.b16 %v10015
        %v10916 = vunpack.c.l.b16 %v10016
        %v10917 = vunpack.c.l.b16 %v10017
        %v10918 = vunpack.c.l.b16 %v10018
        %v10919 = vunpack.c.l.b16 %v10019
        %v10920 = vunpack.c.l.b16 %v10020
        %v10921 = vunpack.c.l.b16 %v10021
        %v10922 = vunpack.c.l.b16 %v10022
        %v10923 = vunpack.c.l.b16 %v10023
        %v10924 = vunpack.c.l.b16 %v10024
        %v10925 = vunpack.c.l.b16 %v10025
        %v10926 = vunpack.c.l.b16 %v10026
        %v10927 = vunpack.c.l.b16 %v10027
        %v10928 = vunpack.c.l.b16 %v10028
        %v10929 = vunpack.c.l.b16 %v10029
        %v10930 = vunpack.c.l.b16 %v10030
        %v10931 = vunpack.c.l.b16 %v10031
        %v10932 = vunpack.c.l.b16 %v10032
        %v10933 = vunpack.c.l.b16 %v10033
        %v10934 = vunpack.c.l.b16 %v10034
        %v10935 = vunpack.c.l.b16 %v10035
        %v10936 = vunpack.c.l.b16 %v10036
        %v10937 = vunpack.c.l.b16 %v10037
        %v10938 = vunpack.c.l.b16 %v10038
        %v10939 = vunpack.c.l.b16 %v10039
        %v10940 = vunpack.c.l.b16 %v10040
        %v10941 = vunpack.c.l.b16 %v10041
        %v10942 = vunpack.c.l.b16 %v10042
        %v10943 = vunpack.c.l.b16 %v10043
        %v10944 = vunpack.c.l.b16 %v10044
        %v10945 = vunpack.c.l.b16 %v10045
        %v10946 = vunpack.c.l.b16 %v10046
        %v10947 = vunpack.c.l.b16 %v10047
        %v10948 = vunpack.c.l.b16 %v10048
        %v10949 = vunpack.c.l.b16 %v10049
        %v10950 = vunpack.c.l.b16 %v10050
        %v10951 = vunpack.c.l.b16 %v10051
        %v10952 = vunpack.c.l.b16 %v10052
        %v10953 = vunpack.c.l.b16 %v10053
        %v10954 = vunpack.c.l.b16 %v10054
        %v10955 = vunpack.c.l.b16 %v10055
        %v10956 = vpack.c.b16 %v10829, %v10828
        %v10957 = vpack.c.b16 %v10831, %v10830
        %v10958 = vpack.c.b16 %v10833, %v10832
        %v10959 = vpack.c.b16 %v10835, %v10834
        %v10960 = vpack.c.b16 %v10837, %v10836
        %v10961 = vpack.c.b16 %v10839, %v10838
        %v10962 = vpack.c.b16 %v10841, %v10840
        %v10963 = vpack.c.b16 %v10843, %v10842
        %v10964 = vpack.c.b16 %v10845, %v10844
        %v10965 = vpack.c.b16 %v10847, %v10846
        %v10966 = vpack.c.b16 %v10849, %v10848
        %v10967 = vpack.c.b16 %v10851, %v10850
        %v10968 = vpack.c.b16 %v10853, %v10852
        %v10969 = vpack.c.b16 %v10855, %v10854
        %v10970 = vpack.c.b16 %v10857, %v10856
        %v10971 = vpack.c.b16 %v10859, %v10858
        %v10972 = vpack.c.b16 %v10861, %v10860
        %v10973 = vpack.c.b16 %v10863, %v10862
        %v10974 = vpack.c.b16 %v10865, %v10864
        %v10975 = vpack.c.b16 %v10867, %v10866
        %v10976 = vpack.c.b16 %v10869, %v10868
        %v10977 = vpack.c.b16 %v10871, %v10870
        %v10978 = vpack.c.b16 %v10873, %v10872
        %v10979 = vpack.c.b16 %v10875, %v10874
        %v10980 = vpack.c.b16 %v10877, %v10876
        %v10981 = vpack.c.b16 %v10879, %v10878
        %v10982 = vpack.c.b16 %v10881, %v10880
        %v10983 = vpack.c.b16 %v10883, %v10882
        %v10984 = vpack.c.b16 %v10885, %v10884
        %v10985 = vpack.c.b16 %v10887, %v10886
        %v10986 = vpack.c.b16 %v10889, %v10888
        %v10987 = vpack.c.b16 %v10891, %v10890
        %v10988 = vpack.c.b16 %v10893, %v10892
        %v10989 = vpack.c.b16 %v10895, %v10894
        %v10990 = vpack.c.b16 %v10897, %v10896
        %v10991 = vpack.c.b16 %v10899, %v10898
        %v10992 = vpack.c.b16 %v10901, %v10900
        %v10993 = vpack.c.b16 %v10903, %v10902
        %v10994 = vpack.c.b16 %v10905, %v10904
        %v10995 = vpack.c.b16 %v10907, %v10906
        %v10996 = vpack.c.b16 %v10909, %v10908
        %v10997 = vpack.c.b16 %v10911, %v10910
        %v10998 = vpack.c.b16 %v10913, %v10912
        %v10999 = vpack.c.b16 %v10915, %v10914
        %v11000 = vpack.c.b16 %v10917, %v10916
        %v11001 = vpack.c.b16 %v10919, %v10918
        %v11002 = vpack.c.b16 %v10921, %v10920
        %v11003 = vpack.c.b16 %v10923, %v10922
        %v11004 = vpack.c.b16 %v10925, %v10924
        %v11005 = vpack.c.b16 %v10927, %v10926
        %v11006 = vpack.c.b16 %v10929, %v10928
        %v11007 = vpack.c.b16 %v10931, %v10930
        %v11008 = vpack.c.b16 %v10933, %v10932
        %v11009 = vpack.c.b16 %v10935, %v10934
        %v11010 = vpack.c.b16 %v10937, %v10936
        %v11011 = vpack.c.b16 %v10939, %v10938
        %v11012 = vpack.c.b16 %v10941, %v10940
        %v11013 = vpack.c.b16 %v10943, %v10942
        %v11014 = vpack.c.b16 %v10945, %v10944
        %v11015 = vpack.c.b16 %v10947, %v10946
        %v11016 = vpack.c.b16 %v10949, %v10948
        %v11017 = vpack.c.b16 %v10951, %v10950
        %v11018 = vpack.c.b16 %v10953, %v10952
        %v11019 = vpack.c.b16 %v10955, %v10954
        %11084 = vmatpush.bf16.msra.mxu0 %v10963
        %11085 = vmatpush.bf16.msra.mxu0 %v10962
        %11086 = vmatpush.bf16.msra.mxu0 %v10961
        %11087 = vmatpush.bf16.msra.mxu0 %v10960
        %11088 = vmatpush.bf16.msra.mxu0 %v10959
        %11089 = vmatpush.bf16.msra.mxu0 %v10958
        %11090 = vmatpush.bf16.msra.mxu0 %v10957
        %11091 = vmatpush.bf16.msra.mxu0 %v10956
        %11092 = vmatmul.bf16.gmra.mxu0 %v10444
        %v11093 = vpop.f32.mrf.mxu0
        %v11094 = vadd.f32 %v10058, %v11093
        %v11095 = vpop.f32.mrf.mxu0
        %v11096 = vadd.f32 %v10058, %v11095
        %11097 = vmatmul.bf16.gmra.mxu0 %v10452
        %v11098 = vpop.f32.mrf.mxu0
        %v11099 = vadd.f32 %v10058, %v11098
        %v11100 = vpop.f32.mrf.mxu0
        %v11101 = vadd.f32 %v10058, %v11100
        %11102 = vmatmul.bf16.gmra.mxu0 %v10460
        %v11103 = vpop.f32.mrf.mxu0
        %v11104 = vadd.f32 %v10058, %v11103
        %v11105 = vpop.f32.mrf.mxu0
        %v11106 = vadd.f32 %v10058, %v11105
        %11107 = vmatmul.bf16.gmra.mxu0 %v10468
        %v11108 = vpop.f32.mrf.mxu0
        %v11109 = vadd.f32 %v10058, %v11108
        %v11110 = vpop.f32.mrf.mxu0
        %v11111 = vadd.f32 %v10058, %v11110
        %11112 = vmatmul.bf16.gmra.mxu0 %v10476
        %v11113 = vpop.f32.mrf.mxu0
        %v11114 = vadd.f32 %v10058, %v11113
        %v11115 = vpop.f32.mrf.mxu0
        %v11116 = vadd.f32 %v10058, %v11115
        %11117 = vmatmul.bf16.gmra.mxu0 %v10484
        %v11118 = vpop.f32.mrf.mxu0
        %v11119 = vadd.f32 %v10058, %v11118
        %v11120 = vpop.f32.mrf.mxu0
        %v11121 = vadd.f32 %v10058, %v11120
        %11122 = vmatmul.bf16.gmra.mxu0 %v10492
        %v11123 = vpop.f32.mrf.mxu0
        %v11124 = vadd.f32 %v10058, %v11123
        %v11125 = vpop.f32.mrf.mxu0
        %v11126 = vadd.f32 %v10058, %v11125
        %11127 = vmatmul.bf16.gmra.mxu0 %v10500
        %v11128 = vpop.f32.mrf.mxu0
        %v11129 = vadd.f32 %v10058, %v11128
        %v11130 = vpop.f32.mrf.mxu0
        %v11131 = vadd.f32 %v10058, %v11130
        %11132 = vmatmul.bf16.gmra.mxu0 %v10508
        %v11133 = vpop.f32.mrf.mxu0
        %v11134 = vadd.f32 %v10058, %v11133
        %v11135 = vpop.f32.mrf.mxu0
        %v11136 = vadd.f32 %v10058, %v11135
        %11137 = vmatmul.bf16.gmra.mxu0 %v10516
        %v11138 = vpop.f32.mrf.mxu0
        %v11139 = vadd.f32 %v10058, %v11138
        %v11140 = vpop.f32.mrf.mxu0
        %v11141 = vadd.f32 %v10058, %v11140
        %11142 = vmatmul.bf16.gmra.mxu0 %v10524
        %v11143 = vpop.f32.mrf.mxu0
        %v11144 = vadd.f32 %v10058, %v11143
        %v11145 = vpop.f32.mrf.mxu0
        %v11146 = vadd.f32 %v10058, %v11145
        %11147 = vmatmul.bf16.gmra.mxu0 %v10532
        %v11148 = vpop.f32.mrf.mxu0
        %v11149 = vadd.f32 %v10058, %v11148
        %v11150 = vpop.f32.mrf.mxu0
        %v11151 = vadd.f32 %v10058, %v11150
        %11152 = vmatmul.bf16.gmra.mxu0 %v10540
        %v11153 = vpop.f32.mrf.mxu0
        %v11154 = vadd.f32 %v10058, %v11153
        %v11155 = vpop.f32.mrf.mxu0
        %v11156 = vadd.f32 %v10058, %v11155
        %11157 = vmatmul.bf16.gmra.mxu0 %v10548
        %v11158 = vpop.f32.mrf.mxu0
        %v11159 = vadd.f32 %v10058, %v11158
        %v11160 = vpop.f32.mrf.mxu0
        %v11161 = vadd.f32 %v10058, %v11160
        %11162 = vmatmul.bf16.gmra.mxu0 %v10556
        %v11163 = vpop.f32.mrf.mxu0
        %v11164 = vadd.f32 %v10058, %v11163
        %v11165 = vpop.f32.mrf.mxu0
        %v11166 = vadd.f32 %v10058, %v11165
        %11167 = vmatmul.bf16.gmra.mxu0 %v10564
        %v11168 = vpop.f32.mrf.mxu0
        %v11169 = vadd.f32 %v10058, %v11168
        %v11170 = vpop.f32.mrf.mxu0
        %v11171 = vadd.f32 %v10058, %v11170
        %11172 = vdwg.mxu0
        %11173 = vmatpush.bf16.msra.mxu0 %v10971
        %11174 = vmatpush.bf16.msra.mxu0 %v10970
        %11175 = vmatpush.bf16.msra.mxu0 %v10969
        %11176 = vmatpush.bf16.msra.mxu0 %v10968
        %11177 = vmatpush.bf16.msra.mxu0 %v10967
        %11178 = vmatpush.bf16.msra.mxu0 %v10966
        %11179 = vmatpush.bf16.msra.mxu0 %v10965
        %11180 = vmatpush.bf16.msra.mxu0 %v10964
        %11181 = vmatmul.bf16.gmra.mxu0 %v10445
        %v11182 = vpop.f32.mrf.mxu0
        %v11183 = vadd.f32 %v11094, %v11182
        %v11184 = vpop.f32.mrf.mxu0
        %v11185 = vadd.f32 %v11096, %v11184
        %11186 = vmatmul.bf16.gmra.mxu0 %v10453
        %v11187 = vpop.f32.mrf.mxu0
        %v11188 = vadd.f32 %v11099, %v11187
        %v11189 = vpop.f32.mrf.mxu0
        %v11190 = vadd.f32 %v11101, %v11189
        %11191 = vmatmul.bf16.gmra.mxu0 %v10461
        %v11192 = vpop.f32.mrf.mxu0
        %v11193 = vadd.f32 %v11104, %v11192
        %v11194 = vpop.f32.mrf.mxu0
        %v11195 = vadd.f32 %v11106, %v11194
        %11196 = vmatmul.bf16.gmra.mxu0 %v10469
        %v11197 = vpop.f32.mrf.mxu0
        %v11198 = vadd.f32 %v11109, %v11197
        %v11199 = vpop.f32.mrf.mxu0
        %v11200 = vadd.f32 %v11111, %v11199
        %11201 = vmatmul.bf16.gmra.mxu0 %v10477
        %v11202 = vpop.f32.mrf.mxu0
        %v11203 = vadd.f32 %v11114, %v11202
        %v11204 = vpop.f32.mrf.mxu0
        %v11205 = vadd.f32 %v11116, %v11204
        %11206 = vmatmul.bf16.gmra.mxu0 %v10485
        %v11207 = vpop.f32.mrf.mxu0
        %v11208 = vadd.f32 %v11119, %v11207
        %v11209 = vpop.f32.mrf.mxu0
        %v11210 = vadd.f32 %v11121, %v11209
        %11211 = vmatmul.bf16.gmra.mxu0 %v10493
        %v11212 = vpop.f32.mrf.mxu0
        %v11213 = vadd.f32 %v11124, %v11212
        %v11214 = vpop.f32.mrf.mxu0
        %v11215 = vadd.f32 %v11126, %v11214
        %11216 = vmatmul.bf16.gmra.mxu0 %v10501
        %v11217 = vpop.f32.mrf.mxu0
        %v11218 = vadd.f32 %v11129, %v11217
        %v11219 = vpop.f32.mrf.mxu0
        %v11220 = vadd.f32 %v11131, %v11219
        %11221 = vmatmul.bf16.gmra.mxu0 %v10509
        %v11222 = vpop.f32.mrf.mxu0
        %v11223 = vadd.f32 %v11134, %v11222
        %v11224 = vpop.f32.mrf.mxu0
        %v11225 = vadd.f32 %v11136, %v11224
        %11226 = vmatmul.bf16.gmra.mxu0 %v10517
        %v11227 = vpop.f32.mrf.mxu0
        %v11228 = vadd.f32 %v11139, %v11227
        %v11229 = vpop.f32.mrf.mxu0
        %v11230 = vadd.f32 %v11141, %v11229
        %11231 = vmatmul.bf16.gmra.mxu0 %v10525
        %v11232 = vpop.f32.mrf.mxu0
        %v11233 = vadd.f32 %v11144, %v11232
        %v11234 = vpop.f32.mrf.mxu0
        %v11235 = vadd.f32 %v11146, %v11234
        %11236 = vmatmul.bf16.gmra.mxu0 %v10533
        %v11237 = vpop.f32.mrf.mxu0
        %v11238 = vadd.f32 %v11149, %v11237
        %v11239 = vpop.f32.mrf.mxu0
        %v11240 = vadd.f32 %v11151, %v11239
        %11241 = vmatmul.bf16.gmra.mxu0 %v10541
        %v11242 = vpop.f32.mrf.mxu0
        %v11243 = vadd.f32 %v11154, %v11242
        %v11244 = vpop.f32.mrf.mxu0
        %v11245 = vadd.f32 %v11156, %v11244
        %11246 = vmatmul.bf16.gmra.mxu0 %v10549
        %v11247 = vpop.f32.mrf.mxu0
        %v11248 = vadd.f32 %v11159, %v11247
        %v11249 = vpop.f32.mrf.mxu0
        %v11250 = vadd.f32 %v11161, %v11249
        %11251 = vmatmul.bf16.gmra.mxu0 %v10557
        %v11252 = vpop.f32.mrf.mxu0
        %v11253 = vadd.f32 %v11164, %v11252
        %v11254 = vpop.f32.mrf.mxu0
        %v11255 = vadd.f32 %v11166, %v11254
        %11256 = vmatmul.bf16.gmra.mxu0 %v10565
        %v11257 = vpop.f32.mrf.mxu0
        %v11258 = vadd.f32 %v11169, %v11257
        %v11259 = vpop.f32.mrf.mxu0
        %v11260 = vadd.f32 %v11171, %v11259
        %11261 = vdwg.mxu0
        %11262 = vmatpush.bf16.msra.mxu0 %v10979
        %11263 = vmatpush.bf16.msra.mxu0 %v10978
        %11264 = vmatpush.bf16.msra.mxu0 %v10977
        %11265 = vmatpush.bf16.msra.mxu0 %v10976
        %11266 = vmatpush.bf16.msra.mxu0 %v10975
        %11267 = vmatpush.bf16.msra.mxu0 %v10974
        %11268 = vmatpush.bf16.msra.mxu0 %v10973
        %11269 = vmatpush.bf16.msra.mxu0 %v10972
        %11270 = vmatmul.bf16.gmra.mxu0 %v10446
        %v11271 = vpop.f32.mrf.mxu0
        %v11272 = vadd.f32 %v11183, %v11271
        %v11273 = vpop.f32.mrf.mxu0
        %v11274 = vadd.f32 %v11185, %v11273
        %11275 = vmatmul.bf16.gmra.mxu0 %v10454
        %v11276 = vpop.f32.mrf.mxu0
        %v11277 = vadd.f32 %v11188, %v11276
        %v11278 = vpop.f32.mrf.mxu0
        %v11279 = vadd.f32 %v11190, %v11278
        %11280 = vmatmul.bf16.gmra.mxu0 %v10462
        %v11281 = vpop.f32.mrf.mxu0
        %v11282 = vadd.f32 %v11193, %v11281
        %v11283 = vpop.f32.mrf.mxu0
        %v11284 = vadd.f32 %v11195, %v11283
        %11285 = vmatmul.bf16.gmra.mxu0 %v10470
        %v11286 = vpop.f32.mrf.mxu0
        %v11287 = vadd.f32 %v11198, %v11286
        %v11288 = vpop.f32.mrf.mxu0
        %v11289 = vadd.f32 %v11200, %v11288
        %11290 = vmatmul.bf16.gmra.mxu0 %v10478
        %v11291 = vpop.f32.mrf.mxu0
        %v11292 = vadd.f32 %v11203, %v11291
        %v11293 = vpop.f32.mrf.mxu0
        %v11294 = vadd.f32 %v11205, %v11293
        %11295 = vmatmul.bf16.gmra.mxu0 %v10486
        %v11296 = vpop.f32.mrf.mxu0
        %v11297 = vadd.f32 %v11208, %v11296
        %v11298 = vpop.f32.mrf.mxu0
        %v11299 = vadd.f32 %v11210, %v11298
        %11300 = vmatmul.bf16.gmra.mxu0 %v10494
        %v11301 = vpop.f32.mrf.mxu0
        %v11302 = vadd.f32 %v11213, %v11301
        %v11303 = vpop.f32.mrf.mxu0
        %v11304 = vadd.f32 %v11215, %v11303
        %11305 = vmatmul.bf16.gmra.mxu0 %v10502
        %v11306 = vpop.f32.mrf.mxu0
        %v11307 = vadd.f32 %v11218, %v11306
        %v11308 = vpop.f32.mrf.mxu0
        %v11309 = vadd.f32 %v11220, %v11308
        %11310 = vmatmul.bf16.gmra.mxu0 %v10510
        %v11311 = vpop.f32.mrf.mxu0
        %v11312 = vadd.f32 %v11223, %v11311
        %v11313 = vpop.f32.mrf.mxu0
        %v11314 = vadd.f32 %v11225, %v11313
        %11315 = vmatmul.bf16.gmra.mxu0 %v10518
        %v11316 = vpop.f32.mrf.mxu0
        %v11317 = vadd.f32 %v11228, %v11316
        %v11318 = vpop.f32.mrf.mxu0
        %v11319 = vadd.f32 %v11230, %v11318
        %11320 = vmatmul.bf16.gmra.mxu0 %v10526
        %v11321 = vpop.f32.mrf.mxu0
        %v11322 = vadd.f32 %v11233, %v11321
        %v11323 = vpop.f32.mrf.mxu0
        %v11324 = vadd.f32 %v11235, %v11323
        %11325 = vmatmul.bf16.gmra.mxu0 %v10534
        %v11326 = vpop.f32.mrf.mxu0
        %v11327 = vadd.f32 %v11238, %v11326
        %v11328 = vpop.f32.mrf.mxu0
        %v11329 = vadd.f32 %v11240, %v11328
        %11330 = vmatmul.bf16.gmra.mxu0 %v10542
        %v11331 = vpop.f32.mrf.mxu0
        %v11332 = vadd.f32 %v11243, %v11331
        %v11333 = vpop.f32.mrf.mxu0
        %v11334 = vadd.f32 %v11245, %v11333
        %11335 = vmatmul.bf16.gmra.mxu0 %v10550
        %v11336 = vpop.f32.mrf.mxu0
        %v11337 = vadd.f32 %v11248, %v11336
        %v11338 = vpop.f32.mrf.mxu0
        %v11339 = vadd.f32 %v11250, %v11338
        %11340 = vmatmul.bf16.gmra.mxu0 %v10558
        %v11341 = vpop.f32.mrf.mxu0
        %v11342 = vadd.f32 %v11253, %v11341
        %v11343 = vpop.f32.mrf.mxu0
        %v11344 = vadd.f32 %v11255, %v11343
        %11345 = vmatmul.bf16.gmra.mxu0 %v10566
        %v11346 = vpop.f32.mrf.mxu0
        %v11347 = vadd.f32 %v11258, %v11346
        %v11348 = vpop.f32.mrf.mxu0
        %v11349 = vadd.f32 %v11260, %v11348
        %11350 = vdwg.mxu0
        %11351 = vmatpush.bf16.msra.mxu0 %v10987
        %11352 = vmatpush.bf16.msra.mxu0 %v10986
        %11353 = vmatpush.bf16.msra.mxu0 %v10985
        %11354 = vmatpush.bf16.msra.mxu0 %v10984
        %11355 = vmatpush.bf16.msra.mxu0 %v10983
        %11356 = vmatpush.bf16.msra.mxu0 %v10982
        %11357 = vmatpush.bf16.msra.mxu0 %v10981
        %11358 = vmatpush.bf16.msra.mxu0 %v10980
        %11359 = vmatmul.bf16.gmra.mxu0 %v10447
        %v11360 = vpop.f32.mrf.mxu0
        %v11361 = vadd.f32 %v11272, %v11360
        %v11362 = vpop.f32.mrf.mxu0
        %v11363 = vadd.f32 %v11274, %v11362
        %11364 = vmatmul.bf16.gmra.mxu0 %v10455
        %v11365 = vpop.f32.mrf.mxu0
        %v11366 = vadd.f32 %v11277, %v11365
        %v11367 = vpop.f32.mrf.mxu0
        %v11368 = vadd.f32 %v11279, %v11367
        %11369 = vmatmul.bf16.gmra.mxu0 %v10463
        %v11370 = vpop.f32.mrf.mxu0
        %v11371 = vadd.f32 %v11282, %v11370
        %v11372 = vpop.f32.mrf.mxu0
        %v11373 = vadd.f32 %v11284, %v11372
        %11374 = vmatmul.bf16.gmra.mxu0 %v10471
        %v11375 = vpop.f32.mrf.mxu0
        %v11376 = vadd.f32 %v11287, %v11375
        %v11377 = vpop.f32.mrf.mxu0
        %v11378 = vadd.f32 %v11289, %v11377
        %11379 = vmatmul.bf16.gmra.mxu0 %v10479
        %v11380 = vpop.f32.mrf.mxu0
        %v11381 = vadd.f32 %v11292, %v11380
        %v11382 = vpop.f32.mrf.mxu0
        %v11383 = vadd.f32 %v11294, %v11382
        %11384 = vmatmul.bf16.gmra.mxu0 %v10487
        %v11385 = vpop.f32.mrf.mxu0
        %v11386 = vadd.f32 %v11297, %v11385
        %v11387 = vpop.f32.mrf.mxu0
        %v11388 = vadd.f32 %v11299, %v11387
        %11389 = vmatmul.bf16.gmra.mxu0 %v10495
        %v11390 = vpop.f32.mrf.mxu0
        %v11391 = vadd.f32 %v11302, %v11390
        %v11392 = vpop.f32.mrf.mxu0
        %v11393 = vadd.f32 %v11304, %v11392
        %11394 = vmatmul.bf16.gmra.mxu0 %v10503
        %v11395 = vpop.f32.mrf.mxu0
        %v11396 = vadd.f32 %v11307, %v11395
        %v11397 = vpop.f32.mrf.mxu0
        %v11398 = vadd.f32 %v11309, %v11397
        %11399 = vmatmul.bf16.gmra.mxu0 %v10511
        %v11400 = vpop.f32.mrf.mxu0
        %v11401 = vadd.f32 %v11312, %v11400
        %v11402 = vpop.f32.mrf.mxu0
        %v11403 = vadd.f32 %v11314, %v11402
        %11404 = vmatmul.bf16.gmra.mxu0 %v10519
        %v11405 = vpop.f32.mrf.mxu0
        %v11406 = vadd.f32 %v11317, %v11405
        %v11407 = vpop.f32.mrf.mxu0
        %v11408 = vadd.f32 %v11319, %v11407
        %11409 = vmatmul.bf16.gmra.mxu0 %v10527
        %v11410 = vpop.f32.mrf.mxu0
        %v11411 = vadd.f32 %v11322, %v11410
        %v11412 = vpop.f32.mrf.mxu0
        %v11413 = vadd.f32 %v11324, %v11412
        %11414 = vmatmul.bf16.gmra.mxu0 %v10535
        %v11415 = vpop.f32.mrf.mxu0
        %v11416 = vadd.f32 %v11327, %v11415
        %v11417 = vpop.f32.mrf.mxu0
        %v11418 = vadd.f32 %v11329, %v11417
        %11419 = vmatmul.bf16.gmra.mxu0 %v10543
        %v11420 = vpop.f32.mrf.mxu0
        %v11421 = vadd.f32 %v11332, %v11420
        %v11422 = vpop.f32.mrf.mxu0
        %v11423 = vadd.f32 %v11334, %v11422
        %11424 = vmatmul.bf16.gmra.mxu0 %v10551
        %v11425 = vpop.f32.mrf.mxu0
        %v11426 = vadd.f32 %v11337, %v11425
        %v11427 = vpop.f32.mrf.mxu0
        %v11428 = vadd.f32 %v11339, %v11427
        %11429 = vmatmul.bf16.gmra.mxu0 %v10559
        %v11430 = vpop.f32.mrf.mxu0
        %v11431 = vadd.f32 %v11342, %v11430
        %v11432 = vpop.f32.mrf.mxu0
        %v11433 = vadd.f32 %v11344, %v11432
        %11434 = vmatmul.bf16.gmra.mxu0 %v10567
        %v11435 = vpop.f32.mrf.mxu0
        %v11436 = vadd.f32 %v11347, %v11435
        %v11437 = vpop.f32.mrf.mxu0
        %v11438 = vadd.f32 %v11349, %v11437
        %11439 = vdwg.mxu0
        %11440 = vmatpush.bf16.msra.mxu0 %v10995
        %11441 = vmatpush.bf16.msra.mxu0 %v10994
        %11442 = vmatpush.bf16.msra.mxu0 %v10993
        %11443 = vmatpush.bf16.msra.mxu0 %v10992
        %11444 = vmatpush.bf16.msra.mxu0 %v10991
        %11445 = vmatpush.bf16.msra.mxu0 %v10990
        %11446 = vmatpush.bf16.msra.mxu0 %v10989
        %11447 = vmatpush.bf16.msra.mxu0 %v10988
        %11448 = vmatmul.bf16.gmra.mxu0 %v10448
        %v11449 = vpop.f32.mrf.mxu0
        %v11450 = vadd.f32 %v11361, %v11449
        %v11451 = vpop.f32.mrf.mxu0
        %v11452 = vadd.f32 %v11363, %v11451
        %11453 = vmatmul.bf16.gmra.mxu0 %v10456
        %v11454 = vpop.f32.mrf.mxu0
        %v11455 = vadd.f32 %v11366, %v11454
        %v11456 = vpop.f32.mrf.mxu0
        %v11457 = vadd.f32 %v11368, %v11456
        %11458 = vmatmul.bf16.gmra.mxu0 %v10464
        %v11459 = vpop.f32.mrf.mxu0
        %v11460 = vadd.f32 %v11371, %v11459
        %v11461 = vpop.f32.mrf.mxu0
        %v11462 = vadd.f32 %v11373, %v11461
        %11463 = vmatmul.bf16.gmra.mxu0 %v10472
        %v11464 = vpop.f32.mrf.mxu0
        %v11465 = vadd.f32 %v11376, %v11464
        %v11466 = vpop.f32.mrf.mxu0
        %v11467 = vadd.f32 %v11378, %v11466
        %11468 = vmatmul.bf16.gmra.mxu0 %v10480
        %v11469 = vpop.f32.mrf.mxu0
        %v11470 = vadd.f32 %v11381, %v11469
        %v11471 = vpop.f32.mrf.mxu0
        %v11472 = vadd.f32 %v11383, %v11471
        %11473 = vmatmul.bf16.gmra.mxu0 %v10488
        %v11474 = vpop.f32.mrf.mxu0
        %v11475 = vadd.f32 %v11386, %v11474
        %v11476 = vpop.f32.mrf.mxu0
        %v11477 = vadd.f32 %v11388, %v11476
        %11478 = vmatmul.bf16.gmra.mxu0 %v10496
        %v11479 = vpop.f32.mrf.mxu0
        %v11480 = vadd.f32 %v11391, %v11479
        %v11481 = vpop.f32.mrf.mxu0
        %v11482 = vadd.f32 %v11393, %v11481
        %11483 = vmatmul.bf16.gmra.mxu0 %v10504
        %v11484 = vpop.f32.mrf.mxu0
        %v11485 = vadd.f32 %v11396, %v11484
        %v11486 = vpop.f32.mrf.mxu0
        %v11487 = vadd.f32 %v11398, %v11486
        %11488 = vmatmul.bf16.gmra.mxu0 %v10512
        %v11489 = vpop.f32.mrf.mxu0
        %v11490 = vadd.f32 %v11401, %v11489
        %v11491 = vpop.f32.mrf.mxu0
        %v11492 = vadd.f32 %v11403, %v11491
        %11493 = vmatmul.bf16.gmra.mxu0 %v10520
        %v11494 = vpop.f32.mrf.mxu0
        %v11495 = vadd.f32 %v11406, %v11494
        %v11496 = vpop.f32.mrf.mxu0
        %v11497 = vadd.f32 %v11408, %v11496
        %11498 = vmatmul.bf16.gmra.mxu0 %v10528
        %v11499 = vpop.f32.mrf.mxu0
        %v11500 = vadd.f32 %v11411, %v11499
        %v11501 = vpop.f32.mrf.mxu0
        %v11502 = vadd.f32 %v11413, %v11501
        %11503 = vmatmul.bf16.gmra.mxu0 %v10536
        %v11504 = vpop.f32.mrf.mxu0
        %v11505 = vadd.f32 %v11416, %v11504
        %v11506 = vpop.f32.mrf.mxu0
        %v11507 = vadd.f32 %v11418, %v11506
        %11508 = vmatmul.bf16.gmra.mxu0 %v10544
        %v11509 = vpop.f32.mrf.mxu0
        %v11510 = vadd.f32 %v11421, %v11509
        %v11511 = vpop.f32.mrf.mxu0
        %v11512 = vadd.f32 %v11423, %v11511
        %11513 = vmatmul.bf16.gmra.mxu0 %v10552
        %v11514 = vpop.f32.mrf.mxu0
        %v11515 = vadd.f32 %v11426, %v11514
        %v11516 = vpop.f32.mrf.mxu0
        %v11517 = vadd.f32 %v11428, %v11516
        %11518 = vmatmul.bf16.gmra.mxu0 %v10560
        %v11519 = vpop.f32.mrf.mxu0
        %v11520 = vadd.f32 %v11431, %v11519
        %v11521 = vpop.f32.mrf.mxu0
        %v11522 = vadd.f32 %v11433, %v11521
        %11523 = vmatmul.bf16.gmra.mxu0 %v10568
        %v11524 = vpop.f32.mrf.mxu0
        %v11525 = vadd.f32 %v11436, %v11524
        %v11526 = vpop.f32.mrf.mxu0
        %v11527 = vadd.f32 %v11438, %v11526
        %11528 = vdwg.mxu0
        %11529 = vmatpush.bf16.msra.mxu0 %v11003
        %11530 = vmatpush.bf16.msra.mxu0 %v11002
        %11531 = vmatpush.bf16.msra.mxu0 %v11001
        %11532 = vmatpush.bf16.msra.mxu0 %v11000
        %11533 = vmatpush.bf16.msra.mxu0 %v10999
        %11534 = vmatpush.bf16.msra.mxu0 %v10998
        %11535 = vmatpush.bf16.msra.mxu0 %v10997
        %11536 = vmatpush.bf16.msra.mxu0 %v10996
        %11537 = vmatmul.bf16.gmra.mxu0 %v10449
        %v11538 = vpop.f32.mrf.mxu0
        %v11539 = vadd.f32 %v11450, %v11538
        %v11540 = vpop.f32.mrf.mxu0
        %v11541 = vadd.f32 %v11452, %v11540
        %11542 = vmatmul.bf16.gmra.mxu0 %v10457
        %v11543 = vpop.f32.mrf.mxu0
        %v11544 = vadd.f32 %v11455, %v11543
        %v11545 = vpop.f32.mrf.mxu0
        %v11546 = vadd.f32 %v11457, %v11545
        %11547 = vmatmul.bf16.gmra.mxu0 %v10465
        %v11548 = vpop.f32.mrf.mxu0
        %v11549 = vadd.f32 %v11460, %v11548
        %v11550 = vpop.f32.mrf.mxu0
        %v11551 = vadd.f32 %v11462, %v11550
        %11552 = vmatmul.bf16.gmra.mxu0 %v10473
        %v11553 = vpop.f32.mrf.mxu0
        %v11554 = vadd.f32 %v11465, %v11553
        %v11555 = vpop.f32.mrf.mxu0
        %v11556 = vadd.f32 %v11467, %v11555
        %11557 = vmatmul.bf16.gmra.mxu0 %v10481
        %v11558 = vpop.f32.mrf.mxu0
        %v11559 = vadd.f32 %v11470, %v11558
        %v11560 = vpop.f32.mrf.mxu0
        %v11561 = vadd.f32 %v11472, %v11560
        %11562 = vmatmul.bf16.gmra.mxu0 %v10489
        %v11563 = vpop.f32.mrf.mxu0
        %v11564 = vadd.f32 %v11475, %v11563
        %v11565 = vpop.f32.mrf.mxu0
        %v11566 = vadd.f32 %v11477, %v11565
        %11567 = vmatmul.bf16.gmra.mxu0 %v10497
        %v11568 = vpop.f32.mrf.mxu0
        %v11569 = vadd.f32 %v11480, %v11568
        %v11570 = vpop.f32.mrf.mxu0
        %v11571 = vadd.f32 %v11482, %v11570
        %11572 = vmatmul.bf16.gmra.mxu0 %v10505
        %v11573 = vpop.f32.mrf.mxu0
        %v11574 = vadd.f32 %v11485, %v11573
        %v11575 = vpop.f32.mrf.mxu0
        %v11576 = vadd.f32 %v11487, %v11575
        %11577 = vmatmul.bf16.gmra.mxu0 %v10513
        %v11578 = vpop.f32.mrf.mxu0
        %v11579 = vadd.f32 %v11490, %v11578
        %v11580 = vpop.f32.mrf.mxu0
        %v11581 = vadd.f32 %v11492, %v11580
        %11582 = vmatmul.bf16.gmra.mxu0 %v10521
        %v11583 = vpop.f32.mrf.mxu0
        %v11584 = vadd.f32 %v11495, %v11583
        %v11585 = vpop.f32.mrf.mxu0
        %v11586 = vadd.f32 %v11497, %v11585
        %11587 = vmatmul.bf16.gmra.mxu0 %v10529
        %v11588 = vpop.f32.mrf.mxu0
        %v11589 = vadd.f32 %v11500, %v11588
        %v11590 = vpop.f32.mrf.mxu0
        %v11591 = vadd.f32 %v11502, %v11590
        %11592 = vmatmul.bf16.gmra.mxu0 %v10537
        %v11593 = vpop.f32.mrf.mxu0
        %v11594 = vadd.f32 %v11505, %v11593
        %v11595 = vpop.f32.mrf.mxu0
        %v11596 = vadd.f32 %v11507, %v11595
        %11597 = vmatmul.bf16.gmra.mxu0 %v10545
        %v11598 = vpop.f32.mrf.mxu0
        %v11599 = vadd.f32 %v11510, %v11598
        %v11600 = vpop.f32.mrf.mxu0
        %v11601 = vadd.f32 %v11512, %v11600
        %11602 = vmatmul.bf16.gmra.mxu0 %v10553
        %v11603 = vpop.f32.mrf.mxu0
        %v11604 = vadd.f32 %v11515, %v11603
        %v11605 = vpop.f32.mrf.mxu0
        %v11606 = vadd.f32 %v11517, %v11605
        %11607 = vmatmul.bf16.gmra.mxu0 %v10561
        %v11608 = vpop.f32.mrf.mxu0
        %v11609 = vadd.f32 %v11520, %v11608
        %v11610 = vpop.f32.mrf.mxu0
        %v11611 = vadd.f32 %v11522, %v11610
        %11612 = vmatmul.bf16.gmra.mxu0 %v10569
        %v11613 = vpop.f32.mrf.mxu0
        %v11614 = vadd.f32 %v11525, %v11613
        %v11615 = vpop.f32.mrf.mxu0
        %v11616 = vadd.f32 %v11527, %v11615
        %11617 = vdwg.mxu0
        %11618 = vmatpush.bf16.msra.mxu0 %v11011
        %11619 = vmatpush.bf16.msra.mxu0 %v11010
        %11620 = vmatpush.bf16.msra.mxu0 %v11009
        %11621 = vmatpush.bf16.msra.mxu0 %v11008
        %11622 = vmatpush.bf16.msra.mxu0 %v11007
        %11623 = vmatpush.bf16.msra.mxu0 %v11006
        %11624 = vmatpush.bf16.msra.mxu0 %v11005
        %11625 = vmatpush.bf16.msra.mxu0 %v11004
        %11626 = vmatmul.bf16.gmra.mxu0 %v10450
        %v11627 = vpop.f32.mrf.mxu0
        %v11628 = vadd.f32 %v11539, %v11627
        %v11629 = vpop.f32.mrf.mxu0
        %v11630 = vadd.f32 %v11541, %v11629
        %11631 = vmatmul.bf16.gmra.mxu0 %v10458
        %v11632 = vpop.f32.mrf.mxu0
        %v11633 = vadd.f32 %v11544, %v11632
        %v11634 = vpop.f32.mrf.mxu0
        %v11635 = vadd.f32 %v11546, %v11634
        %11636 = vmatmul.bf16.gmra.mxu0 %v10466
        %v11637 = vpop.f32.mrf.mxu0
        %v11638 = vadd.f32 %v11549, %v11637
        %v11639 = vpop.f32.mrf.mxu0
        %v11640 = vadd.f32 %v11551, %v11639
        %11641 = vmatmul.bf16.gmra.mxu0 %v10474
        %v11642 = vpop.f32.mrf.mxu0
        %v11643 = vadd.f32 %v11554, %v11642
        %v11644 = vpop.f32.mrf.mxu0
        %v11645 = vadd.f32 %v11556, %v11644
        %11646 = vmatmul.bf16.gmra.mxu0 %v10482
        %v11647 = vpop.f32.mrf.mxu0
        %v11648 = vadd.f32 %v11559, %v11647
        %v11649 = vpop.f32.mrf.mxu0
        %v11650 = vadd.f32 %v11561, %v11649
        %11651 = vmatmul.bf16.gmra.mxu0 %v10490
        %v11652 = vpop.f32.mrf.mxu0
        %v11653 = vadd.f32 %v11564, %v11652
        %v11654 = vpop.f32.mrf.mxu0
        %v11655 = vadd.f32 %v11566, %v11654
        %11656 = vmatmul.bf16.gmra.mxu0 %v10498
        %v11657 = vpop.f32.mrf.mxu0
        %v11658 = vadd.f32 %v11569, %v11657
        %v11659 = vpop.f32.mrf.mxu0
        %v11660 = vadd.f32 %v11571, %v11659
        %11661 = vmatmul.bf16.gmra.mxu0 %v10506
        %v11662 = vpop.f32.mrf.mxu0
        %v11663 = vadd.f32 %v11574, %v11662
        %v11664 = vpop.f32.mrf.mxu0
        %v11665 = vadd.f32 %v11576, %v11664
        %11666 = vmatmul.bf16.gmra.mxu0 %v10514
        %v11667 = vpop.f32.mrf.mxu0
        %v11668 = vadd.f32 %v11579, %v11667
        %v11669 = vpop.f32.mrf.mxu0
        %v11670 = vadd.f32 %v11581, %v11669
        %11671 = vmatmul.bf16.gmra.mxu0 %v10522
        %v11672 = vpop.f32.mrf.mxu0
        %v11673 = vadd.f32 %v11584, %v11672
        %v11674 = vpop.f32.mrf.mxu0
        %v11675 = vadd.f32 %v11586, %v11674
        %11676 = vmatmul.bf16.gmra.mxu0 %v10530
        %v11677 = vpop.f32.mrf.mxu0
        %v11678 = vadd.f32 %v11589, %v11677
        %v11679 = vpop.f32.mrf.mxu0
        %v11680 = vadd.f32 %v11591, %v11679
        %11681 = vmatmul.bf16.gmra.mxu0 %v10538
        %v11682 = vpop.f32.mrf.mxu0
        %v11683 = vadd.f32 %v11594, %v11682
        %v11684 = vpop.f32.mrf.mxu0
        %v11685 = vadd.f32 %v11596, %v11684
        %11686 = vmatmul.bf16.gmra.mxu0 %v10546
        %v11687 = vpop.f32.mrf.mxu0
        %v11688 = vadd.f32 %v11599, %v11687
        %v11689 = vpop.f32.mrf.mxu0
        %v11690 = vadd.f32 %v11601, %v11689
        %11691 = vmatmul.bf16.gmra.mxu0 %v10554
        %v11692 = vpop.f32.mrf.mxu0
        %v11693 = vadd.f32 %v11604, %v11692
        %v11694 = vpop.f32.mrf.mxu0
        %v11695 = vadd.f32 %v11606, %v11694
        %11696 = vmatmul.bf16.gmra.mxu0 %v10562
        %v11697 = vpop.f32.mrf.mxu0
        %v11698 = vadd.f32 %v11609, %v11697
        %v11699 = vpop.f32.mrf.mxu0
        %v11700 = vadd.f32 %v11611, %v11699
        %11701 = vmatmul.bf16.gmra.mxu0 %v10570
        %v11702 = vpop.f32.mrf.mxu0
        %v11703 = vadd.f32 %v11614, %v11702
        %v11704 = vpop.f32.mrf.mxu0
        %v11705 = vadd.f32 %v11616, %v11704
        %11706 = vdwg.mxu0
        %11707 = vmatpush.bf16.msra.mxu0 %v11019
        %11708 = vmatpush.bf16.msra.mxu0 %v11018
        %11709 = vmatpush.bf16.msra.mxu0 %v11017
        %11710 = vmatpush.bf16.msra.mxu0 %v11016
        %11711 = vmatpush.bf16.msra.mxu0 %v11015
        %11712 = vmatpush.bf16.msra.mxu0 %v11014
        %11713 = vmatpush.bf16.msra.mxu0 %v11013
        %11714 = vmatpush.bf16.msra.mxu0 %v11012
        %11715 = vmatmul.bf16.gmra.mxu0 %v10451
        %v11716 = vpop.f32.mrf.mxu0
        %v11717 = vadd.f32 %v11628, %v11716
        %v11718 = vpop.f32.mrf.mxu0
        %v11719 = vadd.f32 %v11630, %v11718
        %11720 = vmatmul.bf16.gmra.mxu0 %v10459
        %v11721 = vpop.f32.mrf.mxu0
        %v11722 = vadd.f32 %v11633, %v11721
        %v11723 = vpop.f32.mrf.mxu0
        %v11724 = vadd.f32 %v11635, %v11723
        %11725 = vmatmul.bf16.gmra.mxu0 %v10467
        %v11726 = vpop.f32.mrf.mxu0
        %v11727 = vadd.f32 %v11638, %v11726
        %v11728 = vpop.f32.mrf.mxu0
        %v11729 = vadd.f32 %v11640, %v11728
        %11730 = vmatmul.bf16.gmra.mxu0 %v10475
        %v11731 = vpop.f32.mrf.mxu0
        %v11732 = vadd.f32 %v11643, %v11731
        %v11733 = vpop.f32.mrf.mxu0
        %v11734 = vadd.f32 %v11645, %v11733
        %11735 = vmatmul.bf16.gmra.mxu0 %v10483
        %v11736 = vpop.f32.mrf.mxu0
        %v11737 = vadd.f32 %v11648, %v11736
        %v11738 = vpop.f32.mrf.mxu0
        %v11739 = vadd.f32 %v11650, %v11738
        %11740 = vmatmul.bf16.gmra.mxu0 %v10491
        %v11741 = vpop.f32.mrf.mxu0
        %v11742 = vadd.f32 %v11653, %v11741
        %v11743 = vpop.f32.mrf.mxu0
        %v11744 = vadd.f32 %v11655, %v11743
        %11745 = vmatmul.bf16.gmra.mxu0 %v10499
        %v11746 = vpop.f32.mrf.mxu0
        %v11747 = vadd.f32 %v11658, %v11746
        %v11748 = vpop.f32.mrf.mxu0
        %v11749 = vadd.f32 %v11660, %v11748
        %11750 = vmatmul.bf16.gmra.mxu0 %v10507
        %v11751 = vpop.f32.mrf.mxu0
        %v11752 = vadd.f32 %v11663, %v11751
        %v11753 = vpop.f32.mrf.mxu0
        %v11754 = vadd.f32 %v11665, %v11753
        %11755 = vmatmul.bf16.gmra.mxu0 %v10515
        %v11756 = vpop.f32.mrf.mxu0
        %v11757 = vadd.f32 %v11668, %v11756
        %v11758 = vpop.f32.mrf.mxu0
        %v11759 = vadd.f32 %v11670, %v11758
        %11760 = vmatmul.bf16.gmra.mxu0 %v10523
        %v11761 = vpop.f32.mrf.mxu0
        %v11762 = vadd.f32 %v11673, %v11761
        %v11763 = vpop.f32.mrf.mxu0
        %v11764 = vadd.f32 %v11675, %v11763
        %11765 = vmatmul.bf16.gmra.mxu0 %v10531
        %v11766 = vpop.f32.mrf.mxu0
        %v11767 = vadd.f32 %v11678, %v11766
        %v11768 = vpop.f32.mrf.mxu0
        %v11769 = vadd.f32 %v11680, %v11768
        %11770 = vmatmul.bf16.gmra.mxu0 %v10539
        %v11771 = vpop.f32.mrf.mxu0
        %v11772 = vadd.f32 %v11683, %v11771
        %v11773 = vpop.f32.mrf.mxu0
        %v11774 = vadd.f32 %v11685, %v11773
        %11775 = vmatmul.bf16.gmra.mxu0 %v10547
        %v11776 = vpop.f32.mrf.mxu0
        %v11777 = vadd.f32 %v11688, %v11776
        %v11778 = vpop.f32.mrf.mxu0
        %v11779 = vadd.f32 %v11690, %v11778
        %11780 = vmatmul.bf16.gmra.mxu0 %v10555
        %v11781 = vpop.f32.mrf.mxu0
        %v11782 = vadd.f32 %v11693, %v11781
        %v11783 = vpop.f32.mrf.mxu0
        %v11784 = vadd.f32 %v11695, %v11783
        %11785 = vmatmul.bf16.gmra.mxu0 %v10563
        %v11786 = vpop.f32.mrf.mxu0
        %v11787 = vadd.f32 %v11698, %v11786
        %v11788 = vpop.f32.mrf.mxu0
        %v11789 = vadd.f32 %v11700, %v11788
        %11790 = vmatmul.bf16.gmra.mxu0 %v10571
        %v11791 = vpop.f32.mrf.mxu0
        %v11792 = vadd.f32 %v11703, %v11791
        %v11793 = vpop.f32.mrf.mxu0
        %v11794 = vadd.f32 %v11705, %v11793
        %11795 = vdwg.mxu0
        %11796 = vst [vmem:[%s379] sm:$0xff] %v11717
        %11797 = vst [vmem:[%s379 + $0x8] sm:$0xff] %v11719
        %11798 = vst [vmem:[%s379 + $0x10] sm:$0xff] %v11722
        %11799 = vst [vmem:[%s379 + $0x18] sm:$0xff] %v11724
        %11800 = vst [vmem:[%s379 + $0x20] sm:$0xff] %v11727
        %11801 = vst [vmem:[%s379 + $0x28] sm:$0xff] %v11729
        %11802 = vst [vmem:[%s379 + $0x30] sm:$0xff] %v11732
        %11803 = vst [vmem:[%s379 + $0x38] sm:$0xff] %v11734
        %11804 = vst [vmem:[%s379 + $0x40] sm:$0xff] %v11737
        %11805 = vst [vmem:[%s379 + $0x48] sm:$0xff] %v11739
        %11806 = vst [vmem:[%s379 + $0x50] sm:$0xff] %v11742
        %11807 = vst [vmem:[%s379 + $0x58] sm:$0xff] %v11744
        %11808 = vst [vmem:[%s379 + $0x60] sm:$0xff] %v11747
        %11809 = vst [vmem:[%s379 + $0x68] sm:$0xff] %v11749
        %11810 = vst [vmem:[%s379 + $0x70] sm:$0xff] %v11752
        %11811 = vst [vmem:[%s379 + $0x78] sm:$0xff] %v11754
        %11812 = vst [vmem:[%s379 + $0x80] sm:$0xff] %v11757
        %11813 = vst [vmem:[%s379 + $0x88] sm:$0xff] %v11759
        %11814 = vst [vmem:[%s379 + $0x90] sm:$0xff] %v11762
        %11815 = vst [vmem:[%s379 + $0x98] sm:$0xff] %v11764
        %11816 = vst [vmem:[%s379 + $0xa0] sm:$0xff] %v11767
        %11817 = vst [vmem:[%s379 + $0xa8] sm:$0xff] %v11769
        %11818 = vst [vmem:[%s379 + $0xb0] sm:$0xff] %v11772
        %11819 = vst [vmem:[%s379 + $0xb8] sm:$0xff] %v11774
        %11820 = vst [vmem:[%s379 + $0xc0] sm:$0xff] %v11777
        %11821 = vst [vmem:[%s379 + $0xc8] sm:$0xff] %v11779
        %11822 = vst [vmem:[%s379 + $0xd0] sm:$0xff] %v11782
        %11823 = vst [vmem:[%s379 + $0xd8] sm:$0xff] %v11784
        %11824 = vst [vmem:[%s379 + $0xe0] sm:$0xff] %v11787
        %11825 = vst [vmem:[%s379 + $0xe8] sm:$0xff] %v11789
        %11826 = vst [vmem:[%s379 + $0xf0] sm:$0xff] %v11792
        %11827 = vst [vmem:[%s379 + $0xf8] sm:$0xff] %v11794
        %s11828 = sand.u32 %s189, 1
        %s11829 = scalar_lea.sflag [#allocation6], %s11828
        %s11830 = sand.u32 %s189, 1
        %s11831 = smul.addr %s11830, 256
        %s11832 = scalar_lea.vmem [#allocation15], %s11831
        // Predicated region
        $region73: #{tpu_custom_call.1} parent=47 // pred_check
          %p11833 = pneg %p199
        $region74: #{tpu_custom_call.1} parent=47 // pred_check_branch
          %11835 = sbr.rel (%p11833) target = $region76
        $region75: #{tpu_custom_call.1} parent=47 // pred_region
          %s11836 = smul.u32 32, %s29
          %11838 = vsyncadd %s11829, 0
          %s11839 = smul.addr %s11836, 8
          %s11840 = scalar_lea.hbm %s8, %s11839
          %s11841 = sshll.u32 %s11832, 4
          %s11842 = int_to_ptr.vmem [resolvable:$true] %s11841
          %s11843 = sshll.u32 %s11840, 4
          %s11844 = int_to_ptr.hbm [resolvable:$true] %s11843
          %11849 = dma.vmem_to_hbm [thread:$0]  %s11842, 4096, %s11844, %s11829, 128, 128, 8
        $region76: #{tpu_custom_call.1} parent=47 // pred_fallthru
          _
      $region48: #{tpu_custom_call.1} parent=5 // pred_fallthru
        _
      %p11850 = scmp.le.s32.totalorder 2, %s24
      // Predicated region
      $region77: #{tpu_custom_call.1} parent=5 // pred_check
        %p11851 = pneg %p11850
      $region78: #{tpu_custom_call.1} parent=5 // pred_check_branch
        %11853 = sbr.rel (%p11851) target = $region80
      $region79: #{tpu_custom_call.1} parent=5 // pred_region
        %s11854 = ssub.s32 %s24, 2
        // Predicated region
        $region81: #{tpu_custom_call.1} parent=79 // pred_check
          %p11855 = pneg %p205
        $region82: #{tpu_custom_call.1} parent=79 // pred_check_branch
          %11857 = sbr.rel (%p11855) target = $region84
        $region83: #{tpu_custom_call.1} parent=79 // pred_region
          %s11858 = sand.u32 %s190, 1
          %s11859 = scalar_lea.sflag [#allocation6], %s11858
          %s11860 = sand.u32 %s190, 1
          %s11861 = smul.addr %s11860, 256
          %s11862 = scalar_lea.vmem [#allocation15], %s11861
          %11864 = dma.done %s11859, 4096
        $region84: #{tpu_custom_call.1} parent=79 // pred_fallthru
          _
      $region80: #{tpu_custom_call.1} parent=5 // pred_fallthru
        _
    $region6: #{tpu_custom_call.1} parent=1 // loop_footer
      %s28 = sadd.s32 1, %s24
    $region7: #{tpu_custom_call.1} parent=1 // loop_footer_branch
      %23 = sbr.rel target = $region3
    $region8: #{tpu_custom_call.1} parent=1 // loop_exit
      _
    %11865 = vsyncpa [#allocation5], 1
    %s11866 = scalar_lea.sflag [#allocation5], 1
    %11867 = vsyncpa %s11866, 1
    %11868 = vsyncpa [#allocation8], 1
    %11869 = vsyncpa [#allocation11], 1
    %11870 = vsyncpa [#allocation14], 1
    %11871 = vsyncpa [#allocation6], 1
    %s11872 = scalar_lea.sflag [#allocation6], 1
    %11873 = vsyncpa %s11872, 1

</llo_original>
